<compile_context>
chip_gen: v7x
topology: tpu7x:2x2x1
jax: 0.10.0
libtpu: 0.0.40
codegen_flags: <defaults>
</compile_context>

<pallas_src>
import functools

import jax
import jax.numpy as jnp
from jax.experimental import pallas as pl
from jax.experimental.pallas import tpu as pltpu


# --------------------------------------------------------------------------
# VMEM budget (hardware-aware, conservative fallback = v7x 64 MiB per core)
# --------------------------------------------------------------------------
def _vmem_capacity_bytes():
    try:
        info = pltpu.get_tpu_info()
        cap = getattr(info, "vmem_capacity_bytes", None)
        if cap:
            return int(cap)
    except Exception:
        pass
    return 64 * 1024 * 1024


_VMEM_LIMIT = min(int(_vmem_capacity_bytes() * 0.75), 100 * 1024 * 1024)
_BLOCK_BUDGET = _VMEM_LIMIT // 2   # budget for the streamed (double-buffered) blocks


def _lane_pad(c):
    return ((c + 127) // 128) * 128


def _row_block_bytes(col_dtypes, extra_f32_cols=0):
    """Approx VMEM bytes per block row: double-buffered in/out blocks + f32 temps."""
    total = 0
    for cols, dt in col_dtypes:
        total += 2 * _lane_pad(cols) * jnp.dtype(dt).itemsize
    total += _lane_pad(extra_f32_cols) * 4
    return max(total, 1)


def _pick_block_rows(rows, bytes_per_row, budget):
    """Largest multiple-of-8 row-tile fitting `budget`, preferring an exact divisor
    of `rows` (no padding copy) and >= 2 grid steps (v7x megacore)."""
    cap = max(8, budget // max(bytes_per_row, 1))
    if rows >= 16:
        cap = min(cap, max(8, rows // 2))
    cap = min(cap, max(8, rows))
    cap = max(8, (cap // 8) * 8)
    for tr in range(cap, 7, -8):
        if rows % tr == 0:
            return tr, rows
    tr = cap
    return tr, pl.cdiv(rows, tr) * tr


def _div_mod(n, d):
    """Vector int32 div/mod by a static positive int (shift/mask when power of 2)."""
    if d & (d - 1) == 0:
        shift = d.bit_length() - 1
        return n >> shift, n & (d - 1)
    return n // d, n % d


def _compiler_params():
    return pltpu.CompilerParams(dimension_semantics=("parallel",),
                                vmem_limit_bytes=_VMEM_LIMIT)


# --------------------------------------------------------------------------
# Kernel 1: fused lifting  (in-kernel positional embedding + 2-layer MLP)
#   h1 = gelu(u*w1[0] + py*w1[1] + px*w1[2] + b1);  h = h1 @ w2 + b2  (bf16 out)
# --------------------------------------------------------------------------
def _lift_kernel(u_ref, w1_ref, b1_ref, w2_ref, b2_ref, o_ref, *, H, W):
    tm = u_ref.shape[0]
    n = pl.program_id(0) * tm + jax.lax.broadcasted_iota(jnp.int32, (tm, 1), 0)
    hw, w_idx = _div_mod(n, W)
    _, h_idx = _div_mod(hw, H)
    inv_h = 1.0 / float(max(H - 1, 1))
    inv_w = 1.0 / float(max(W - 1, 1))
    py = h_idx.astype(jnp.float32) * inv_h          # (tm, 1)
    px = w_idx.astype(jnp.float32) * inv_w          # (tm, 1)
    u = u_ref[...]                                  # (tm, 1) f32
    w1 = w1_ref[...]                                # (3, P) f32
    h1 = (u * w1[0:1, :] + py * w1[1:2, :] + px * w1[2:3, :] + b1_ref[...])
    h1 = jax.nn.gelu(h1, approximate=True)
    y = jnp.dot(h1.astype(jnp.bfloat16), w2_ref[...],
                preferred_element_type=jnp.float32) + b2_ref[...]
    o_ref[...] = y.astype(o_ref.dtype)


def lift(u2d, w1, b1, w2, b2, H, W):
    """u2d: (N, 1) f32 -> (N, Ch) bf16."""
    N = u2d.shape[0]
    P = w1.shape[1]
    Ch = w2.shape[1]
    rb = _row_block_bytes([(1, jnp.float32), (Ch, jnp.bfloat16)], extra_f32_cols=2 * P)
    TR, Np = _pick_block_rows(N, rb, _BLOCK_BUDGET)
    u_in = jnp.pad(u2d, ((0, Np - N), (0, 0))) if Np != N else u2d
    out = pl.pallas_call(
        functools.partial(_lift_kernel, H=H, W=W),
        grid=(Np // TR,),
        out_shape=jax.ShapeDtypeStruct((Np, Ch), jnp.bfloat16),
        in_specs=[
            pl.BlockSpec((TR, 1), lambda i: (i, 0)),
            pl.BlockSpec((3, P), lambda i: (0, 0)),
            pl.BlockSpec((1, P), lambda i: (0, 0)),
            pl.BlockSpec((P, Ch), lambda i: (0, 0)),
            pl.BlockSpec((1, Ch), lambda i: (0, 0)),
        ],
        out_specs=pl.BlockSpec((TR, Ch), lambda i: (i, 0)),
        compiler_params=_compiler_params(),
    )(u_in, w1, b1.reshape(1, P), w2, b2.reshape(1, Ch))
    return out[:N] if Np != N else out


# --------------------------------------------------------------------------
# Kernel 2: fused per-layer epilogue (folded, lane-dense):
#   y = sc + h @ block_diag(skip_w) + b  [, gelu]   -> bf16
# --------------------------------------------------------------------------
def _skip_kernel(h_ref, sc_ref, w_ref, b_ref, o_ref, *, activate):
    y = jnp.dot(h_ref[...], w_ref[...], preferred_element_type=jnp.float32)
    y = y + b_ref[...] + sc_ref[...]
    if activate:
        y = jax.nn.gelu(y, approximate=True)
    o_ref[...] = y.astype(o_ref.dtype)


def skip_residual(h, sc, w, b, *, activate, fold):
    """h: (N, C) bf16, sc: (N, C) f32, w: (C, C) f32 -> (N, C) bf16."""
    N, C = h.shape
    FC = fold * C
    Ng = N // fold
    hf = h.reshape(Ng, FC)
    scf = sc.reshape(Ng, FC)
    w_bd = jnp.kron(jnp.eye(fold, dtype=jnp.float32),
                    w.astype(jnp.float32)).astype(jnp.bfloat16)
    b_t = jnp.tile(b, fold).reshape(1, FC)
    rb = _row_block_bytes([(FC, jnp.bfloat16), (FC, jnp.float32), (FC, jnp.bfloat16)],
                          extra_f32_cols=FC)
    TR, Rp = _pick_block_rows(Ng, rb, _BLOCK_BUDGET)
    if Rp != Ng:
        hf = jnp.pad(hf, ((0, Rp - Ng), (0, 0)))
        scf = jnp.pad(scf, ((0, Rp - Ng), (0, 0)))
    out = pl.pallas_call(
        functools.partial(_skip_kernel, activate=activate),
        grid=(Rp // TR,),
        out_shape=jax.ShapeDtypeStruct((Rp, FC), jnp.bfloat16),
        in_specs=[
            pl.BlockSpec((TR, FC), lambda i: (i, 0)),
            pl.BlockSpec((TR, FC), lambda i: (i, 0)),
            pl.BlockSpec((FC, FC), lambda i: (0, 0)),
            pl.BlockSpec((1, FC), lambda i: (0, 0)),
        ],
        out_specs=pl.BlockSpec((TR, FC), lambda i: (i, 0)),
        compiler_params=_compiler_params(),
    )(hf, scf, w_bd, b_t)
    if Rp != Ng:
        out = out[:Ng]
    return out.reshape(N, C)


# --------------------------------------------------------------------------
# Kernel 3: projection MLP (folded): hidden -> proj (GELU) -> 1
# --------------------------------------------------------------------------
def _proj_kernel(h_ref, w1_ref, b1_ref, w2_ref, b2_ref, o_ref):
    h1 = jnp.dot(h_ref[...], w1_ref[...],
                 preferred_element_type=jnp.float32) + b1_ref[...]
    h1 = jax.nn.gelu(h1, approximate=True)
    y = jnp.dot(h1.astype(jnp.bfloat16), w2_ref[...],
                preferred_element_type=jnp.float32) + b2_ref[...]
    o_ref[...] = y


def project(h, w1, b1, w2, b2, *, fold):
    """h: (N, C) bf16 -> (N,) f32."""
    N, C = h.shape
    P = w1.shape[1]
    FC, FP = fold * C, fold * P
    Ng = N // fold
    hf = h.reshape(Ng, FC)
    w1_bd = jnp.kron(jnp.eye(fold, dtype=jnp.float32),
                     w1.astype(jnp.float32)).astype(jnp.bfloat16)
    b1_t = jnp.tile(b1, fold).reshape(1, FP)
    w2_bd = jnp.kron(jnp.eye(fold, dtype=jnp.float32),
                     w2.astype(jnp.float32)).astype(jnp.bfloat16)
    b2_t = jnp.tile(b2, fold).reshape(1, fold)
    rb = _row_block_bytes([(FC, jnp.bfloat16), (fold, jnp.float32)],
                          extra_f32_cols=2 * FP)
    TR, Rp = _pick_block_rows(Ng, rb, _BLOCK_BUDGET)
    if Rp != Ng:
        hf = jnp.pad(hf, ((0, Rp - Ng), (0, 0)))
    out = pl.pallas_call(
        _proj_kernel,
        grid=(Rp // TR,),
        out_shape=jax.ShapeDtypeStruct((Rp, fold), jnp.float32),
        in_specs=[
            pl.BlockSpec((TR, FC), lambda i: (i, 0)),
            pl.BlockSpec((FC, FP), lambda i: (0, 0)),
            pl.BlockSpec((1, FP), lambda i: (0, 0)),
            pl.BlockSpec((FP, fold), lambda i: (0, 0)),
            pl.BlockSpec((1, fold), lambda i: (0, 0)),
        ],
        out_specs=pl.BlockSpec((TR, fold), lambda i: (i, 0)),
        compiler_params=_compiler_params(),
    )(hf, w1_bd, b1_t, w2_bd, b2_t)
    if Rp != Ng:
        out = out[:Ng]
    return out.reshape(N)


# --------------------------------------------------------------------------
# Kernel 4: mode-blocked complex channel contraction  Y[m] = X[m] @ W[m]
# --------------------------------------------------------------------------
def _spectral_kernel(xr_ref, xi_ref, wr_ref, wi_ref, yr_ref, yi_ref):
    xr = xr_ref[...].astype(jnp.bfloat16)
    xi = xi_ref[...].astype(jnp.bfloat16)
    wr = wr_ref[...]
    wi = wi_ref[...]
    rr = jnp.einsum("mbc,mcd->mbd", xr, wr, preferred_element_type=jnp.float32)
    ii = jnp.einsum("mbc,mcd->mbd", xi, wi, preferred_element_type=jnp.float32)
    ri = jnp.einsum("mbc,mcd->mbd", xr, wi, preferred_element_type=jnp.float32)
    ir = jnp.einsum("mbc,mcd->mbd", xi, wr, preferred_element_type=jnp.float32)
    yr_ref[...] = rr - ii
    yi_ref[...] = ri + ir


def _choose_mblk(M, B, Ci, Co):
    """Per-mode VMEM footprint incl. (sublane,lane) tile padding and double
    buffering; keep >= 2 grid steps so both v7x TensorCores get work."""
    def tile_bytes(r, c, itemsize, sub):
        return (-(-r // sub) * sub) * _lane_pad(c) * itemsize
    per_mode = (2 * tile_bytes(B, Ci, 4, 8)        # xr, xi (f32 in)
                + 2 * tile_bytes(Ci, Co, 2, 16)    # wr, wi (bf16)
                + 2 * tile_bytes(B, Co, 4, 8))     # yr, yi (f32 out)
    per_mode *= 2                                  # double buffering
    cap = max(1, _BLOCK_BUDGET // per_mode)
    if M >= 2:
        cap = min(cap, max(1, M // 2))
    cap = min(cap, M)
    m = cap
    while M % m:
        m -= 1
    return m


def spectral_matmul(xr, xi, wr, wi):
    """xr/xi: (M, B, C) f32, wr/wi: (M, C, C) bf16 -> (yr, yi): (M, B, C) f32."""
    M, B, Ci = xr.shape
    Co = wr.shape[2]
    mblk = _choose_mblk(M, B, Ci, Co)
    x_spec = pl.BlockSpec((mblk, B, Ci), lambda m: (m, 0, 0))
    w_spec = pl.BlockSpec((mblk, Ci, Co), lambda m: (m, 0, 0))
    y_spec = pl.BlockSpec((mblk, B, Co), lambda m: (m, 0, 0))
    return pl.pallas_call(
        _spectral_kernel,
        grid=(M // mblk,),
        out_shape=(jax.ShapeDtypeStruct((M, B, Co), jnp.float32),
                   jax.ShapeDtypeStruct((M, B, Co), jnp.float32)),
        in_specs=[x_spec, x_spec, w_spec, w_spec],
        out_specs=(y_spec, y_spec),
        compiler_params=_compiler_params(),
    )(xr, xi, wr, wi)


def spectral_conv2d(x, wr, wi, m1, m2):
    """x: (B, H, W, C) f32; wr/wi: (2*m1*m2, C, C) bf16 -> (B, H, W, C) f32."""
    B, H, W, C = x.shape
    Wf = W // 2 + 1
    M = 2 * m1 * m2
    xft = jnp.fft.rfft2(x, axes=(1, 2))                   # (B, H, Wf, C) complex64
    top = xft[:, :m1, :m2, :]
    bot = xft[:, H - m1:, :m2, :]
    blocks = jnp.concatenate([top, bot], axis=1)          # (B, 2*m1, m2, C)
    Xm = blocks.reshape(B, M, C).transpose(1, 0, 2)       # (M, B, C) small tensor
    yr, yi = spectral_matmul(jnp.real(Xm), jnp.imag(Xm), wr, wi)
    Ym = (yr + 1j * yi).astype(xft.dtype)
    Ym = Ym.transpose(1, 0, 2).reshape(B, 2 * m1, m2, C)
    # Assemble the full spectrum with concat + pad (no zeros-tensor + scatters).
    mid = jnp.zeros((B, H - 2 * m1, m2, C), Ym.dtype)
    stacked = jnp.concatenate([Ym[:, :m1], mid, Ym[:, m1:]], axis=1)   # (B,H,m2,C)
    out_ft = jnp.pad(stacked, ((0, 0), (0, 0), (0, Wf - m2), (0, 0)))
    return jnp.fft.irfft2(out_ft, s=(H, W), axes=(1, 2)).astype(jnp.float32)


# --------------------------------------------------------------------------
# Parameter construction (deterministic, in-script)
# --------------------------------------------------------------------------
def init_params(key, n_modes, hidden, proj, n_layers):
    m1, m2 = n_modes
    M = 2 * m1 * m2
    keys = jax.random.split(key, 4 + 3 * n_layers)
    k = iter(keys)

    def dense(kk, cin, cout, dtype=jnp.float32):
        w = jax.random.normal(kk, (cin, cout), jnp.float32) / jnp.sqrt(cin)
        return w.astype(dtype)

    params = {
        "lift_w1": dense(next(k), 3, proj),                       # rows: [u, py, px]
        "lift_b1": jnp.zeros((proj,), jnp.float32),
        "lift_w2": dense(next(k), proj, hidden, jnp.bfloat16),
        "lift_b2": jnp.zeros((hidden,), jnp.float32),
        "proj_w1": dense(next(k), hidden, proj),
        "proj_b1": jnp.zeros((proj,), jnp.float32),
        "proj_w2": dense(next(k), proj, 1),
        "proj_b2": jnp.zeros((1,), jnp.float32),
        "layers": [],
    }
    scale = 1.0 / (hidden * hidden)
    for _ in range(n_layers):
        params["layers"].append({
            "wr": (scale * jax.random.normal(next(k), (M, hidden, hidden),
                                             jnp.float32)).astype(jnp.bfloat16),
            "wi": (scale * jax.random.normal(next(k), (M, hidden, hidden),
                                             jnp.float32)).astype(jnp.bfloat16),
            "skip_w": dense(next(k), hidden, hidden),
            "skip_b": jnp.zeros((hidden,), jnp.float32),
        })
    return params


# --------------------------------------------------------------------------
# Full FNOVanilla forward
# --------------------------------------------------------------------------
def fno_vanilla_forward(u, params, n_modes):
    """u: (B, H, W) f32 -> (B, H, W) f32."""
    B, H, W = u.shape
    m1, m2 = n_modes
    assert H >= 2 * m1 and m2 <= W // 2 + 1, "mode count exceeds grid resolution"
    N = B * H * W
    Ch = params["lift_w2"].shape[1]

    # Fold factor: pack `fold` spatial rows into one 128-lane row (free reshape).
    fold = 128 // Ch if (128 % Ch == 0 and N % max(128 // Ch, 1) == 0) else 1

    # Lifting (in-kernel positional embedding): (N,1) -> (N, Ch) bf16
    h = lift(u.reshape(N, 1), params["lift_w1"], params["lift_b1"],
             params["lift_w2"], params["lift_b2"], H, W)

    # FNO blocks: spectral conv + fused (1x1 skip + residual + GELU)
    n_layers = len(params["layers"])
    for l, lp in enumerate(params["layers"]):
        x = h.astype(jnp.float32).reshape(B, H, W, Ch)
        sc = spectral_conv2d(x, lp["wr"], lp["wi"], m1, m2)
        h = skip_residual(h, sc.reshape(N, Ch), lp["skip_w"], lp["skip_b"],
                          activate=(l < n_layers - 1), fold=fold)

    # Projection MLP: (N, Ch) -> (N,) -> (B, H, W)
    p = project(h, params["proj_w1"], params["proj_b1"],
                params["proj_w2"], params["proj_b2"], fold=fold)
    return p.reshape(B, H, W)


if __name__ == "__main__":
    B, H, W = 2, 16, 16
    n_modes = (4, 4)
    hidden_channels = 32
    proj_channels = 64
    n_layers = 2

    key = jax.random.PRNGKey(0)
    ku, kp = jax.random.split(key)
    u = jax.random.normal(ku, (B, H, W), jnp.float32)
    params = init_params(kp, n_modes, hidden_channels, proj_channels, n_layers)

    fwd = jax.jit(lambda uu: fno_vanilla_forward(uu, params, n_modes))
    out = jax.block_until_ready(fwd(u))
    assert out.shape == (B, H, W) and out.dtype == jnp.float32
    assert bool(jnp.all(jnp.isfinite(out)))
    print("KERNEL_OK")
</pallas_src>

<mosaic_0001>
module attributes {stable_mosaic.version = 11 : i64} {
  func.func @_lift_kernel(%arg0: i32, %arg1: memref<256x1xf32, #tpu.memory_space<vmem>>, %arg2: memref<3x64xf32, #tpu.memory_space<vmem>>, %arg3: memref<1x64xf32, #tpu.memory_space<vmem>>, %arg4: memref<64x32xbf16, #tpu.memory_space<vmem>>, %arg5: memref<1x32xf32, #tpu.memory_space<vmem>>, %arg6: memref<256x32xbf16, #tpu.memory_space<vmem>>) attributes {dimension_semantics = [#tpu.dimension_semantics<parallel>], iteration_bounds = array<i64: 2>, scalar_prefetch = 0 : i64, scratch_operands = 0 : i64, tpu.core_type = #tpu.core_type<tc>, window_params = [{transform_indices = @transform_0, window_bounds = array<i64: 256, 1>}, {pipeline_mode = #tpu.pipeline_mode<synchronous>, transform_indices = @transform_1, window_bounds = array<i64: 3, 64>}, {pipeline_mode = #tpu.pipeline_mode<synchronous>, transform_indices = @transform_2, window_bounds = array<i64: 1, 64>}, {pipeline_mode = #tpu.pipeline_mode<synchronous>, transform_indices = @transform_3, window_bounds = array<i64: 64, 32>}, {pipeline_mode = #tpu.pipeline_mode<synchronous>, transform_indices = @transform_4, window_bounds = array<i64: 1, 32>}, {transform_indices = @transform_5, window_bounds = array<i64: 256, 32>}]} {
    %c256_i32 = arith.constant 256 : i32
    %0 = arith.muli %arg0, %c256_i32 : i32
    %1 = tpu.iota {dimensions = array<i32: 0>} : vector<256x1xi32>
    %2 = vector.broadcast %0 : i32 to vector<256x1xi32>
    %3 = arith.addi %2, %1 : vector<256x1xi32>
    %c4_i32 = arith.constant 4 : i32
    %4 = vector.broadcast %c4_i32 : i32 to vector<256x1xi32>
    %5 = arith.shrsi %3, %4 : vector<256x1xi32>
    %c15_i32 = arith.constant 15 : i32
    %6 = vector.broadcast %c15_i32 : i32 to vector<256x1xi32>
    %7 = arith.andi %3, %6 : vector<256x1xi32>
    %c15_i32_0 = arith.constant 15 : i32
    %8 = vector.broadcast %c15_i32_0 : i32 to vector<256x1xi32>
    %9 = arith.andi %5, %8 : vector<256x1xi32>
    %10 = arith.sitofp %9 : vector<256x1xi32> to vector<256x1xf32>
    %cst = arith.constant 0.0666666701 : f32
    %11 = vector.broadcast %cst : f32 to vector<256x1xf32>
    %12 = arith.mulf %10, %11 : vector<256x1xf32>
    %13 = arith.sitofp %7 : vector<256x1xi32> to vector<256x1xf32>
    %cst_1 = arith.constant 0.0666666701 : f32
    %14 = vector.broadcast %cst_1 : f32 to vector<256x1xf32>
    %15 = arith.mulf %13, %14 : vector<256x1xf32>
    %c0 = arith.constant 0 : index
    %c0_2 = arith.constant 0 : index
    %16 = vector.load %arg1[%c0, %c0_2] : memref<256x1xf32, #tpu.memory_space<vmem>>, vector<256x1xf32>
    %c0_3 = arith.constant 0 : index
    %c0_4 = arith.constant 0 : index
    %17 = vector.load %arg2[%c0_3, %c0_4] : memref<3x64xf32, #tpu.memory_space<vmem>>, vector<3x64xf32>
    %18 = vector.extract_strided_slice %17 {offsets = [0, 0], sizes = [1, 64], strides = [1, 1]} : vector<3x64xf32> to vector<1x64xf32>
    %19 = vector.broadcast %16 : vector<256x1xf32> to vector<256x64xf32>
    %20 = vector.broadcast %18 : vector<1x64xf32> to vector<256x64xf32>
    %21 = arith.mulf %19, %20 : vector<256x64xf32>
    %22 = vector.extract_strided_slice %17 {offsets = [1, 0], sizes = [1, 64], strides = [1, 1]} : vector<3x64xf32> to vector<1x64xf32>
    %23 = vector.broadcast %12 : vector<256x1xf32> to vector<256x64xf32>
    %24 = vector.broadcast %22 : vector<1x64xf32> to vector<256x64xf32>
    %25 = arith.mulf %23, %24 : vector<256x64xf32>
    %26 = arith.addf %21, %25 : vector<256x64xf32>
    %27 = vector.extract_strided_slice %17 {offsets = [2, 0], sizes = [1, 64], strides = [1, 1]} : vector<3x64xf32> to vector<1x64xf32>
    %28 = vector.broadcast %15 : vector<256x1xf32> to vector<256x64xf32>
    %29 = vector.broadcast %27 : vector<1x64xf32> to vector<256x64xf32>
    %30 = arith.mulf %28, %29 : vector<256x64xf32>
    %31 = arith.addf %26, %30 : vector<256x64xf32>
    %c0_5 = arith.constant 0 : index
    %c0_6 = arith.constant 0 : index
    %32 = vector.load %arg3[%c0_5, %c0_6] : memref<1x64xf32, #tpu.memory_space<vmem>>, vector<1x64xf32>
    %33 = vector.broadcast %32 : vector<1x64xf32> to vector<256x64xf32>
    %34 = arith.addf %31, %33 : vector<256x64xf32>
    %35 = arith.mulf %34, %34 : vector<256x64xf32>
    %36 = arith.mulf %34, %35 : vector<256x64xf32>
    %cst_7 = arith.constant 4.471500e-02 : f32
    %37 = vector.broadcast %cst_7 : f32 to vector<256x64xf32>
    %38 = arith.mulf %37, %36 : vector<256x64xf32>
    %39 = arith.addf %34, %38 : vector<256x64xf32>
    %cst_8 = arith.constant 0.797884583 : f32
    %40 = vector.broadcast %cst_8 : f32 to vector<256x64xf32>
    %41 = arith.mulf %40, %39 : vector<256x64xf32>
    %42 = math.tanh %41 : vector<256x64xf32>
    %cst_9 = arith.constant 1.000000e+00 : f32
    %43 = vector.broadcast %cst_9 : f32 to vector<256x64xf32>
    %44 = arith.addf %43, %42 : vector<256x64xf32>
    %cst_10 = arith.constant 5.000000e-01 : f32
    %45 = vector.broadcast %cst_10 : f32 to vector<256x64xf32>
    %46 = arith.mulf %45, %44 : vector<256x64xf32>
    %47 = arith.mulf %34, %46 : vector<256x64xf32>
    %48 = arith.truncf %47 : vector<256x64xf32> to vector<256x64xbf16>
    %c0_11 = arith.constant 0 : index
    %c0_12 = arith.constant 0 : index
    %49 = vector.load %arg4[%c0_11, %c0_12] : memref<64x32xbf16, #tpu.memory_space<vmem>>, vector<64x32xbf16>
    %cst_13 = arith.constant dense<0.000000e+00> : vector<256x32xf32>
    %50 = tpu.matmul %48, %49, %cst_13 {dimension_numbers = #tpu.dot_dimension_numbers<[1], [0], [0], [1], [0, 0, 1, 1], [], []>} : vector<256x64xbf16>, vector<64x32xbf16>, vector<256x32xf32> -> vector<256x32xf32>
    %c0_14 = arith.constant 0 : index
    %c0_15 = arith.constant 0 : index
    %51 = vector.load %arg5[%c0_14, %c0_15] : memref<1x32xf32, #tpu.memory_space<vmem>>, vector<1x32xf32>
    %52 = vector.broadcast %51 : vector<1x32xf32> to vector<256x32xf32>
    %53 = arith.addf %50, %52 : vector<256x32xf32>
    %54 = arith.truncf %53 : vector<256x32xf32> to vector<256x32xbf16>
    %c0_16 = arith.constant 0 : index
    %c0_17 = arith.constant 0 : index
    %55 = vector.load %arg6[%c0_16, %c0_17] : memref<256x32xbf16, #tpu.memory_space<vmem>>, vector<256x32xbf16>
    tpu.vector_store %arg6[%c0_16, %c0_17], %54 {strides = array<i32>} : memref<256x32xbf16, #tpu.memory_space<vmem>>, vector<256x32xbf16>,
    return
  }
  func.func @transform_0(%arg0: i32) -> (i32, i32) {
    %c0_i32 = arith.constant 0 : i32
    %c0_i32_0 = arith.constant 0 : i32
    return %arg0, %c0_i32 : i32, i32
  }
  func.func @transform_1(%arg0: i32) -> (i32, i32) {
    %c0_i32 = arith.constant 0 : i32
    %c0_i32_0 = arith.constant 0 : i32
    %c0_i32_1 = arith.constant 0 : i32
    return %c0_i32, %c0_i32_0 : i32, i32
  }
  func.func @transform_2(%arg0: i32) -> (i32, i32) {
    %c0_i32 = arith.constant 0 : i32
    %c0_i32_0 = arith.constant 0 : i32
    %c0_i32_1 = arith.constant 0 : i32
    return %c0_i32, %c0_i32_0 : i32, i32
  }
  func.func @transform_3(%arg0: i32) -> (i32, i32) {
    %c0_i32 = arith.constant 0 : i32
    %c0_i32_0 = arith.constant 0 : i32
    %c0_i32_1 = arith.constant 0 : i32
    return %c0_i32, %c0_i32_0 : i32, i32
  }
  func.func @transform_4(%arg0: i32) -> (i32, i32) {
    %c0_i32 = arith.constant 0 : i32
    %c0_i32_0 = arith.constant 0 : i32
    %c0_i32_1 = arith.constant 0 : i32
    return %c0_i32, %c0_i32_0 : i32, i32
  }
  func.func @transform_5(%arg0: i32) -> (i32, i32) {
    %c0_i32 = arith.constant 0 : i32
    %c0_i32_0 = arith.constant 0 : i32
    return %arg0, %c0_i32 : i32, i32
  }
}

module attributes {stable_mosaic.version = 11 : i64} {
  func.func @_spectral_kernel(%arg0: i32, %arg1: memref<16x2x32xf32, #tpu.memory_space<vmem>>, %arg2: memref<16x2x32xf32, #tpu.memory_space<vmem>>, %arg3: memref<16x32x32xbf16, #tpu.memory_space<vmem>>, %arg4: memref<16x32x32xbf16, #tpu.memory_space<vmem>>, %arg5: memref<16x2x32xf32, #tpu.memory_space<vmem>>, %arg6: memref<16x2x32xf32, #tpu.memory_space<vmem>>) attributes {dimension_semantics = [#tpu.dimension_semantics<parallel>], iteration_bounds = array<i64: 2>, scalar_prefetch = 0 : i64, scratch_operands = 0 : i64, tpu.core_type = #tpu.core_type<tc>, window_params = [{transform_indices = @transform_0, window_bounds = array<i64: 16, 2, 32>}, {transform_indices = @transform_1, window_bounds = array<i64: 16, 2, 32>}, {transform_indices = @transform_2, window_bounds = array<i64: 16, 32, 32>}, {transform_indices = @transform_3, window_bounds = array<i64: 16, 32, 32>}, {transform_indices = @transform_4, window_bounds = array<i64: 16, 2, 32>}, {transform_indices = @transform_5, window_bounds = array<i64: 16, 2, 32>}]} {
    %c0 = arith.constant 0 : index
    %c0_0 = arith.constant 0 : index
    %c0_1 = arith.constant 0 : index
    %0 = vector.load %arg1[%c0, %c0_0, %c0_1] : memref<16x2x32xf32, #tpu.memory_space<vmem>>, vector<16x2x32xf32>
    %1 = arith.truncf %0 : vector<16x2x32xf32> to vector<16x2x32xbf16>
    %c0_2 = arith.constant 0 : index
    %c0_3 = arith.constant 0 : index
    %c0_4 = arith.constant 0 : index
    %2 = vector.load %arg2[%c0_2, %c0_3, %c0_4] : memref<16x2x32xf32, #tpu.memory_space<vmem>>, vector<16x2x32xf32>
    %3 = arith.truncf %2 : vector<16x2x32xf32> to vector<16x2x32xbf16>
    %c0_5 = arith.constant 0 : index
    %c0_6 = arith.constant 0 : index
    %c0_7 = arith.constant 0 : index
    %4 = vector.load %arg3[%c0_5, %c0_6, %c0_7] : memref<16x32x32xbf16, #tpu.memory_space<vmem>>, vector<16x32x32xbf16>
    %c0_8 = arith.constant 0 : index
    %c0_9 = arith.constant 0 : index
    %c0_10 = arith.constant 0 : index
    %5 = vector.load %arg4[%c0_8, %c0_9, %c0_10] : memref<16x32x32xbf16, #tpu.memory_space<vmem>>, vector<16x32x32xbf16>
    "tpu.trace_start"() <{level = 10 : i32, message = "mbc,mcd->mbd"}> : () -> ()
    %cst = arith.constant dense<0.000000e+00> : vector<16x2x32xf32>
    %6 = tpu.matmul %1, %4, %cst {dimension_numbers = #tpu.dot_dimension_numbers<[2], [1], [1], [2], [0, 0, 0, 1, 1, 2], [0], [0]>} : vector<16x2x32xbf16>, vector<16x32x32xbf16>, vector<16x2x32xf32> -> vector<16x2x32xf32>
    %cst_11 = arith.constant dense<0.000000e+00> : vector<16x2x32xf32>
    %7 = tpu.matmul %3, %5, %cst_11 {dimension_numbers = #tpu.dot_dimension_numbers<[2], [1], [1], [2], [0, 0, 0, 1, 1, 2], [0], [0]>} : vector<16x2x32xbf16>, vector<16x32x32xbf16>, vector<16x2x32xf32> -> vector<16x2x32xf32>
    %cst_12 = arith.constant dense<0.000000e+00> : vector<16x2x32xf32>
    %8 = tpu.matmul %1, %5, %cst_12 {dimension_numbers = #tpu.dot_dimension_numbers<[2], [1], [1], [2], [0, 0, 0, 1, 1, 2], [0], [0]>} : vector<16x2x32xbf16>, vector<16x32x32xbf16>, vector<16x2x32xf32> -> vector<16x2x32xf32>
    %cst_13 = arith.constant dense<0.000000e+00> : vector<16x2x32xf32>
    %9 = tpu.matmul %3, %4, %cst_13 {dimension_numbers = #tpu.dot_dimension_numbers<[2], [1], [1], [2], [0, 0, 0, 1, 1, 2], [0], [0]>} : vector<16x2x32xbf16>, vector<16x32x32xbf16>, vector<16x2x32xf32> -> vector<16x2x32xf32>
    "tpu.trace_stop"() : () -> ()
    %10 = arith.subf %6, %7 : vector<16x2x32xf32>
    %c0_14 = arith.constant 0 : index
    %c0_15 = arith.constant 0 : index
    %c0_16 = arith.constant 0 : index
    %11 = vector.load %arg5[%c0_14, %c0_15, %c0_16] : memref<16x2x32xf32, #tpu.memory_space<vmem>>, vector<16x2x32xf32>
    tpu.vector_store %arg5[%c0_14, %c0_15, %c0_16], %10 {strides = array<i32>} : memref<16x2x32xf32, #tpu.memory_space<vmem>>, vector<16x2x32xf32>,
    %12 = arith.addf %8, %9 : vector<16x2x32xf32>
    %c0_17 = arith.constant 0 : index
    %c0_18 = arith.constant 0 : index
    %c0_19 = arith.constant 0 : index
    %13 = vector.load %arg6[%c0_17, %c0_18, %c0_19] : memref<16x2x32xf32, #tpu.memory_space<vmem>>, vector<16x2x32xf32>
    tpu.vector_store %arg6[%c0_17, %c0_18, %c0_19], %12 {strides = array<i32>} : memref<16x2x32xf32, #tpu.memory_space<vmem>>, vector<16x2x32xf32>,
    return
  }
  func.func @transform_0(%arg0: i32) -> (i32, i32, i32) {
    %c0_i32 = arith.constant 0 : i32
    %c0_i32_0 = arith.constant 0 : i32
    %c0_i32_1 = arith.constant 0 : i32
    return %arg0, %c0_i32, %c0_i32_0 : i32, i32, i32
  }
  func.func @transform_1(%arg0: i32) -> (i32, i32, i32) {
    %c0_i32 = arith.constant 0 : i32
    %c0_i32_0 = arith.constant 0 : i32
    %c0_i32_1 = arith.constant 0 : i32
    return %arg0, %c0_i32, %c0_i32_0 : i32, i32, i32
  }
  func.func @transform_2(%arg0: i32) -> (i32, i32, i32) {
    %c0_i32 = arith.constant 0 : i32
    %c0_i32_0 = arith.constant 0 : i32
    %c0_i32_1 = arith.constant 0 : i32
    return %arg0, %c0_i32, %c0_i32_0 : i32, i32, i32
  }
  func.func @transform_3(%arg0: i32) -> (i32, i32, i32) {
    %c0_i32 = arith.constant 0 : i32
    %c0_i32_0 = arith.constant 0 : i32
    %c0_i32_1 = arith.constant 0 : i32
    return %arg0, %c0_i32, %c0_i32_0 : i32, i32, i32
  }
  func.func @transform_4(%arg0: i32) -> (i32, i32, i32) {
    %c0_i32 = arith.constant 0 : i32
    %c0_i32_0 = arith.constant 0 : i32
    %c0_i32_1 = arith.constant 0 : i32
    return %arg0, %c0_i32, %c0_i32_0 : i32, i32, i32
  }
  func.func @transform_5(%arg0: i32) -> (i32, i32, i32) {
    %c0_i32 = arith.constant 0 : i32
    %c0_i32_0 = arith.constant 0 : i32
    %c0_i32_1 = arith.constant 0 : i32
    return %arg0, %c0_i32, %c0_i32_0 : i32, i32, i32
  }
}

module attributes {stable_mosaic.version = 11 : i64} {
  func.func @_skip_kernel(%arg0: i32, %arg1: memref<64x128xbf16, #tpu.memory_space<vmem>>, %arg2: memref<64x128xf32, #tpu.memory_space<vmem>>, %arg3: memref<128x128xbf16, #tpu.memory_space<vmem>>, %arg4: memref<1x128xf32, #tpu.memory_space<vmem>>, %arg5: memref<64x128xbf16, #tpu.memory_space<vmem>>) attributes {dimension_semantics = [#tpu.dimension_semantics<parallel>], iteration_bounds = array<i64: 2>, scalar_prefetch = 0 : i64, scratch_operands = 0 : i64, tpu.core_type = #tpu.core_type<tc>, window_params = [{transform_indices = @transform_0, window_bounds = array<i64: 64, 128>}, {transform_indices = @transform_1, window_bounds = array<i64: 64, 128>}, {pipeline_mode = #tpu.pipeline_mode<synchronous>, transform_indices = @transform_2, window_bounds = array<i64: 128, 128>}, {pipeline_mode = #tpu.pipeline_mode<synchronous>, transform_indices = @transform_3, window_bounds = array<i64: 1, 128>}, {transform_indices = @transform_4, window_bounds = array<i64: 64, 128>}]} {
    %c0 = arith.constant 0 : index
    %c0_0 = arith.constant 0 : index
    %0 = vector.load %arg1[%c0, %c0_0] : memref<64x128xbf16, #tpu.memory_space<vmem>>, vector<64x128xbf16>
    %c0_1 = arith.constant 0 : index
    %c0_2 = arith.constant 0 : index
    %1 = vector.load %arg3[%c0_1, %c0_2] : memref<128x128xbf16, #tpu.memory_space<vmem>>, vector<128x128xbf16>
    %cst = arith.constant dense<0.000000e+00> : vector<64x128xf32>
    %2 = tpu.matmul %0, %1, %cst {dimension_numbers = #tpu.dot_dimension_numbers<[1], [0], [0], [1], [0, 0, 1, 1], [], []>} : vector<64x128xbf16>, vector<128x128xbf16>, vector<64x128xf32> -> vector<64x128xf32>
    %c0_3 = arith.constant 0 : index
    %c0_4 = arith.constant 0 : index
    %3 = vector.load %arg4[%c0_3, %c0_4] : memref<1x128xf32, #tpu.memory_space<vmem>>, vector<1x128xf32>
    %4 = vector.broadcast %3 : vector<1x128xf32> to vector<64x128xf32>
    %5 = arith.addf %2, %4 : vector<64x128xf32>
    %c0_5 = arith.constant 0 : index
    %c0_6 = arith.constant 0 : index
    %6 = vector.load %arg2[%c0_5, %c0_6] : memref<64x128xf32, #tpu.memory_space<vmem>>, vector<64x128xf32>
    %7 = arith.addf %5, %6 : vector<64x128xf32>
    %8 = arith.mulf %7, %7 : vector<64x128xf32>
    %9 = arith.mulf %7, %8 : vector<64x128xf32>
    %cst_7 = arith.constant 4.471500e-02 : f32
    %10 = vector.broadcast %cst_7 : f32 to vector<64x128xf32>
    %11 = arith.mulf %10, %9 : vector<64x128xf32>
    %12 = arith.addf %7, %11 : vector<64x128xf32>
    %cst_8 = arith.constant 0.797884583 : f32
    %13 = vector.broadcast %cst_8 : f32 to vector<64x128xf32>
    %14 = arith.mulf %13, %12 : vector<64x128xf32>
    %15 = math.tanh %14 : vector<64x128xf32>
    %cst_9 = arith.constant 1.000000e+00 : f32
    %16 = vector.broadcast %cst_9 : f32 to vector<64x128xf32>
    %17 = arith.addf %16, %15 : vector<64x128xf32>
    %cst_10 = arith.constant 5.000000e-01 : f32
    %18 = vector.broadcast %cst_10 : f32 to vector<64x128xf32>
    %19 = arith.mulf %18, %17 : vector<64x128xf32>
    %20 = arith.mulf %7, %19 : vector<64x128xf32>
    %21 = arith.truncf %20 : vector<64x128xf32> to vector<64x128xbf16>
    %c0_11 = arith.constant 0 : index
    %c0_12 = arith.constant 0 : index
    %22 = vector.load %arg5[%c0_11, %c0_12] : memref<64x128xbf16, #tpu.memory_space<vmem>>, vector<64x128xbf16>
    tpu.vector_store %arg5[%c0_11, %c0_12], %21 {strides = array<i32>} : memref<64x128xbf16, #tpu.memory_space<vmem>>, vector<64x128xbf16>,
    return
  }
  func.func @transform_0(%arg0: i32) -> (i32, i32) {
    %c0_i32 = arith.constant 0 : i32
    %c0_i32_0 = arith.constant 0 : i32
    return %arg0, %c0_i32 : i32, i32
  }
  func.func @transform_1(%arg0: i32) -> (i32, i32) {
    %c0_i32 = arith.constant 0 : i32
    %c0_i32_0 = arith.constant 0 : i32
    return %arg0, %c0_i32 : i32, i32
  }
  func.func @transform_2(%arg0: i32) -> (i32, i32) {
    %c0_i32 = arith.constant 0 : i32
    %c0_i32_0 = arith.constant 0 : i32
    %c0_i32_1 = arith.constant 0 : i32
    return %c0_i32, %c0_i32_0 : i32, i32
  }
  func.func @transform_3(%arg0: i32) -> (i32, i32) {
    %c0_i32 = arith.constant 0 : i32
    %c0_i32_0 = arith.constant 0 : i32
    %c0_i32_1 = arith.constant 0 : i32
    return %c0_i32, %c0_i32_0 : i32, i32
  }
  func.func @transform_4(%arg0: i32) -> (i32, i32) {
    %c0_i32 = arith.constant 0 : i32
    %c0_i32_0 = arith.constant 0 : i32
    return %arg0, %c0_i32 : i32, i32
  }
}

module attributes {stable_mosaic.version = 11 : i64} {
  func.func @_skip_kernel(%arg0: i32, %arg1: memref<64x128xbf16, #tpu.memory_space<vmem>>, %arg2: memref<64x128xf32, #tpu.memory_space<vmem>>, %arg3: memref<128x128xbf16, #tpu.memory_space<vmem>>, %arg4: memref<1x128xf32, #tpu.memory_space<vmem>>, %arg5: memref<64x128xbf16, #tpu.memory_space<vmem>>) attributes {dimension_semantics = [#tpu.dimension_semantics<parallel>], iteration_bounds = array<i64: 2>, scalar_prefetch = 0 : i64, scratch_operands = 0 : i64, tpu.core_type = #tpu.core_type<tc>, window_params = [{transform_indices = @transform_0, window_bounds = array<i64: 64, 128>}, {transform_indices = @transform_1, window_bounds = array<i64: 64, 128>}, {pipeline_mode = #tpu.pipeline_mode<synchronous>, transform_indices = @transform_2, window_bounds = array<i64: 128, 128>}, {pipeline_mode = #tpu.pipeline_mode<synchronous>, transform_indices = @transform_3, window_bounds = array<i64: 1, 128>}, {transform_indices = @transform_4, window_bounds = array<i64: 64, 128>}]} {
    %c0 = arith.constant 0 : index
    %c0_0 = arith.constant 0 : index
    %0 = vector.load %arg1[%c0, %c0_0] : memref<64x128xbf16, #tpu.memory_space<vmem>>, vector<64x128xbf16>
    %c0_1 = arith.constant 0 : index
    %c0_2 = arith.constant 0 : index
    %1 = vector.load %arg3[%c0_1, %c0_2] : memref<128x128xbf16, #tpu.memory_space<vmem>>, vector<128x128xbf16>
    %cst = arith.constant dense<0.000000e+00> : vector<64x128xf32>
    %2 = tpu.matmul %0, %1, %cst {dimension_numbers = #tpu.dot_dimension_numbers<[1], [0], [0], [1], [0, 0, 1, 1], [], []>} : vector<64x128xbf16>, vector<128x128xbf16>, vector<64x128xf32> -> vector<64x128xf32>
    %c0_3 = arith.constant 0 : index
    %c0_4 = arith.constant 0 : index
    %3 = vector.load %arg4[%c0_3, %c0_4] : memref<1x128xf32, #tpu.memory_space<vmem>>, vector<1x128xf32>
    %4 = vector.broadcast %3 : vector<1x128xf32> to vector<64x128xf32>
    %5 = arith.addf %2, %4 : vector<64x128xf32>
    %c0_5 = arith.constant 0 : index
    %c0_6 = arith.constant 0 : index
    %6 = vector.load %arg2[%c0_5, %c0_6] : memref<64x128xf32, #tpu.memory_space<vmem>>, vector<64x128xf32>
    %7 = arith.addf %5, %6 : vector<64x128xf32>
    %8 = arith.truncf %7 : vector<64x128xf32> to vector<64x128xbf16>
    %c0_7 = arith.constant 0 : index
    %c0_8 = arith.constant 0 : index
    %9 = vector.load %arg5[%c0_7, %c0_8] : memref<64x128xbf16, #tpu.memory_space<vmem>>, vector<64x128xbf16>
    tpu.vector_store %arg5[%c0_7, %c0_8], %8 {strides = array<i32>} : memref<64x128xbf16, #tpu.memory_space<vmem>>, vector<64x128xbf16>,
    return
  }
  func.func @transform_0(%arg0: i32) -> (i32, i32) {
    %c0_i32 = arith.constant 0 : i32
    %c0_i32_0 = arith.constant 0 : i32
    return %arg0, %c0_i32 : i32, i32
  }
  func.func @transform_1(%arg0: i32) -> (i32, i32) {
    %c0_i32 = arith.constant 0 : i32
    %c0_i32_0 = arith.constant 0 : i32
    return %arg0, %c0_i32 : i32, i32
  }
  func.func @transform_2(%arg0: i32) -> (i32, i32) {
    %c0_i32 = arith.constant 0 : i32
    %c0_i32_0 = arith.constant 0 : i32
    %c0_i32_1 = arith.constant 0 : i32
    return %c0_i32, %c0_i32_0 : i32, i32
  }
  func.func @transform_3(%arg0: i32) -> (i32, i32) {
    %c0_i32 = arith.constant 0 : i32
    %c0_i32_0 = arith.constant 0 : i32
    %c0_i32_1 = arith.constant 0 : i32
    return %c0_i32, %c0_i32_0 : i32, i32
  }
  func.func @transform_4(%arg0: i32) -> (i32, i32) {
    %c0_i32 = arith.constant 0 : i32
    %c0_i32_0 = arith.constant 0 : i32
    return %arg0, %c0_i32 : i32, i32
  }
}

module attributes {stable_mosaic.version = 11 : i64} {
  func.func @_proj_kernel(%arg0: i32, %arg1: memref<64x128xbf16, #tpu.memory_space<vmem>>, %arg2: memref<128x256xbf16, #tpu.memory_space<vmem>>, %arg3: memref<1x256xf32, #tpu.memory_space<vmem>>, %arg4: memref<256x4xbf16, #tpu.memory_space<vmem>>, %arg5: memref<1x4xf32, #tpu.memory_space<vmem>>, %arg6: memref<64x4xf32, #tpu.memory_space<vmem>>) attributes {dimension_semantics = [#tpu.dimension_semantics<parallel>], iteration_bounds = array<i64: 2>, scalar_prefetch = 0 : i64, scratch_operands = 0 : i64, tpu.core_type = #tpu.core_type<tc>, window_params = [{transform_indices = @transform_0, window_bounds = array<i64: 64, 128>}, {pipeline_mode = #tpu.pipeline_mode<synchronous>, transform_indices = @transform_1, window_bounds = array<i64: 128, 256>}, {pipeline_mode = #tpu.pipeline_mode<synchronous>, transform_indices = @transform_2, window_bounds = array<i64: 1, 256>}, {pipeline_mode = #tpu.pipeline_mode<synchronous>, transform_indices = @transform_3, window_bounds = array<i64: 256, 4>}, {pipeline_mode = #tpu.pipeline_mode<synchronous>, transform_indices = @transform_4, window_bounds = array<i64: 1, 4>}, {transform_indices = @transform_5, window_bounds = array<i64: 64, 4>}]} {
    %c0 = arith.constant 0 : index
    %c0_0 = arith.constant 0 : index
    %0 = vector.load %arg1[%c0, %c0_0] : memref<64x128xbf16, #tpu.memory_space<vmem>>, vector<64x128xbf16>
    %c0_1 = arith.constant 0 : index
    %c0_2 = arith.constant 0 : index
    %1 = vector.load %arg2[%c0_1, %c0_2] : memref<128x256xbf16, #tpu.memory_space<vmem>>, vector<128x256xbf16>
    %cst = arith.constant dense<0.000000e+00> : vector<64x256xf32>
    %2 = tpu.matmul %0, %1, %cst {dimension_numbers = #tpu.dot_dimension_numbers<[1], [0], [0], [1], [0, 0, 1, 1], [], []>} : vector<64x128xbf16>, vector<128x256xbf16>, vector<64x256xf32> -> vector<64x256xf32>
    %c0_3 = arith.constant 0 : index
    %c0_4 = arith.constant 0 : index
    %3 = vector.load %arg3[%c0_3, %c0_4] : memref<1x256xf32, #tpu.memory_space<vmem>>, vector<1x256xf32>
    %4 = vector.broadcast %3 : vector<1x256xf32> to vector<64x256xf32>
    %5 = arith.addf %2, %4 : vector<64x256xf32>
    %6 = arith.mulf %5, %5 : vector<64x256xf32>
    %7 = arith.mulf %5, %6 : vector<64x256xf32>
    %cst_5 = arith.constant 4.471500e-02 : f32
    %8 = vector.broadcast %cst_5 : f32 to vector<64x256xf32>
    %9 = arith.mulf %8, %7 : vector<64x256xf32>
    %10 = arith.addf %5, %9 : vector<64x256xf32>
    %cst_6 = arith.constant 0.797884583 : f32
    %11 = vector.broadcast %cst_6 : f32 to vector<64x256xf32>
    %12 = arith.mulf %11, %10 : vector<64x256xf32>
    %13 = math.tanh %12 : vector<64x256xf32>
    %cst_7 = arith.constant 1.000000e+00 : f32
    %14 = vector.broadcast %cst_7 : f32 to vector<64x256xf32>
    %15 = arith.addf %14, %13 : vector<64x256xf32>
    %cst_8 = arith.constant 5.000000e-01 : f32
    %16 = vector.broadcast %cst_8 : f32 to vector<64x256xf32>
    %17 = arith.mulf %16, %15 : vector<64x256xf32>
    %18 = arith.mulf %5, %17 : vector<64x256xf32>
    %19 = arith.truncf %18 : vector<64x256xf32> to vector<64x256xbf16>
    %c0_9 = arith.constant 0 : index
    %c0_10 = arith.constant 0 : index
    %20 = vector.load %arg4[%c0_9, %c0_10] : memref<256x4xbf16, #tpu.memory_space<vmem>>, vector<256x4xbf16>
    %cst_11 = arith.constant dense<0.000000e+00> : vector<64x4xf32>
    %21 = tpu.matmul %19, %20, %cst_11 {dimension_numbers = #tpu.dot_dimension_numbers<[1], [0], [0], [1], [0, 0, 1, 1], [], []>} : vector<64x256xbf16>, vector<256x4xbf16>, vector<64x4xf32> -> vector<64x4xf32>
    %c0_12 = arith.constant 0 : index
    %c0_13 = arith.constant 0 : index
    %22 = vector.load %arg5[%c0_12, %c0_13] : memref<1x4xf32, #tpu.memory_space<vmem>>, vector<1x4xf32>
    %23 = vector.broadcast %22 : vector<1x4xf32> to vector<64x4xf32>
    %24 = arith.addf %21, %23 : vector<64x4xf32>
    %c0_14 = arith.constant 0 : index
    %c0_15 = arith.constant 0 : index
    %25 = vector.load %arg6[%c0_14, %c0_15] : memref<64x4xf32, #tpu.memory_space<vmem>>, vector<64x4xf32>
    tpu.vector_store %arg6[%c0_14, %c0_15], %24 {strides = array<i32>} : memref<64x4xf32, #tpu.memory_space<vmem>>, vector<64x4xf32>,
    return
  }
  func.func @transform_0(%arg0: i32) -> (i32, i32) {
    %c0_i32 = arith.constant 0 : i32
    %c0_i32_0 = arith.constant 0 : i32
    return %arg0, %c0_i32 : i32, i32
  }
  func.func @transform_1(%arg0: i32) -> (i32, i32) {
    %c0_i32 = arith.constant 0 : i32
    %c0_i32_0 = arith.constant 0 : i32
    %c0_i32_1 = arith.constant 0 : i32
    return %c0_i32, %c0_i32_0 : i32, i32
  }
  func.func @transform_2(%arg0: i32) -> (i32, i32) {
    %c0_i32 = arith.constant 0 : i32
    %c0_i32_0 = arith.constant 0 : i32
    %c0_i32_1 = arith.constant 0 : i32
    return %c0_i32, %c0_i32_0 : i32, i32
  }
  func.func @transform_3(%arg0: i32) -> (i32, i32) {
    %c0_i32 = arith.constant 0 : i32
    %c0_i32_0 = arith.constant 0 : i32
    %c0_i32_1 = arith.constant 0 : i32
    return %c0_i32, %c0_i32_0 : i32, i32
  }
  func.func @transform_4(%arg0: i32) -> (i32, i32) {
    %c0_i32 = arith.constant 0 : i32
    %c0_i32_0 = arith.constant 0 : i32
    %c0_i32_1 = arith.constant 0 : i32
    return %c0_i32, %c0_i32_0 : i32, i32
  }
  func.func @transform_5(%arg0: i32) -> (i32, i32) {
    %c0_i32 = arith.constant 0 : i32
    %c0_i32_0 = arith.constant 0 : i32
    return %arg0, %c0_i32 : i32, i32
  }
}

</mosaic_0001>

<llo_original>
// kernel: _lambda_.6
$region0: #{_lambda_.6}
  #allocation0 [shape = 'u32[]', space=smem, size = 0x4, offset = 0x4, fixed_abs, tag = 'smem constant byte address 0x4 - core index']
  #allocation1 [shape = 'u32[144,128]{1,0:T(1,128)}', space=vmem, size = 0x12000, scoped, tag = 'internal scratch']
  %s0 = inlined_call_operand.vmem [shape: f32[512,1], index: 0, kind: input, shape index: {}]
  %s1 = inlined_call_operand.vmem [shape: f32[3,64], index: 1, kind: input, shape index: {}]
  %s2 = inlined_call_operand.vmem [shape: f32[1,64], index: 2, kind: input, shape index: {}]
  %s3 = inlined_call_operand.vmem [shape: bf16[64,32], index: 3, kind: input, shape index: {}]
  %s4 = inlined_call_operand.vmem [shape: f32[1,32], index: 4, kind: input, shape index: {}]
  %s5 = inlined_call_operand.vmem [shape: bf16[512,32], index: 5, kind: output, shape index: {}]
  %s6 = sld [smem:[#allocation0]]
  $region53: #{_lambda_.6} parent=0
    _
  %s8 = ssub.s32 1, %s6
  %s9 = scalar_select 0, %s8, %s6
  loop: start=0, step=1, limit=4
  $region2: #{_lambda_.6} parent=0 // loop_pre_header
    _
  $region3: #{_lambda_.6} parent=0 // loop_header
    %s11 = sphi 0, %s15
    %p12 = scmp.ge.s32.totalorder %s11, 4
    %s21 = sphi 0, %s23
    %s24 = sphi 0, %s21
    %s25 = sphi 0, %s24
    %s41 = sphi 0, %s25
    %s45 = sphi 0, %s45
    %s47 = sphi 0, %s45
    %s48 = sphi 0, %s47
    %s62 = sphi 0, %s48
    %s66 = sphi 0, %s66
    %s68 = sphi 0, %s66
    %s69 = sphi 0, %s68
    %s83 = sphi 0, %s69
    %s87 = sphi 0, %s87
    %s89 = sphi 0, %s87
    %s90 = sphi 0, %s89
    %s104 = sphi 0, %s90
    %s108 = sphi 0, %s108
    %s110 = sphi 0, %s108
    %s111 = sphi 0, %s110
    %s125 = sphi 0, %s111
    %s131 = sphi 0, %s133
    %s134 = sphi 0, %s131
    %s135 = sphi 0, %s134
    %s151 = sphi 0, %s135
  $region4: #{_lambda_.6} parent=0 // loop_header_branch
    %14 = sbr.rel (%p12) target = $region8
  $region5: #{_lambda_.6} parent=0 // loop_body
    %s16 = ssub.s32 %s11, 1
    %s17 = ssub.s32 %s11, 2
    %s18 = sadd.s32 %s11, 1
    %s19 = ssub.s32 %s11, %s18
    %p20 = scmp.eq.s32.totalorder %s19, 0
    %s22 = sadd.s32 %s21, 1
    %s23 = scalar_select %p20, %s21, %s22
    %p26 = pneg %p20
    %p27 = scmp.eq.s32.totalorder %s11, 1
    %p28 = por %p26, %p27
    %p29 = scmp.ne.s32.totalorder %s21, %s24
    %p30 = scmp.eq.s32.totalorder %s11, 0
    %p31 = por %p29, %p30
    %p32 = scmp.ne.s32.totalorder %s21, %s24
    %p33 = scmp.eq.s32.totalorder %s16, 1
    %p34 = por %p32, %p33
    %p35 = scmp.ne.s32.totalorder %s24, %s25
    %p36 = scmp.eq.s32.totalorder %s16, 0
    %p37 = por %p35, %p36
    %p38 = scmp.ne.s32.totalorder %s24, %s25
    %p39 = scmp.eq.s32.totalorder %s17, 1
    %p40 = por %p38, %p39
    %p42 = scmp.ne.s32.totalorder %s25, %s41
    %p43 = scmp.eq.s32.totalorder %s17, 0
    %p44 = por %p42, %p43
    %s46 = sadd.s32 %s45, 1
    %p49 = scmp.eq.s32.totalorder %s11, 1
    %p50 = scmp.ne.s32.totalorder %s45, %s47
    %p51 = scmp.eq.s32.totalorder %s11, 0
    %p52 = por %p50, %p51
    %p53 = scmp.ne.s32.totalorder %s45, %s47
    %p54 = scmp.eq.s32.totalorder %s16, 1
    %p55 = por %p53, %p54
    %p56 = scmp.ne.s32.totalorder %s47, %s48
    %p57 = scmp.eq.s32.totalorder %s16, 0
    %p58 = por %p56, %p57
    %p59 = scmp.ne.s32.totalorder %s47, %s48
    %p60 = scmp.eq.s32.totalorder %s17, 1
    %p61 = por %p59, %p60
    %p63 = scmp.ne.s32.totalorder %s48, %s62
    %p64 = scmp.eq.s32.totalorder %s17, 0
    %p65 = por %p63, %p64
    %s67 = sadd.s32 %s66, 1
    %p70 = scmp.eq.s32.totalorder %s11, 1
    %p71 = scmp.ne.s32.totalorder %s66, %s68
    %p72 = scmp.eq.s32.totalorder %s11, 0
    %p73 = por %p71, %p72
    %p74 = scmp.ne.s32.totalorder %s66, %s68
    %p75 = scmp.eq.s32.totalorder %s16, 1
    %p76 = por %p74, %p75
    %p77 = scmp.ne.s32.totalorder %s68, %s69
    %p78 = scmp.eq.s32.totalorder %s16, 0
    %p79 = por %p77, %p78
    %p80 = scmp.ne.s32.totalorder %s68, %s69
    %p81 = scmp.eq.s32.totalorder %s17, 1
    %p82 = por %p80, %p81
    %p84 = scmp.ne.s32.totalorder %s69, %s83
    %p85 = scmp.eq.s32.totalorder %s17, 0
    %p86 = por %p84, %p85
    %s88 = sadd.s32 %s87, 1
    %p91 = scmp.eq.s32.totalorder %s11, 1
    %p92 = scmp.ne.s32.totalorder %s87, %s89
    %p93 = scmp.eq.s32.totalorder %s11, 0
    %p94 = por %p92, %p93
    %p95 = scmp.ne.s32.totalorder %s87, %s89
    %p96 = scmp.eq.s32.totalorder %s16, 1
    %p97 = por %p95, %p96
    %p98 = scmp.ne.s32.totalorder %s89, %s90
    %p99 = scmp.eq.s32.totalorder %s16, 0
    %p100 = por %p98, %p99
    %p101 = scmp.ne.s32.totalorder %s89, %s90
    %p102 = scmp.eq.s32.totalorder %s17, 1
    %p103 = por %p101, %p102
    %p105 = scmp.ne.s32.totalorder %s90, %s104
    %p106 = scmp.eq.s32.totalorder %s17, 0
    %p107 = por %p105, %p106
    %s109 = sadd.s32 %s108, 1
    %p112 = scmp.eq.s32.totalorder %s11, 1
    %p113 = scmp.ne.s32.totalorder %s108, %s110
    %p114 = scmp.eq.s32.totalorder %s11, 0
    %p115 = por %p113, %p114
    %p116 = scmp.ne.s32.totalorder %s108, %s110
    %p117 = scmp.eq.s32.totalorder %s16, 1
    %p118 = por %p116, %p117
    %p119 = scmp.ne.s32.totalorder %s110, %s111
    %p120 = scmp.eq.s32.totalorder %s16, 0
    %p121 = por %p119, %p120
    %p122 = scmp.ne.s32.totalorder %s110, %s111
    %p123 = scmp.eq.s32.totalorder %s17, 1
    %p124 = por %p122, %p123
    %p126 = scmp.ne.s32.totalorder %s111, %s125
    %p127 = scmp.eq.s32.totalorder %s17, 0
    %p128 = por %p126, %p127
    %s129 = ssub.s32 %s11, %s18
    %p130 = scmp.eq.s32.totalorder %s129, 0
    %s132 = sadd.s32 %s131, 1
    %s133 = scalar_select %p130, %s131, %s132
    %p136 = pneg %p130
    %p137 = scmp.eq.s32.totalorder %s11, 1
    %p138 = por %p136, %p137
    %p139 = scmp.ne.s32.totalorder %s131, %s134
    %p140 = scmp.eq.s32.totalorder %s11, 0
    %p141 = por %p139, %p140
    %p142 = scmp.ne.s32.totalorder %s131, %s134
    %p143 = scmp.eq.s32.totalorder %s16, 1
    %p144 = por %p142, %p143
    %p145 = scmp.ne.s32.totalorder %s134, %s135
    %p146 = scmp.eq.s32.totalorder %s16, 0
    %p147 = por %p145, %p146
    %p148 = scmp.ne.s32.totalorder %s134, %s135
    %p149 = scmp.eq.s32.totalorder %s17, 1
    %p150 = por %p148, %p149
    %p152 = scmp.ne.s32.totalorder %s135, %s151
    %p153 = scmp.eq.s32.totalorder %s17, 0
    %p154 = por %p152, %p153
    %p155 = scmp.le.s32.totalorder 1, %s11
    %p156 = scmp.lt.s32.totalorder %s11, 3
    %p157 = pnand %p155, %p156
    %p158 = pneg %p157
    // Predicated region
    $region9: #{_lambda_.6} parent=5 // pred_check
      _
    $region10: #{_lambda_.6} parent=5 // pred_check_branch
      %160 = sbr.rel (%p157) target = $region12
    $region11: #{_lambda_.6} parent=5 // pred_region
      %s161 = ssub.s32 %s11, 1
      // Predicated region
      $region13: #{_lambda_.6} parent=11 // pred_check
        %p162 = pneg %p58
      $region14: #{_lambda_.6} parent=11 // pred_check_branch
        %164 = sbr.rel (%p162) target = $region16
      $region15: #{_lambda_.6} parent=11 // pred_region
        _
      $region16: #{_lambda_.6} parent=11 // pred_fallthru
        _
      // Predicated region
      $region17: #{_lambda_.6} parent=11 // pred_check
        %p165 = pneg %p79
      $region18: #{_lambda_.6} parent=11 // pred_check_branch
        %167 = sbr.rel (%p165) target = $region20
      $region19: #{_lambda_.6} parent=11 // pred_region
        _
      $region20: #{_lambda_.6} parent=11 // pred_fallthru
        _
      // Predicated region
      $region21: #{_lambda_.6} parent=11 // pred_check
        %p168 = pneg %p100
      $region22: #{_lambda_.6} parent=11 // pred_check_branch
        %170 = sbr.rel (%p168) target = $region24
      $region23: #{_lambda_.6} parent=11 // pred_region
        _
      $region24: #{_lambda_.6} parent=11 // pred_fallthru
        _
      // Predicated region
      $region25: #{_lambda_.6} parent=11 // pred_check
        %p171 = pneg %p121
      $region26: #{_lambda_.6} parent=11 // pred_check_branch
        %173 = sbr.rel (%p171) target = $region28
      $region27: #{_lambda_.6} parent=11 // pred_region
        _
      $region28: #{_lambda_.6} parent=11 // pred_fallthru
        _
    $region12: #{_lambda_.6} parent=5 // pred_fallthru
      _
    %p174 = scmp.lt.s32.totalorder %s11, 2
    // Predicated region
    $region29: #{_lambda_.6} parent=5 // pred_check
      %p175 = pneg %p174
    $region30: #{_lambda_.6} parent=5 // pred_check_branch
      %177 = sbr.rel (%p175) target = $region32
    $region31: #{_lambda_.6} parent=5 // pred_region
      // Predicated region
      $region33: #{_lambda_.6} parent=31 // pred_check
        %p178 = pneg %p31
      $region34: #{_lambda_.6} parent=31 // pred_check_branch
        %180 = sbr.rel (%p178) target = $region36
      $region35: #{_lambda_.6} parent=31 // pred_region
        %s181 = smul.u32 32, %s11
        %p182 = scmp.lt.s32.totalorder %s181, 63
        %s183 = scalar_select %p182, %s181, 63
        %s184 = smul.addr %s183, 8
        %s185 = scalar_lea.vmem %s0, %s184
        %s186 = smul.u32 32, %s11
      $region36: #{_lambda_.6} parent=31 // pred_fallthru
        _
    $region32: #{_lambda_.6} parent=5 // pred_fallthru
      _
    %p187 = scmp.le.s32.totalorder 1, %s11
    %p188 = scmp.lt.s32.totalorder %s11, 3
    %p189 = pnand %p187, %p188
    %p190 = pneg %p189
    // Predicated region
    $region37: #{_lambda_.6} parent=5 // pred_check
      _
    $region38: #{_lambda_.6} parent=5 // pred_check_branch
      %192 = sbr.rel (%p189) target = $region40
    $region39: #{_lambda_.6} parent=5 // pred_region
      %s193 = ssub.s32 %s11, 1
      %s194 = smul.u32 32, %s16
      %p195 = scmp.lt.s32.totalorder %s194, 63
      %s196 = scalar_select %p195, %s194, 63
      %s197 = smul.addr %s196, 8
      %s198 = scalar_lea.vmem %s0, %s197
      %p199 = pneg %p37
      %p200 = pneg %p34
      %p201 = pneg %p58
      %p202 = pneg %p55
      %p203 = pneg %p79
      %p204 = pneg %p76
      %p205 = pneg %p100
      %p206 = pneg %p97
      %p207 = pneg %p121
      %p208 = pneg %p118
      %p209 = pneg %p147
      %p210 = pneg %p144
      %s211 = smul.u32 32, %s16
      %p212 = scmp.lt.s32.totalorder %s211, 63
      %s213 = scalar_select %p212, %s211, 63
      %s214 = smul.addr %s213, 4
      %s215 = scalar_lea.vmem %s5, %s214
      %s216 = smul.u32 32, %s16
      %p217 = scmp.lt.s32.totalorder %s216, 63
      %s218 = scalar_select %p217, %s216, 63
      %s219 = smul.addr %s218, 8
      %s220 = scalar_lea.vmem %s0, %s219
      %s221 = smul.u32 32, %s16
      %s222 = smul.u32 32, %s16
      %p223 = scmp.lt.s32.totalorder %s222, 63
      %s224 = scalar_select %p223, %s222, 63
      %s225 = smul.addr %s224, 4
      %s226 = scalar_lea.vmem %s5, %s225
      %s227 = smul.u32 32, %s16
      %s229 = smul.u32 %s16, 256
      %v230 = vlaneseq
      %v231 = vshrl.u32 %v230, 7
      %v232 = vadd.s32 %v231, 8
      %v233 = vadd.s32 %v231, 16
      %v234 = vadd.s32 %v231, 24
      %v235 = vadd.s32 %v231, 32
      %v236 = vadd.s32 %v231, 40
      %v237 = vadd.s32 %v231, 48
      %v238 = vadd.s32 %v231, 56
      %v239 = vadd.s32 %v231, 64
      %v240 = vadd.s32 %v231, 72
      %v241 = vadd.s32 %v231, 80
      %v242 = vadd.s32 %v231, 88
      %v243 = vadd.s32 %v231, 96
      %v244 = vadd.s32 %v231, 104
      %v245 = vadd.s32 %v231, 112
      %v246 = vadd.s32 %v231, 120
      %v247 = vadd.s32 %v231, 128
      %v248 = vadd.s32 %v231, 136
      %v249 = vadd.s32 %v231, 144
      %v250 = vadd.s32 %v231, 152
      %v251 = vadd.s32 %v231, 160
      %v252 = vadd.s32 %v231, 168
      %v253 = vadd.s32 %v231, 176
      %v254 = vadd.s32 %v231, 184
      %v255 = vadd.s32 %v231, 192
      %v256 = vadd.s32 %v231, 200
      %v257 = vadd.s32 %v231, 208
      %v258 = vadd.s32 %v231, 216
      %v259 = vadd.s32 %v231, 224
      %v260 = vadd.s32 %v231, 232
      %v261 = vadd.s32 %v231, 240
      %v262 = vadd.s32 %v231, 248
      %v263 = vstv %s229
      %v264 = vadd.s32 %v263, %v231
      %v265 = vadd.s32 %v263, %v232
      %v266 = vadd.s32 %v263, %v233
      %v267 = vadd.s32 %v263, %v234
      %v268 = vadd.s32 %v263, %v235
      %v269 = vadd.s32 %v263, %v236
      %v270 = vadd.s32 %v263, %v237
      %v271 = vadd.s32 %v263, %v238
      %v272 = vadd.s32 %v263, %v239
      %v273 = vadd.s32 %v263, %v240
      %v274 = vadd.s32 %v263, %v241
      %v275 = vadd.s32 %v263, %v242
      %v276 = vadd.s32 %v263, %v243
      %v277 = vadd.s32 %v263, %v244
      %v278 = vadd.s32 %v263, %v245
      %v279 = vadd.s32 %v263, %v246
      %v280 = vadd.s32 %v263, %v247
      %v281 = vadd.s32 %v263, %v248
      %v282 = vadd.s32 %v263, %v249
      %v283 = vadd.s32 %v263, %v250
      %v284 = vadd.s32 %v263, %v251
      %v285 = vadd.s32 %v263, %v252
      %v286 = vadd.s32 %v263, %v253
      %v287 = vadd.s32 %v263, %v254
      %v288 = vadd.s32 %v263, %v255
      %v289 = vadd.s32 %v263, %v256
      %v290 = vadd.s32 %v263, %v257
      %v291 = vadd.s32 %v263, %v258
      %v292 = vadd.s32 %v263, %v259
      %v293 = vadd.s32 %v263, %v260
      %v294 = vadd.s32 %v263, %v261
      %v295 = vadd.s32 %v263, %v262
      %v296 = vshra.s32 %v264, 4
      %v297 = vshra.s32 %v265, 4
      %v298 = vshra.s32 %v266, 4
      %v299 = vshra.s32 %v267, 4
      %v300 = vshra.s32 %v268, 4
      %v301 = vshra.s32 %v269, 4
      %v302 = vshra.s32 %v270, 4
      %v303 = vshra.s32 %v271, 4
      %v304 = vshra.s32 %v272, 4
      %v305 = vshra.s32 %v273, 4
      %v306 = vshra.s32 %v274, 4
      %v307 = vshra.s32 %v275, 4
      %v308 = vshra.s32 %v276, 4
      %v309 = vshra.s32 %v277, 4
      %v310 = vshra.s32 %v278, 4
      %v311 = vshra.s32 %v279, 4
      %v312 = vshra.s32 %v280, 4
      %v313 = vshra.s32 %v281, 4
      %v314 = vshra.s32 %v282, 4
      %v315 = vshra.s32 %v283, 4
      %v316 = vshra.s32 %v284, 4
      %v317 = vshra.s32 %v285, 4
      %v318 = vshra.s32 %v286, 4
      %v319 = vshra.s32 %v287, 4
      %v320 = vshra.s32 %v288, 4
      %v321 = vshra.s32 %v289, 4
      %v322 = vshra.s32 %v290, 4
      %v323 = vshra.s32 %v291, 4
      %v324 = vshra.s32 %v292, 4
      %v325 = vshra.s32 %v293, 4
      %v326 = vshra.s32 %v294, 4
      %v327 = vshra.s32 %v295, 4
      %v328 = vand.u32 %v264, 15
      %v329 = vand.u32 %v265, 15
      %v330 = vand.u32 %v266, 15
      %v331 = vand.u32 %v267, 15
      %v332 = vand.u32 %v268, 15
      %v333 = vand.u32 %v269, 15
      %v334 = vand.u32 %v270, 15
      %v335 = vand.u32 %v271, 15
      %v336 = vand.u32 %v272, 15
      %v337 = vand.u32 %v273, 15
      %v338 = vand.u32 %v274, 15
      %v339 = vand.u32 %v275, 15
      %v340 = vand.u32 %v276, 15
      %v341 = vand.u32 %v277, 15
      %v342 = vand.u32 %v278, 15
      %v343 = vand.u32 %v279, 15
      %v344 = vand.u32 %v280, 15
      %v345 = vand.u32 %v281, 15
      %v346 = vand.u32 %v282, 15
      %v347 = vand.u32 %v283, 15
      %v348 = vand.u32 %v284, 15
      %v349 = vand.u32 %v285, 15
      %v350 = vand.u32 %v286, 15
      %v351 = vand.u32 %v287, 15
      %v352 = vand.u32 %v288, 15
      %v353 = vand.u32 %v289, 15
      %v354 = vand.u32 %v290, 15
      %v355 = vand.u32 %v291, 15
      %v356 = vand.u32 %v292, 15
      %v357 = vand.u32 %v293, 15
      %v358 = vand.u32 %v294, 15
      %v359 = vand.u32 %v295, 15
      %v360 = vand.u32 %v296, 15
      %v361 = vand.u32 %v297, 15
      %v362 = vand.u32 %v298, 15
      %v363 = vand.u32 %v299, 15
      %v364 = vand.u32 %v300, 15
      %v365 = vand.u32 %v301, 15
      %v366 = vand.u32 %v302, 15
      %v367 = vand.u32 %v303, 15
      %v368 = vand.u32 %v304, 15
      %v369 = vand.u32 %v305, 15
      %v370 = vand.u32 %v306, 15
      %v371 = vand.u32 %v307, 15
      %v372 = vand.u32 %v308, 15
      %v373 = vand.u32 %v309, 15
      %v374 = vand.u32 %v310, 15
      %v375 = vand.u32 %v311, 15
      %v376 = vand.u32 %v312, 15
      %v377 = vand.u32 %v313, 15
      %v378 = vand.u32 %v314, 15
      %v379 = vand.u32 %v315, 15
      %v380 = vand.u32 %v316, 15
      %v381 = vand.u32 %v317, 15
      %v382 = vand.u32 %v318, 15
      %v383 = vand.u32 %v319, 15
      %v384 = vand.u32 %v320, 15
      %v385 = vand.u32 %v321, 15
      %v386 = vand.u32 %v322, 15
      %v387 = vand.u32 %v323, 15
      %v388 = vand.u32 %v324, 15
      %v389 = vand.u32 %v325, 15
      %v390 = vand.u32 %v326, 15
      %v391 = vand.u32 %v327, 15
      %v392 = vcvt.s32.f32 %v360
      %v393 = vcvt.s32.f32 %v361
      %v394 = vcvt.s32.f32 %v362
      %v395 = vcvt.s32.f32 %v363
      %v396 = vcvt.s32.f32 %v364
      %v397 = vcvt.s32.f32 %v365
      %v398 = vcvt.s32.f32 %v366
      %v399 = vcvt.s32.f32 %v367
      %v400 = vcvt.s32.f32 %v368
      %v401 = vcvt.s32.f32 %v369
      %v402 = vcvt.s32.f32 %v370
      %v403 = vcvt.s32.f32 %v371
      %v404 = vcvt.s32.f32 %v372
      %v405 = vcvt.s32.f32 %v373
      %v406 = vcvt.s32.f32 %v374
      %v407 = vcvt.s32.f32 %v375
      %v408 = vcvt.s32.f32 %v376
      %v409 = vcvt.s32.f32 %v377
      %v410 = vcvt.s32.f32 %v378
      %v411 = vcvt.s32.f32 %v379
      %v412 = vcvt.s32.f32 %v380
      %v413 = vcvt.s32.f32 %v381
      %v414 = vcvt.s32.f32 %v382
      %v415 = vcvt.s32.f32 %v383
      %v416 = vcvt.s32.f32 %v384
      %v417 = vcvt.s32.f32 %v385
      %v418 = vcvt.s32.f32 %v386
      %v419 = vcvt.s32.f32 %v387
      %v420 = vcvt.s32.f32 %v388
      %v421 = vcvt.s32.f32 %v389
      %v422 = vcvt.s32.f32 %v390
      %v423 = vcvt.s32.f32 %v391
      %v424 = vmul.f32 %v392, 0.06666667
      %v425 = vmul.f32 %v393, 0.06666667
      %v426 = vmul.f32 %v394, 0.06666667
      %v427 = vmul.f32 %v395, 0.06666667
      %v428 = vmul.f32 %v396, 0.06666667
      %v429 = vmul.f32 %v397, 0.06666667
      %v430 = vmul.f32 %v398, 0.06666667
      %v431 = vmul.f32 %v399, 0.06666667
      %v432 = vmul.f32 %v400, 0.06666667
      %v433 = vmul.f32 %v401, 0.06666667
      %v434 = vmul.f32 %v402, 0.06666667
      %v435 = vmul.f32 %v403, 0.06666667
      %v436 = vmul.f32 %v404, 0.06666667
      %v437 = vmul.f32 %v405, 0.06666667
      %v438 = vmul.f32 %v406, 0.06666667
      %v439 = vmul.f32 %v407, 0.06666667
      %v440 = vmul.f32 %v408, 0.06666667
      %v441 = vmul.f32 %v409, 0.06666667
      %v442 = vmul.f32 %v410, 0.06666667
      %v443 = vmul.f32 %v411, 0.06666667
      %v444 = vmul.f32 %v412, 0.06666667
      %v445 = vmul.f32 %v413, 0.06666667
      %v446 = vmul.f32 %v414, 0.06666667
      %v447 = vmul.f32 %v415, 0.06666667
      %v448 = vmul.f32 %v416, 0.06666667
      %v449 = vmul.f32 %v417, 0.06666667
      %v450 = vmul.f32 %v418, 0.06666667
      %v451 = vmul.f32 %v419, 0.06666667
      %v452 = vmul.f32 %v420, 0.06666667
      %v453 = vmul.f32 %v421, 0.06666667
      %v454 = vmul.f32 %v422, 0.06666667
      %v455 = vmul.f32 %v423, 0.06666667
      %v456 = vcvt.s32.f32 %v328
      %v457 = vcvt.s32.f32 %v329
      %v458 = vcvt.s32.f32 %v330
      %v459 = vcvt.s32.f32 %v331
      %v460 = vcvt.s32.f32 %v332
      %v461 = vcvt.s32.f32 %v333
      %v462 = vcvt.s32.f32 %v334
      %v463 = vcvt.s32.f32 %v335
      %v464 = vcvt.s32.f32 %v336
      %v465 = vcvt.s32.f32 %v337
      %v466 = vcvt.s32.f32 %v338
      %v467 = vcvt.s32.f32 %v339
      %v468 = vcvt.s32.f32 %v340
      %v469 = vcvt.s32.f32 %v341
      %v470 = vcvt.s32.f32 %v342
      %v471 = vcvt.s32.f32 %v343
      %v472 = vcvt.s32.f32 %v344
      %v473 = vcvt.s32.f32 %v345
      %v474 = vcvt.s32.f32 %v346
      %v475 = vcvt.s32.f32 %v347
      %v476 = vcvt.s32.f32 %v348
      %v477 = vcvt.s32.f32 %v349
      %v478 = vcvt.s32.f32 %v350
      %v479 = vcvt.s32.f32 %v351
      %v480 = vcvt.s32.f32 %v352
      %v481 = vcvt.s32.f32 %v353
      %v482 = vcvt.s32.f32 %v354
      %v483 = vcvt.s32.f32 %v355
      %v484 = vcvt.s32.f32 %v356
      %v485 = vcvt.s32.f32 %v357
      %v486 = vcvt.s32.f32 %v358
      %v487 = vcvt.s32.f32 %v359
      %v488 = vmul.f32 %v456, 0.06666667
      %v489 = vmul.f32 %v457, 0.06666667
      %v490 = vmul.f32 %v458, 0.06666667
      %v491 = vmul.f32 %v459, 0.06666667
      %v492 = vmul.f32 %v460, 0.06666667
      %v493 = vmul.f32 %v461, 0.06666667
      %v494 = vmul.f32 %v462, 0.06666667
      %v495 = vmul.f32 %v463, 0.06666667
      %v496 = vmul.f32 %v464, 0.06666667
      %v497 = vmul.f32 %v465, 0.06666667
      %v498 = vmul.f32 %v466, 0.06666667
      %v499 = vmul.f32 %v467, 0.06666667
      %v500 = vmul.f32 %v468, 0.06666667
      %v501 = vmul.f32 %v469, 0.06666667
      %v502 = vmul.f32 %v470, 0.06666667
      %v503 = vmul.f32 %v471, 0.06666667
      %v504 = vmul.f32 %v472, 0.06666667
      %v505 = vmul.f32 %v473, 0.06666667
      %v506 = vmul.f32 %v474, 0.06666667
      %v507 = vmul.f32 %v475, 0.06666667
      %v508 = vmul.f32 %v476, 0.06666667
      %v509 = vmul.f32 %v477, 0.06666667
      %v510 = vmul.f32 %v478, 0.06666667
      %v511 = vmul.f32 %v479, 0.06666667
      %v512 = vmul.f32 %v480, 0.06666667
      %v513 = vmul.f32 %v481, 0.06666667
      %v514 = vmul.f32 %v482, 0.06666667
      %v515 = vmul.f32 %v483, 0.06666667
      %v516 = vmul.f32 %v484, 0.06666667
      %v517 = vmul.f32 %v485, 0.06666667
      %v518 = vmul.f32 %v486, 0.06666667
      %v519 = vmul.f32 %v487, 0.06666667
      %v520 = vld [vmem:[%s220] sm:$0xff]
      %v521 = vld [vmem:[%s220 + $0x8] sm:$0xff]
      %v522 = vld [vmem:[%s220 + $0x10] sm:$0xff]
      %v523 = vld [vmem:[%s220 + $0x18] sm:$0xff]
      %v524 = vld [vmem:[%s220 + $0x20] sm:$0xff]
      %v525 = vld [vmem:[%s220 + $0x28] sm:$0xff]
      %v526 = vld [vmem:[%s220 + $0x30] sm:$0xff]
      %v527 = vld [vmem:[%s220 + $0x38] sm:$0xff]
      %v528 = vld [vmem:[%s220 + $0x40] sm:$0xff]
      %v529 = vld [vmem:[%s220 + $0x48] sm:$0xff]
      %v530 = vld [vmem:[%s220 + $0x50] sm:$0xff]
      %v531 = vld [vmem:[%s220 + $0x58] sm:$0xff]
      %v532 = vld [vmem:[%s220 + $0x60] sm:$0xff]
      %v533 = vld [vmem:[%s220 + $0x68] sm:$0xff]
      %v534 = vld [vmem:[%s220 + $0x70] sm:$0xff]
      %v535 = vld [vmem:[%s220 + $0x78] sm:$0xff]
      %v536 = vld [vmem:[%s220 + $0x80] sm:$0xff]
      %v537 = vld [vmem:[%s220 + $0x88] sm:$0xff]
      %v538 = vld [vmem:[%s220 + $0x90] sm:$0xff]
      %v539 = vld [vmem:[%s220 + $0x98] sm:$0xff]
      %v540 = vld [vmem:[%s220 + $0xa0] sm:$0xff]
      %v541 = vld [vmem:[%s220 + $0xa8] sm:$0xff]
      %v542 = vld [vmem:[%s220 + $0xb0] sm:$0xff]
      %v543 = vld [vmem:[%s220 + $0xb8] sm:$0xff]
      %v544 = vld [vmem:[%s220 + $0xc0] sm:$0xff]
      %v545 = vld [vmem:[%s220 + $0xc8] sm:$0xff]
      %v546 = vld [vmem:[%s220 + $0xd0] sm:$0xff]
      %v547 = vld [vmem:[%s220 + $0xd8] sm:$0xff]
      %v548 = vld [vmem:[%s220 + $0xe0] sm:$0xff]
      %v549 = vld [vmem:[%s220 + $0xe8] sm:$0xff]
      %v550 = vld [vmem:[%s220 + $0xf0] sm:$0xff]
      %v551 = vld [vmem:[%s220 + $0xf8] sm:$0xff]
      %v552 = vld [vmem:[%s1] sm:$0x7]
      %554 = vset.pattern.permute.xlu0 0
      %555 = vperm.xlu0 %554, %v520
      %v556 = vpop.permute.xlu0 %555
      %559 = vset.pattern.permute.xlu0 0
      %560 = vperm.xlu0 %559, %v521
      %v561 = vpop.permute.xlu0 %560
      %564 = vset.pattern.permute.xlu0 0
      %565 = vperm.xlu0 %564, %v522
      %v566 = vpop.permute.xlu0 %565
      %569 = vset.pattern.permute.xlu0 0
      %570 = vperm.xlu0 %569, %v523
      %v571 = vpop.permute.xlu0 %570
      %574 = vset.pattern.permute.xlu0 0
      %575 = vperm.xlu0 %574, %v524
      %v576 = vpop.permute.xlu0 %575
      %579 = vset.pattern.permute.xlu0 0
      %580 = vperm.xlu0 %579, %v525
      %v581 = vpop.permute.xlu0 %580
      %584 = vset.pattern.permute.xlu0 0
      %585 = vperm.xlu0 %584, %v526
      %v586 = vpop.permute.xlu0 %585
      %589 = vset.pattern.permute.xlu0 0
      %590 = vperm.xlu0 %589, %v527
      %v591 = vpop.permute.xlu0 %590
      %594 = vset.pattern.permute.xlu0 0
      %595 = vperm.xlu0 %594, %v528
      %v596 = vpop.permute.xlu0 %595
      %599 = vset.pattern.permute.xlu0 0
      %600 = vperm.xlu0 %599, %v529
      %v601 = vpop.permute.xlu0 %600
      %604 = vset.pattern.permute.xlu0 0
      %605 = vperm.xlu0 %604, %v530
      %v606 = vpop.permute.xlu0 %605
      %609 = vset.pattern.permute.xlu0 0
      %610 = vperm.xlu0 %609, %v531
      %v611 = vpop.permute.xlu0 %610
      %614 = vset.pattern.permute.xlu0 0
      %615 = vperm.xlu0 %614, %v532
      %v616 = vpop.permute.xlu0 %615
      %619 = vset.pattern.permute.xlu0 0
      %620 = vperm.xlu0 %619, %v533
      %v621 = vpop.permute.xlu0 %620
      %624 = vset.pattern.permute.xlu0 0
      %625 = vperm.xlu0 %624, %v534
      %v626 = vpop.permute.xlu0 %625
      %629 = vset.pattern.permute.xlu0 0
      %630 = vperm.xlu0 %629, %v535
      %v631 = vpop.permute.xlu0 %630
      %634 = vset.pattern.permute.xlu0 0
      %635 = vperm.xlu0 %634, %v536
      %v636 = vpop.permute.xlu0 %635
      %639 = vset.pattern.permute.xlu0 0
      %640 = vperm.xlu0 %639, %v537
      %v641 = vpop.permute.xlu0 %640
      %644 = vset.pattern.permute.xlu0 0
      %645 = vperm.xlu0 %644, %v538
      %v646 = vpop.permute.xlu0 %645
      %649 = vset.pattern.permute.xlu0 0
      %650 = vperm.xlu0 %649, %v539
      %v651 = vpop.permute.xlu0 %650
      %654 = vset.pattern.permute.xlu0 0
      %655 = vperm.xlu0 %654, %v540
      %v656 = vpop.permute.xlu0 %655
      %659 = vset.pattern.permute.xlu0 0
      %660 = vperm.xlu0 %659, %v541
      %v661 = vpop.permute.xlu0 %660
      %664 = vset.pattern.permute.xlu0 0
      %665 = vperm.xlu0 %664, %v542
      %v666 = vpop.permute.xlu0 %665
      %669 = vset.pattern.permute.xlu0 0
      %670 = vperm.xlu0 %669, %v543
      %v671 = vpop.permute.xlu0 %670
      %674 = vset.pattern.permute.xlu0 0
      %675 = vperm.xlu0 %674, %v544
      %v676 = vpop.permute.xlu0 %675
      %679 = vset.pattern.permute.xlu0 0
      %680 = vperm.xlu0 %679, %v545
      %v681 = vpop.permute.xlu0 %680
      %684 = vset.pattern.permute.xlu0 0
      %685 = vperm.xlu0 %684, %v546
      %v686 = vpop.permute.xlu0 %685
      %689 = vset.pattern.permute.xlu0 0
      %690 = vperm.xlu0 %689, %v547
      %v691 = vpop.permute.xlu0 %690
      %694 = vset.pattern.permute.xlu0 0
      %695 = vperm.xlu0 %694, %v548
      %v696 = vpop.permute.xlu0 %695
      %699 = vset.pattern.permute.xlu0 0
      %700 = vperm.xlu0 %699, %v549
      %v701 = vpop.permute.xlu0 %700
      %704 = vset.pattern.permute.xlu0 0
      %705 = vperm.xlu0 %704, %v550
      %v706 = vpop.permute.xlu0 %705
      %709 = vset.pattern.permute.xlu0 0
      %710 = vperm.xlu0 %709, %v551
      %v711 = vpop.permute.xlu0 %710
      %v713 = vlaneseq
      %v714 = vshrl.u32 %v713, 7
      %v715 = vsub.s32 0, %v714
      %v716 = vrot.slane %v552, %v715
      %v717 = vmul.f32 %v556, %v716
      %v718 = vmul.f32 %v561, %v716
      %v719 = vmul.f32 %v566, %v716
      %v720 = vmul.f32 %v571, %v716
      %v721 = vmul.f32 %v576, %v716
      %v722 = vmul.f32 %v581, %v716
      %v723 = vmul.f32 %v586, %v716
      %v724 = vmul.f32 %v591, %v716
      %v725 = vmul.f32 %v596, %v716
      %v726 = vmul.f32 %v601, %v716
      %v727 = vmul.f32 %v606, %v716
      %v728 = vmul.f32 %v611, %v716
      %v729 = vmul.f32 %v616, %v716
      %v730 = vmul.f32 %v621, %v716
      %v731 = vmul.f32 %v626, %v716
      %v732 = vmul.f32 %v631, %v716
      %v733 = vmul.f32 %v636, %v716
      %v734 = vmul.f32 %v641, %v716
      %v735 = vmul.f32 %v646, %v716
      %v736 = vmul.f32 %v651, %v716
      %v737 = vmul.f32 %v656, %v716
      %v738 = vmul.f32 %v661, %v716
      %v739 = vmul.f32 %v666, %v716
      %v740 = vmul.f32 %v671, %v716
      %v741 = vmul.f32 %v676, %v716
      %v742 = vmul.f32 %v681, %v716
      %v743 = vmul.f32 %v686, %v716
      %v744 = vmul.f32 %v691, %v716
      %v745 = vmul.f32 %v696, %v716
      %v746 = vmul.f32 %v701, %v716
      %v747 = vmul.f32 %v706, %v716
      %v748 = vmul.f32 %v711, %v716
      %v749 = vlaneseq
      %v750 = vshrl.u32 %v749, 7
      %v751 = vsub.s32 1, %v750
      %v752 = vrot.slane %v552, %v751
      %v753 = vmul.f32 %v424, %v752
      %v754 = vmul.f32 %v425, %v752
      %v755 = vmul.f32 %v426, %v752
      %v756 = vmul.f32 %v427, %v752
      %v757 = vmul.f32 %v428, %v752
      %v758 = vmul.f32 %v429, %v752
      %v759 = vmul.f32 %v430, %v752
      %v760 = vmul.f32 %v431, %v752
      %v761 = vmul.f32 %v432, %v752
      %v762 = vmul.f32 %v433, %v752
      %v763 = vmul.f32 %v434, %v752
      %v764 = vmul.f32 %v435, %v752
      %v765 = vmul.f32 %v436, %v752
      %v766 = vmul.f32 %v437, %v752
      %v767 = vmul.f32 %v438, %v752
      %v768 = vmul.f32 %v439, %v752
      %v769 = vmul.f32 %v440, %v752
      %v770 = vmul.f32 %v441, %v752
      %v771 = vmul.f32 %v442, %v752
      %v772 = vmul.f32 %v443, %v752
      %v773 = vmul.f32 %v444, %v752
      %v774 = vmul.f32 %v445, %v752
      %v775 = vmul.f32 %v446, %v752
      %v776 = vmul.f32 %v447, %v752
      %v777 = vmul.f32 %v448, %v752
      %v778 = vmul.f32 %v449, %v752
      %v779 = vmul.f32 %v450, %v752
      %v780 = vmul.f32 %v451, %v752
      %v781 = vmul.f32 %v452, %v752
      %v782 = vmul.f32 %v453, %v752
      %v783 = vmul.f32 %v454, %v752
      %v784 = vmul.f32 %v455, %v752
      %v785 = vadd.f32 %v717, %v753
      %v786 = vadd.f32 %v718, %v754
      %v787 = vadd.f32 %v719, %v755
      %v788 = vadd.f32 %v720, %v756
      %v789 = vadd.f32 %v721, %v757
      %v790 = vadd.f32 %v722, %v758
      %v791 = vadd.f32 %v723, %v759
      %v792 = vadd.f32 %v724, %v760
      %v793 = vadd.f32 %v725, %v761
      %v794 = vadd.f32 %v726, %v762
      %v795 = vadd.f32 %v727, %v763
      %v796 = vadd.f32 %v728, %v764
      %v797 = vadd.f32 %v729, %v765
      %v798 = vadd.f32 %v730, %v766
      %v799 = vadd.f32 %v731, %v767
      %v800 = vadd.f32 %v732, %v768
      %v801 = vadd.f32 %v733, %v769
      %v802 = vadd.f32 %v734, %v770
      %v803 = vadd.f32 %v735, %v771
      %v804 = vadd.f32 %v736, %v772
      %v805 = vadd.f32 %v737, %v773
      %v806 = vadd.f32 %v738, %v774
      %v807 = vadd.f32 %v739, %v775
      %v808 = vadd.f32 %v740, %v776
      %v809 = vadd.f32 %v741, %v777
      %v810 = vadd.f32 %v742, %v778
      %v811 = vadd.f32 %v743, %v779
      %v812 = vadd.f32 %v744, %v780
      %v813 = vadd.f32 %v745, %v781
      %v814 = vadd.f32 %v746, %v782
      %v815 = vadd.f32 %v747, %v783
      %v816 = vadd.f32 %v748, %v784
      %v817 = vlaneseq
      %v818 = vshrl.u32 %v817, 7
      %v819 = vsub.s32 2, %v818
      %v820 = vrot.slane %v552, %v819
      %v821 = vmul.f32 %v488, %v820
      %v822 = vmul.f32 %v489, %v820
      %v823 = vmul.f32 %v490, %v820
      %v824 = vmul.f32 %v491, %v820
      %v825 = vmul.f32 %v492, %v820
      %v826 = vmul.f32 %v493, %v820
      %v827 = vmul.f32 %v494, %v820
      %v828 = vmul.f32 %v495, %v820
      %v829 = vmul.f32 %v496, %v820
      %v830 = vmul.f32 %v497, %v820
      %v831 = vmul.f32 %v498, %v820
      %v832 = vmul.f32 %v499, %v820
      %v833 = vmul.f32 %v500, %v820
      %v834 = vmul.f32 %v501, %v820
      %v835 = vmul.f32 %v502, %v820
      %v836 = vmul.f32 %v503, %v820
      %v837 = vmul.f32 %v504, %v820
      %v838 = vmul.f32 %v505, %v820
      %v839 = vmul.f32 %v506, %v820
      %v840 = vmul.f32 %v507, %v820
      %v841 = vmul.f32 %v508, %v820
      %v842 = vmul.f32 %v509, %v820
      %v843 = vmul.f32 %v510, %v820
      %v844 = vmul.f32 %v511, %v820
      %v845 = vmul.f32 %v512, %v820
      %v846 = vmul.f32 %v513, %v820
      %v847 = vmul.f32 %v514, %v820
      %v848 = vmul.f32 %v515, %v820
      %v849 = vmul.f32 %v516, %v820
      %v850 = vmul.f32 %v517, %v820
      %v851 = vmul.f32 %v518, %v820
      %v852 = vmul.f32 %v519, %v820
      %v853 = vadd.f32 %v785, %v821
      %v854 = vadd.f32 %v786, %v822
      %v855 = vadd.f32 %v787, %v823
      %v856 = vadd.f32 %v788, %v824
      %v857 = vadd.f32 %v789, %v825
      %v858 = vadd.f32 %v790, %v826
      %v859 = vadd.f32 %v791, %v827
      %v860 = vadd.f32 %v792, %v828
      %v861 = vadd.f32 %v793, %v829
      %v862 = vadd.f32 %v794, %v830
      %v863 = vadd.f32 %v795, %v831
      %v864 = vadd.f32 %v796, %v832
      %v865 = vadd.f32 %v797, %v833
      %v866 = vadd.f32 %v798, %v834
      %v867 = vadd.f32 %v799, %v835
      %v868 = vadd.f32 %v800, %v836
      %v869 = vadd.f32 %v801, %v837
      %v870 = vadd.f32 %v802, %v838
      %v871 = vadd.f32 %v803, %v839
      %v872 = vadd.f32 %v804, %v840
      %v873 = vadd.f32 %v805, %v841
      %v874 = vadd.f32 %v806, %v842
      %v875 = vadd.f32 %v807, %v843
      %v876 = vadd.f32 %v808, %v844
      %v877 = vadd.f32 %v809, %v845
      %v878 = vadd.f32 %v810, %v846
      %v879 = vadd.f32 %v811, %v847
      %v880 = vadd.f32 %v812, %v848
      %v881 = vadd.f32 %v813, %v849
      %v882 = vadd.f32 %v814, %v850
      %v883 = vadd.f32 %v815, %v851
      %v884 = vadd.f32 %v816, %v852
      %v885 = vld [vmem:[%s2] sm:$0x1]
      %v887 = vlaneseq
      %v888 = vshrl.u32 %v887, 7
      %v889 = vsub.s32 0, %v888
      %v890 = vrot.slane %v885, %v889
      %v892 = vadd.f32 %v853, %v890
      %v893 = vadd.f32 %v854, %v890
      %v894 = vadd.f32 %v855, %v890
      %v895 = vadd.f32 %v856, %v890
      %v896 = vadd.f32 %v857, %v890
      %v897 = vadd.f32 %v858, %v890
      %v898 = vadd.f32 %v859, %v890
      %v899 = vadd.f32 %v860, %v890
      %v900 = vadd.f32 %v861, %v890
      %v901 = vadd.f32 %v862, %v890
      %v902 = vadd.f32 %v863, %v890
      %v903 = vadd.f32 %v864, %v890
      %v904 = vadd.f32 %v865, %v890
      %v905 = vadd.f32 %v866, %v890
      %v906 = vadd.f32 %v867, %v890
      %v907 = vadd.f32 %v868, %v890
      %v908 = vadd.f32 %v869, %v890
      %v909 = vadd.f32 %v870, %v890
      %v910 = vadd.f32 %v871, %v890
      %v911 = vadd.f32 %v872, %v890
      %v912 = vadd.f32 %v873, %v890
      %v913 = vadd.f32 %v874, %v890
      %v914 = vadd.f32 %v875, %v890
      %v915 = vadd.f32 %v876, %v890
      %v916 = vadd.f32 %v877, %v890
      %v917 = vadd.f32 %v878, %v890
      %v918 = vadd.f32 %v879, %v890
      %v919 = vadd.f32 %v880, %v890
      %v920 = vadd.f32 %v881, %v890
      %v921 = vadd.f32 %v882, %v890
      %v922 = vadd.f32 %v883, %v890
      %v923 = vadd.f32 %v884, %v890
      %v924 = vmul.f32 %v892, %v892
      %v925 = vmul.f32 %v893, %v893
      %v926 = vmul.f32 %v894, %v894
      %v927 = vmul.f32 %v895, %v895
      %v928 = vmul.f32 %v896, %v896
      %v929 = vmul.f32 %v897, %v897
      %v930 = vmul.f32 %v898, %v898
      %v931 = vmul.f32 %v899, %v899
      %v932 = vmul.f32 %v900, %v900
      %v933 = vmul.f32 %v901, %v901
      %v934 = vmul.f32 %v902, %v902
      %v935 = vmul.f32 %v903, %v903
      %v936 = vmul.f32 %v904, %v904
      %v937 = vmul.f32 %v905, %v905
      %v938 = vmul.f32 %v906, %v906
      %v939 = vmul.f32 %v907, %v907
      %v940 = vmul.f32 %v908, %v908
      %v941 = vmul.f32 %v909, %v909
      %v942 = vmul.f32 %v910, %v910
      %v943 = vmul.f32 %v911, %v911
      %v944 = vmul.f32 %v912, %v912
      %v945 = vmul.f32 %v913, %v913
      %v946 = vmul.f32 %v914, %v914
      %v947 = vmul.f32 %v915, %v915
      %v948 = vmul.f32 %v916, %v916
      %v949 = vmul.f32 %v917, %v917
      %v950 = vmul.f32 %v918, %v918
      %v951 = vmul.f32 %v919, %v919
      %v952 = vmul.f32 %v920, %v920
      %v953 = vmul.f32 %v921, %v921
      %v954 = vmul.f32 %v922, %v922
      %v955 = vmul.f32 %v923, %v923
      %v956 = vmul.f32 %v892, %v924
      %v957 = vmul.f32 %v893, %v925
      %v958 = vmul.f32 %v894, %v926
      %v959 = vmul.f32 %v895, %v927
      %v960 = vmul.f32 %v896, %v928
      %v961 = vmul.f32 %v897, %v929
      %v962 = vmul.f32 %v898, %v930
      %v963 = vmul.f32 %v899, %v931
      %v964 = vmul.f32 %v900, %v932
      %v965 = vmul.f32 %v901, %v933
      %v966 = vmul.f32 %v902, %v934
      %v967 = vmul.f32 %v903, %v935
      %v968 = vmul.f32 %v904, %v936
      %v969 = vmul.f32 %v905, %v937
      %v970 = vmul.f32 %v906, %v938
      %v971 = vmul.f32 %v907, %v939
      %v972 = vmul.f32 %v908, %v940
      %v973 = vmul.f32 %v909, %v941
      %v974 = vmul.f32 %v910, %v942
      %v975 = vmul.f32 %v911, %v943
      %v976 = vmul.f32 %v912, %v944
      %v977 = vmul.f32 %v913, %v945
      %v978 = vmul.f32 %v914, %v946
      %v979 = vmul.f32 %v915, %v947
      %v980 = vmul.f32 %v916, %v948
      %v981 = vmul.f32 %v917, %v949
      %v982 = vmul.f32 %v918, %v950
      %v983 = vmul.f32 %v919, %v951
      %v984 = vmul.f32 %v920, %v952
      %v985 = vmul.f32 %v921, %v953
      %v986 = vmul.f32 %v922, %v954
      %v987 = vmul.f32 %v923, %v955
      %v988 = vmul.f32 %v956, 0.044715
      %v989 = vmul.f32 %v957, 0.044715
      %v990 = vmul.f32 %v958, 0.044715
      %v991 = vmul.f32 %v959, 0.044715
      %v992 = vmul.f32 %v960, 0.044715
      %v993 = vmul.f32 %v961, 0.044715
      %v994 = vmul.f32 %v962, 0.044715
      %v995 = vmul.f32 %v963, 0.044715
      %v996 = vmul.f32 %v964, 0.044715
      %v997 = vmul.f32 %v965, 0.044715
      %v998 = vmul.f32 %v966, 0.044715
      %v999 = vmul.f32 %v967, 0.044715
      %v1000 = vmul.f32 %v968, 0.044715
      %v1001 = vmul.f32 %v969, 0.044715
      %v1002 = vmul.f32 %v970, 0.044715
      %v1003 = vmul.f32 %v971, 0.044715
      %v1004 = vmul.f32 %v972, 0.044715
      %v1005 = vmul.f32 %v973, 0.044715
      %v1006 = vmul.f32 %v974, 0.044715
      %v1007 = vmul.f32 %v975, 0.044715
      %v1008 = vmul.f32 %v976, 0.044715
      %v1009 = vmul.f32 %v977, 0.044715
      %v1010 = vmul.f32 %v978, 0.044715
      %v1011 = vmul.f32 %v979, 0.044715
      %v1012 = vmul.f32 %v980, 0.044715
      %v1013 = vmul.f32 %v981, 0.044715
      %v1014 = vmul.f32 %v982, 0.044715
      %v1015 = vmul.f32 %v983, 0.044715
      %v1016 = vmul.f32 %v984, 0.044715
      %v1017 = vmul.f32 %v985, 0.044715
      %v1018 = vmul.f32 %v986, 0.044715
      %v1019 = vmul.f32 %v987, 0.044715
      %v1020 = vadd.f32 %v892, %v988
      %v1021 = vadd.f32 %v893, %v989
      %v1022 = vadd.f32 %v894, %v990
      %v1023 = vadd.f32 %v895, %v991
      %v1024 = vadd.f32 %v896, %v992
      %v1025 = vadd.f32 %v897, %v993
      %v1026 = vadd.f32 %v898, %v994
      %v1027 = vadd.f32 %v899, %v995
      %v1028 = vadd.f32 %v900, %v996
      %v1029 = vadd.f32 %v901, %v997
      %v1030 = vadd.f32 %v902, %v998
      %v1031 = vadd.f32 %v903, %v999
      %v1032 = vadd.f32 %v904, %v1000
      %v1033 = vadd.f32 %v905, %v1001
      %v1034 = vadd.f32 %v906, %v1002
      %v1035 = vadd.f32 %v907, %v1003
      %v1036 = vadd.f32 %v908, %v1004
      %v1037 = vadd.f32 %v909, %v1005
      %v1038 = vadd.f32 %v910, %v1006
      %v1039 = vadd.f32 %v911, %v1007
      %v1040 = vadd.f32 %v912, %v1008
      %v1041 = vadd.f32 %v913, %v1009
      %v1042 = vadd.f32 %v914, %v1010
      %v1043 = vadd.f32 %v915, %v1011
      %v1044 = vadd.f32 %v916, %v1012
      %v1045 = vadd.f32 %v917, %v1013
      %v1046 = vadd.f32 %v918, %v1014
      %v1047 = vadd.f32 %v919, %v1015
      %v1048 = vadd.f32 %v920, %v1016
      %v1049 = vadd.f32 %v921, %v1017
      %v1050 = vadd.f32 %v922, %v1018
      %v1051 = vadd.f32 %v923, %v1019
      %v1052 = vmul.f32 %v1020, 0.7978846
      %v1053 = vmul.f32 %v1021, 0.7978846
      %v1054 = vmul.f32 %v1022, 0.7978846
      %v1055 = vmul.f32 %v1023, 0.7978846
      %v1056 = vmul.f32 %v1024, 0.7978846
      %v1057 = vmul.f32 %v1025, 0.7978846
      %v1058 = vmul.f32 %v1026, 0.7978846
      %v1059 = vmul.f32 %v1027, 0.7978846
      %v1060 = vmul.f32 %v1028, 0.7978846
      %v1061 = vmul.f32 %v1029, 0.7978846
      %v1062 = vmul.f32 %v1030, 0.7978846
      %v1063 = vmul.f32 %v1031, 0.7978846
      %v1064 = vmul.f32 %v1032, 0.7978846
      %v1065 = vmul.f32 %v1033, 0.7978846
      %v1066 = vmul.f32 %v1034, 0.7978846
      %v1067 = vmul.f32 %v1035, 0.7978846
      %v1068 = vmul.f32 %v1036, 0.7978846
      %v1069 = vmul.f32 %v1037, 0.7978846
      %v1070 = vmul.f32 %v1038, 0.7978846
      %v1071 = vmul.f32 %v1039, 0.7978846
      %v1072 = vmul.f32 %v1040, 0.7978846
      %v1073 = vmul.f32 %v1041, 0.7978846
      %v1074 = vmul.f32 %v1042, 0.7978846
      %v1075 = vmul.f32 %v1043, 0.7978846
      %v1076 = vmul.f32 %v1044, 0.7978846
      %v1077 = vmul.f32 %v1045, 0.7978846
      %v1078 = vmul.f32 %v1046, 0.7978846
      %v1079 = vmul.f32 %v1047, 0.7978846
      %v1080 = vmul.f32 %v1048, 0.7978846
      %v1081 = vmul.f32 %v1049, 0.7978846
      %v1082 = vmul.f32 %v1050, 0.7978846
      %v1083 = vmul.f32 %v1051, 0.7978846
      %v1084 = vtanh.pop %v1052
      %v1085 = vtanh.pop %v1053
      %v1086 = vtanh.pop %v1054
      %v1087 = vtanh.pop %v1055
      %v1088 = vtanh.pop %v1056
      %v1089 = vtanh.pop %v1057
      %v1090 = vtanh.pop %v1058
      %v1091 = vtanh.pop %v1059
      %v1092 = vtanh.pop %v1060
      %v1093 = vtanh.pop %v1061
      %v1094 = vtanh.pop %v1062
      %v1095 = vtanh.pop %v1063
      %v1096 = vtanh.pop %v1064
      %v1097 = vtanh.pop %v1065
      %v1098 = vtanh.pop %v1066
      %v1099 = vtanh.pop %v1067
      %v1100 = vtanh.pop %v1068
      %v1101 = vtanh.pop %v1069
      %v1102 = vtanh.pop %v1070
      %v1103 = vtanh.pop %v1071
      %v1104 = vtanh.pop %v1072
      %v1105 = vtanh.pop %v1073
      %v1106 = vtanh.pop %v1074
      %v1107 = vtanh.pop %v1075
      %v1108 = vtanh.pop %v1076
      %v1109 = vtanh.pop %v1077
      %v1110 = vtanh.pop %v1078
      %v1111 = vtanh.pop %v1079
      %v1112 = vtanh.pop %v1080
      %v1113 = vtanh.pop %v1081
      %v1114 = vtanh.pop %v1082
      %v1115 = vtanh.pop %v1083
      %v1116 = vadd.f32 %v1084, 1.0
      %v1117 = vadd.f32 %v1085, 1.0
      %v1118 = vadd.f32 %v1086, 1.0
      %v1119 = vadd.f32 %v1087, 1.0
      %v1120 = vadd.f32 %v1088, 1.0
      %v1121 = vadd.f32 %v1089, 1.0
      %v1122 = vadd.f32 %v1090, 1.0
      %v1123 = vadd.f32 %v1091, 1.0
      %v1124 = vadd.f32 %v1092, 1.0
      %v1125 = vadd.f32 %v1093, 1.0
      %v1126 = vadd.f32 %v1094, 1.0
      %v1127 = vadd.f32 %v1095, 1.0
      %v1128 = vadd.f32 %v1096, 1.0
      %v1129 = vadd.f32 %v1097, 1.0
      %v1130 = vadd.f32 %v1098, 1.0
      %v1131 = vadd.f32 %v1099, 1.0
      %v1132 = vadd.f32 %v1100, 1.0
      %v1133 = vadd.f32 %v1101, 1.0
      %v1134 = vadd.f32 %v1102, 1.0
      %v1135 = vadd.f32 %v1103, 1.0
      %v1136 = vadd.f32 %v1104, 1.0
      %v1137 = vadd.f32 %v1105, 1.0
      %v1138 = vadd.f32 %v1106, 1.0
      %v1139 = vadd.f32 %v1107, 1.0
      %v1140 = vadd.f32 %v1108, 1.0
      %v1141 = vadd.f32 %v1109, 1.0
      %v1142 = vadd.f32 %v1110, 1.0
      %v1143 = vadd.f32 %v1111, 1.0
      %v1144 = vadd.f32 %v1112, 1.0
      %v1145 = vadd.f32 %v1113, 1.0
      %v1146 = vadd.f32 %v1114, 1.0
      %v1147 = vadd.f32 %v1115, 1.0
      %v1148 = vmul.f32 %v1116, 0.5
      %v1149 = vmul.f32 %v1117, 0.5
      %v1150 = vmul.f32 %v1118, 0.5
      %v1151 = vmul.f32 %v1119, 0.5
      %v1152 = vmul.f32 %v1120, 0.5
      %v1153 = vmul.f32 %v1121, 0.5
      %v1154 = vmul.f32 %v1122, 0.5
      %v1155 = vmul.f32 %v1123, 0.5
      %v1156 = vmul.f32 %v1124, 0.5
      %v1157 = vmul.f32 %v1125, 0.5
      %v1158 = vmul.f32 %v1126, 0.5
      %v1159 = vmul.f32 %v1127, 0.5
      %v1160 = vmul.f32 %v1128, 0.5
      %v1161 = vmul.f32 %v1129, 0.5
      %v1162 = vmul.f32 %v1130, 0.5
      %v1163 = vmul.f32 %v1131, 0.5
      %v1164 = vmul.f32 %v1132, 0.5
      %v1165 = vmul.f32 %v1133, 0.5
      %v1166 = vmul.f32 %v1134, 0.5
      %v1167 = vmul.f32 %v1135, 0.5
      %v1168 = vmul.f32 %v1136, 0.5
      %v1169 = vmul.f32 %v1137, 0.5
      %v1170 = vmul.f32 %v1138, 0.5
      %v1171 = vmul.f32 %v1139, 0.5
      %v1172 = vmul.f32 %v1140, 0.5
      %v1173 = vmul.f32 %v1141, 0.5
      %v1174 = vmul.f32 %v1142, 0.5
      %v1175 = vmul.f32 %v1143, 0.5
      %v1176 = vmul.f32 %v1144, 0.5
      %v1177 = vmul.f32 %v1145, 0.5
      %v1178 = vmul.f32 %v1146, 0.5
      %v1179 = vmul.f32 %v1147, 0.5
      %v1180 = vmul.f32 %v892, %v1148
      %v1181 = vmul.f32 %v893, %v1149
      %v1182 = vmul.f32 %v894, %v1150
      %v1183 = vmul.f32 %v895, %v1151
      %v1184 = vmul.f32 %v896, %v1152
      %v1185 = vmul.f32 %v897, %v1153
      %v1186 = vmul.f32 %v898, %v1154
      %v1187 = vmul.f32 %v899, %v1155
      %v1188 = vmul.f32 %v900, %v1156
      %v1189 = vmul.f32 %v901, %v1157
      %v1190 = vmul.f32 %v902, %v1158
      %v1191 = vmul.f32 %v903, %v1159
      %v1192 = vmul.f32 %v904, %v1160
      %v1193 = vmul.f32 %v905, %v1161
      %v1194 = vmul.f32 %v906, %v1162
      %v1195 = vmul.f32 %v907, %v1163
      %v1196 = vmul.f32 %v908, %v1164
      %v1197 = vmul.f32 %v909, %v1165
      %v1198 = vmul.f32 %v910, %v1166
      %v1199 = vmul.f32 %v911, %v1167
      %v1200 = vmul.f32 %v912, %v1168
      %v1201 = vmul.f32 %v913, %v1169
      %v1202 = vmul.f32 %v914, %v1170
      %v1203 = vmul.f32 %v915, %v1171
      %v1204 = vmul.f32 %v916, %v1172
      %v1205 = vmul.f32 %v917, %v1173
      %v1206 = vmul.f32 %v918, %v1174
      %v1207 = vmul.f32 %v919, %v1175
      %v1208 = vmul.f32 %v920, %v1176
      %v1209 = vmul.f32 %v921, %v1177
      %v1210 = vmul.f32 %v922, %v1178
      %v1211 = vmul.f32 %v923, %v1179
      %v1212 = vpack.c.bf16 %v1181, %v1180
      %v1213 = vpack.c.bf16 %v1183, %v1182
      %v1214 = vpack.c.bf16 %v1185, %v1184
      %v1215 = vpack.c.bf16 %v1187, %v1186
      %v1216 = vpack.c.bf16 %v1189, %v1188
      %v1217 = vpack.c.bf16 %v1191, %v1190
      %v1218 = vpack.c.bf16 %v1193, %v1192
      %v1219 = vpack.c.bf16 %v1195, %v1194
      %v1220 = vpack.c.bf16 %v1197, %v1196
      %v1221 = vpack.c.bf16 %v1199, %v1198
      %v1222 = vpack.c.bf16 %v1201, %v1200
      %v1223 = vpack.c.bf16 %v1203, %v1202
      %v1224 = vpack.c.bf16 %v1205, %v1204
      %v1225 = vpack.c.bf16 %v1207, %v1206
      %v1226 = vpack.c.bf16 %v1209, %v1208
      %v1227 = vpack.c.bf16 %v1211, %v1210
      %v1228 = vld [vmem:[%s3] sm:$0xf]
      %v1229 = vld [vmem:[%s3 + $0x4] sm:$0xf]
      %v1230 = vld [vmem:[%s3 + $0x8] sm:$0xf]
      %v1231 = vld [vmem:[%s3 + $0xc] sm:$0xf]
      %v1232 = vld [vmem:[%s3 + $0x10] sm:$0xf]
      %v1233 = vld [vmem:[%s3 + $0x14] sm:$0xf]
      %v1234 = vld [vmem:[%s3 + $0x18] sm:$0xf]
      %v1235 = vld [vmem:[%s3 + $0x1c] sm:$0xf]
      %v1236 = vld [vmem:[%s4] sm:$0x1]
      %v1238 = vlaneseq
      %v1239 = vshrl.u32 %v1238, 7
      %v1240 = vsub.s32 0, %v1239
      %v1241 = vrot.slane %v1236, %v1240
      %v1251 = vunpack.c.l.b16 %v1228
      %v1252 = vunpack.c.l.b16 %v1229
      %v1253 = vunpack.c.l.b16 %v1230
      %v1254 = vunpack.c.l.b16 %v1231
      %v1255 = vunpack.c.l.b16 %v1232
      %v1256 = vunpack.c.l.b16 %v1233
      %v1257 = vunpack.c.l.b16 %v1234
      %v1258 = vunpack.c.l.b16 %v1235
      %v1259 = vpack.c.b16 %v1252, %v1251
      %v1260 = vpack.c.b16 %v1254, %v1253
      %v1261 = vpack.c.b16 %v1256, %v1255
      %v1262 = vpack.c.b16 %v1258, %v1257
      %vm1267 = vcmask 523264
      %v1269 = vsel %vm1267, %v1212, 0
      %v1272 = vsel %vm1267, %v1213, 0
      %v1275 = vsel %vm1267, %v1214, 0
      %v1278 = vsel %vm1267, %v1215, 0
      %v1281 = vsel %vm1267, %v1216, 0
      %v1284 = vsel %vm1267, %v1217, 0
      %v1287 = vsel %vm1267, %v1218, 0
      %v1290 = vsel %vm1267, %v1219, 0
      %v1293 = vsel %vm1267, %v1220, 0
      %v1296 = vsel %vm1267, %v1221, 0
      %v1299 = vsel %vm1267, %v1222, 0
      %v1302 = vsel %vm1267, %v1223, 0
      %v1305 = vsel %vm1267, %v1224, 0
      %v1308 = vsel %vm1267, %v1225, 0
      %v1311 = vsel %vm1267, %v1226, 0
      %v1314 = vsel %vm1267, %v1227, 0
      %1316 = vmatprep.subr.bf16.mxu0 0
      %1317 = vmatpush1.bf16.msra.mxu0 %v1259
      %1318 = vmatprep.subr.bf16.mxu0 0
      %1319 = vmatpush1.bf16.msra.mxu0 %v1260
      %1320 = vmatprep.subr.bf16.mxu0 0
      %1321 = vmatpush1.bf16.msra.mxu0 %v1261
      %1322 = vmatprep.subr.bf16.mxu0 0
      %1323 = vmatpush1.bf16.msra.mxu0 %v1262
      %1324 = vmatprep.subr.bf16.mxu0 0
      %1325 = vmatpush1.bf16.msra.mxu0 0
      %1326 = vmatprep.subr.bf16.mxu0 0
      %1327 = vmatpush1.bf16.msra.mxu0 0
      %1328 = vmatprep.subr.bf16.mxu0 0
      %1329 = vmatpush1.bf16.msra.mxu0 0
      %1330 = vmatprep.subr.bf16.mxu0 0
      %1331 = vmatpush1.bf16.msra.mxu0 0
      %1332 = vmatprep.subr.bf16.mxu0 0
      %1333 = vmatpush1.bf16.msra.mxu0 0
      %1334 = vmatprep.subr.bf16.mxu0 0
      %1335 = vmatpush1.bf16.msra.mxu0 0
      %1336 = vmatprep.subr.bf16.mxu0 0
      %1337 = vmatpush1.bf16.msra.mxu0 0
      %1338 = vmatprep.subr.bf16.mxu0 0
      %1339 = vmatpush1.bf16.msra.mxu0 0
      %1340 = vmatprep.subr.bf16.mxu0 0
      %1341 = vmatpush1.bf16.msra.mxu0 0
      %1342 = vmatprep.subr.bf16.mxu0 0
      %1343 = vmatpush1.bf16.msra.mxu0 0
      %1344 = vmatprep.subr.bf16.mxu0 0
      %1345 = vmatpush1.bf16.msra.mxu0 0
      %1346 = vmatprep.subr.bf16.mxu0 0
      %1347 = vmatpush1.bf16.msra.mxu0 0
      %1348 = vmatprep.mubr.bf16.mxu0 0
      %1349 = vmatmul.mubr.bf16.gmra.mrb[0].mxu0 %v1269
      %v1350 = vpop.f32.mrb[0].mxu0
      %v1351 = vadd.f32 %v1241, %v1350
      %v1352 = vpop.f32.mrb[0].mxu0
      %v1353 = vpop.f32.mrb[0].mxu0
      %v1354 = vadd.f32 %v1241, %v1353
      %v1355 = vpop.f32.mrb[0].mxu0
      %1356 = vmatprep.mubr.bf16.mxu0 0
      %1357 = vmatmul.mubr.bf16.gmra.mrb[0].mxu0 %v1272
      %v1358 = vpop.f32.mrb[0].mxu0
      %v1359 = vadd.f32 %v1241, %v1358
      %v1360 = vpop.f32.mrb[0].mxu0
      %v1361 = vpop.f32.mrb[0].mxu0
      %v1362 = vadd.f32 %v1241, %v1361
      %v1363 = vpop.f32.mrb[0].mxu0
      %1364 = vmatprep.mubr.bf16.mxu0 0
      %1365 = vmatmul.mubr.bf16.gmra.mrb[0].mxu0 %v1275
      %v1366 = vpop.f32.mrb[0].mxu0
      %v1367 = vadd.f32 %v1241, %v1366
      %v1368 = vpop.f32.mrb[0].mxu0
      %v1369 = vpop.f32.mrb[0].mxu0
      %v1370 = vadd.f32 %v1241, %v1369
      %v1371 = vpop.f32.mrb[0].mxu0
      %1372 = vmatprep.mubr.bf16.mxu0 0
      %1373 = vmatmul.mubr.bf16.gmra.mrb[0].mxu0 %v1278
      %v1374 = vpop.f32.mrb[0].mxu0
      %v1375 = vadd.f32 %v1241, %v1374
      %v1376 = vpop.f32.mrb[0].mxu0
      %v1377 = vpop.f32.mrb[0].mxu0
      %v1378 = vadd.f32 %v1241, %v1377
      %v1379 = vpop.f32.mrb[0].mxu0
      %1380 = vmatprep.mubr.bf16.mxu0 0
      %1381 = vmatmul.mubr.bf16.gmra.mrb[0].mxu0 %v1281
      %v1382 = vpop.f32.mrb[0].mxu0
      %v1383 = vadd.f32 %v1241, %v1382
      %v1384 = vpop.f32.mrb[0].mxu0
      %v1385 = vpop.f32.mrb[0].mxu0
      %v1386 = vadd.f32 %v1241, %v1385
      %v1387 = vpop.f32.mrb[0].mxu0
      %1388 = vmatprep.mubr.bf16.mxu0 0
      %1389 = vmatmul.mubr.bf16.gmra.mrb[0].mxu0 %v1284
      %v1390 = vpop.f32.mrb[0].mxu0
      %v1391 = vadd.f32 %v1241, %v1390
      %v1392 = vpop.f32.mrb[0].mxu0
      %v1393 = vpop.f32.mrb[0].mxu0
      %v1394 = vadd.f32 %v1241, %v1393
      %v1395 = vpop.f32.mrb[0].mxu0
      %1396 = vmatprep.mubr.bf16.mxu0 0
      %1397 = vmatmul.mubr.bf16.gmra.mrb[0].mxu0 %v1287
      %v1398 = vpop.f32.mrb[0].mxu0
      %v1399 = vadd.f32 %v1241, %v1398
      %v1400 = vpop.f32.mrb[0].mxu0
      %v1401 = vpop.f32.mrb[0].mxu0
      %v1402 = vadd.f32 %v1241, %v1401
      %v1403 = vpop.f32.mrb[0].mxu0
      %1404 = vmatprep.mubr.bf16.mxu0 0
      %1405 = vmatmul.mubr.bf16.gmra.mrb[0].mxu0 %v1290
      %v1406 = vpop.f32.mrb[0].mxu0
      %v1407 = vadd.f32 %v1241, %v1406
      %v1408 = vpop.f32.mrb[0].mxu0
      %v1409 = vpop.f32.mrb[0].mxu0
      %v1410 = vadd.f32 %v1241, %v1409
      %v1411 = vpop.f32.mrb[0].mxu0
      %1412 = vmatprep.mubr.bf16.mxu0 0
      %1413 = vmatmul.mubr.bf16.gmra.mrb[0].mxu0 %v1293
      %v1414 = vpop.f32.mrb[0].mxu0
      %v1415 = vadd.f32 %v1241, %v1414
      %v1416 = vpop.f32.mrb[0].mxu0
      %v1417 = vpop.f32.mrb[0].mxu0
      %v1418 = vadd.f32 %v1241, %v1417
      %v1419 = vpop.f32.mrb[0].mxu0
      %1420 = vmatprep.mubr.bf16.mxu0 0
      %1421 = vmatmul.mubr.bf16.gmra.mrb[0].mxu0 %v1296
      %v1422 = vpop.f32.mrb[0].mxu0
      %v1423 = vadd.f32 %v1241, %v1422
      %v1424 = vpop.f32.mrb[0].mxu0
      %v1425 = vpop.f32.mrb[0].mxu0
      %v1426 = vadd.f32 %v1241, %v1425
      %v1427 = vpop.f32.mrb[0].mxu0
      %1428 = vmatprep.mubr.bf16.mxu0 0
      %1429 = vmatmul.mubr.bf16.gmra.mrb[0].mxu0 %v1299
      %v1430 = vpop.f32.mrb[0].mxu0
      %v1431 = vadd.f32 %v1241, %v1430
      %v1432 = vpop.f32.mrb[0].mxu0
      %v1433 = vpop.f32.mrb[0].mxu0
      %v1434 = vadd.f32 %v1241, %v1433
      %v1435 = vpop.f32.mrb[0].mxu0
      %1436 = vmatprep.mubr.bf16.mxu0 0
      %1437 = vmatmul.mubr.bf16.gmra.mrb[0].mxu0 %v1302
      %v1438 = vpop.f32.mrb[0].mxu0
      %v1439 = vadd.f32 %v1241, %v1438
      %v1440 = vpop.f32.mrb[0].mxu0
      %v1441 = vpop.f32.mrb[0].mxu0
      %v1442 = vadd.f32 %v1241, %v1441
      %v1443 = vpop.f32.mrb[0].mxu0
      %1444 = vmatprep.mubr.bf16.mxu0 0
      %1445 = vmatmul.mubr.bf16.gmra.mrb[0].mxu0 %v1305
      %v1446 = vpop.f32.mrb[0].mxu0
      %v1447 = vadd.f32 %v1241, %v1446
      %v1448 = vpop.f32.mrb[0].mxu0
      %v1449 = vpop.f32.mrb[0].mxu0
      %v1450 = vadd.f32 %v1241, %v1449
      %v1451 = vpop.f32.mrb[0].mxu0
      %1452 = vmatprep.mubr.bf16.mxu0 0
      %1453 = vmatmul.mubr.bf16.gmra.mrb[0].mxu0 %v1308
      %v1454 = vpop.f32.mrb[0].mxu0
      %v1455 = vadd.f32 %v1241, %v1454
      %v1456 = vpop.f32.mrb[0].mxu0
      %v1457 = vpop.f32.mrb[0].mxu0
      %v1458 = vadd.f32 %v1241, %v1457
      %v1459 = vpop.f32.mrb[0].mxu0
      %1460 = vmatprep.mubr.bf16.mxu0 0
      %1461 = vmatmul.mubr.bf16.gmra.mrb[0].mxu0 %v1311
      %v1462 = vpop.f32.mrb[0].mxu0
      %v1463 = vadd.f32 %v1241, %v1462
      %v1464 = vpop.f32.mrb[0].mxu0
      %v1465 = vpop.f32.mrb[0].mxu0
      %v1466 = vadd.f32 %v1241, %v1465
      %v1467 = vpop.f32.mrb[0].mxu0
      %1468 = vmatprep.mubr.bf16.mxu0 0
      %1469 = vmatmul.mubr.bf16.gmra.mrb[0].mxu0 %v1314
      %v1470 = vpop.f32.mrb[0].mxu0
      %v1471 = vadd.f32 %v1241, %v1470
      %v1472 = vpop.f32.mrb[0].mxu0
      %v1473 = vpop.f32.mrb[0].mxu0
      %v1474 = vadd.f32 %v1241, %v1473
      %v1475 = vpop.f32.mrb[0].mxu0
      %1476 = vdwg.mxu0
      %v1477 = vpack.c.bf16 %v1354, %v1351
      %v1478 = vpack.c.bf16 %v1362, %v1359
      %v1479 = vpack.c.bf16 %v1370, %v1367
      %v1480 = vpack.c.bf16 %v1378, %v1375
      %v1481 = vpack.c.bf16 %v1386, %v1383
      %v1482 = vpack.c.bf16 %v1394, %v1391
      %v1483 = vpack.c.bf16 %v1402, %v1399
      %v1484 = vpack.c.bf16 %v1410, %v1407
      %v1485 = vpack.c.bf16 %v1418, %v1415
      %v1486 = vpack.c.bf16 %v1426, %v1423
      %v1487 = vpack.c.bf16 %v1434, %v1431
      %v1488 = vpack.c.bf16 %v1442, %v1439
      %v1489 = vpack.c.bf16 %v1450, %v1447
      %v1490 = vpack.c.bf16 %v1458, %v1455
      %v1491 = vpack.c.bf16 %v1466, %v1463
      %v1492 = vpack.c.bf16 %v1474, %v1471
      %v1509 = vunpack.c.l.b16 %v1477
      %v1510 = vunpack.c.h.b16 %v1477
      %v1511 = vunpack.c.l.b16 %v1478
      %v1512 = vunpack.c.h.b16 %v1478
      %v1513 = vunpack.c.l.b16 %v1479
      %v1514 = vunpack.c.h.b16 %v1479
      %v1515 = vunpack.c.l.b16 %v1480
      %v1516 = vunpack.c.h.b16 %v1480
      %v1517 = vunpack.c.l.b16 %v1481
      %v1518 = vunpack.c.h.b16 %v1481
      %v1519 = vunpack.c.l.b16 %v1482
      %v1520 = vunpack.c.h.b16 %v1482
      %v1521 = vunpack.c.l.b16 %v1483
      %v1522 = vunpack.c.h.b16 %v1483
      %v1523 = vunpack.c.l.b16 %v1484
      %v1524 = vunpack.c.h.b16 %v1484
      %v1525 = vunpack.c.l.b16 %v1485
      %v1526 = vunpack.c.h.b16 %v1485
      %v1527 = vunpack.c.l.b16 %v1486
      %v1528 = vunpack.c.h.b16 %v1486
      %v1529 = vunpack.c.l.b16 %v1487
      %v1530 = vunpack.c.h.b16 %v1487
      %v1531 = vunpack.c.l.b16 %v1488
      %v1532 = vunpack.c.h.b16 %v1488
      %v1533 = vunpack.c.l.b16 %v1489
      %v1534 = vunpack.c.h.b16 %v1489
      %v1535 = vunpack.c.l.b16 %v1490
      %v1536 = vunpack.c.h.b16 %v1490
      %v1537 = vunpack.c.l.b16 %v1491
      %v1538 = vunpack.c.h.b16 %v1491
      %v1539 = vunpack.c.l.b16 %v1492
      %v1540 = vunpack.c.h.b16 %v1492
      %v1541 = vpack.c.b16 %v1509, %v1509
      %v1542 = vpack.c.b16 %v1510, %v1510
      %v1543 = vpack.c.b16 %v1511, %v1511
      %v1544 = vpack.c.b16 %v1512, %v1512
      %v1545 = vpack.c.b16 %v1513, %v1513
      %v1546 = vpack.c.b16 %v1514, %v1514
      %v1547 = vpack.c.b16 %v1515, %v1515
      %v1548 = vpack.c.b16 %v1516, %v1516
      %v1549 = vpack.c.b16 %v1517, %v1517
      %v1550 = vpack.c.b16 %v1518, %v1518
      %v1551 = vpack.c.b16 %v1519, %v1519
      %v1552 = vpack.c.b16 %v1520, %v1520
      %v1553 = vpack.c.b16 %v1521, %v1521
      %v1554 = vpack.c.b16 %v1522, %v1522
      %v1555 = vpack.c.b16 %v1523, %v1523
      %v1556 = vpack.c.b16 %v1524, %v1524
      %v1557 = vpack.c.b16 %v1525, %v1525
      %v1558 = vpack.c.b16 %v1526, %v1526
      %v1559 = vpack.c.b16 %v1527, %v1527
      %v1560 = vpack.c.b16 %v1528, %v1528
      %v1561 = vpack.c.b16 %v1529, %v1529
      %v1562 = vpack.c.b16 %v1530, %v1530
      %v1563 = vpack.c.b16 %v1531, %v1531
      %v1564 = vpack.c.b16 %v1532, %v1532
      %v1565 = vpack.c.b16 %v1533, %v1533
      %v1566 = vpack.c.b16 %v1534, %v1534
      %v1567 = vpack.c.b16 %v1535, %v1535
      %v1568 = vpack.c.b16 %v1536, %v1536
      %v1569 = vpack.c.b16 %v1537, %v1537
      %v1570 = vpack.c.b16 %v1538, %v1538
      %v1571 = vpack.c.b16 %v1539, %v1539
      %v1572 = vpack.c.b16 %v1540, %v1540
      %vm1605 = vcmask 257024
      %1606 = vst.msk [vmem:[%s226] sm:$0xf] %vm1605, %v1541
      %1607 = vst.msk [vmem:[%s226 + $0x4] sm:$0xf] %vm1605, %v1542
      %1608 = vst.msk [vmem:[%s226 + $0x8] sm:$0xf] %vm1605, %v1543
      %1609 = vst.msk [vmem:[%s226 + $0xc] sm:$0xf] %vm1605, %v1544
      %1610 = vst.msk [vmem:[%s226 + $0x10] sm:$0xf] %vm1605, %v1545
      %1611 = vst.msk [vmem:[%s226 + $0x14] sm:$0xf] %vm1605, %v1546
      %1612 = vst.msk [vmem:[%s226 + $0x18] sm:$0xf] %vm1605, %v1547
      %1613 = vst.msk [vmem:[%s226 + $0x1c] sm:$0xf] %vm1605, %v1548
      %1614 = vst.msk [vmem:[%s226 + $0x20] sm:$0xf] %vm1605, %v1549
      %1615 = vst.msk [vmem:[%s226 + $0x24] sm:$0xf] %vm1605, %v1550
      %1616 = vst.msk [vmem:[%s226 + $0x28] sm:$0xf] %vm1605, %v1551
      %1617 = vst.msk [vmem:[%s226 + $0x2c] sm:$0xf] %vm1605, %v1552
      %1618 = vst.msk [vmem:[%s226 + $0x30] sm:$0xf] %vm1605, %v1553
      %1619 = vst.msk [vmem:[%s226 + $0x34] sm:$0xf] %vm1605, %v1554
      %1620 = vst.msk [vmem:[%s226 + $0x38] sm:$0xf] %vm1605, %v1555
      %1621 = vst.msk [vmem:[%s226 + $0x3c] sm:$0xf] %vm1605, %v1556
      %1622 = vst.msk [vmem:[%s226 + $0x40] sm:$0xf] %vm1605, %v1557
      %1623 = vst.msk [vmem:[%s226 + $0x44] sm:$0xf] %vm1605, %v1558
      %1624 = vst.msk [vmem:[%s226 + $0x48] sm:$0xf] %vm1605, %v1559
      %1625 = vst.msk [vmem:[%s226 + $0x4c] sm:$0xf] %vm1605, %v1560
      %1626 = vst.msk [vmem:[%s226 + $0x50] sm:$0xf] %vm1605, %v1561
      %1627 = vst.msk [vmem:[%s226 + $0x54] sm:$0xf] %vm1605, %v1562
      %1628 = vst.msk [vmem:[%s226 + $0x58] sm:$0xf] %vm1605, %v1563
      %1629 = vst.msk [vmem:[%s226 + $0x5c] sm:$0xf] %vm1605, %v1564
      %1630 = vst.msk [vmem:[%s226 + $0x60] sm:$0xf] %vm1605, %v1565
      %1631 = vst.msk [vmem:[%s226 + $0x64] sm:$0xf] %vm1605, %v1566
      %1632 = vst.msk [vmem:[%s226 + $0x68] sm:$0xf] %vm1605, %v1567
      %1633 = vst.msk [vmem:[%s226 + $0x6c] sm:$0xf] %vm1605, %v1568
      %1634 = vst.msk [vmem:[%s226 + $0x70] sm:$0xf] %vm1605, %v1569
      %1635 = vst.msk [vmem:[%s226 + $0x74] sm:$0xf] %vm1605, %v1570
      %1636 = vst.msk [vmem:[%s226 + $0x78] sm:$0xf] %vm1605, %v1571
      %1637 = vst.msk [vmem:[%s226 + $0x7c] sm:$0xf] %vm1605, %v1572
      %s1638 = smul.u32 32, %s16
      %p1639 = scmp.lt.s32.totalorder %s1638, 63
      %s1640 = scalar_select %p1639, %s1638, 63
      %s1641 = smul.addr %s1640, 4
      %s1642 = scalar_lea.vmem %s5, %s1641
      // Predicated region
      $region41: #{_lambda_.6} parent=39 // pred_check
        %p1643 = pneg %p144
      $region42: #{_lambda_.6} parent=39 // pred_check_branch
        %1645 = sbr.rel (%p1643) target = $region44
      $region43: #{_lambda_.6} parent=39 // pred_region
        %s1646 = smul.u32 32, %s16
      $region44: #{_lambda_.6} parent=39 // pred_fallthru
        _
    $region40: #{_lambda_.6} parent=5 // pred_fallthru
      _
    %p1647 = scmp.le.s32.totalorder 2, %s11
    // Predicated region
    $region45: #{_lambda_.6} parent=5 // pred_check
      %p1648 = pneg %p1647
    $region46: #{_lambda_.6} parent=5 // pred_check_branch
      %1650 = sbr.rel (%p1648) target = $region48
    $region47: #{_lambda_.6} parent=5 // pred_region
      %s1651 = ssub.s32 %s11, 2
      // Predicated region
      $region49: #{_lambda_.6} parent=47 // pred_check
        %p1652 = pneg %p150
      $region50: #{_lambda_.6} parent=47 // pred_check_branch
        %1654 = sbr.rel (%p1652) target = $region52
      $region51: #{_lambda_.6} parent=47 // pred_region
        %s1655 = smul.u32 32, %s17
        %p1656 = scmp.lt.s32.totalorder %s1655, 63
        %s1657 = scalar_select %p1656, %s1655, 63
        %s1658 = smul.addr %s1657, 4
        %s1659 = scalar_lea.vmem %s5, %s1658
      $region52: #{_lambda_.6} parent=47 // pred_fallthru
        _
    $region48: #{_lambda_.6} parent=5 // pred_fallthru
      _
  $region6: #{_lambda_.6} parent=0 // loop_footer
    %s15 = sadd.s32 1, %s11
  $region7: #{_lambda_.6} parent=0 // loop_footer_branch
    %10 = sbr.rel target = $region3
  $region8: #{_lambda_.6} parent=0 // loop_exit
    _

// kernel: reverse.4
$region0: #{reverse.4}
  #allocation0 [shape = 's32[1]{0}', space=sflag, size = 0x4, scoped, tag = 'scoped memory for reverse.4']
  %s0 = inlined_call_operand.vmem [shape: f32[2,32,16,7], index: 0, kind: input, shape index: {}]
  %s1 = inlined_call_operand.vmem [shape: f32[2,32,16,7], index: 1, kind: output, shape index: {}]
  %s2 = scalar_lea.vmem %s0, 96
  %v3 = vld [vmem:[%s2] sm:$0xff]
  %4 = vst [vmem:[%s1] sm:$0xff] %v3
  %s5 = scalar_lea.vmem %s0, 208
  %v6 = vld [vmem:[%s5] sm:$0xff]
  %s7 = scalar_lea.vmem %s1, 112
  %8 = vst [vmem:[%s7] sm:$0xff] %v6
  %s9 = scalar_lea.vmem %s0, 80
  %v10 = vld [vmem:[%s9] sm:$0xff]
  %s11 = scalar_lea.vmem %s1, 16
  %12 = vst [vmem:[%s11] sm:$0xff] %v10
  %s13 = scalar_lea.vmem %s0, 192
  %v14 = vld [vmem:[%s13] sm:$0xff]
  %s15 = scalar_lea.vmem %s1, 128
  %16 = vst [vmem:[%s15] sm:$0xff] %v14
  %s17 = scalar_lea.vmem %s0, 64
  %v18 = vld [vmem:[%s17] sm:$0xff]
  %s19 = scalar_lea.vmem %s1, 32
  %20 = vst [vmem:[%s19] sm:$0xff] %v18
  %s21 = scalar_lea.vmem %s0, 176
  %v22 = vld [vmem:[%s21] sm:$0xff]
  %s23 = scalar_lea.vmem %s1, 144
  %24 = vst [vmem:[%s23] sm:$0xff] %v22
  %s25 = scalar_lea.vmem %s0, 48
  %v26 = vld [vmem:[%s25] sm:$0xff]
  %s27 = scalar_lea.vmem %s1, 48
  %28 = vst [vmem:[%s27] sm:$0xff] %v26
  %s29 = scalar_lea.vmem %s0, 160
  %v30 = vld [vmem:[%s29] sm:$0xff]
  %s31 = scalar_lea.vmem %s1, 160
  %32 = vst [vmem:[%s31] sm:$0xff] %v30
  %s33 = scalar_lea.vmem %s0, 32
  %v34 = vld [vmem:[%s33] sm:$0xff]
  %s35 = scalar_lea.vmem %s1, 64
  %36 = vst [vmem:[%s35] sm:$0xff] %v34
  %s37 = scalar_lea.vmem %s0, 144
  %v38 = vld [vmem:[%s37] sm:$0xff]
  %s39 = scalar_lea.vmem %s1, 176
  %40 = vst [vmem:[%s39] sm:$0xff] %v38
  %s41 = scalar_lea.vmem %s0, 16
  %v42 = vld [vmem:[%s41] sm:$0xff]
  %s43 = scalar_lea.vmem %s1, 80
  %44 = vst [vmem:[%s43] sm:$0xff] %v42
  %s45 = scalar_lea.vmem %s0, 128
  %v46 = vld [vmem:[%s45] sm:$0xff]
  %s47 = scalar_lea.vmem %s1, 192
  %48 = vst [vmem:[%s47] sm:$0xff] %v46
  %v49 = vld [vmem:[%s0] sm:$0xff]
  %s50 = scalar_lea.vmem %s1, 96
  %51 = vst [vmem:[%s50] sm:$0xff] %v49
  %s52 = scalar_lea.vmem %s0, 112
  %v53 = vld [vmem:[%s52] sm:$0xff]
  %s54 = scalar_lea.vmem %s1, 208
  %55 = vst [vmem:[%s54] sm:$0xff] %v53
  %s56 = scalar_lea.vmem %s0, 104
  %v57 = vld [vmem:[%s56] sm:$0xff]
  %s58 = scalar_lea.vmem %s1, 8
  %59 = vst [vmem:[%s58] sm:$0xff] %v57
  %s60 = scalar_lea.vmem %s0, 216
  %v61 = vld [vmem:[%s60] sm:$0xff]
  %s62 = scalar_lea.vmem %s1, 120
  %63 = vst [vmem:[%s62] sm:$0xff] %v61
  %s64 = scalar_lea.vmem %s0, 88
  %v65 = vld [vmem:[%s64] sm:$0xff]
  %s66 = scalar_lea.vmem %s1, 24
  %67 = vst [vmem:[%s66] sm:$0xff] %v65
  %s68 = scalar_lea.vmem %s0, 200
  %v69 = vld [vmem:[%s68] sm:$0xff]
  %s70 = scalar_lea.vmem %s1, 136
  %71 = vst [vmem:[%s70] sm:$0xff] %v69
  %s72 = scalar_lea.vmem %s0, 72
  %v73 = vld [vmem:[%s72] sm:$0xff]
  %s74 = scalar_lea.vmem %s1, 40
  %75 = vst [vmem:[%s74] sm:$0xff] %v73
  %s76 = scalar_lea.vmem %s0, 184
  %v77 = vld [vmem:[%s76] sm:$0xff]
  %s78 = scalar_lea.vmem %s1, 152
  %79 = vst [vmem:[%s78] sm:$0xff] %v77
  %s80 = scalar_lea.vmem %s0, 56
  %v81 = vld [vmem:[%s80] sm:$0xff]
  %s82 = scalar_lea.vmem %s1, 56
  %83 = vst [vmem:[%s82] sm:$0xff] %v81
  %s84 = scalar_lea.vmem %s0, 168
  %v85 = vld [vmem:[%s84] sm:$0xff]
  %s86 = scalar_lea.vmem %s1, 168
  %87 = vst [vmem:[%s86] sm:$0xff] %v85
  %s88 = scalar_lea.vmem %s0, 40
  %v89 = vld [vmem:[%s88] sm:$0xff]
  %s90 = scalar_lea.vmem %s1, 72
  %91 = vst [vmem:[%s90] sm:$0xff] %v89
  %s92 = scalar_lea.vmem %s0, 152
  %v93 = vld [vmem:[%s92] sm:$0xff]
  %s94 = scalar_lea.vmem %s1, 184
  %95 = vst [vmem:[%s94] sm:$0xff] %v93
  %s96 = scalar_lea.vmem %s0, 24
  %v97 = vld [vmem:[%s96] sm:$0xff]
  %s98 = scalar_lea.vmem %s1, 88
  %99 = vst [vmem:[%s98] sm:$0xff] %v97
  %s100 = scalar_lea.vmem %s0, 136
  %v101 = vld [vmem:[%s100] sm:$0xff]
  %s102 = scalar_lea.vmem %s1, 200
  %103 = vst [vmem:[%s102] sm:$0xff] %v101
  %s104 = scalar_lea.vmem %s0, 8
  %v105 = vld [vmem:[%s104] sm:$0xff]
  %s106 = scalar_lea.vmem %s1, 104
  %107 = vst [vmem:[%s106] sm:$0xff] %v105
  %s108 = scalar_lea.vmem %s0, 120
  %v109 = vld [vmem:[%s108] sm:$0xff]
  %s110 = scalar_lea.vmem %s1, 216
  %111 = vst [vmem:[%s110] sm:$0xff] %v109

// kernel: _lambda_.7
$region0: #{_lambda_.7}
  #allocation0 [shape = 'u32[]', space=smem, size = 0x4, offset = 0x4, fixed_abs, tag = 'smem constant byte address 0x4 - core index']
  #allocation1 [shape = 'u32[144,128]{1,0:T(1,128)}', space=vmem, size = 0x12000, scoped, tag = 'internal scratch']
  %s0 = inlined_call_operand.vmem [shape: f32[32,2,32], index: 0, kind: input, shape index: {}]
  %s1 = inlined_call_operand.vmem [shape: f32[32,2,32], index: 1, kind: input, shape index: {}]
  %s2 = inlined_call_operand.vmem [shape: bf16[32,32,32], index: 2, kind: input, shape index: {}]
  %s3 = inlined_call_operand.vmem [shape: bf16[32,32,32], index: 3, kind: input, shape index: {}]
  %s4 = inlined_call_operand.vmem [shape: f32[32,2,32], index: 4, kind: output, shape index: {0}]
  %s5 = inlined_call_operand.vmem [shape: f32[32,2,32], index: 5, kind: output, shape index: {1}]
  %6 = xla_tuple %s4, %s5
  %s7 = sld [smem:[#allocation0]]
  $region57: #{_lambda_.7} parent=0
    _
  %s9 = ssub.s32 1, %s7
  %s10 = scalar_select 0, %s9, %s7
  loop: start=0, step=1, limit=4
  $region2: #{_lambda_.7} parent=0 // loop_pre_header
    _
  $region3: #{_lambda_.7} parent=0 // loop_header
    %s12 = sphi 0, %s16
    %p13 = scmp.ge.s32.totalorder %s12, 4
    %s22 = sphi 0, %s24
    %s25 = sphi 0, %s22
    %s26 = sphi 0, %s25
    %s42 = sphi 0, %s26
    %s48 = sphi 0, %s50
    %s51 = sphi 0, %s48
    %s52 = sphi 0, %s51
    %s68 = sphi 0, %s52
    %s74 = sphi 0, %s76
    %s77 = sphi 0, %s74
    %s78 = sphi 0, %s77
    %s94 = sphi 0, %s78
    %s100 = sphi 0, %s102
    %s103 = sphi 0, %s100
    %s104 = sphi 0, %s103
    %s120 = sphi 0, %s104
    %s126 = sphi 0, %s128
    %s129 = sphi 0, %s126
    %s130 = sphi 0, %s129
    %s146 = sphi 0, %s130
    %s152 = sphi 0, %s154
    %s155 = sphi 0, %s152
    %s156 = sphi 0, %s155
    %s172 = sphi 0, %s156
  $region4: #{_lambda_.7} parent=0 // loop_header_branch
    %15 = sbr.rel (%p13) target = $region8
  $region5: #{_lambda_.7} parent=0 // loop_body
    %s17 = ssub.s32 %s12, 1
    %s18 = ssub.s32 %s12, 2
    %s19 = sadd.s32 %s12, 1
    %s20 = ssub.s32 %s12, %s19
    %p21 = scmp.eq.s32.totalorder %s20, 0
    %s23 = sadd.s32 %s22, 1
    %s24 = scalar_select %p21, %s22, %s23
    %p27 = pneg %p21
    %p28 = scmp.eq.s32.totalorder %s12, 1
    %p29 = por %p27, %p28
    %p30 = scmp.ne.s32.totalorder %s22, %s25
    %p31 = scmp.eq.s32.totalorder %s12, 0
    %p32 = por %p30, %p31
    %p33 = scmp.ne.s32.totalorder %s22, %s25
    %p34 = scmp.eq.s32.totalorder %s17, 1
    %p35 = por %p33, %p34
    %p36 = scmp.ne.s32.totalorder %s25, %s26
    %p37 = scmp.eq.s32.totalorder %s17, 0
    %p38 = por %p36, %p37
    %p39 = scmp.ne.s32.totalorder %s25, %s26
    %p40 = scmp.eq.s32.totalorder %s18, 1
    %p41 = por %p39, %p40
    %p43 = scmp.ne.s32.totalorder %s26, %s42
    %p44 = scmp.eq.s32.totalorder %s18, 0
    %p45 = por %p43, %p44
    %s46 = ssub.s32 %s12, %s19
    %p47 = scmp.eq.s32.totalorder %s46, 0
    %s49 = sadd.s32 %s48, 1
    %s50 = scalar_select %p47, %s48, %s49
    %p53 = pneg %p47
    %p54 = scmp.eq.s32.totalorder %s12, 1
    %p55 = por %p53, %p54
    %p56 = scmp.ne.s32.totalorder %s48, %s51
    %p57 = scmp.eq.s32.totalorder %s12, 0
    %p58 = por %p56, %p57
    %p59 = scmp.ne.s32.totalorder %s48, %s51
    %p60 = scmp.eq.s32.totalorder %s17, 1
    %p61 = por %p59, %p60
    %p62 = scmp.ne.s32.totalorder %s51, %s52
    %p63 = scmp.eq.s32.totalorder %s17, 0
    %p64 = por %p62, %p63
    %p65 = scmp.ne.s32.totalorder %s51, %s52
    %p66 = scmp.eq.s32.totalorder %s18, 1
    %p67 = por %p65, %p66
    %p69 = scmp.ne.s32.totalorder %s52, %s68
    %p70 = scmp.eq.s32.totalorder %s18, 0
    %p71 = por %p69, %p70
    %s72 = ssub.s32 %s12, %s19
    %p73 = scmp.eq.s32.totalorder %s72, 0
    %s75 = sadd.s32 %s74, 1
    %s76 = scalar_select %p73, %s74, %s75
    %p79 = pneg %p73
    %p80 = scmp.eq.s32.totalorder %s12, 1
    %p81 = por %p79, %p80
    %p82 = scmp.ne.s32.totalorder %s74, %s77
    %p83 = scmp.eq.s32.totalorder %s12, 0
    %p84 = por %p82, %p83
    %p85 = scmp.ne.s32.totalorder %s74, %s77
    %p86 = scmp.eq.s32.totalorder %s17, 1
    %p87 = por %p85, %p86
    %p88 = scmp.ne.s32.totalorder %s77, %s78
    %p89 = scmp.eq.s32.totalorder %s17, 0
    %p90 = por %p88, %p89
    %p91 = scmp.ne.s32.totalorder %s77, %s78
    %p92 = scmp.eq.s32.totalorder %s18, 1
    %p93 = por %p91, %p92
    %p95 = scmp.ne.s32.totalorder %s78, %s94
    %p96 = scmp.eq.s32.totalorder %s18, 0
    %p97 = por %p95, %p96
    %s98 = ssub.s32 %s12, %s19
    %p99 = scmp.eq.s32.totalorder %s98, 0
    %s101 = sadd.s32 %s100, 1
    %s102 = scalar_select %p99, %s100, %s101
    %p105 = pneg %p99
    %p106 = scmp.eq.s32.totalorder %s12, 1
    %p107 = por %p105, %p106
    %p108 = scmp.ne.s32.totalorder %s100, %s103
    %p109 = scmp.eq.s32.totalorder %s12, 0
    %p110 = por %p108, %p109
    %p111 = scmp.ne.s32.totalorder %s100, %s103
    %p112 = scmp.eq.s32.totalorder %s17, 1
    %p113 = por %p111, %p112
    %p114 = scmp.ne.s32.totalorder %s103, %s104
    %p115 = scmp.eq.s32.totalorder %s17, 0
    %p116 = por %p114, %p115
    %p117 = scmp.ne.s32.totalorder %s103, %s104
    %p118 = scmp.eq.s32.totalorder %s18, 1
    %p119 = por %p117, %p118
    %p121 = scmp.ne.s32.totalorder %s104, %s120
    %p122 = scmp.eq.s32.totalorder %s18, 0
    %p123 = por %p121, %p122
    %s124 = ssub.s32 %s12, %s19
    %p125 = scmp.eq.s32.totalorder %s124, 0
    %s127 = sadd.s32 %s126, 1
    %s128 = scalar_select %p125, %s126, %s127
    %p131 = pneg %p125
    %p132 = scmp.eq.s32.totalorder %s12, 1
    %p133 = por %p131, %p132
    %p134 = scmp.ne.s32.totalorder %s126, %s129
    %p135 = scmp.eq.s32.totalorder %s12, 0
    %p136 = por %p134, %p135
    %p137 = scmp.ne.s32.totalorder %s126, %s129
    %p138 = scmp.eq.s32.totalorder %s17, 1
    %p139 = por %p137, %p138
    %p140 = scmp.ne.s32.totalorder %s129, %s130
    %p141 = scmp.eq.s32.totalorder %s17, 0
    %p142 = por %p140, %p141
    %p143 = scmp.ne.s32.totalorder %s129, %s130
    %p144 = scmp.eq.s32.totalorder %s18, 1
    %p145 = por %p143, %p144
    %p147 = scmp.ne.s32.totalorder %s130, %s146
    %p148 = scmp.eq.s32.totalorder %s18, 0
    %p149 = por %p147, %p148
    %s150 = ssub.s32 %s12, %s19
    %p151 = scmp.eq.s32.totalorder %s150, 0
    %s153 = sadd.s32 %s152, 1
    %s154 = scalar_select %p151, %s152, %s153
    %p157 = pneg %p151
    %p158 = scmp.eq.s32.totalorder %s12, 1
    %p159 = por %p157, %p158
    %p160 = scmp.ne.s32.totalorder %s152, %s155
    %p161 = scmp.eq.s32.totalorder %s12, 0
    %p162 = por %p160, %p161
    %p163 = scmp.ne.s32.totalorder %s152, %s155
    %p164 = scmp.eq.s32.totalorder %s17, 1
    %p165 = por %p163, %p164
    %p166 = scmp.ne.s32.totalorder %s155, %s156
    %p167 = scmp.eq.s32.totalorder %s17, 0
    %p168 = por %p166, %p167
    %p169 = scmp.ne.s32.totalorder %s155, %s156
    %p170 = scmp.eq.s32.totalorder %s18, 1
    %p171 = por %p169, %p170
    %p173 = scmp.ne.s32.totalorder %s156, %s172
    %p174 = scmp.eq.s32.totalorder %s18, 0
    %p175 = por %p173, %p174
    %p176 = scmp.le.s32.totalorder 1, %s12
    %p177 = scmp.lt.s32.totalorder %s12, 3
    %p178 = pnand %p176, %p177
    %p179 = pneg %p178
    // Predicated region
    $region9: #{_lambda_.7} parent=5 // pred_check
      _
    $region10: #{_lambda_.7} parent=5 // pred_check_branch
      %181 = sbr.rel (%p178) target = $region12
    $region11: #{_lambda_.7} parent=5 // pred_region
      %s182 = ssub.s32 %s12, 1
    $region12: #{_lambda_.7} parent=5 // pred_fallthru
      _
    %p183 = scmp.lt.s32.totalorder %s12, 2
    // Predicated region
    $region13: #{_lambda_.7} parent=5 // pred_check
      %p184 = pneg %p183
    $region14: #{_lambda_.7} parent=5 // pred_check_branch
      %186 = sbr.rel (%p184) target = $region16
    $region15: #{_lambda_.7} parent=5 // pred_region
      // Predicated region
      $region17: #{_lambda_.7} parent=15 // pred_check
        %p187 = pneg %p32
      $region18: #{_lambda_.7} parent=15 // pred_check_branch
        %189 = sbr.rel (%p187) target = $region20
      $region19: #{_lambda_.7} parent=15 // pred_region
        %s190 = smul.u32 16, %s12
        %p191 = scmp.lt.s32.totalorder %s190, 31
        %s192 = scalar_select %p191, %s190, 31
        %s193 = smul.addr %s192, 2
        %s194 = scalar_lea.vmem %s0, %s193
        %s195 = smul.u32 16, %s12
      $region20: #{_lambda_.7} parent=15 // pred_fallthru
        _
      // Predicated region
      $region21: #{_lambda_.7} parent=15 // pred_check
        %p196 = pneg %p58
      $region22: #{_lambda_.7} parent=15 // pred_check_branch
        %198 = sbr.rel (%p196) target = $region24
      $region23: #{_lambda_.7} parent=15 // pred_region
        %s199 = smul.u32 16, %s12
        %p200 = scmp.lt.s32.totalorder %s199, 31
        %s201 = scalar_select %p200, %s199, 31
        %s202 = smul.addr %s201, 2
        %s203 = scalar_lea.vmem %s1, %s202
        %s204 = smul.u32 16, %s12
      $region24: #{_lambda_.7} parent=15 // pred_fallthru
        _
      // Predicated region
      $region25: #{_lambda_.7} parent=15 // pred_check
        %p205 = pneg %p84
      $region26: #{_lambda_.7} parent=15 // pred_check_branch
        %207 = sbr.rel (%p205) target = $region28
      $region27: #{_lambda_.7} parent=15 // pred_region
        %s208 = smul.u32 16, %s12
        %p209 = scmp.lt.s32.totalorder %s208, 31
        %s210 = scalar_select %p209, %s208, 31
        %s211 = smul.addr %s210, 4
        %s212 = smul.addr %s211, 4
        %s213 = scalar_lea.vmem %s2, %s212
        %s214 = smul.u32 16, %s12
      $region28: #{_lambda_.7} parent=15 // pred_fallthru
        _
      // Predicated region
      $region29: #{_lambda_.7} parent=15 // pred_check
        %p215 = pneg %p110
      $region30: #{_lambda_.7} parent=15 // pred_check_branch
        %217 = sbr.rel (%p215) target = $region32
      $region31: #{_lambda_.7} parent=15 // pred_region
        %s218 = smul.u32 16, %s12
        %p219 = scmp.lt.s32.totalorder %s218, 31
        %s220 = scalar_select %p219, %s218, 31
        %s221 = smul.addr %s220, 4
        %s222 = smul.addr %s221, 4
        %s223 = scalar_lea.vmem %s3, %s222
        %s224 = smul.u32 16, %s12
      $region32: #{_lambda_.7} parent=15 // pred_fallthru
        _
    $region16: #{_lambda_.7} parent=5 // pred_fallthru
      _
    %p225 = scmp.le.s32.totalorder 1, %s12
    %p226 = scmp.lt.s32.totalorder %s12, 3
    %p227 = pnand %p225, %p226
    %p228 = pneg %p227
    // Predicated region
    $region33: #{_lambda_.7} parent=5 // pred_check
      _
    $region34: #{_lambda_.7} parent=5 // pred_check_branch
      %230 = sbr.rel (%p227) target = $region36
    $region35: #{_lambda_.7} parent=5 // pred_region
      %s231 = ssub.s32 %s12, 1
      %s232 = smul.u32 16, %s17
      %p233 = scmp.lt.s32.totalorder %s232, 31
      %s234 = scalar_select %p233, %s232, 31
      %s235 = smul.addr %s234, 2
      %s236 = scalar_lea.vmem %s0, %s235
      %p237 = pneg %p38
      %p238 = pneg %p35
      %s239 = smul.u32 16, %s17
      %p240 = scmp.lt.s32.totalorder %s239, 31
      %s241 = scalar_select %p240, %s239, 31
      %s242 = smul.addr %s241, 2
      %s243 = scalar_lea.vmem %s1, %s242
      %p244 = pneg %p64
      %p245 = pneg %p61
      %s246 = smul.u32 16, %s17
      %p247 = scmp.lt.s32.totalorder %s246, 31
      %s248 = scalar_select %p247, %s246, 31
      %s249 = smul.addr %s248, 4
      %s250 = smul.addr %s249, 4
      %s251 = scalar_lea.vmem %s2, %s250
      %p252 = pneg %p90
      %p253 = pneg %p87
      %s254 = smul.u32 16, %s17
      %p255 = scmp.lt.s32.totalorder %s254, 31
      %s256 = scalar_select %p255, %s254, 31
      %s257 = smul.addr %s256, 4
      %s258 = smul.addr %s257, 4
      %s259 = scalar_lea.vmem %s3, %s258
      %p260 = pneg %p116
      %p261 = pneg %p113
      %p262 = pneg %p142
      %p263 = pneg %p139
      %s264 = smul.u32 16, %s17
      %p265 = scmp.lt.s32.totalorder %s264, 31
      %s266 = scalar_select %p265, %s264, 31
      %s267 = smul.addr %s266, 2
      %s268 = scalar_lea.vmem %s4, %s267
      %p269 = pneg %p168
      %p270 = pneg %p165
      %s271 = smul.u32 16, %s17
      %p272 = scmp.lt.s32.totalorder %s271, 31
      %s273 = scalar_select %p272, %s271, 31
      %s274 = smul.addr %s273, 2
      %s275 = scalar_lea.vmem %s5, %s274
      %s276 = smul.u32 16, %s17
      %p277 = scmp.lt.s32.totalorder %s276, 31
      %s278 = scalar_select %p277, %s276, 31
      %s279 = smul.addr %s278, 2
      %s280 = scalar_lea.vmem %s0, %s279
      %s281 = smul.u32 16, %s17
      %s282 = smul.u32 16, %s17
      %p283 = scmp.lt.s32.totalorder %s282, 31
      %s284 = scalar_select %p283, %s282, 31
      %s285 = smul.addr %s284, 2
      %s286 = scalar_lea.vmem %s1, %s285
      %s287 = smul.u32 16, %s17
      %s288 = smul.u32 16, %s17
      %p289 = scmp.lt.s32.totalorder %s288, 31
      %s290 = scalar_select %p289, %s288, 31
      %s291 = smul.addr %s290, 4
      %s292 = smul.addr %s291, 4
      %s293 = scalar_lea.vmem %s2, %s292
      %s294 = smul.u32 16, %s17
      %s295 = smul.u32 16, %s17
      %p296 = scmp.lt.s32.totalorder %s295, 31
      %s297 = scalar_select %p296, %s295, 31
      %s298 = smul.addr %s297, 4
      %s299 = smul.addr %s298, 4
      %s300 = scalar_lea.vmem %s3, %s299
      %s301 = smul.u32 16, %s17
      %s302 = smul.u32 16, %s17
      %p303 = scmp.lt.s32.totalorder %s302, 31
      %s304 = scalar_select %p303, %s302, 31
      %s305 = smul.addr %s304, 2
      %s306 = scalar_lea.vmem %s4, %s305
      %s307 = smul.u32 16, %s17
      %s308 = smul.u32 16, %s17
      %p309 = scmp.lt.s32.totalorder %s308, 31
      %s310 = scalar_select %p309, %s308, 31
      %s311 = smul.addr %s310, 2
      %s312 = scalar_lea.vmem %s5, %s311
      %s313 = smul.u32 16, %s17
      %v315 = vld [vmem:[%s280] sm:$0x3]
      %v316 = vld [vmem:[%s280 + $0x2] sm:$0x3]
      %v317 = vld [vmem:[%s280 + $0x4] sm:$0x3]
      %v318 = vld [vmem:[%s280 + $0x6] sm:$0x3]
      %v319 = vld [vmem:[%s280 + $0x8] sm:$0x3]
      %v320 = vld [vmem:[%s280 + $0xa] sm:$0x3]
      %v321 = vld [vmem:[%s280 + $0xc] sm:$0x3]
      %v322 = vld [vmem:[%s280 + $0xe] sm:$0x3]
      %v323 = vld [vmem:[%s280 + $0x10] sm:$0x3]
      %v324 = vld [vmem:[%s280 + $0x12] sm:$0x3]
      %v325 = vld [vmem:[%s280 + $0x14] sm:$0x3]
      %v326 = vld [vmem:[%s280 + $0x16] sm:$0x3]
      %v327 = vld [vmem:[%s280 + $0x18] sm:$0x3]
      %v328 = vld [vmem:[%s280 + $0x1a] sm:$0x3]
      %v329 = vld [vmem:[%s280 + $0x1c] sm:$0x3]
      %v330 = vld [vmem:[%s280 + $0x1e] sm:$0x3]
      %v331 = vpack.c.bf16 %v315, %v315
      %v332 = vpack.c.bf16 %v316, %v316
      %v333 = vpack.c.bf16 %v317, %v317
      %v334 = vpack.c.bf16 %v318, %v318
      %v335 = vpack.c.bf16 %v319, %v319
      %v336 = vpack.c.bf16 %v320, %v320
      %v337 = vpack.c.bf16 %v321, %v321
      %v338 = vpack.c.bf16 %v322, %v322
      %v339 = vpack.c.bf16 %v323, %v323
      %v340 = vpack.c.bf16 %v324, %v324
      %v341 = vpack.c.bf16 %v325, %v325
      %v342 = vpack.c.bf16 %v326, %v326
      %v343 = vpack.c.bf16 %v327, %v327
      %v344 = vpack.c.bf16 %v328, %v328
      %v345 = vpack.c.bf16 %v329, %v329
      %v346 = vpack.c.bf16 %v330, %v330
      %v347 = vld [vmem:[%s286] sm:$0x3]
      %v348 = vld [vmem:[%s286 + $0x2] sm:$0x3]
      %v349 = vld [vmem:[%s286 + $0x4] sm:$0x3]
      %v350 = vld [vmem:[%s286 + $0x6] sm:$0x3]
      %v351 = vld [vmem:[%s286 + $0x8] sm:$0x3]
      %v352 = vld [vmem:[%s286 + $0xa] sm:$0x3]
      %v353 = vld [vmem:[%s286 + $0xc] sm:$0x3]
      %v354 = vld [vmem:[%s286 + $0xe] sm:$0x3]
      %v355 = vld [vmem:[%s286 + $0x10] sm:$0x3]
      %v356 = vld [vmem:[%s286 + $0x12] sm:$0x3]
      %v357 = vld [vmem:[%s286 + $0x14] sm:$0x3]
      %v358 = vld [vmem:[%s286 + $0x16] sm:$0x3]
      %v359 = vld [vmem:[%s286 + $0x18] sm:$0x3]
      %v360 = vld [vmem:[%s286 + $0x1a] sm:$0x3]
      %v361 = vld [vmem:[%s286 + $0x1c] sm:$0x3]
      %v362 = vld [vmem:[%s286 + $0x1e] sm:$0x3]
      %v363 = vpack.c.bf16 %v347, %v347
      %v364 = vpack.c.bf16 %v348, %v348
      %v365 = vpack.c.bf16 %v349, %v349
      %v366 = vpack.c.bf16 %v350, %v350
      %v367 = vpack.c.bf16 %v351, %v351
      %v368 = vpack.c.bf16 %v352, %v352
      %v369 = vpack.c.bf16 %v353, %v353
      %v370 = vpack.c.bf16 %v354, %v354
      %v371 = vpack.c.bf16 %v355, %v355
      %v372 = vpack.c.bf16 %v356, %v356
      %v373 = vpack.c.bf16 %v357, %v357
      %v374 = vpack.c.bf16 %v358, %v358
      %v375 = vpack.c.bf16 %v359, %v359
      %v376 = vpack.c.bf16 %v360, %v360
      %v377 = vpack.c.bf16 %v361, %v361
      %v378 = vpack.c.bf16 %v362, %v362
      %v379 = vld [vmem:[%s293] sm:$0xf]
      %v380 = vld [vmem:[%s293 + $0x4] sm:$0xf]
      %v381 = vld [vmem:[%s293 + $0x8] sm:$0xf]
      %v382 = vld [vmem:[%s293 + $0xc] sm:$0xf]
      %v383 = vld [vmem:[%s293 + $0x10] sm:$0xf]
      %v384 = vld [vmem:[%s293 + $0x14] sm:$0xf]
      %v385 = vld [vmem:[%s293 + $0x18] sm:$0xf]
      %v386 = vld [vmem:[%s293 + $0x1c] sm:$0xf]
      %v387 = vld [vmem:[%s293 + $0x20] sm:$0xf]
      %v388 = vld [vmem:[%s293 + $0x24] sm:$0xf]
      %v389 = vld [vmem:[%s293 + $0x28] sm:$0xf]
      %v390 = vld [vmem:[%s293 + $0x2c] sm:$0xf]
      %v391 = vld [vmem:[%s293 + $0x30] sm:$0xf]
      %v392 = vld [vmem:[%s293 + $0x34] sm:$0xf]
      %v393 = vld [vmem:[%s293 + $0x38] sm:$0xf]
      %v394 = vld [vmem:[%s293 + $0x3c] sm:$0xf]
      %v395 = vld [vmem:[%s293 + $0x40] sm:$0xf]
      %v396 = vld [vmem:[%s293 + $0x44] sm:$0xf]
      %v397 = vld [vmem:[%s293 + $0x48] sm:$0xf]
      %v398 = vld [vmem:[%s293 + $0x4c] sm:$0xf]
      %v399 = vld [vmem:[%s293 + $0x50] sm:$0xf]
      %v400 = vld [vmem:[%s293 + $0x54] sm:$0xf]
      %v401 = vld [vmem:[%s293 + $0x58] sm:$0xf]
      %v402 = vld [vmem:[%s293 + $0x5c] sm:$0xf]
      %v403 = vld [vmem:[%s293 + $0x60] sm:$0xf]
      %v404 = vld [vmem:[%s293 + $0x64] sm:$0xf]
      %v405 = vld [vmem:[%s293 + $0x68] sm:$0xf]
      %v406 = vld [vmem:[%s293 + $0x6c] sm:$0xf]
      %v407 = vld [vmem:[%s293 + $0x70] sm:$0xf]
      %v408 = vld [vmem:[%s293 + $0x74] sm:$0xf]
      %v409 = vld [vmem:[%s293 + $0x78] sm:$0xf]
      %v410 = vld [vmem:[%s293 + $0x7c] sm:$0xf]
      %v411 = vld [vmem:[%s293 + $0x80] sm:$0xf]
      %v412 = vld [vmem:[%s293 + $0x84] sm:$0xf]
      %v413 = vld [vmem:[%s293 + $0x88] sm:$0xf]
      %v414 = vld [vmem:[%s293 + $0x8c] sm:$0xf]
      %v415 = vld [vmem:[%s293 + $0x90] sm:$0xf]
      %v416 = vld [vmem:[%s293 + $0x94] sm:$0xf]
      %v417 = vld [vmem:[%s293 + $0x98] sm:$0xf]
      %v418 = vld [vmem:[%s293 + $0x9c] sm:$0xf]
      %v419 = vld [vmem:[%s293 + $0xa0] sm:$0xf]
      %v420 = vld [vmem:[%s293 + $0xa4] sm:$0xf]
      %v421 = vld [vmem:[%s293 + $0xa8] sm:$0xf]
      %v422 = vld [vmem:[%s293 + $0xac] sm:$0xf]
      %v423 = vld [vmem:[%s293 + $0xb0] sm:$0xf]
      %v424 = vld [vmem:[%s293 + $0xb4] sm:$0xf]
      %v425 = vld [vmem:[%s293 + $0xb8] sm:$0xf]
      %v426 = vld [vmem:[%s293 + $0xbc] sm:$0xf]
      %v427 = vld [vmem:[%s293 + $0xc0] sm:$0xf]
      %v428 = vld [vmem:[%s293 + $0xc4] sm:$0xf]
      %v429 = vld [vmem:[%s293 + $0xc8] sm:$0xf]
      %v430 = vld [vmem:[%s293 + $0xcc] sm:$0xf]
      %v431 = vld [vmem:[%s293 + $0xd0] sm:$0xf]
      %v432 = vld [vmem:[%s293 + $0xd4] sm:$0xf]
      %v433 = vld [vmem:[%s293 + $0xd8] sm:$0xf]
      %v434 = vld [vmem:[%s293 + $0xdc] sm:$0xf]
      %v435 = vld [vmem:[%s293 + $0xe0] sm:$0xf]
      %v436 = vld [vmem:[%s293 + $0xe4] sm:$0xf]
      %v437 = vld [vmem:[%s293 + $0xe8] sm:$0xf]
      %v438 = vld [vmem:[%s293 + $0xec] sm:$0xf]
      %v439 = vld [vmem:[%s293 + $0xf0] sm:$0xf]
      %v440 = vld [vmem:[%s293 + $0xf4] sm:$0xf]
      %v441 = vld [vmem:[%s293 + $0xf8] sm:$0xf]
      %v442 = vld [vmem:[%s293 + $0xfc] sm:$0xf]
      %v443 = vld [vmem:[%s300] sm:$0xf]
      %v444 = vld [vmem:[%s300 + $0x4] sm:$0xf]
      %v445 = vld [vmem:[%s300 + $0x8] sm:$0xf]
      %v446 = vld [vmem:[%s300 + $0xc] sm:$0xf]
      %v447 = vld [vmem:[%s300 + $0x10] sm:$0xf]
      %v448 = vld [vmem:[%s300 + $0x14] sm:$0xf]
      %v449 = vld [vmem:[%s300 + $0x18] sm:$0xf]
      %v450 = vld [vmem:[%s300 + $0x1c] sm:$0xf]
      %v451 = vld [vmem:[%s300 + $0x20] sm:$0xf]
      %v452 = vld [vmem:[%s300 + $0x24] sm:$0xf]
      %v453 = vld [vmem:[%s300 + $0x28] sm:$0xf]
      %v454 = vld [vmem:[%s300 + $0x2c] sm:$0xf]
      %v455 = vld [vmem:[%s300 + $0x30] sm:$0xf]
      %v456 = vld [vmem:[%s300 + $0x34] sm:$0xf]
      %v457 = vld [vmem:[%s300 + $0x38] sm:$0xf]
      %v458 = vld [vmem:[%s300 + $0x3c] sm:$0xf]
      %v459 = vld [vmem:[%s300 + $0x40] sm:$0xf]
      %v460 = vld [vmem:[%s300 + $0x44] sm:$0xf]
      %v461 = vld [vmem:[%s300 + $0x48] sm:$0xf]
      %v462 = vld [vmem:[%s300 + $0x4c] sm:$0xf]
      %v463 = vld [vmem:[%s300 + $0x50] sm:$0xf]
      %v464 = vld [vmem:[%s300 + $0x54] sm:$0xf]
      %v465 = vld [vmem:[%s300 + $0x58] sm:$0xf]
      %v466 = vld [vmem:[%s300 + $0x5c] sm:$0xf]
      %v467 = vld [vmem:[%s300 + $0x60] sm:$0xf]
      %v468 = vld [vmem:[%s300 + $0x64] sm:$0xf]
      %v469 = vld [vmem:[%s300 + $0x68] sm:$0xf]
      %v470 = vld [vmem:[%s300 + $0x6c] sm:$0xf]
      %v471 = vld [vmem:[%s300 + $0x70] sm:$0xf]
      %v472 = vld [vmem:[%s300 + $0x74] sm:$0xf]
      %v473 = vld [vmem:[%s300 + $0x78] sm:$0xf]
      %v474 = vld [vmem:[%s300 + $0x7c] sm:$0xf]
      %v475 = vld [vmem:[%s300 + $0x80] sm:$0xf]
      %v476 = vld [vmem:[%s300 + $0x84] sm:$0xf]
      %v477 = vld [vmem:[%s300 + $0x88] sm:$0xf]
      %v478 = vld [vmem:[%s300 + $0x8c] sm:$0xf]
      %v479 = vld [vmem:[%s300 + $0x90] sm:$0xf]
      %v480 = vld [vmem:[%s300 + $0x94] sm:$0xf]
      %v481 = vld [vmem:[%s300 + $0x98] sm:$0xf]
      %v482 = vld [vmem:[%s300 + $0x9c] sm:$0xf]
      %v483 = vld [vmem:[%s300 + $0xa0] sm:$0xf]
      %v484 = vld [vmem:[%s300 + $0xa4] sm:$0xf]
      %v485 = vld [vmem:[%s300 + $0xa8] sm:$0xf]
      %v486 = vld [vmem:[%s300 + $0xac] sm:$0xf]
      %v487 = vld [vmem:[%s300 + $0xb0] sm:$0xf]
      %v488 = vld [vmem:[%s300 + $0xb4] sm:$0xf]
      %v489 = vld [vmem:[%s300 + $0xb8] sm:$0xf]
      %v490 = vld [vmem:[%s300 + $0xbc] sm:$0xf]
      %v491 = vld [vmem:[%s300 + $0xc0] sm:$0xf]
      %v492 = vld [vmem:[%s300 + $0xc4] sm:$0xf]
      %v493 = vld [vmem:[%s300 + $0xc8] sm:$0xf]
      %v494 = vld [vmem:[%s300 + $0xcc] sm:$0xf]
      %v495 = vld [vmem:[%s300 + $0xd0] sm:$0xf]
      %v496 = vld [vmem:[%s300 + $0xd4] sm:$0xf]
      %v497 = vld [vmem:[%s300 + $0xd8] sm:$0xf]
      %v498 = vld [vmem:[%s300 + $0xdc] sm:$0xf]
      %v499 = vld [vmem:[%s300 + $0xe0] sm:$0xf]
      %v500 = vld [vmem:[%s300 + $0xe4] sm:$0xf]
      %v501 = vld [vmem:[%s300 + $0xe8] sm:$0xf]
      %v502 = vld [vmem:[%s300 + $0xec] sm:$0xf]
      %v503 = vld [vmem:[%s300 + $0xf0] sm:$0xf]
      %v504 = vld [vmem:[%s300 + $0xf4] sm:$0xf]
      %v505 = vld [vmem:[%s300 + $0xf8] sm:$0xf]
      %v506 = vld [vmem:[%s300 + $0xfc] sm:$0xf]
      %v511 = vunpack.c.l.b16 %v379
      %v512 = vunpack.c.l.b16 %v380
      %v513 = vunpack.c.l.b16 %v381
      %v514 = vunpack.c.l.b16 %v382
      %v515 = vpack.c.b16 %v512, %v511
      %v516 = vpack.c.b16 %v514, %v513
      %vm519 = vcmask 261120
      %v521 = vsel %vm519, %v331, 0
      %523 = vmatprep.subr.bf16.mxu0 0
      %524 = vmatpush1.bf16.msra.mxu0 %v515
      %525 = vmatprep.subr.bf16.mxu0 0
      %526 = vmatpush1.bf16.msra.mxu0 %v516
      %527 = vmatprep.subr.bf16.mxu0 0
      %528 = vmatpush1.bf16.msra.mxu0 0
      %529 = vmatprep.subr.bf16.mxu0 0
      %530 = vmatpush1.bf16.msra.mxu0 0
      %531 = vmatprep.subr.bf16.mxu0 0
      %532 = vmatpush1.bf16.msra.mxu0 0
      %533 = vmatprep.subr.bf16.mxu0 0
      %534 = vmatpush1.bf16.msra.mxu0 0
      %535 = vmatprep.subr.bf16.mxu0 0
      %536 = vmatpush1.bf16.msra.mxu0 0
      %537 = vmatprep.subr.bf16.mxu0 0
      %538 = vmatpush1.bf16.msra.mxu0 0
      %539 = vmatprep.subr.bf16.mxu0 0
      %540 = vmatpush1.bf16.msra.mxu0 0
      %541 = vmatprep.subr.bf16.mxu0 0
      %542 = vmatpush1.bf16.msra.mxu0 0
      %543 = vmatprep.subr.bf16.mxu0 0
      %544 = vmatpush1.bf16.msra.mxu0 0
      %545 = vmatprep.subr.bf16.mxu0 0
      %546 = vmatpush1.bf16.msra.mxu0 0
      %547 = vmatprep.subr.bf16.mxu0 0
      %548 = vmatpush1.bf16.msra.mxu0 0
      %549 = vmatprep.subr.bf16.mxu0 0
      %550 = vmatpush1.bf16.msra.mxu0 0
      %551 = vmatprep.subr.bf16.mxu0 0
      %552 = vmatpush1.bf16.msra.mxu0 0
      %553 = vmatprep.subr.bf16.mxu0 0
      %554 = vmatpush1.bf16.msra.mxu0 0
      %555 = vmatprep.mubr.bf16.mxu0 0
      %556 = vmatmul.mubr.bf16.gmra.mrb[0].mxu0 %v521
      %v557 = vpop.f32.mrb[0].mxu0
      %v558 = vadd.f32 0.0, %v557
      %v559 = vpop.f32.mrb[0].mxu0
      %v560 = vpop.f32.mrb[0].mxu0
      %v561 = vpop.f32.mrb[0].mxu0
      %562 = vdwg.mxu0
      %v567 = vunpack.c.l.b16 %v383
      %v568 = vunpack.c.l.b16 %v384
      %v569 = vunpack.c.l.b16 %v385
      %v570 = vunpack.c.l.b16 %v386
      %v571 = vpack.c.b16 %v568, %v567
      %v572 = vpack.c.b16 %v570, %v569
      %v576 = vsel %vm519, %v332, 0
      %578 = vmatprep.subr.bf16.mxu0 0
      %579 = vmatpush1.bf16.msra.mxu0 %v571
      %580 = vmatprep.subr.bf16.mxu0 0
      %581 = vmatpush1.bf16.msra.mxu0 %v572
      %582 = vmatprep.subr.bf16.mxu0 0
      %583 = vmatpush1.bf16.msra.mxu0 0
      %584 = vmatprep.subr.bf16.mxu0 0
      %585 = vmatpush1.bf16.msra.mxu0 0
      %586 = vmatprep.subr.bf16.mxu0 0
      %587 = vmatpush1.bf16.msra.mxu0 0
      %588 = vmatprep.subr.bf16.mxu0 0
      %589 = vmatpush1.bf16.msra.mxu0 0
      %590 = vmatprep.subr.bf16.mxu0 0
      %591 = vmatpush1.bf16.msra.mxu0 0
      %592 = vmatprep.subr.bf16.mxu0 0
      %593 = vmatpush1.bf16.msra.mxu0 0
      %594 = vmatprep.subr.bf16.mxu0 0
      %595 = vmatpush1.bf16.msra.mxu0 0
      %596 = vmatprep.subr.bf16.mxu0 0
      %597 = vmatpush1.bf16.msra.mxu0 0
      %598 = vmatprep.subr.bf16.mxu0 0
      %599 = vmatpush1.bf16.msra.mxu0 0
      %600 = vmatprep.subr.bf16.mxu0 0
      %601 = vmatpush1.bf16.msra.mxu0 0
      %602 = vmatprep.subr.bf16.mxu0 0
      %603 = vmatpush1.bf16.msra.mxu0 0
      %604 = vmatprep.subr.bf16.mxu0 0
      %605 = vmatpush1.bf16.msra.mxu0 0
      %606 = vmatprep.subr.bf16.mxu0 0
      %607 = vmatpush1.bf16.msra.mxu0 0
      %608 = vmatprep.subr.bf16.mxu0 0
      %609 = vmatpush1.bf16.msra.mxu0 0
      %610 = vmatprep.mubr.bf16.mxu0 0
      %611 = vmatmul.mubr.bf16.gmra.mrb[0].mxu0 %v576
      %v612 = vpop.f32.mrb[0].mxu0
      %v613 = vadd.f32 0.0, %v612
      %v614 = vpop.f32.mrb[0].mxu0
      %v615 = vpop.f32.mrb[0].mxu0
      %v616 = vpop.f32.mrb[0].mxu0
      %617 = vdwg.mxu0
      %v622 = vunpack.c.l.b16 %v387
      %v623 = vunpack.c.l.b16 %v388
      %v624 = vunpack.c.l.b16 %v389
      %v625 = vunpack.c.l.b16 %v390
      %v626 = vpack.c.b16 %v623, %v622
      %v627 = vpack.c.b16 %v625, %v624
      %v631 = vsel %vm519, %v333, 0
      %633 = vmatprep.subr.bf16.mxu0 0
      %634 = vmatpush1.bf16.msra.mxu0 %v626
      %635 = vmatprep.subr.bf16.mxu0 0
      %636 = vmatpush1.bf16.msra.mxu0 %v627
      %637 = vmatprep.subr.bf16.mxu0 0
      %638 = vmatpush1.bf16.msra.mxu0 0
      %639 = vmatprep.subr.bf16.mxu0 0
      %640 = vmatpush1.bf16.msra.mxu0 0
      %641 = vmatprep.subr.bf16.mxu0 0
      %642 = vmatpush1.bf16.msra.mxu0 0
      %643 = vmatprep.subr.bf16.mxu0 0
      %644 = vmatpush1.bf16.msra.mxu0 0
      %645 = vmatprep.subr.bf16.mxu0 0
      %646 = vmatpush1.bf16.msra.mxu0 0
      %647 = vmatprep.subr.bf16.mxu0 0
      %648 = vmatpush1.bf16.msra.mxu0 0
      %649 = vmatprep.subr.bf16.mxu0 0
      %650 = vmatpush1.bf16.msra.mxu0 0
      %651 = vmatprep.subr.bf16.mxu0 0
      %652 = vmatpush1.bf16.msra.mxu0 0
      %653 = vmatprep.subr.bf16.mxu0 0
      %654 = vmatpush1.bf16.msra.mxu0 0
      %655 = vmatprep.subr.bf16.mxu0 0
      %656 = vmatpush1.bf16.msra.mxu0 0
      %657 = vmatprep.subr.bf16.mxu0 0
      %658 = vmatpush1.bf16.msra.mxu0 0
      %659 = vmatprep.subr.bf16.mxu0 0
      %660 = vmatpush1.bf16.msra.mxu0 0
      %661 = vmatprep.subr.bf16.mxu0 0
      %662 = vmatpush1.bf16.msra.mxu0 0
      %663 = vmatprep.subr.bf16.mxu0 0
      %664 = vmatpush1.bf16.msra.mxu0 0
      %665 = vmatprep.mubr.bf16.mxu0 0
      %666 = vmatmul.mubr.bf16.gmra.mrb[0].mxu0 %v631
      %v667 = vpop.f32.mrb[0].mxu0
      %v668 = vadd.f32 0.0, %v667
      %v669 = vpop.f32.mrb[0].mxu0
      %v670 = vpop.f32.mrb[0].mxu0
      %v671 = vpop.f32.mrb[0].mxu0
      %672 = vdwg.mxu0
      %v677 = vunpack.c.l.b16 %v391
      %v678 = vunpack.c.l.b16 %v392
      %v679 = vunpack.c.l.b16 %v393
      %v680 = vunpack.c.l.b16 %v394
      %v681 = vpack.c.b16 %v678, %v677
      %v682 = vpack.c.b16 %v680, %v679
      %v686 = vsel %vm519, %v334, 0
      %688 = vmatprep.subr.bf16.mxu0 0
      %689 = vmatpush1.bf16.msra.mxu0 %v681
      %690 = vmatprep.subr.bf16.mxu0 0
      %691 = vmatpush1.bf16.msra.mxu0 %v682
      %692 = vmatprep.subr.bf16.mxu0 0
      %693 = vmatpush1.bf16.msra.mxu0 0
      %694 = vmatprep.subr.bf16.mxu0 0
      %695 = vmatpush1.bf16.msra.mxu0 0
      %696 = vmatprep.subr.bf16.mxu0 0
      %697 = vmatpush1.bf16.msra.mxu0 0
      %698 = vmatprep.subr.bf16.mxu0 0
      %699 = vmatpush1.bf16.msra.mxu0 0
      %700 = vmatprep.subr.bf16.mxu0 0
      %701 = vmatpush1.bf16.msra.mxu0 0
      %702 = vmatprep.subr.bf16.mxu0 0
      %703 = vmatpush1.bf16.msra.mxu0 0
      %704 = vmatprep.subr.bf16.mxu0 0
      %705 = vmatpush1.bf16.msra.mxu0 0
      %706 = vmatprep.subr.bf16.mxu0 0
      %707 = vmatpush1.bf16.msra.mxu0 0
      %708 = vmatprep.subr.bf16.mxu0 0
      %709 = vmatpush1.bf16.msra.mxu0 0
      %710 = vmatprep.subr.bf16.mxu0 0
      %711 = vmatpush1.bf16.msra.mxu0 0
      %712 = vmatprep.subr.bf16.mxu0 0
      %713 = vmatpush1.bf16.msra.mxu0 0
      %714 = vmatprep.subr.bf16.mxu0 0
      %715 = vmatpush1.bf16.msra.mxu0 0
      %716 = vmatprep.subr.bf16.mxu0 0
      %717 = vmatpush1.bf16.msra.mxu0 0
      %718 = vmatprep.subr.bf16.mxu0 0
      %719 = vmatpush1.bf16.msra.mxu0 0
      %720 = vmatprep.mubr.bf16.mxu0 0
      %721 = vmatmul.mubr.bf16.gmra.mrb[0].mxu0 %v686
      %v722 = vpop.f32.mrb[0].mxu0
      %v723 = vadd.f32 0.0, %v722
      %v724 = vpop.f32.mrb[0].mxu0
      %v725 = vpop.f32.mrb[0].mxu0
      %v726 = vpop.f32.mrb[0].mxu0
      %727 = vdwg.mxu0
      %v732 = vunpack.c.l.b16 %v395
      %v733 = vunpack.c.l.b16 %v396
      %v734 = vunpack.c.l.b16 %v397
      %v735 = vunpack.c.l.b16 %v398
      %v736 = vpack.c.b16 %v733, %v732
      %v737 = vpack.c.b16 %v735, %v734
      %v741 = vsel %vm519, %v335, 0
      %743 = vmatprep.subr.bf16.mxu0 0
      %744 = vmatpush1.bf16.msra.mxu0 %v736
      %745 = vmatprep.subr.bf16.mxu0 0
      %746 = vmatpush1.bf16.msra.mxu0 %v737
      %747 = vmatprep.subr.bf16.mxu0 0
      %748 = vmatpush1.bf16.msra.mxu0 0
      %749 = vmatprep.subr.bf16.mxu0 0
      %750 = vmatpush1.bf16.msra.mxu0 0
      %751 = vmatprep.subr.bf16.mxu0 0
      %752 = vmatpush1.bf16.msra.mxu0 0
      %753 = vmatprep.subr.bf16.mxu0 0
      %754 = vmatpush1.bf16.msra.mxu0 0
      %755 = vmatprep.subr.bf16.mxu0 0
      %756 = vmatpush1.bf16.msra.mxu0 0
      %757 = vmatprep.subr.bf16.mxu0 0
      %758 = vmatpush1.bf16.msra.mxu0 0
      %759 = vmatprep.subr.bf16.mxu0 0
      %760 = vmatpush1.bf16.msra.mxu0 0
      %761 = vmatprep.subr.bf16.mxu0 0
      %762 = vmatpush1.bf16.msra.mxu0 0
      %763 = vmatprep.subr.bf16.mxu0 0
      %764 = vmatpush1.bf16.msra.mxu0 0
      %765 = vmatprep.subr.bf16.mxu0 0
      %766 = vmatpush1.bf16.msra.mxu0 0
      %767 = vmatprep.subr.bf16.mxu0 0
      %768 = vmatpush1.bf16.msra.mxu0 0
      %769 = vmatprep.subr.bf16.mxu0 0
      %770 = vmatpush1.bf16.msra.mxu0 0
      %771 = vmatprep.subr.bf16.mxu0 0
      %772 = vmatpush1.bf16.msra.mxu0 0
      %773 = vmatprep.subr.bf16.mxu0 0
      %774 = vmatpush1.bf16.msra.mxu0 0
      %775 = vmatprep.mubr.bf16.mxu0 0
      %776 = vmatmul.mubr.bf16.gmra.mrb[0].mxu0 %v741
      %v777 = vpop.f32.mrb[0].mxu0
      %v778 = vadd.f32 0.0, %v777
      %v779 = vpop.f32.mrb[0].mxu0
      %v780 = vpop.f32.mrb[0].mxu0
      %v781 = vpop.f32.mrb[0].mxu0
      %782 = vdwg.mxu0
      %v787 = vunpack.c.l.b16 %v399
      %v788 = vunpack.c.l.b16 %v400
      %v789 = vunpack.c.l.b16 %v401
      %v790 = vunpack.c.l.b16 %v402
      %v791 = vpack.c.b16 %v788, %v787
      %v792 = vpack.c.b16 %v790, %v789
      %v796 = vsel %vm519, %v336, 0
      %798 = vmatprep.subr.bf16.mxu0 0
      %799 = vmatpush1.bf16.msra.mxu0 %v791
      %800 = vmatprep.subr.bf16.mxu0 0
      %801 = vmatpush1.bf16.msra.mxu0 %v792
      %802 = vmatprep.subr.bf16.mxu0 0
      %803 = vmatpush1.bf16.msra.mxu0 0
      %804 = vmatprep.subr.bf16.mxu0 0
      %805 = vmatpush1.bf16.msra.mxu0 0
      %806 = vmatprep.subr.bf16.mxu0 0
      %807 = vmatpush1.bf16.msra.mxu0 0
      %808 = vmatprep.subr.bf16.mxu0 0
      %809 = vmatpush1.bf16.msra.mxu0 0
      %810 = vmatprep.subr.bf16.mxu0 0
      %811 = vmatpush1.bf16.msra.mxu0 0
      %812 = vmatprep.subr.bf16.mxu0 0
      %813 = vmatpush1.bf16.msra.mxu0 0
      %814 = vmatprep.subr.bf16.mxu0 0
      %815 = vmatpush1.bf16.msra.mxu0 0
      %816 = vmatprep.subr.bf16.mxu0 0
      %817 = vmatpush1.bf16.msra.mxu0 0
      %818 = vmatprep.subr.bf16.mxu0 0
      %819 = vmatpush1.bf16.msra.mxu0 0
      %820 = vmatprep.subr.bf16.mxu0 0
      %821 = vmatpush1.bf16.msra.mxu0 0
      %822 = vmatprep.subr.bf16.mxu0 0
      %823 = vmatpush1.bf16.msra.mxu0 0
      %824 = vmatprep.subr.bf16.mxu0 0
      %825 = vmatpush1.bf16.msra.mxu0 0
      %826 = vmatprep.subr.bf16.mxu0 0
      %827 = vmatpush1.bf16.msra.mxu0 0
      %828 = vmatprep.subr.bf16.mxu0 0
      %829 = vmatpush1.bf16.msra.mxu0 0
      %830 = vmatprep.mubr.bf16.mxu0 0
      %831 = vmatmul.mubr.bf16.gmra.mrb[0].mxu0 %v796
      %v832 = vpop.f32.mrb[0].mxu0
      %v833 = vadd.f32 0.0, %v832
      %v834 = vpop.f32.mrb[0].mxu0
      %v835 = vpop.f32.mrb[0].mxu0
      %v836 = vpop.f32.mrb[0].mxu0
      %837 = vdwg.mxu0
      %v842 = vunpack.c.l.b16 %v403
      %v843 = vunpack.c.l.b16 %v404
      %v844 = vunpack.c.l.b16 %v405
      %v845 = vunpack.c.l.b16 %v406
      %v846 = vpack.c.b16 %v843, %v842
      %v847 = vpack.c.b16 %v845, %v844
      %v851 = vsel %vm519, %v337, 0
      %853 = vmatprep.subr.bf16.mxu0 0
      %854 = vmatpush1.bf16.msra.mxu0 %v846
      %855 = vmatprep.subr.bf16.mxu0 0
      %856 = vmatpush1.bf16.msra.mxu0 %v847
      %857 = vmatprep.subr.bf16.mxu0 0
      %858 = vmatpush1.bf16.msra.mxu0 0
      %859 = vmatprep.subr.bf16.mxu0 0
      %860 = vmatpush1.bf16.msra.mxu0 0
      %861 = vmatprep.subr.bf16.mxu0 0
      %862 = vmatpush1.bf16.msra.mxu0 0
      %863 = vmatprep.subr.bf16.mxu0 0
      %864 = vmatpush1.bf16.msra.mxu0 0
      %865 = vmatprep.subr.bf16.mxu0 0
      %866 = vmatpush1.bf16.msra.mxu0 0
      %867 = vmatprep.subr.bf16.mxu0 0
      %868 = vmatpush1.bf16.msra.mxu0 0
      %869 = vmatprep.subr.bf16.mxu0 0
      %870 = vmatpush1.bf16.msra.mxu0 0
      %871 = vmatprep.subr.bf16.mxu0 0
      %872 = vmatpush1.bf16.msra.mxu0 0
      %873 = vmatprep.subr.bf16.mxu0 0
      %874 = vmatpush1.bf16.msra.mxu0 0
      %875 = vmatprep.subr.bf16.mxu0 0
      %876 = vmatpush1.bf16.msra.mxu0 0
      %877 = vmatprep.subr.bf16.mxu0 0
      %878 = vmatpush1.bf16.msra.mxu0 0
      %879 = vmatprep.subr.bf16.mxu0 0
      %880 = vmatpush1.bf16.msra.mxu0 0
      %881 = vmatprep.subr.bf16.mxu0 0
      %882 = vmatpush1.bf16.msra.mxu0 0
      %883 = vmatprep.subr.bf16.mxu0 0
      %884 = vmatpush1.bf16.msra.mxu0 0
      %885 = vmatprep.mubr.bf16.mxu0 0
      %886 = vmatmul.mubr.bf16.gmra.mrb[0].mxu0 %v851
      %v887 = vpop.f32.mrb[0].mxu0
      %v888 = vadd.f32 0.0, %v887
      %v889 = vpop.f32.mrb[0].mxu0
      %v890 = vpop.f32.mrb[0].mxu0
      %v891 = vpop.f32.mrb[0].mxu0
      %892 = vdwg.mxu0
      %v897 = vunpack.c.l.b16 %v407
      %v898 = vunpack.c.l.b16 %v408
      %v899 = vunpack.c.l.b16 %v409
      %v900 = vunpack.c.l.b16 %v410
      %v901 = vpack.c.b16 %v898, %v897
      %v902 = vpack.c.b16 %v900, %v899
      %v906 = vsel %vm519, %v338, 0
      %908 = vmatprep.subr.bf16.mxu0 0
      %909 = vmatpush1.bf16.msra.mxu0 %v901
      %910 = vmatprep.subr.bf16.mxu0 0
      %911 = vmatpush1.bf16.msra.mxu0 %v902
      %912 = vmatprep.subr.bf16.mxu0 0
      %913 = vmatpush1.bf16.msra.mxu0 0
      %914 = vmatprep.subr.bf16.mxu0 0
      %915 = vmatpush1.bf16.msra.mxu0 0
      %916 = vmatprep.subr.bf16.mxu0 0
      %917 = vmatpush1.bf16.msra.mxu0 0
      %918 = vmatprep.subr.bf16.mxu0 0
      %919 = vmatpush1.bf16.msra.mxu0 0
      %920 = vmatprep.subr.bf16.mxu0 0
      %921 = vmatpush1.bf16.msra.mxu0 0
      %922 = vmatprep.subr.bf16.mxu0 0
      %923 = vmatpush1.bf16.msra.mxu0 0
      %924 = vmatprep.subr.bf16.mxu0 0
      %925 = vmatpush1.bf16.msra.mxu0 0
      %926 = vmatprep.subr.bf16.mxu0 0
      %927 = vmatpush1.bf16.msra.mxu0 0
      %928 = vmatprep.subr.bf16.mxu0 0
      %929 = vmatpush1.bf16.msra.mxu0 0
      %930 = vmatprep.subr.bf16.mxu0 0
      %931 = vmatpush1.bf16.msra.mxu0 0
      %932 = vmatprep.subr.bf16.mxu0 0
      %933 = vmatpush1.bf16.msra.mxu0 0
      %934 = vmatprep.subr.bf16.mxu0 0
      %935 = vmatpush1.bf16.msra.mxu0 0
      %936 = vmatprep.subr.bf16.mxu0 0
      %937 = vmatpush1.bf16.msra.mxu0 0
      %938 = vmatprep.subr.bf16.mxu0 0
      %939 = vmatpush1.bf16.msra.mxu0 0
      %940 = vmatprep.mubr.bf16.mxu0 0
      %941 = vmatmul.mubr.bf16.gmra.mrb[0].mxu0 %v906
      %v942 = vpop.f32.mrb[0].mxu0
      %v943 = vadd.f32 0.0, %v942
      %v944 = vpop.f32.mrb[0].mxu0
      %v945 = vpop.f32.mrb[0].mxu0
      %v946 = vpop.f32.mrb[0].mxu0
      %947 = vdwg.mxu0
      %v952 = vunpack.c.l.b16 %v411
      %v953 = vunpack.c.l.b16 %v412
      %v954 = vunpack.c.l.b16 %v413
      %v955 = vunpack.c.l.b16 %v414
      %v956 = vpack.c.b16 %v953, %v952
      %v957 = vpack.c.b16 %v955, %v954
      %v961 = vsel %vm519, %v339, 0
      %963 = vmatprep.subr.bf16.mxu0 0
      %964 = vmatpush1.bf16.msra.mxu0 %v956
      %965 = vmatprep.subr.bf16.mxu0 0
      %966 = vmatpush1.bf16.msra.mxu0 %v957
      %967 = vmatprep.subr.bf16.mxu0 0
      %968 = vmatpush1.bf16.msra.mxu0 0
      %969 = vmatprep.subr.bf16.mxu0 0
      %970 = vmatpush1.bf16.msra.mxu0 0
      %971 = vmatprep.subr.bf16.mxu0 0
      %972 = vmatpush1.bf16.msra.mxu0 0
      %973 = vmatprep.subr.bf16.mxu0 0
      %974 = vmatpush1.bf16.msra.mxu0 0
      %975 = vmatprep.subr.bf16.mxu0 0
      %976 = vmatpush1.bf16.msra.mxu0 0
      %977 = vmatprep.subr.bf16.mxu0 0
      %978 = vmatpush1.bf16.msra.mxu0 0
      %979 = vmatprep.subr.bf16.mxu0 0
      %980 = vmatpush1.bf16.msra.mxu0 0
      %981 = vmatprep.subr.bf16.mxu0 0
      %982 = vmatpush1.bf16.msra.mxu0 0
      %983 = vmatprep.subr.bf16.mxu0 0
      %984 = vmatpush1.bf16.msra.mxu0 0
      %985 = vmatprep.subr.bf16.mxu0 0
      %986 = vmatpush1.bf16.msra.mxu0 0
      %987 = vmatprep.subr.bf16.mxu0 0
      %988 = vmatpush1.bf16.msra.mxu0 0
      %989 = vmatprep.subr.bf16.mxu0 0
      %990 = vmatpush1.bf16.msra.mxu0 0
      %991 = vmatprep.subr.bf16.mxu0 0
      %992 = vmatpush1.bf16.msra.mxu0 0
      %993 = vmatprep.subr.bf16.mxu0 0
      %994 = vmatpush1.bf16.msra.mxu0 0
      %995 = vmatprep.mubr.bf16.mxu0 0
      %996 = vmatmul.mubr.bf16.gmra.mrb[0].mxu0 %v961
      %v997 = vpop.f32.mrb[0].mxu0
      %v998 = vadd.f32 0.0, %v997
      %v999 = vpop.f32.mrb[0].mxu0
      %v1000 = vpop.f32.mrb[0].mxu0
      %v1001 = vpop.f32.mrb[0].mxu0
      %1002 = vdwg.mxu0
      %v1007 = vunpack.c.l.b16 %v415
      %v1008 = vunpack.c.l.b16 %v416
      %v1009 = vunpack.c.l.b16 %v417
      %v1010 = vunpack.c.l.b16 %v418
      %v1011 = vpack.c.b16 %v1008, %v1007
      %v1012 = vpack.c.b16 %v1010, %v1009
      %v1016 = vsel %vm519, %v340, 0
      %1018 = vmatprep.subr.bf16.mxu0 0
      %1019 = vmatpush1.bf16.msra.mxu0 %v1011
      %1020 = vmatprep.subr.bf16.mxu0 0
      %1021 = vmatpush1.bf16.msra.mxu0 %v1012
      %1022 = vmatprep.subr.bf16.mxu0 0
      %1023 = vmatpush1.bf16.msra.mxu0 0
      %1024 = vmatprep.subr.bf16.mxu0 0
      %1025 = vmatpush1.bf16.msra.mxu0 0
      %1026 = vmatprep.subr.bf16.mxu0 0
      %1027 = vmatpush1.bf16.msra.mxu0 0
      %1028 = vmatprep.subr.bf16.mxu0 0
      %1029 = vmatpush1.bf16.msra.mxu0 0
      %1030 = vmatprep.subr.bf16.mxu0 0
      %1031 = vmatpush1.bf16.msra.mxu0 0
      %1032 = vmatprep.subr.bf16.mxu0 0
      %1033 = vmatpush1.bf16.msra.mxu0 0
      %1034 = vmatprep.subr.bf16.mxu0 0
      %1035 = vmatpush1.bf16.msra.mxu0 0
      %1036 = vmatprep.subr.bf16.mxu0 0
      %1037 = vmatpush1.bf16.msra.mxu0 0
      %1038 = vmatprep.subr.bf16.mxu0 0
      %1039 = vmatpush1.bf16.msra.mxu0 0
      %1040 = vmatprep.subr.bf16.mxu0 0
      %1041 = vmatpush1.bf16.msra.mxu0 0
      %1042 = vmatprep.subr.bf16.mxu0 0
      %1043 = vmatpush1.bf16.msra.mxu0 0
      %1044 = vmatprep.subr.bf16.mxu0 0
      %1045 = vmatpush1.bf16.msra.mxu0 0
      %1046 = vmatprep.subr.bf16.mxu0 0
      %1047 = vmatpush1.bf16.msra.mxu0 0
      %1048 = vmatprep.subr.bf16.mxu0 0
      %1049 = vmatpush1.bf16.msra.mxu0 0
      %1050 = vmatprep.mubr.bf16.mxu0 0
      %1051 = vmatmul.mubr.bf16.gmra.mrb[0].mxu0 %v1016
      %v1052 = vpop.f32.mrb[0].mxu0
      %v1053 = vadd.f32 0.0, %v1052
      %v1054 = vpop.f32.mrb[0].mxu0
      %v1055 = vpop.f32.mrb[0].mxu0
      %v1056 = vpop.f32.mrb[0].mxu0
      %1057 = vdwg.mxu0
      %v1062 = vunpack.c.l.b16 %v419
      %v1063 = vunpack.c.l.b16 %v420
      %v1064 = vunpack.c.l.b16 %v421
      %v1065 = vunpack.c.l.b16 %v422
      %v1066 = vpack.c.b16 %v1063, %v1062
      %v1067 = vpack.c.b16 %v1065, %v1064
      %v1071 = vsel %vm519, %v341, 0
      %1073 = vmatprep.subr.bf16.mxu0 0
      %1074 = vmatpush1.bf16.msra.mxu0 %v1066
      %1075 = vmatprep.subr.bf16.mxu0 0
      %1076 = vmatpush1.bf16.msra.mxu0 %v1067
      %1077 = vmatprep.subr.bf16.mxu0 0
      %1078 = vmatpush1.bf16.msra.mxu0 0
      %1079 = vmatprep.subr.bf16.mxu0 0
      %1080 = vmatpush1.bf16.msra.mxu0 0
      %1081 = vmatprep.subr.bf16.mxu0 0
      %1082 = vmatpush1.bf16.msra.mxu0 0
      %1083 = vmatprep.subr.bf16.mxu0 0
      %1084 = vmatpush1.bf16.msra.mxu0 0
      %1085 = vmatprep.subr.bf16.mxu0 0
      %1086 = vmatpush1.bf16.msra.mxu0 0
      %1087 = vmatprep.subr.bf16.mxu0 0
      %1088 = vmatpush1.bf16.msra.mxu0 0
      %1089 = vmatprep.subr.bf16.mxu0 0
      %1090 = vmatpush1.bf16.msra.mxu0 0
      %1091 = vmatprep.subr.bf16.mxu0 0
      %1092 = vmatpush1.bf16.msra.mxu0 0
      %1093 = vmatprep.subr.bf16.mxu0 0
      %1094 = vmatpush1.bf16.msra.mxu0 0
      %1095 = vmatprep.subr.bf16.mxu0 0
      %1096 = vmatpush1.bf16.msra.mxu0 0
      %1097 = vmatprep.subr.bf16.mxu0 0
      %1098 = vmatpush1.bf16.msra.mxu0 0
      %1099 = vmatprep.subr.bf16.mxu0 0
      %1100 = vmatpush1.bf16.msra.mxu0 0
      %1101 = vmatprep.subr.bf16.mxu0 0
      %1102 = vmatpush1.bf16.msra.mxu0 0
      %1103 = vmatprep.subr.bf16.mxu0 0
      %1104 = vmatpush1.bf16.msra.mxu0 0
      %1105 = vmatprep.mubr.bf16.mxu0 0
      %1106 = vmatmul.mubr.bf16.gmra.mrb[0].mxu0 %v1071
      %v1107 = vpop.f32.mrb[0].mxu0
      %v1108 = vadd.f32 0.0, %v1107
      %v1109 = vpop.f32.mrb[0].mxu0
      %v1110 = vpop.f32.mrb[0].mxu0
      %v1111 = vpop.f32.mrb[0].mxu0
      %1112 = vdwg.mxu0
      %v1117 = vunpack.c.l.b16 %v423
      %v1118 = vunpack.c.l.b16 %v424
      %v1119 = vunpack.c.l.b16 %v425
      %v1120 = vunpack.c.l.b16 %v426
      %v1121 = vpack.c.b16 %v1118, %v1117
      %v1122 = vpack.c.b16 %v1120, %v1119
      %v1126 = vsel %vm519, %v342, 0
      %1128 = vmatprep.subr.bf16.mxu0 0
      %1129 = vmatpush1.bf16.msra.mxu0 %v1121
      %1130 = vmatprep.subr.bf16.mxu0 0
      %1131 = vmatpush1.bf16.msra.mxu0 %v1122
      %1132 = vmatprep.subr.bf16.mxu0 0
      %1133 = vmatpush1.bf16.msra.mxu0 0
      %1134 = vmatprep.subr.bf16.mxu0 0
      %1135 = vmatpush1.bf16.msra.mxu0 0
      %1136 = vmatprep.subr.bf16.mxu0 0
      %1137 = vmatpush1.bf16.msra.mxu0 0
      %1138 = vmatprep.subr.bf16.mxu0 0
      %1139 = vmatpush1.bf16.msra.mxu0 0
      %1140 = vmatprep.subr.bf16.mxu0 0
      %1141 = vmatpush1.bf16.msra.mxu0 0
      %1142 = vmatprep.subr.bf16.mxu0 0
      %1143 = vmatpush1.bf16.msra.mxu0 0
      %1144 = vmatprep.subr.bf16.mxu0 0
      %1145 = vmatpush1.bf16.msra.mxu0 0
      %1146 = vmatprep.subr.bf16.mxu0 0
      %1147 = vmatpush1.bf16.msra.mxu0 0
      %1148 = vmatprep.subr.bf16.mxu0 0
      %1149 = vmatpush1.bf16.msra.mxu0 0
      %1150 = vmatprep.subr.bf16.mxu0 0
      %1151 = vmatpush1.bf16.msra.mxu0 0
      %1152 = vmatprep.subr.bf16.mxu0 0
      %1153 = vmatpush1.bf16.msra.mxu0 0
      %1154 = vmatprep.subr.bf16.mxu0 0
      %1155 = vmatpush1.bf16.msra.mxu0 0
      %1156 = vmatprep.subr.bf16.mxu0 0
      %1157 = vmatpush1.bf16.msra.mxu0 0
      %1158 = vmatprep.subr.bf16.mxu0 0
      %1159 = vmatpush1.bf16.msra.mxu0 0
      %1160 = vmatprep.mubr.bf16.mxu0 0
      %1161 = vmatmul.mubr.bf16.gmra.mrb[0].mxu0 %v1126
      %v1162 = vpop.f32.mrb[0].mxu0
      %v1163 = vadd.f32 0.0, %v1162
      %v1164 = vpop.f32.mrb[0].mxu0
      %v1165 = vpop.f32.mrb[0].mxu0
      %v1166 = vpop.f32.mrb[0].mxu0
      %1167 = vdwg.mxu0
      %v1172 = vunpack.c.l.b16 %v427
      %v1173 = vunpack.c.l.b16 %v428
      %v1174 = vunpack.c.l.b16 %v429
      %v1175 = vunpack.c.l.b16 %v430
      %v1176 = vpack.c.b16 %v1173, %v1172
      %v1177 = vpack.c.b16 %v1175, %v1174
      %v1181 = vsel %vm519, %v343, 0
      %1183 = vmatprep.subr.bf16.mxu0 0
      %1184 = vmatpush1.bf16.msra.mxu0 %v1176
      %1185 = vmatprep.subr.bf16.mxu0 0
      %1186 = vmatpush1.bf16.msra.mxu0 %v1177
      %1187 = vmatprep.subr.bf16.mxu0 0
      %1188 = vmatpush1.bf16.msra.mxu0 0
      %1189 = vmatprep.subr.bf16.mxu0 0
      %1190 = vmatpush1.bf16.msra.mxu0 0
      %1191 = vmatprep.subr.bf16.mxu0 0
      %1192 = vmatpush1.bf16.msra.mxu0 0
      %1193 = vmatprep.subr.bf16.mxu0 0
      %1194 = vmatpush1.bf16.msra.mxu0 0
      %1195 = vmatprep.subr.bf16.mxu0 0
      %1196 = vmatpush1.bf16.msra.mxu0 0
      %1197 = vmatprep.subr.bf16.mxu0 0
      %1198 = vmatpush1.bf16.msra.mxu0 0
      %1199 = vmatprep.subr.bf16.mxu0 0
      %1200 = vmatpush1.bf16.msra.mxu0 0
      %1201 = vmatprep.subr.bf16.mxu0 0
      %1202 = vmatpush1.bf16.msra.mxu0 0
      %1203 = vmatprep.subr.bf16.mxu0 0
      %1204 = vmatpush1.bf16.msra.mxu0 0
      %1205 = vmatprep.subr.bf16.mxu0 0
      %1206 = vmatpush1.bf16.msra.mxu0 0
      %1207 = vmatprep.subr.bf16.mxu0 0
      %1208 = vmatpush1.bf16.msra.mxu0 0
      %1209 = vmatprep.subr.bf16.mxu0 0
      %1210 = vmatpush1.bf16.msra.mxu0 0
      %1211 = vmatprep.subr.bf16.mxu0 0
      %1212 = vmatpush1.bf16.msra.mxu0 0
      %1213 = vmatprep.subr.bf16.mxu0 0
      %1214 = vmatpush1.bf16.msra.mxu0 0
      %1215 = vmatprep.mubr.bf16.mxu0 0
      %1216 = vmatmul.mubr.bf16.gmra.mrb[0].mxu0 %v1181
      %v1217 = vpop.f32.mrb[0].mxu0
      %v1218 = vadd.f32 0.0, %v1217
      %v1219 = vpop.f32.mrb[0].mxu0
      %v1220 = vpop.f32.mrb[0].mxu0
      %v1221 = vpop.f32.mrb[0].mxu0
      %1222 = vdwg.mxu0
      %v1227 = vunpack.c.l.b16 %v431
      %v1228 = vunpack.c.l.b16 %v432
      %v1229 = vunpack.c.l.b16 %v433
      %v1230 = vunpack.c.l.b16 %v434
      %v1231 = vpack.c.b16 %v1228, %v1227
      %v1232 = vpack.c.b16 %v1230, %v1229
      %v1236 = vsel %vm519, %v344, 0
      %1238 = vmatprep.subr.bf16.mxu0 0
      %1239 = vmatpush1.bf16.msra.mxu0 %v1231
      %1240 = vmatprep.subr.bf16.mxu0 0
      %1241 = vmatpush1.bf16.msra.mxu0 %v1232
      %1242 = vmatprep.subr.bf16.mxu0 0
      %1243 = vmatpush1.bf16.msra.mxu0 0
      %1244 = vmatprep.subr.bf16.mxu0 0
      %1245 = vmatpush1.bf16.msra.mxu0 0
      %1246 = vmatprep.subr.bf16.mxu0 0
      %1247 = vmatpush1.bf16.msra.mxu0 0
      %1248 = vmatprep.subr.bf16.mxu0 0
      %1249 = vmatpush1.bf16.msra.mxu0 0
      %1250 = vmatprep.subr.bf16.mxu0 0
      %1251 = vmatpush1.bf16.msra.mxu0 0
      %1252 = vmatprep.subr.bf16.mxu0 0
      %1253 = vmatpush1.bf16.msra.mxu0 0
      %1254 = vmatprep.subr.bf16.mxu0 0
      %1255 = vmatpush1.bf16.msra.mxu0 0
      %1256 = vmatprep.subr.bf16.mxu0 0
      %1257 = vmatpush1.bf16.msra.mxu0 0
      %1258 = vmatprep.subr.bf16.mxu0 0
      %1259 = vmatpush1.bf16.msra.mxu0 0
      %1260 = vmatprep.subr.bf16.mxu0 0
      %1261 = vmatpush1.bf16.msra.mxu0 0
      %1262 = vmatprep.subr.bf16.mxu0 0
      %1263 = vmatpush1.bf16.msra.mxu0 0
      %1264 = vmatprep.subr.bf16.mxu0 0
      %1265 = vmatpush1.bf16.msra.mxu0 0
      %1266 = vmatprep.subr.bf16.mxu0 0
      %1267 = vmatpush1.bf16.msra.mxu0 0
      %1268 = vmatprep.subr.bf16.mxu0 0
      %1269 = vmatpush1.bf16.msra.mxu0 0
      %1270 = vmatprep.mubr.bf16.mxu0 0
      %1271 = vmatmul.mubr.bf16.gmra.mrb[0].mxu0 %v1236
      %v1272 = vpop.f32.mrb[0].mxu0
      %v1273 = vadd.f32 0.0, %v1272
      %v1274 = vpop.f32.mrb[0].mxu0
      %v1275 = vpop.f32.mrb[0].mxu0
      %v1276 = vpop.f32.mrb[0].mxu0
      %1277 = vdwg.mxu0
      %v1282 = vunpack.c.l.b16 %v435
      %v1283 = vunpack.c.l.b16 %v436
      %v1284 = vunpack.c.l.b16 %v437
      %v1285 = vunpack.c.l.b16 %v438
      %v1286 = vpack.c.b16 %v1283, %v1282
      %v1287 = vpack.c.b16 %v1285, %v1284
      %v1291 = vsel %vm519, %v345, 0
      %1293 = vmatprep.subr.bf16.mxu0 0
      %1294 = vmatpush1.bf16.msra.mxu0 %v1286
      %1295 = vmatprep.subr.bf16.mxu0 0
      %1296 = vmatpush1.bf16.msra.mxu0 %v1287
      %1297 = vmatprep.subr.bf16.mxu0 0
      %1298 = vmatpush1.bf16.msra.mxu0 0
      %1299 = vmatprep.subr.bf16.mxu0 0
      %1300 = vmatpush1.bf16.msra.mxu0 0
      %1301 = vmatprep.subr.bf16.mxu0 0
      %1302 = vmatpush1.bf16.msra.mxu0 0
      %1303 = vmatprep.subr.bf16.mxu0 0
      %1304 = vmatpush1.bf16.msra.mxu0 0
      %1305 = vmatprep.subr.bf16.mxu0 0
      %1306 = vmatpush1.bf16.msra.mxu0 0
      %1307 = vmatprep.subr.bf16.mxu0 0
      %1308 = vmatpush1.bf16.msra.mxu0 0
      %1309 = vmatprep.subr.bf16.mxu0 0
      %1310 = vmatpush1.bf16.msra.mxu0 0
      %1311 = vmatprep.subr.bf16.mxu0 0
      %1312 = vmatpush1.bf16.msra.mxu0 0
      %1313 = vmatprep.subr.bf16.mxu0 0
      %1314 = vmatpush1.bf16.msra.mxu0 0
      %1315 = vmatprep.subr.bf16.mxu0 0
      %1316 = vmatpush1.bf16.msra.mxu0 0
      %1317 = vmatprep.subr.bf16.mxu0 0
      %1318 = vmatpush1.bf16.msra.mxu0 0
      %1319 = vmatprep.subr.bf16.mxu0 0
      %1320 = vmatpush1.bf16.msra.mxu0 0
      %1321 = vmatprep.subr.bf16.mxu0 0
      %1322 = vmatpush1.bf16.msra.mxu0 0
      %1323 = vmatprep.subr.bf16.mxu0 0
      %1324 = vmatpush1.bf16.msra.mxu0 0
      %1325 = vmatprep.mubr.bf16.mxu0 0
      %1326 = vmatmul.mubr.bf16.gmra.mrb[0].mxu0 %v1291
      %v1327 = vpop.f32.mrb[0].mxu0
      %v1328 = vadd.f32 0.0, %v1327
      %v1329 = vpop.f32.mrb[0].mxu0
      %v1330 = vpop.f32.mrb[0].mxu0
      %v1331 = vpop.f32.mrb[0].mxu0
      %1332 = vdwg.mxu0
      %v1337 = vunpack.c.l.b16 %v439
      %v1338 = vunpack.c.l.b16 %v440
      %v1339 = vunpack.c.l.b16 %v441
      %v1340 = vunpack.c.l.b16 %v442
      %v1341 = vpack.c.b16 %v1338, %v1337
      %v1342 = vpack.c.b16 %v1340, %v1339
      %v1346 = vsel %vm519, %v346, 0
      %1348 = vmatprep.subr.bf16.mxu0 0
      %1349 = vmatpush1.bf16.msra.mxu0 %v1341
      %1350 = vmatprep.subr.bf16.mxu0 0
      %1351 = vmatpush1.bf16.msra.mxu0 %v1342
      %1352 = vmatprep.subr.bf16.mxu0 0
      %1353 = vmatpush1.bf16.msra.mxu0 0
      %1354 = vmatprep.subr.bf16.mxu0 0
      %1355 = vmatpush1.bf16.msra.mxu0 0
      %1356 = vmatprep.subr.bf16.mxu0 0
      %1357 = vmatpush1.bf16.msra.mxu0 0
      %1358 = vmatprep.subr.bf16.mxu0 0
      %1359 = vmatpush1.bf16.msra.mxu0 0
      %1360 = vmatprep.subr.bf16.mxu0 0
      %1361 = vmatpush1.bf16.msra.mxu0 0
      %1362 = vmatprep.subr.bf16.mxu0 0
      %1363 = vmatpush1.bf16.msra.mxu0 0
      %1364 = vmatprep.subr.bf16.mxu0 0
      %1365 = vmatpush1.bf16.msra.mxu0 0
      %1366 = vmatprep.subr.bf16.mxu0 0
      %1367 = vmatpush1.bf16.msra.mxu0 0
      %1368 = vmatprep.subr.bf16.mxu0 0
      %1369 = vmatpush1.bf16.msra.mxu0 0
      %1370 = vmatprep.subr.bf16.mxu0 0
      %1371 = vmatpush1.bf16.msra.mxu0 0
      %1372 = vmatprep.subr.bf16.mxu0 0
      %1373 = vmatpush1.bf16.msra.mxu0 0
      %1374 = vmatprep.subr.bf16.mxu0 0
      %1375 = vmatpush1.bf16.msra.mxu0 0
      %1376 = vmatprep.subr.bf16.mxu0 0
      %1377 = vmatpush1.bf16.msra.mxu0 0
      %1378 = vmatprep.subr.bf16.mxu0 0
      %1379 = vmatpush1.bf16.msra.mxu0 0
      %1380 = vmatprep.mubr.bf16.mxu0 0
      %1381 = vmatmul.mubr.bf16.gmra.mrb[0].mxu0 %v1346
      %v1382 = vpop.f32.mrb[0].mxu0
      %v1383 = vadd.f32 0.0, %v1382
      %v1384 = vpop.f32.mrb[0].mxu0
      %v1385 = vpop.f32.mrb[0].mxu0
      %v1386 = vpop.f32.mrb[0].mxu0
      %1387 = vdwg.mxu0
      %v1392 = vunpack.c.l.b16 %v443
      %v1393 = vunpack.c.l.b16 %v444
      %v1394 = vunpack.c.l.b16 %v445
      %v1395 = vunpack.c.l.b16 %v446
      %v1396 = vpack.c.b16 %v1393, %v1392
      %v1397 = vpack.c.b16 %v1395, %v1394
      %v1401 = vsel %vm519, %v363, 0
      %1403 = vmatprep.subr.bf16.mxu0 0
      %1404 = vmatpush1.bf16.msra.mxu0 %v1396
      %1405 = vmatprep.subr.bf16.mxu0 0
      %1406 = vmatpush1.bf16.msra.mxu0 %v1397
      %1407 = vmatprep.subr.bf16.mxu0 0
      %1408 = vmatpush1.bf16.msra.mxu0 0
      %1409 = vmatprep.subr.bf16.mxu0 0
      %1410 = vmatpush1.bf16.msra.mxu0 0
      %1411 = vmatprep.subr.bf16.mxu0 0
      %1412 = vmatpush1.bf16.msra.mxu0 0
      %1413 = vmatprep.subr.bf16.mxu0 0
      %1414 = vmatpush1.bf16.msra.mxu0 0
      %1415 = vmatprep.subr.bf16.mxu0 0
      %1416 = vmatpush1.bf16.msra.mxu0 0
      %1417 = vmatprep.subr.bf16.mxu0 0
      %1418 = vmatpush1.bf16.msra.mxu0 0
      %1419 = vmatprep.subr.bf16.mxu0 0
      %1420 = vmatpush1.bf16.msra.mxu0 0
      %1421 = vmatprep.subr.bf16.mxu0 0
      %1422 = vmatpush1.bf16.msra.mxu0 0
      %1423 = vmatprep.subr.bf16.mxu0 0
      %1424 = vmatpush1.bf16.msra.mxu0 0
      %1425 = vmatprep.subr.bf16.mxu0 0
      %1426 = vmatpush1.bf16.msra.mxu0 0
      %1427 = vmatprep.subr.bf16.mxu0 0
      %1428 = vmatpush1.bf16.msra.mxu0 0
      %1429 = vmatprep.subr.bf16.mxu0 0
      %1430 = vmatpush1.bf16.msra.mxu0 0
      %1431 = vmatprep.subr.bf16.mxu0 0
      %1432 = vmatpush1.bf16.msra.mxu0 0
      %1433 = vmatprep.subr.bf16.mxu0 0
      %1434 = vmatpush1.bf16.msra.mxu0 0
      %1435 = vmatprep.mubr.bf16.mxu0 0
      %1436 = vmatmul.mubr.bf16.gmra.mrb[0].mxu0 %v1401
      %v1437 = vpop.f32.mrb[0].mxu0
      %v1438 = vadd.f32 0.0, %v1437
      %v1439 = vpop.f32.mrb[0].mxu0
      %v1440 = vpop.f32.mrb[0].mxu0
      %v1441 = vpop.f32.mrb[0].mxu0
      %1442 = vdwg.mxu0
      %v1447 = vunpack.c.l.b16 %v447
      %v1448 = vunpack.c.l.b16 %v448
      %v1449 = vunpack.c.l.b16 %v449
      %v1450 = vunpack.c.l.b16 %v450
      %v1451 = vpack.c.b16 %v1448, %v1447
      %v1452 = vpack.c.b16 %v1450, %v1449
      %v1456 = vsel %vm519, %v364, 0
      %1458 = vmatprep.subr.bf16.mxu0 0
      %1459 = vmatpush1.bf16.msra.mxu0 %v1451
      %1460 = vmatprep.subr.bf16.mxu0 0
      %1461 = vmatpush1.bf16.msra.mxu0 %v1452
      %1462 = vmatprep.subr.bf16.mxu0 0
      %1463 = vmatpush1.bf16.msra.mxu0 0
      %1464 = vmatprep.subr.bf16.mxu0 0
      %1465 = vmatpush1.bf16.msra.mxu0 0
      %1466 = vmatprep.subr.bf16.mxu0 0
      %1467 = vmatpush1.bf16.msra.mxu0 0
      %1468 = vmatprep.subr.bf16.mxu0 0
      %1469 = vmatpush1.bf16.msra.mxu0 0
      %1470 = vmatprep.subr.bf16.mxu0 0
      %1471 = vmatpush1.bf16.msra.mxu0 0
      %1472 = vmatprep.subr.bf16.mxu0 0
      %1473 = vmatpush1.bf16.msra.mxu0 0
      %1474 = vmatprep.subr.bf16.mxu0 0
      %1475 = vmatpush1.bf16.msra.mxu0 0
      %1476 = vmatprep.subr.bf16.mxu0 0
      %1477 = vmatpush1.bf16.msra.mxu0 0
      %1478 = vmatprep.subr.bf16.mxu0 0
      %1479 = vmatpush1.bf16.msra.mxu0 0
      %1480 = vmatprep.subr.bf16.mxu0 0
      %1481 = vmatpush1.bf16.msra.mxu0 0
      %1482 = vmatprep.subr.bf16.mxu0 0
      %1483 = vmatpush1.bf16.msra.mxu0 0
      %1484 = vmatprep.subr.bf16.mxu0 0
      %1485 = vmatpush1.bf16.msra.mxu0 0
      %1486 = vmatprep.subr.bf16.mxu0 0
      %1487 = vmatpush1.bf16.msra.mxu0 0
      %1488 = vmatprep.subr.bf16.mxu0 0
      %1489 = vmatpush1.bf16.msra.mxu0 0
      %1490 = vmatprep.mubr.bf16.mxu0 0
      %1491 = vmatmul.mubr.bf16.gmra.mrb[0].mxu0 %v1456
      %v1492 = vpop.f32.mrb[0].mxu0
      %v1493 = vadd.f32 0.0, %v1492
      %v1494 = vpop.f32.mrb[0].mxu0
      %v1495 = vpop.f32.mrb[0].mxu0
      %v1496 = vpop.f32.mrb[0].mxu0
      %1497 = vdwg.mxu0
      %v1502 = vunpack.c.l.b16 %v451
      %v1503 = vunpack.c.l.b16 %v452
      %v1504 = vunpack.c.l.b16 %v453
      %v1505 = vunpack.c.l.b16 %v454
      %v1506 = vpack.c.b16 %v1503, %v1502
      %v1507 = vpack.c.b16 %v1505, %v1504
      %v1511 = vsel %vm519, %v365, 0
      %1513 = vmatprep.subr.bf16.mxu0 0
      %1514 = vmatpush1.bf16.msra.mxu0 %v1506
      %1515 = vmatprep.subr.bf16.mxu0 0
      %1516 = vmatpush1.bf16.msra.mxu0 %v1507
      %1517 = vmatprep.subr.bf16.mxu0 0
      %1518 = vmatpush1.bf16.msra.mxu0 0
      %1519 = vmatprep.subr.bf16.mxu0 0
      %1520 = vmatpush1.bf16.msra.mxu0 0
      %1521 = vmatprep.subr.bf16.mxu0 0
      %1522 = vmatpush1.bf16.msra.mxu0 0
      %1523 = vmatprep.subr.bf16.mxu0 0
      %1524 = vmatpush1.bf16.msra.mxu0 0
      %1525 = vmatprep.subr.bf16.mxu0 0
      %1526 = vmatpush1.bf16.msra.mxu0 0
      %1527 = vmatprep.subr.bf16.mxu0 0
      %1528 = vmatpush1.bf16.msra.mxu0 0
      %1529 = vmatprep.subr.bf16.mxu0 0
      %1530 = vmatpush1.bf16.msra.mxu0 0
      %1531 = vmatprep.subr.bf16.mxu0 0
      %1532 = vmatpush1.bf16.msra.mxu0 0
      %1533 = vmatprep.subr.bf16.mxu0 0
      %1534 = vmatpush1.bf16.msra.mxu0 0
      %1535 = vmatprep.subr.bf16.mxu0 0
      %1536 = vmatpush1.bf16.msra.mxu0 0
      %1537 = vmatprep.subr.bf16.mxu0 0
      %1538 = vmatpush1.bf16.msra.mxu0 0
      %1539 = vmatprep.subr.bf16.mxu0 0
      %1540 = vmatpush1.bf16.msra.mxu0 0
      %1541 = vmatprep.subr.bf16.mxu0 0
      %1542 = vmatpush1.bf16.msra.mxu0 0
      %1543 = vmatprep.subr.bf16.mxu0 0
      %1544 = vmatpush1.bf16.msra.mxu0 0
      %1545 = vmatprep.mubr.bf16.mxu0 0
      %1546 = vmatmul.mubr.bf16.gmra.mrb[0].mxu0 %v1511
      %v1547 = vpop.f32.mrb[0].mxu0
      %v1548 = vadd.f32 0.0, %v1547
      %v1549 = vpop.f32.mrb[0].mxu0
      %v1550 = vpop.f32.mrb[0].mxu0
      %v1551 = vpop.f32.mrb[0].mxu0
      %1552 = vdwg.mxu0
      %v1557 = vunpack.c.l.b16 %v455
      %v1558 = vunpack.c.l.b16 %v456
      %v1559 = vunpack.c.l.b16 %v457
      %v1560 = vunpack.c.l.b16 %v458
      %v1561 = vpack.c.b16 %v1558, %v1557
      %v1562 = vpack.c.b16 %v1560, %v1559
      %v1566 = vsel %vm519, %v366, 0
      %1568 = vmatprep.subr.bf16.mxu0 0
      %1569 = vmatpush1.bf16.msra.mxu0 %v1561
      %1570 = vmatprep.subr.bf16.mxu0 0
      %1571 = vmatpush1.bf16.msra.mxu0 %v1562
      %1572 = vmatprep.subr.bf16.mxu0 0
      %1573 = vmatpush1.bf16.msra.mxu0 0
      %1574 = vmatprep.subr.bf16.mxu0 0
      %1575 = vmatpush1.bf16.msra.mxu0 0
      %1576 = vmatprep.subr.bf16.mxu0 0
      %1577 = vmatpush1.bf16.msra.mxu0 0
      %1578 = vmatprep.subr.bf16.mxu0 0
      %1579 = vmatpush1.bf16.msra.mxu0 0
      %1580 = vmatprep.subr.bf16.mxu0 0
      %1581 = vmatpush1.bf16.msra.mxu0 0
      %1582 = vmatprep.subr.bf16.mxu0 0
      %1583 = vmatpush1.bf16.msra.mxu0 0
      %1584 = vmatprep.subr.bf16.mxu0 0
      %1585 = vmatpush1.bf16.msra.mxu0 0
      %1586 = vmatprep.subr.bf16.mxu0 0
      %1587 = vmatpush1.bf16.msra.mxu0 0
      %1588 = vmatprep.subr.bf16.mxu0 0
      %1589 = vmatpush1.bf16.msra.mxu0 0
      %1590 = vmatprep.subr.bf16.mxu0 0
      %1591 = vmatpush1.bf16.msra.mxu0 0
      %1592 = vmatprep.subr.bf16.mxu0 0
      %1593 = vmatpush1.bf16.msra.mxu0 0
      %1594 = vmatprep.subr.bf16.mxu0 0
      %1595 = vmatpush1.bf16.msra.mxu0 0
      %1596 = vmatprep.subr.bf16.mxu0 0
      %1597 = vmatpush1.bf16.msra.mxu0 0
      %1598 = vmatprep.subr.bf16.mxu0 0
      %1599 = vmatpush1.bf16.msra.mxu0 0
      %1600 = vmatprep.mubr.bf16.mxu0 0
      %1601 = vmatmul.mubr.bf16.gmra.mrb[0].mxu0 %v1566
      %v1602 = vpop.f32.mrb[0].mxu0
      %v1603 = vadd.f32 0.0, %v1602
      %v1604 = vpop.f32.mrb[0].mxu0
      %v1605 = vpop.f32.mrb[0].mxu0
      %v1606 = vpop.f32.mrb[0].mxu0
      %1607 = vdwg.mxu0
      %v1612 = vunpack.c.l.b16 %v459
      %v1613 = vunpack.c.l.b16 %v460
      %v1614 = vunpack.c.l.b16 %v461
      %v1615 = vunpack.c.l.b16 %v462
      %v1616 = vpack.c.b16 %v1613, %v1612
      %v1617 = vpack.c.b16 %v1615, %v1614
      %v1621 = vsel %vm519, %v367, 0
      %1623 = vmatprep.subr.bf16.mxu0 0
      %1624 = vmatpush1.bf16.msra.mxu0 %v1616
      %1625 = vmatprep.subr.bf16.mxu0 0
      %1626 = vmatpush1.bf16.msra.mxu0 %v1617
      %1627 = vmatprep.subr.bf16.mxu0 0
      %1628 = vmatpush1.bf16.msra.mxu0 0
      %1629 = vmatprep.subr.bf16.mxu0 0
      %1630 = vmatpush1.bf16.msra.mxu0 0
      %1631 = vmatprep.subr.bf16.mxu0 0
      %1632 = vmatpush1.bf16.msra.mxu0 0
      %1633 = vmatprep.subr.bf16.mxu0 0
      %1634 = vmatpush1.bf16.msra.mxu0 0
      %1635 = vmatprep.subr.bf16.mxu0 0
      %1636 = vmatpush1.bf16.msra.mxu0 0
      %1637 = vmatprep.subr.bf16.mxu0 0
      %1638 = vmatpush1.bf16.msra.mxu0 0
      %1639 = vmatprep.subr.bf16.mxu0 0
      %1640 = vmatpush1.bf16.msra.mxu0 0
      %1641 = vmatprep.subr.bf16.mxu0 0
      %1642 = vmatpush1.bf16.msra.mxu0 0
      %1643 = vmatprep.subr.bf16.mxu0 0
      %1644 = vmatpush1.bf16.msra.mxu0 0
      %1645 = vmatprep.subr.bf16.mxu0 0
      %1646 = vmatpush1.bf16.msra.mxu0 0
      %1647 = vmatprep.subr.bf16.mxu0 0
      %1648 = vmatpush1.bf16.msra.mxu0 0
      %1649 = vmatprep.subr.bf16.mxu0 0
      %1650 = vmatpush1.bf16.msra.mxu0 0
      %1651 = vmatprep.subr.bf16.mxu0 0
      %1652 = vmatpush1.bf16.msra.mxu0 0
      %1653 = vmatprep.subr.bf16.mxu0 0
      %1654 = vmatpush1.bf16.msra.mxu0 0
      %1655 = vmatprep.mubr.bf16.mxu0 0
      %1656 = vmatmul.mubr.bf16.gmra.mrb[0].mxu0 %v1621
      %v1657 = vpop.f32.mrb[0].mxu0
      %v1658 = vadd.f32 0.0, %v1657
      %v1659 = vpop.f32.mrb[0].mxu0
      %v1660 = vpop.f32.mrb[0].mxu0
      %v1661 = vpop.f32.mrb[0].mxu0
      %1662 = vdwg.mxu0
      %v1667 = vunpack.c.l.b16 %v463
      %v1668 = vunpack.c.l.b16 %v464
      %v1669 = vunpack.c.l.b16 %v465
      %v1670 = vunpack.c.l.b16 %v466
      %v1671 = vpack.c.b16 %v1668, %v1667
      %v1672 = vpack.c.b16 %v1670, %v1669
      %v1676 = vsel %vm519, %v368, 0
      %1678 = vmatprep.subr.bf16.mxu0 0
      %1679 = vmatpush1.bf16.msra.mxu0 %v1671
      %1680 = vmatprep.subr.bf16.mxu0 0
      %1681 = vmatpush1.bf16.msra.mxu0 %v1672
      %1682 = vmatprep.subr.bf16.mxu0 0
      %1683 = vmatpush1.bf16.msra.mxu0 0
      %1684 = vmatprep.subr.bf16.mxu0 0
      %1685 = vmatpush1.bf16.msra.mxu0 0
      %1686 = vmatprep.subr.bf16.mxu0 0
      %1687 = vmatpush1.bf16.msra.mxu0 0
      %1688 = vmatprep.subr.bf16.mxu0 0
      %1689 = vmatpush1.bf16.msra.mxu0 0
      %1690 = vmatprep.subr.bf16.mxu0 0
      %1691 = vmatpush1.bf16.msra.mxu0 0
      %1692 = vmatprep.subr.bf16.mxu0 0
      %1693 = vmatpush1.bf16.msra.mxu0 0
      %1694 = vmatprep.subr.bf16.mxu0 0
      %1695 = vmatpush1.bf16.msra.mxu0 0
      %1696 = vmatprep.subr.bf16.mxu0 0
      %1697 = vmatpush1.bf16.msra.mxu0 0
      %1698 = vmatprep.subr.bf16.mxu0 0
      %1699 = vmatpush1.bf16.msra.mxu0 0
      %1700 = vmatprep.subr.bf16.mxu0 0
      %1701 = vmatpush1.bf16.msra.mxu0 0
      %1702 = vmatprep.subr.bf16.mxu0 0
      %1703 = vmatpush1.bf16.msra.mxu0 0
      %1704 = vmatprep.subr.bf16.mxu0 0
      %1705 = vmatpush1.bf16.msra.mxu0 0
      %1706 = vmatprep.subr.bf16.mxu0 0
      %1707 = vmatpush1.bf16.msra.mxu0 0
      %1708 = vmatprep.subr.bf16.mxu0 0
      %1709 = vmatpush1.bf16.msra.mxu0 0
      %1710 = vmatprep.mubr.bf16.mxu0 0
      %1711 = vmatmul.mubr.bf16.gmra.mrb[0].mxu0 %v1676
      %v1712 = vpop.f32.mrb[0].mxu0
      %v1713 = vadd.f32 0.0, %v1712
      %v1714 = vpop.f32.mrb[0].mxu0
      %v1715 = vpop.f32.mrb[0].mxu0
      %v1716 = vpop.f32.mrb[0].mxu0
      %1717 = vdwg.mxu0
      %v1722 = vunpack.c.l.b16 %v467
      %v1723 = vunpack.c.l.b16 %v468
      %v1724 = vunpack.c.l.b16 %v469
      %v1725 = vunpack.c.l.b16 %v470
      %v1726 = vpack.c.b16 %v1723, %v1722
      %v1727 = vpack.c.b16 %v1725, %v1724
      %v1731 = vsel %vm519, %v369, 0
      %1733 = vmatprep.subr.bf16.mxu0 0
      %1734 = vmatpush1.bf16.msra.mxu0 %v1726
      %1735 = vmatprep.subr.bf16.mxu0 0
      %1736 = vmatpush1.bf16.msra.mxu0 %v1727
      %1737 = vmatprep.subr.bf16.mxu0 0
      %1738 = vmatpush1.bf16.msra.mxu0 0
      %1739 = vmatprep.subr.bf16.mxu0 0
      %1740 = vmatpush1.bf16.msra.mxu0 0
      %1741 = vmatprep.subr.bf16.mxu0 0
      %1742 = vmatpush1.bf16.msra.mxu0 0
      %1743 = vmatprep.subr.bf16.mxu0 0
      %1744 = vmatpush1.bf16.msra.mxu0 0
      %1745 = vmatprep.subr.bf16.mxu0 0
      %1746 = vmatpush1.bf16.msra.mxu0 0
      %1747 = vmatprep.subr.bf16.mxu0 0
      %1748 = vmatpush1.bf16.msra.mxu0 0
      %1749 = vmatprep.subr.bf16.mxu0 0
      %1750 = vmatpush1.bf16.msra.mxu0 0
      %1751 = vmatprep.subr.bf16.mxu0 0
      %1752 = vmatpush1.bf16.msra.mxu0 0
      %1753 = vmatprep.subr.bf16.mxu0 0
      %1754 = vmatpush1.bf16.msra.mxu0 0
      %1755 = vmatprep.subr.bf16.mxu0 0
      %1756 = vmatpush1.bf16.msra.mxu0 0
      %1757 = vmatprep.subr.bf16.mxu0 0
      %1758 = vmatpush1.bf16.msra.mxu0 0
      %1759 = vmatprep.subr.bf16.mxu0 0
      %1760 = vmatpush1.bf16.msra.mxu0 0
      %1761 = vmatprep.subr.bf16.mxu0 0
      %1762 = vmatpush1.bf16.msra.mxu0 0
      %1763 = vmatprep.subr.bf16.mxu0 0
      %1764 = vmatpush1.bf16.msra.mxu0 0
      %1765 = vmatprep.mubr.bf16.mxu0 0
      %1766 = vmatmul.mubr.bf16.gmra.mrb[0].mxu0 %v1731
      %v1767 = vpop.f32.mrb[0].mxu0
      %v1768 = vadd.f32 0.0, %v1767
      %v1769 = vpop.f32.mrb[0].mxu0
      %v1770 = vpop.f32.mrb[0].mxu0
      %v1771 = vpop.f32.mrb[0].mxu0
      %1772 = vdwg.mxu0
      %v1777 = vunpack.c.l.b16 %v471
      %v1778 = vunpack.c.l.b16 %v472
      %v1779 = vunpack.c.l.b16 %v473
      %v1780 = vunpack.c.l.b16 %v474
      %v1781 = vpack.c.b16 %v1778, %v1777
      %v1782 = vpack.c.b16 %v1780, %v1779
      %v1786 = vsel %vm519, %v370, 0
      %1788 = vmatprep.subr.bf16.mxu0 0
      %1789 = vmatpush1.bf16.msra.mxu0 %v1781
      %1790 = vmatprep.subr.bf16.mxu0 0
      %1791 = vmatpush1.bf16.msra.mxu0 %v1782
      %1792 = vmatprep.subr.bf16.mxu0 0
      %1793 = vmatpush1.bf16.msra.mxu0 0
      %1794 = vmatprep.subr.bf16.mxu0 0
      %1795 = vmatpush1.bf16.msra.mxu0 0
      %1796 = vmatprep.subr.bf16.mxu0 0
      %1797 = vmatpush1.bf16.msra.mxu0 0
      %1798 = vmatprep.subr.bf16.mxu0 0
      %1799 = vmatpush1.bf16.msra.mxu0 0
      %1800 = vmatprep.subr.bf16.mxu0 0
      %1801 = vmatpush1.bf16.msra.mxu0 0
      %1802 = vmatprep.subr.bf16.mxu0 0
      %1803 = vmatpush1.bf16.msra.mxu0 0
      %1804 = vmatprep.subr.bf16.mxu0 0
      %1805 = vmatpush1.bf16.msra.mxu0 0
      %1806 = vmatprep.subr.bf16.mxu0 0
      %1807 = vmatpush1.bf16.msra.mxu0 0
      %1808 = vmatprep.subr.bf16.mxu0 0
      %1809 = vmatpush1.bf16.msra.mxu0 0
      %1810 = vmatprep.subr.bf16.mxu0 0
      %1811 = vmatpush1.bf16.msra.mxu0 0
      %1812 = vmatprep.subr.bf16.mxu0 0
      %1813 = vmatpush1.bf16.msra.mxu0 0
      %1814 = vmatprep.subr.bf16.mxu0 0
      %1815 = vmatpush1.bf16.msra.mxu0 0
      %1816 = vmatprep.subr.bf16.mxu0 0
      %1817 = vmatpush1.bf16.msra.mxu0 0
      %1818 = vmatprep.subr.bf16.mxu0 0
      %1819 = vmatpush1.bf16.msra.mxu0 0
      %1820 = vmatprep.mubr.bf16.mxu0 0
      %1821 = vmatmul.mubr.bf16.gmra.mrb[0].mxu0 %v1786
      %v1822 = vpop.f32.mrb[0].mxu0
      %v1823 = vadd.f32 0.0, %v1822
      %v1824 = vpop.f32.mrb[0].mxu0
      %v1825 = vpop.f32.mrb[0].mxu0
      %v1826 = vpop.f32.mrb[0].mxu0
      %1827 = vdwg.mxu0
      %v1832 = vunpack.c.l.b16 %v475
      %v1833 = vunpack.c.l.b16 %v476
      %v1834 = vunpack.c.l.b16 %v477
      %v1835 = vunpack.c.l.b16 %v478
      %v1836 = vpack.c.b16 %v1833, %v1832
      %v1837 = vpack.c.b16 %v1835, %v1834
      %v1841 = vsel %vm519, %v371, 0
      %1843 = vmatprep.subr.bf16.mxu0 0
      %1844 = vmatpush1.bf16.msra.mxu0 %v1836
      %1845 = vmatprep.subr.bf16.mxu0 0
      %1846 = vmatpush1.bf16.msra.mxu0 %v1837
      %1847 = vmatprep.subr.bf16.mxu0 0
      %1848 = vmatpush1.bf16.msra.mxu0 0
      %1849 = vmatprep.subr.bf16.mxu0 0
      %1850 = vmatpush1.bf16.msra.mxu0 0
      %1851 = vmatprep.subr.bf16.mxu0 0
      %1852 = vmatpush1.bf16.msra.mxu0 0
      %1853 = vmatprep.subr.bf16.mxu0 0
      %1854 = vmatpush1.bf16.msra.mxu0 0
      %1855 = vmatprep.subr.bf16.mxu0 0
      %1856 = vmatpush1.bf16.msra.mxu0 0
      %1857 = vmatprep.subr.bf16.mxu0 0
      %1858 = vmatpush1.bf16.msra.mxu0 0
      %1859 = vmatprep.subr.bf16.mxu0 0
      %1860 = vmatpush1.bf16.msra.mxu0 0
      %1861 = vmatprep.subr.bf16.mxu0 0
      %1862 = vmatpush1.bf16.msra.mxu0 0
      %1863 = vmatprep.subr.bf16.mxu0 0
      %1864 = vmatpush1.bf16.msra.mxu0 0
      %1865 = vmatprep.subr.bf16.mxu0 0
      %1866 = vmatpush1.bf16.msra.mxu0 0
      %1867 = vmatprep.subr.bf16.mxu0 0
      %1868 = vmatpush1.bf16.msra.mxu0 0
      %1869 = vmatprep.subr.bf16.mxu0 0
      %1870 = vmatpush1.bf16.msra.mxu0 0
      %1871 = vmatprep.subr.bf16.mxu0 0
      %1872 = vmatpush1.bf16.msra.mxu0 0
      %1873 = vmatprep.subr.bf16.mxu0 0
      %1874 = vmatpush1.bf16.msra.mxu0 0
      %1875 = vmatprep.mubr.bf16.mxu0 0
      %1876 = vmatmul.mubr.bf16.gmra.mrb[0].mxu0 %v1841
      %v1877 = vpop.f32.mrb[0].mxu0
      %v1878 = vadd.f32 0.0, %v1877
      %v1879 = vpop.f32.mrb[0].mxu0
      %v1880 = vpop.f32.mrb[0].mxu0
      %v1881 = vpop.f32.mrb[0].mxu0
      %1882 = vdwg.mxu0
      %v1887 = vunpack.c.l.b16 %v479
      %v1888 = vunpack.c.l.b16 %v480
      %v1889 = vunpack.c.l.b16 %v481
      %v1890 = vunpack.c.l.b16 %v482
      %v1891 = vpack.c.b16 %v1888, %v1887
      %v1892 = vpack.c.b16 %v1890, %v1889
      %v1896 = vsel %vm519, %v372, 0
      %1898 = vmatprep.subr.bf16.mxu0 0
      %1899 = vmatpush1.bf16.msra.mxu0 %v1891
      %1900 = vmatprep.subr.bf16.mxu0 0
      %1901 = vmatpush1.bf16.msra.mxu0 %v1892
      %1902 = vmatprep.subr.bf16.mxu0 0
      %1903 = vmatpush1.bf16.msra.mxu0 0
      %1904 = vmatprep.subr.bf16.mxu0 0
      %1905 = vmatpush1.bf16.msra.mxu0 0
      %1906 = vmatprep.subr.bf16.mxu0 0
      %1907 = vmatpush1.bf16.msra.mxu0 0
      %1908 = vmatprep.subr.bf16.mxu0 0
      %1909 = vmatpush1.bf16.msra.mxu0 0
      %1910 = vmatprep.subr.bf16.mxu0 0
      %1911 = vmatpush1.bf16.msra.mxu0 0
      %1912 = vmatprep.subr.bf16.mxu0 0
      %1913 = vmatpush1.bf16.msra.mxu0 0
      %1914 = vmatprep.subr.bf16.mxu0 0
      %1915 = vmatpush1.bf16.msra.mxu0 0
      %1916 = vmatprep.subr.bf16.mxu0 0
      %1917 = vmatpush1.bf16.msra.mxu0 0
      %1918 = vmatprep.subr.bf16.mxu0 0
      %1919 = vmatpush1.bf16.msra.mxu0 0
      %1920 = vmatprep.subr.bf16.mxu0 0
      %1921 = vmatpush1.bf16.msra.mxu0 0
      %1922 = vmatprep.subr.bf16.mxu0 0
      %1923 = vmatpush1.bf16.msra.mxu0 0
      %1924 = vmatprep.subr.bf16.mxu0 0
      %1925 = vmatpush1.bf16.msra.mxu0 0
      %1926 = vmatprep.subr.bf16.mxu0 0
      %1927 = vmatpush1.bf16.msra.mxu0 0
      %1928 = vmatprep.subr.bf16.mxu0 0
      %1929 = vmatpush1.bf16.msra.mxu0 0
      %1930 = vmatprep.mubr.bf16.mxu0 0
      %1931 = vmatmul.mubr.bf16.gmra.mrb[0].mxu0 %v1896
      %v1932 = vpop.f32.mrb[0].mxu0
      %v1933 = vadd.f32 0.0, %v1932
      %v1934 = vpop.f32.mrb[0].mxu0
      %v1935 = vpop.f32.mrb[0].mxu0
      %v1936 = vpop.f32.mrb[0].mxu0
      %1937 = vdwg.mxu0
      %v1942 = vunpack.c.l.b16 %v483
      %v1943 = vunpack.c.l.b16 %v484
      %v1944 = vunpack.c.l.b16 %v485
      %v1945 = vunpack.c.l.b16 %v486
      %v1946 = vpack.c.b16 %v1943, %v1942
      %v1947 = vpack.c.b16 %v1945, %v1944
      %v1951 = vsel %vm519, %v373, 0
      %1953 = vmatprep.subr.bf16.mxu0 0
      %1954 = vmatpush1.bf16.msra.mxu0 %v1946
      %1955 = vmatprep.subr.bf16.mxu0 0
      %1956 = vmatpush1.bf16.msra.mxu0 %v1947
      %1957 = vmatprep.subr.bf16.mxu0 0
      %1958 = vmatpush1.bf16.msra.mxu0 0
      %1959 = vmatprep.subr.bf16.mxu0 0
      %1960 = vmatpush1.bf16.msra.mxu0 0
      %1961 = vmatprep.subr.bf16.mxu0 0
      %1962 = vmatpush1.bf16.msra.mxu0 0
      %1963 = vmatprep.subr.bf16.mxu0 0
      %1964 = vmatpush1.bf16.msra.mxu0 0
      %1965 = vmatprep.subr.bf16.mxu0 0
      %1966 = vmatpush1.bf16.msra.mxu0 0
      %1967 = vmatprep.subr.bf16.mxu0 0
      %1968 = vmatpush1.bf16.msra.mxu0 0
      %1969 = vmatprep.subr.bf16.mxu0 0
      %1970 = vmatpush1.bf16.msra.mxu0 0
      %1971 = vmatprep.subr.bf16.mxu0 0
      %1972 = vmatpush1.bf16.msra.mxu0 0
      %1973 = vmatprep.subr.bf16.mxu0 0
      %1974 = vmatpush1.bf16.msra.mxu0 0
      %1975 = vmatprep.subr.bf16.mxu0 0
      %1976 = vmatpush1.bf16.msra.mxu0 0
      %1977 = vmatprep.subr.bf16.mxu0 0
      %1978 = vmatpush1.bf16.msra.mxu0 0
      %1979 = vmatprep.subr.bf16.mxu0 0
      %1980 = vmatpush1.bf16.msra.mxu0 0
      %1981 = vmatprep.subr.bf16.mxu0 0
      %1982 = vmatpush1.bf16.msra.mxu0 0
      %1983 = vmatprep.subr.bf16.mxu0 0
      %1984 = vmatpush1.bf16.msra.mxu0 0
      %1985 = vmatprep.mubr.bf16.mxu0 0
      %1986 = vmatmul.mubr.bf16.gmra.mrb[0].mxu0 %v1951
      %v1987 = vpop.f32.mrb[0].mxu0
      %v1988 = vadd.f32 0.0, %v1987
      %v1989 = vpop.f32.mrb[0].mxu0
      %v1990 = vpop.f32.mrb[0].mxu0
      %v1991 = vpop.f32.mrb[0].mxu0
      %1992 = vdwg.mxu0
      %v1997 = vunpack.c.l.b16 %v487
      %v1998 = vunpack.c.l.b16 %v488
      %v1999 = vunpack.c.l.b16 %v489
      %v2000 = vunpack.c.l.b16 %v490
      %v2001 = vpack.c.b16 %v1998, %v1997
      %v2002 = vpack.c.b16 %v2000, %v1999
      %v2006 = vsel %vm519, %v374, 0
      %2008 = vmatprep.subr.bf16.mxu0 0
      %2009 = vmatpush1.bf16.msra.mxu0 %v2001
      %2010 = vmatprep.subr.bf16.mxu0 0
      %2011 = vmatpush1.bf16.msra.mxu0 %v2002
      %2012 = vmatprep.subr.bf16.mxu0 0
      %2013 = vmatpush1.bf16.msra.mxu0 0
      %2014 = vmatprep.subr.bf16.mxu0 0
      %2015 = vmatpush1.bf16.msra.mxu0 0
      %2016 = vmatprep.subr.bf16.mxu0 0
      %2017 = vmatpush1.bf16.msra.mxu0 0
      %2018 = vmatprep.subr.bf16.mxu0 0
      %2019 = vmatpush1.bf16.msra.mxu0 0
      %2020 = vmatprep.subr.bf16.mxu0 0
      %2021 = vmatpush1.bf16.msra.mxu0 0
      %2022 = vmatprep.subr.bf16.mxu0 0
      %2023 = vmatpush1.bf16.msra.mxu0 0
      %2024 = vmatprep.subr.bf16.mxu0 0
      %2025 = vmatpush1.bf16.msra.mxu0 0
      %2026 = vmatprep.subr.bf16.mxu0 0
      %2027 = vmatpush1.bf16.msra.mxu0 0
      %2028 = vmatprep.subr.bf16.mxu0 0
      %2029 = vmatpush1.bf16.msra.mxu0 0
      %2030 = vmatprep.subr.bf16.mxu0 0
      %2031 = vmatpush1.bf16.msra.mxu0 0
      %2032 = vmatprep.subr.bf16.mxu0 0
      %2033 = vmatpush1.bf16.msra.mxu0 0
      %2034 = vmatprep.subr.bf16.mxu0 0
      %2035 = vmatpush1.bf16.msra.mxu0 0
      %2036 = vmatprep.subr.bf16.mxu0 0
      %2037 = vmatpush1.bf16.msra.mxu0 0
      %2038 = vmatprep.subr.bf16.mxu0 0
      %2039 = vmatpush1.bf16.msra.mxu0 0
      %2040 = vmatprep.mubr.bf16.mxu0 0
      %2041 = vmatmul.mubr.bf16.gmra.mrb[0].mxu0 %v2006
      %v2042 = vpop.f32.mrb[0].mxu0
      %v2043 = vadd.f32 0.0, %v2042
      %v2044 = vpop.f32.mrb[0].mxu0
      %v2045 = vpop.f32.mrb[0].mxu0
      %v2046 = vpop.f32.mrb[0].mxu0
      %2047 = vdwg.mxu0
      %v2052 = vunpack.c.l.b16 %v491
      %v2053 = vunpack.c.l.b16 %v492
      %v2054 = vunpack.c.l.b16 %v493
      %v2055 = vunpack.c.l.b16 %v494
      %v2056 = vpack.c.b16 %v2053, %v2052
      %v2057 = vpack.c.b16 %v2055, %v2054
      %v2061 = vsel %vm519, %v375, 0
      %2063 = vmatprep.subr.bf16.mxu0 0
      %2064 = vmatpush1.bf16.msra.mxu0 %v2056
      %2065 = vmatprep.subr.bf16.mxu0 0
      %2066 = vmatpush1.bf16.msra.mxu0 %v2057
      %2067 = vmatprep.subr.bf16.mxu0 0
      %2068 = vmatpush1.bf16.msra.mxu0 0
      %2069 = vmatprep.subr.bf16.mxu0 0
      %2070 = vmatpush1.bf16.msra.mxu0 0
      %2071 = vmatprep.subr.bf16.mxu0 0
      %2072 = vmatpush1.bf16.msra.mxu0 0
      %2073 = vmatprep.subr.bf16.mxu0 0
      %2074 = vmatpush1.bf16.msra.mxu0 0
      %2075 = vmatprep.subr.bf16.mxu0 0
      %2076 = vmatpush1.bf16.msra.mxu0 0
      %2077 = vmatprep.subr.bf16.mxu0 0
      %2078 = vmatpush1.bf16.msra.mxu0 0
      %2079 = vmatprep.subr.bf16.mxu0 0
      %2080 = vmatpush1.bf16.msra.mxu0 0
      %2081 = vmatprep.subr.bf16.mxu0 0
      %2082 = vmatpush1.bf16.msra.mxu0 0
      %2083 = vmatprep.subr.bf16.mxu0 0
      %2084 = vmatpush1.bf16.msra.mxu0 0
      %2085 = vmatprep.subr.bf16.mxu0 0
      %2086 = vmatpush1.bf16.msra.mxu0 0
      %2087 = vmatprep.subr.bf16.mxu0 0
      %2088 = vmatpush1.bf16.msra.mxu0 0
      %2089 = vmatprep.subr.bf16.mxu0 0
      %2090 = vmatpush1.bf16.msra.mxu0 0
      %2091 = vmatprep.subr.bf16.mxu0 0
      %2092 = vmatpush1.bf16.msra.mxu0 0
      %2093 = vmatprep.subr.bf16.mxu0 0
      %2094 = vmatpush1.bf16.msra.mxu0 0
      %2095 = vmatprep.mubr.bf16.mxu0 0
      %2096 = vmatmul.mubr.bf16.gmra.mrb[0].mxu0 %v2061
      %v2097 = vpop.f32.mrb[0].mxu0
      %v2098 = vadd.f32 0.0, %v2097
      %v2099 = vpop.f32.mrb[0].mxu0
      %v2100 = vpop.f32.mrb[0].mxu0
      %v2101 = vpop.f32.mrb[0].mxu0
      %2102 = vdwg.mxu0
      %v2107 = vunpack.c.l.b16 %v495
      %v2108 = vunpack.c.l.b16 %v496
      %v2109 = vunpack.c.l.b16 %v497
      %v2110 = vunpack.c.l.b16 %v498
      %v2111 = vpack.c.b16 %v2108, %v2107
      %v2112 = vpack.c.b16 %v2110, %v2109
      %v2116 = vsel %vm519, %v376, 0
      %2118 = vmatprep.subr.bf16.mxu0 0
      %2119 = vmatpush1.bf16.msra.mxu0 %v2111
      %2120 = vmatprep.subr.bf16.mxu0 0
      %2121 = vmatpush1.bf16.msra.mxu0 %v2112
      %2122 = vmatprep.subr.bf16.mxu0 0
      %2123 = vmatpush1.bf16.msra.mxu0 0
      %2124 = vmatprep.subr.bf16.mxu0 0
      %2125 = vmatpush1.bf16.msra.mxu0 0
      %2126 = vmatprep.subr.bf16.mxu0 0
      %2127 = vmatpush1.bf16.msra.mxu0 0
      %2128 = vmatprep.subr.bf16.mxu0 0
      %2129 = vmatpush1.bf16.msra.mxu0 0
      %2130 = vmatprep.subr.bf16.mxu0 0
      %2131 = vmatpush1.bf16.msra.mxu0 0
      %2132 = vmatprep.subr.bf16.mxu0 0
      %2133 = vmatpush1.bf16.msra.mxu0 0
      %2134 = vmatprep.subr.bf16.mxu0 0
      %2135 = vmatpush1.bf16.msra.mxu0 0
      %2136 = vmatprep.subr.bf16.mxu0 0
      %2137 = vmatpush1.bf16.msra.mxu0 0
      %2138 = vmatprep.subr.bf16.mxu0 0
      %2139 = vmatpush1.bf16.msra.mxu0 0
      %2140 = vmatprep.subr.bf16.mxu0 0
      %2141 = vmatpush1.bf16.msra.mxu0 0
      %2142 = vmatprep.subr.bf16.mxu0 0
      %2143 = vmatpush1.bf16.msra.mxu0 0
      %2144 = vmatprep.subr.bf16.mxu0 0
      %2145 = vmatpush1.bf16.msra.mxu0 0
      %2146 = vmatprep.subr.bf16.mxu0 0
      %2147 = vmatpush1.bf16.msra.mxu0 0
      %2148 = vmatprep.subr.bf16.mxu0 0
      %2149 = vmatpush1.bf16.msra.mxu0 0
      %2150 = vmatprep.mubr.bf16.mxu0 0
      %2151 = vmatmul.mubr.bf16.gmra.mrb[0].mxu0 %v2116
      %v2152 = vpop.f32.mrb[0].mxu0
      %v2153 = vadd.f32 0.0, %v2152
      %v2154 = vpop.f32.mrb[0].mxu0
      %v2155 = vpop.f32.mrb[0].mxu0
      %v2156 = vpop.f32.mrb[0].mxu0
      %2157 = vdwg.mxu0
      %v2162 = vunpack.c.l.b16 %v499
      %v2163 = vunpack.c.l.b16 %v500
      %v2164 = vunpack.c.l.b16 %v501
      %v2165 = vunpack.c.l.b16 %v502
      %v2166 = vpack.c.b16 %v2163, %v2162
      %v2167 = vpack.c.b16 %v2165, %v2164
      %v2171 = vsel %vm519, %v377, 0
      %2173 = vmatprep.subr.bf16.mxu0 0
      %2174 = vmatpush1.bf16.msra.mxu0 %v2166
      %2175 = vmatprep.subr.bf16.mxu0 0
      %2176 = vmatpush1.bf16.msra.mxu0 %v2167
      %2177 = vmatprep.subr.bf16.mxu0 0
      %2178 = vmatpush1.bf16.msra.mxu0 0
      %2179 = vmatprep.subr.bf16.mxu0 0
      %2180 = vmatpush1.bf16.msra.mxu0 0
      %2181 = vmatprep.subr.bf16.mxu0 0
      %2182 = vmatpush1.bf16.msra.mxu0 0
      %2183 = vmatprep.subr.bf16.mxu0 0
      %2184 = vmatpush1.bf16.msra.mxu0 0
      %2185 = vmatprep.subr.bf16.mxu0 0
      %2186 = vmatpush1.bf16.msra.mxu0 0
      %2187 = vmatprep.subr.bf16.mxu0 0
      %2188 = vmatpush1.bf16.msra.mxu0 0
      %2189 = vmatprep.subr.bf16.mxu0 0
      %2190 = vmatpush1.bf16.msra.mxu0 0
      %2191 = vmatprep.subr.bf16.mxu0 0
      %2192 = vmatpush1.bf16.msra.mxu0 0
      %2193 = vmatprep.subr.bf16.mxu0 0
      %2194 = vmatpush1.bf16.msra.mxu0 0
      %2195 = vmatprep.subr.bf16.mxu0 0
      %2196 = vmatpush1.bf16.msra.mxu0 0
      %2197 = vmatprep.subr.bf16.mxu0 0
      %2198 = vmatpush1.bf16.msra.mxu0 0
      %2199 = vmatprep.subr.bf16.mxu0 0
      %2200 = vmatpush1.bf16.msra.mxu0 0
      %2201 = vmatprep.subr.bf16.mxu0 0
      %2202 = vmatpush1.bf16.msra.mxu0 0
      %2203 = vmatprep.subr.bf16.mxu0 0
      %2204 = vmatpush1.bf16.msra.mxu0 0
      %2205 = vmatprep.mubr.bf16.mxu0 0
      %2206 = vmatmul.mubr.bf16.gmra.mrb[0].mxu0 %v2171
      %v2207 = vpop.f32.mrb[0].mxu0
      %v2208 = vadd.f32 0.0, %v2207
      %v2209 = vpop.f32.mrb[0].mxu0
      %v2210 = vpop.f32.mrb[0].mxu0
      %v2211 = vpop.f32.mrb[0].mxu0
      %2212 = vdwg.mxu0
      %v2217 = vunpack.c.l.b16 %v503
      %v2218 = vunpack.c.l.b16 %v504
      %v2219 = vunpack.c.l.b16 %v505
      %v2220 = vunpack.c.l.b16 %v506
      %v2221 = vpack.c.b16 %v2218, %v2217
      %v2222 = vpack.c.b16 %v2220, %v2219
      %v2226 = vsel %vm519, %v378, 0
      %2228 = vmatprep.subr.bf16.mxu0 0
      %2229 = vmatpush1.bf16.msra.mxu0 %v2221
      %2230 = vmatprep.subr.bf16.mxu0 0
      %2231 = vmatpush1.bf16.msra.mxu0 %v2222
      %2232 = vmatprep.subr.bf16.mxu0 0
      %2233 = vmatpush1.bf16.msra.mxu0 0
      %2234 = vmatprep.subr.bf16.mxu0 0
      %2235 = vmatpush1.bf16.msra.mxu0 0
      %2236 = vmatprep.subr.bf16.mxu0 0
      %2237 = vmatpush1.bf16.msra.mxu0 0
      %2238 = vmatprep.subr.bf16.mxu0 0
      %2239 = vmatpush1.bf16.msra.mxu0 0
      %2240 = vmatprep.subr.bf16.mxu0 0
      %2241 = vmatpush1.bf16.msra.mxu0 0
      %2242 = vmatprep.subr.bf16.mxu0 0
      %2243 = vmatpush1.bf16.msra.mxu0 0
      %2244 = vmatprep.subr.bf16.mxu0 0
      %2245 = vmatpush1.bf16.msra.mxu0 0
      %2246 = vmatprep.subr.bf16.mxu0 0
      %2247 = vmatpush1.bf16.msra.mxu0 0
      %2248 = vmatprep.subr.bf16.mxu0 0
      %2249 = vmatpush1.bf16.msra.mxu0 0
      %2250 = vmatprep.subr.bf16.mxu0 0
      %2251 = vmatpush1.bf16.msra.mxu0 0
      %2252 = vmatprep.subr.bf16.mxu0 0
      %2253 = vmatpush1.bf16.msra.mxu0 0
      %2254 = vmatprep.subr.bf16.mxu0 0
      %2255 = vmatpush1.bf16.msra.mxu0 0
      %2256 = vmatprep.subr.bf16.mxu0 0
      %2257 = vmatpush1.bf16.msra.mxu0 0
      %2258 = vmatprep.subr.bf16.mxu0 0
      %2259 = vmatpush1.bf16.msra.mxu0 0
      %2260 = vmatprep.mubr.bf16.mxu0 0
      %2261 = vmatmul.mubr.bf16.gmra.mrb[0].mxu0 %v2226
      %v2262 = vpop.f32.mrb[0].mxu0
      %v2263 = vadd.f32 0.0, %v2262
      %v2264 = vpop.f32.mrb[0].mxu0
      %v2265 = vpop.f32.mrb[0].mxu0
      %v2266 = vpop.f32.mrb[0].mxu0
      %2267 = vdwg.mxu0
      %2268 = vmatprep.subr.bf16.mxu0 0
      %2269 = vmatpush1.bf16.msra.mxu0 %v515
      %2270 = vmatprep.subr.bf16.mxu0 0
      %2271 = vmatpush1.bf16.msra.mxu0 %v516
      %2272 = vmatprep.subr.bf16.mxu0 0
      %2273 = vmatpush1.bf16.msra.mxu0 0
      %2274 = vmatprep.subr.bf16.mxu0 0
      %2275 = vmatpush1.bf16.msra.mxu0 0
      %2276 = vmatprep.subr.bf16.mxu0 0
      %2277 = vmatpush1.bf16.msra.mxu0 0
      %2278 = vmatprep.subr.bf16.mxu0 0
      %2279 = vmatpush1.bf16.msra.mxu0 0
      %2280 = vmatprep.subr.bf16.mxu0 0
      %2281 = vmatpush1.bf16.msra.mxu0 0
      %2282 = vmatprep.subr.bf16.mxu0 0
      %2283 = vmatpush1.bf16.msra.mxu0 0
      %2284 = vmatprep.subr.bf16.mxu0 0
      %2285 = vmatpush1.bf16.msra.mxu0 0
      %2286 = vmatprep.subr.bf16.mxu0 0
      %2287 = vmatpush1.bf16.msra.mxu0 0
      %2288 = vmatprep.subr.bf16.mxu0 0
      %2289 = vmatpush1.bf16.msra.mxu0 0
      %2290 = vmatprep.subr.bf16.mxu0 0
      %2291 = vmatpush1.bf16.msra.mxu0 0
      %2292 = vmatprep.subr.bf16.mxu0 0
      %2293 = vmatpush1.bf16.msra.mxu0 0
      %2294 = vmatprep.subr.bf16.mxu0 0
      %2295 = vmatpush1.bf16.msra.mxu0 0
      %2296 = vmatprep.subr.bf16.mxu0 0
      %2297 = vmatpush1.bf16.msra.mxu0 0
      %2298 = vmatprep.subr.bf16.mxu0 0
      %2299 = vmatpush1.bf16.msra.mxu0 0
      %2300 = vmatprep.mubr.bf16.mxu0 0
      %2301 = vmatmul.mubr.bf16.gmra.mrb[0].mxu0 %v1401
      %v2302 = vpop.f32.mrb[0].mxu0
      %v2303 = vadd.f32 0.0, %v2302
      %v2304 = vpop.f32.mrb[0].mxu0
      %v2305 = vpop.f32.mrb[0].mxu0
      %v2306 = vpop.f32.mrb[0].mxu0
      %2307 = vdwg.mxu0
      %2308 = vmatprep.subr.bf16.mxu0 0
      %2309 = vmatpush1.bf16.msra.mxu0 %v571
      %2310 = vmatprep.subr.bf16.mxu0 0
      %2311 = vmatpush1.bf16.msra.mxu0 %v572
      %2312 = vmatprep.subr.bf16.mxu0 0
      %2313 = vmatpush1.bf16.msra.mxu0 0
      %2314 = vmatprep.subr.bf16.mxu0 0
      %2315 = vmatpush1.bf16.msra.mxu0 0
      %2316 = vmatprep.subr.bf16.mxu0 0
      %2317 = vmatpush1.bf16.msra.mxu0 0
      %2318 = vmatprep.subr.bf16.mxu0 0
      %2319 = vmatpush1.bf16.msra.mxu0 0
      %2320 = vmatprep.subr.bf16.mxu0 0
      %2321 = vmatpush1.bf16.msra.mxu0 0
      %2322 = vmatprep.subr.bf16.mxu0 0
      %2323 = vmatpush1.bf16.msra.mxu0 0
      %2324 = vmatprep.subr.bf16.mxu0 0
      %2325 = vmatpush1.bf16.msra.mxu0 0
      %2326 = vmatprep.subr.bf16.mxu0 0
      %2327 = vmatpush1.bf16.msra.mxu0 0
      %2328 = vmatprep.subr.bf16.mxu0 0
      %2329 = vmatpush1.bf16.msra.mxu0 0
      %2330 = vmatprep.subr.bf16.mxu0 0
      %2331 = vmatpush1.bf16.msra.mxu0 0
      %2332 = vmatprep.subr.bf16.mxu0 0
      %2333 = vmatpush1.bf16.msra.mxu0 0
      %2334 = vmatprep.subr.bf16.mxu0 0
      %2335 = vmatpush1.bf16.msra.mxu0 0
      %2336 = vmatprep.subr.bf16.mxu0 0
      %2337 = vmatpush1.bf16.msra.mxu0 0
      %2338 = vmatprep.subr.bf16.mxu0 0
      %2339 = vmatpush1.bf16.msra.mxu0 0
      %2340 = vmatprep.mubr.bf16.mxu0 0
      %2341 = vmatmul.mubr.bf16.gmra.mrb[0].mxu0 %v1456
      %v2342 = vpop.f32.mrb[0].mxu0
      %v2343 = vadd.f32 0.0, %v2342
      %v2344 = vpop.f32.mrb[0].mxu0
      %v2345 = vpop.f32.mrb[0].mxu0
      %v2346 = vpop.f32.mrb[0].mxu0
      %2347 = vdwg.mxu0
      %2348 = vmatprep.subr.bf16.mxu0 0
      %2349 = vmatpush1.bf16.msra.mxu0 %v626
      %2350 = vmatprep.subr.bf16.mxu0 0
      %2351 = vmatpush1.bf16.msra.mxu0 %v627
      %2352 = vmatprep.subr.bf16.mxu0 0
      %2353 = vmatpush1.bf16.msra.mxu0 0
      %2354 = vmatprep.subr.bf16.mxu0 0
      %2355 = vmatpush1.bf16.msra.mxu0 0
      %2356 = vmatprep.subr.bf16.mxu0 0
      %2357 = vmatpush1.bf16.msra.mxu0 0
      %2358 = vmatprep.subr.bf16.mxu0 0
      %2359 = vmatpush1.bf16.msra.mxu0 0
      %2360 = vmatprep.subr.bf16.mxu0 0
      %2361 = vmatpush1.bf16.msra.mxu0 0
      %2362 = vmatprep.subr.bf16.mxu0 0
      %2363 = vmatpush1.bf16.msra.mxu0 0
      %2364 = vmatprep.subr.bf16.mxu0 0
      %2365 = vmatpush1.bf16.msra.mxu0 0
      %2366 = vmatprep.subr.bf16.mxu0 0
      %2367 = vmatpush1.bf16.msra.mxu0 0
      %2368 = vmatprep.subr.bf16.mxu0 0
      %2369 = vmatpush1.bf16.msra.mxu0 0
      %2370 = vmatprep.subr.bf16.mxu0 0
      %2371 = vmatpush1.bf16.msra.mxu0 0
      %2372 = vmatprep.subr.bf16.mxu0 0
      %2373 = vmatpush1.bf16.msra.mxu0 0
      %2374 = vmatprep.subr.bf16.mxu0 0
      %2375 = vmatpush1.bf16.msra.mxu0 0
      %2376 = vmatprep.subr.bf16.mxu0 0
      %2377 = vmatpush1.bf16.msra.mxu0 0
      %2378 = vmatprep.subr.bf16.mxu0 0
      %2379 = vmatpush1.bf16.msra.mxu0 0
      %2380 = vmatprep.mubr.bf16.mxu0 0
      %2381 = vmatmul.mubr.bf16.gmra.mrb[0].mxu0 %v1511
      %v2382 = vpop.f32.mrb[0].mxu0
      %v2383 = vadd.f32 0.0, %v2382
      %v2384 = vpop.f32.mrb[0].mxu0
      %v2385 = vpop.f32.mrb[0].mxu0
      %v2386 = vpop.f32.mrb[0].mxu0
      %2387 = vdwg.mxu0
      %2388 = vmatprep.subr.bf16.mxu0 0
      %2389 = vmatpush1.bf16.msra.mxu0 %v681
      %2390 = vmatprep.subr.bf16.mxu0 0
      %2391 = vmatpush1.bf16.msra.mxu0 %v682
      %2392 = vmatprep.subr.bf16.mxu0 0
      %2393 = vmatpush1.bf16.msra.mxu0 0
      %2394 = vmatprep.subr.bf16.mxu0 0
      %2395 = vmatpush1.bf16.msra.mxu0 0
      %2396 = vmatprep.subr.bf16.mxu0 0
      %2397 = vmatpush1.bf16.msra.mxu0 0
      %2398 = vmatprep.subr.bf16.mxu0 0
      %2399 = vmatpush1.bf16.msra.mxu0 0
      %2400 = vmatprep.subr.bf16.mxu0 0
      %2401 = vmatpush1.bf16.msra.mxu0 0
      %2402 = vmatprep.subr.bf16.mxu0 0
      %2403 = vmatpush1.bf16.msra.mxu0 0
      %2404 = vmatprep.subr.bf16.mxu0 0
      %2405 = vmatpush1.bf16.msra.mxu0 0
      %2406 = vmatprep.subr.bf16.mxu0 0
      %2407 = vmatpush1.bf16.msra.mxu0 0
      %2408 = vmatprep.subr.bf16.mxu0 0
      %2409 = vmatpush1.bf16.msra.mxu0 0
      %2410 = vmatprep.subr.bf16.mxu0 0
      %2411 = vmatpush1.bf16.msra.mxu0 0
      %2412 = vmatprep.subr.bf16.mxu0 0
      %2413 = vmatpush1.bf16.msra.mxu0 0
      %2414 = vmatprep.subr.bf16.mxu0 0
      %2415 = vmatpush1.bf16.msra.mxu0 0
      %2416 = vmatprep.subr.bf16.mxu0 0
      %2417 = vmatpush1.bf16.msra.mxu0 0
      %2418 = vmatprep.subr.bf16.mxu0 0
      %2419 = vmatpush1.bf16.msra.mxu0 0
      %2420 = vmatprep.mubr.bf16.mxu0 0
      %2421 = vmatmul.mubr.bf16.gmra.mrb[0].mxu0 %v1566
      %v2422 = vpop.f32.mrb[0].mxu0
      %v2423 = vadd.f32 0.0, %v2422
      %v2424 = vpop.f32.mrb[0].mxu0
      %v2425 = vpop.f32.mrb[0].mxu0
      %v2426 = vpop.f32.mrb[0].mxu0
      %2427 = vdwg.mxu0
      %2428 = vmatprep.subr.bf16.mxu0 0
      %2429 = vmatpush1.bf16.msra.mxu0 %v736
      %2430 = vmatprep.subr.bf16.mxu0 0
      %2431 = vmatpush1.bf16.msra.mxu0 %v737
      %2432 = vmatprep.subr.bf16.mxu0 0
      %2433 = vmatpush1.bf16.msra.mxu0 0
      %2434 = vmatprep.subr.bf16.mxu0 0
      %2435 = vmatpush1.bf16.msra.mxu0 0
      %2436 = vmatprep.subr.bf16.mxu0 0
      %2437 = vmatpush1.bf16.msra.mxu0 0
      %2438 = vmatprep.subr.bf16.mxu0 0
      %2439 = vmatpush1.bf16.msra.mxu0 0
      %2440 = vmatprep.subr.bf16.mxu0 0
      %2441 = vmatpush1.bf16.msra.mxu0 0
      %2442 = vmatprep.subr.bf16.mxu0 0
      %2443 = vmatpush1.bf16.msra.mxu0 0
      %2444 = vmatprep.subr.bf16.mxu0 0
      %2445 = vmatpush1.bf16.msra.mxu0 0
      %2446 = vmatprep.subr.bf16.mxu0 0
      %2447 = vmatpush1.bf16.msra.mxu0 0
      %2448 = vmatprep.subr.bf16.mxu0 0
      %2449 = vmatpush1.bf16.msra.mxu0 0
      %2450 = vmatprep.subr.bf16.mxu0 0
      %2451 = vmatpush1.bf16.msra.mxu0 0
      %2452 = vmatprep.subr.bf16.mxu0 0
      %2453 = vmatpush1.bf16.msra.mxu0 0
      %2454 = vmatprep.subr.bf16.mxu0 0
      %2455 = vmatpush1.bf16.msra.mxu0 0
      %2456 = vmatprep.subr.bf16.mxu0 0
      %2457 = vmatpush1.bf16.msra.mxu0 0
      %2458 = vmatprep.subr.bf16.mxu0 0
      %2459 = vmatpush1.bf16.msra.mxu0 0
      %2460 = vmatprep.mubr.bf16.mxu0 0
      %2461 = vmatmul.mubr.bf16.gmra.mrb[0].mxu0 %v1621
      %v2462 = vpop.f32.mrb[0].mxu0
      %v2463 = vadd.f32 0.0, %v2462
      %v2464 = vpop.f32.mrb[0].mxu0
      %v2465 = vpop.f32.mrb[0].mxu0
      %v2466 = vpop.f32.mrb[0].mxu0
      %2467 = vdwg.mxu0
      %2468 = vmatprep.subr.bf16.mxu0 0
      %2469 = vmatpush1.bf16.msra.mxu0 %v791
      %2470 = vmatprep.subr.bf16.mxu0 0
      %2471 = vmatpush1.bf16.msra.mxu0 %v792
      %2472 = vmatprep.subr.bf16.mxu0 0
      %2473 = vmatpush1.bf16.msra.mxu0 0
      %2474 = vmatprep.subr.bf16.mxu0 0
      %2475 = vmatpush1.bf16.msra.mxu0 0
      %2476 = vmatprep.subr.bf16.mxu0 0
      %2477 = vmatpush1.bf16.msra.mxu0 0
      %2478 = vmatprep.subr.bf16.mxu0 0
      %2479 = vmatpush1.bf16.msra.mxu0 0
      %2480 = vmatprep.subr.bf16.mxu0 0
      %2481 = vmatpush1.bf16.msra.mxu0 0
      %2482 = vmatprep.subr.bf16.mxu0 0
      %2483 = vmatpush1.bf16.msra.mxu0 0
      %2484 = vmatprep.subr.bf16.mxu0 0
      %2485 = vmatpush1.bf16.msra.mxu0 0
      %2486 = vmatprep.subr.bf16.mxu0 0
      %2487 = vmatpush1.bf16.msra.mxu0 0
      %2488 = vmatprep.subr.bf16.mxu0 0
      %2489 = vmatpush1.bf16.msra.mxu0 0
      %2490 = vmatprep.subr.bf16.mxu0 0
      %2491 = vmatpush1.bf16.msra.mxu0 0
      %2492 = vmatprep.subr.bf16.mxu0 0
      %2493 = vmatpush1.bf16.msra.mxu0 0
      %2494 = vmatprep.subr.bf16.mxu0 0
      %2495 = vmatpush1.bf16.msra.mxu0 0
      %2496 = vmatprep.subr.bf16.mxu0 0
      %2497 = vmatpush1.bf16.msra.mxu0 0
      %2498 = vmatprep.subr.bf16.mxu0 0
      %2499 = vmatpush1.bf16.msra.mxu0 0
      %2500 = vmatprep.mubr.bf16.mxu0 0
      %2501 = vmatmul.mubr.bf16.gmra.mrb[0].mxu0 %v1676
      %v2502 = vpop.f32.mrb[0].mxu0
      %v2503 = vadd.f32 0.0, %v2502
      %v2504 = vpop.f32.mrb[0].mxu0
      %v2505 = vpop.f32.mrb[0].mxu0
      %v2506 = vpop.f32.mrb[0].mxu0
      %2507 = vdwg.mxu0
      %2508 = vmatprep.subr.bf16.mxu0 0
      %2509 = vmatpush1.bf16.msra.mxu0 %v846
      %2510 = vmatprep.subr.bf16.mxu0 0
      %2511 = vmatpush1.bf16.msra.mxu0 %v847
      %2512 = vmatprep.subr.bf16.mxu0 0
      %2513 = vmatpush1.bf16.msra.mxu0 0
      %2514 = vmatprep.subr.bf16.mxu0 0
      %2515 = vmatpush1.bf16.msra.mxu0 0
      %2516 = vmatprep.subr.bf16.mxu0 0
      %2517 = vmatpush1.bf16.msra.mxu0 0
      %2518 = vmatprep.subr.bf16.mxu0 0
      %2519 = vmatpush1.bf16.msra.mxu0 0
      %2520 = vmatprep.subr.bf16.mxu0 0
      %2521 = vmatpush1.bf16.msra.mxu0 0
      %2522 = vmatprep.subr.bf16.mxu0 0
      %2523 = vmatpush1.bf16.msra.mxu0 0
      %2524 = vmatprep.subr.bf16.mxu0 0
      %2525 = vmatpush1.bf16.msra.mxu0 0
      %2526 = vmatprep.subr.bf16.mxu0 0
      %2527 = vmatpush1.bf16.msra.mxu0 0
      %2528 = vmatprep.subr.bf16.mxu0 0
      %2529 = vmatpush1.bf16.msra.mxu0 0
      %2530 = vmatprep.subr.bf16.mxu0 0
      %2531 = vmatpush1.bf16.msra.mxu0 0
      %2532 = vmatprep.subr.bf16.mxu0 0
      %2533 = vmatpush1.bf16.msra.mxu0 0
      %2534 = vmatprep.subr.bf16.mxu0 0
      %2535 = vmatpush1.bf16.msra.mxu0 0
      %2536 = vmatprep.subr.bf16.mxu0 0
      %2537 = vmatpush1.bf16.msra.mxu0 0
      %2538 = vmatprep.subr.bf16.mxu0 0
      %2539 = vmatpush1.bf16.msra.mxu0 0
      %2540 = vmatprep.mubr.bf16.mxu0 0
      %2541 = vmatmul.mubr.bf16.gmra.mrb[0].mxu0 %v1731
      %v2542 = vpop.f32.mrb[0].mxu0
      %v2543 = vadd.f32 0.0, %v2542
      %v2544 = vpop.f32.mrb[0].mxu0
      %v2545 = vpop.f32.mrb[0].mxu0
      %v2546 = vpop.f32.mrb[0].mxu0
      %2547 = vdwg.mxu0
      %2548 = vmatprep.subr.bf16.mxu0 0
      %2549 = vmatpush1.bf16.msra.mxu0 %v901
      %2550 = vmatprep.subr.bf16.mxu0 0
      %2551 = vmatpush1.bf16.msra.mxu0 %v902
      %2552 = vmatprep.subr.bf16.mxu0 0
      %2553 = vmatpush1.bf16.msra.mxu0 0
      %2554 = vmatprep.subr.bf16.mxu0 0
      %2555 = vmatpush1.bf16.msra.mxu0 0
      %2556 = vmatprep.subr.bf16.mxu0 0
      %2557 = vmatpush1.bf16.msra.mxu0 0
      %2558 = vmatprep.subr.bf16.mxu0 0
      %2559 = vmatpush1.bf16.msra.mxu0 0
      %2560 = vmatprep.subr.bf16.mxu0 0
      %2561 = vmatpush1.bf16.msra.mxu0 0
      %2562 = vmatprep.subr.bf16.mxu0 0
      %2563 = vmatpush1.bf16.msra.mxu0 0
      %2564 = vmatprep.subr.bf16.mxu0 0
      %2565 = vmatpush1.bf16.msra.mxu0 0
      %2566 = vmatprep.subr.bf16.mxu0 0
      %2567 = vmatpush1.bf16.msra.mxu0 0
      %2568 = vmatprep.subr.bf16.mxu0 0
      %2569 = vmatpush1.bf16.msra.mxu0 0
      %2570 = vmatprep.subr.bf16.mxu0 0
      %2571 = vmatpush1.bf16.msra.mxu0 0
      %2572 = vmatprep.subr.bf16.mxu0 0
      %2573 = vmatpush1.bf16.msra.mxu0 0
      %2574 = vmatprep.subr.bf16.mxu0 0
      %2575 = vmatpush1.bf16.msra.mxu0 0
      %2576 = vmatprep.subr.bf16.mxu0 0
      %2577 = vmatpush1.bf16.msra.mxu0 0
      %2578 = vmatprep.subr.bf16.mxu0 0
      %2579 = vmatpush1.bf16.msra.mxu0 0
      %2580 = vmatprep.mubr.bf16.mxu0 0
      %2581 = vmatmul.mubr.bf16.gmra.mrb[0].mxu0 %v1786
      %v2582 = vpop.f32.mrb[0].mxu0
      %v2583 = vadd.f32 0.0, %v2582
      %v2584 = vpop.f32.mrb[0].mxu0
      %v2585 = vpop.f32.mrb[0].mxu0
      %v2586 = vpop.f32.mrb[0].mxu0
      %2587 = vdwg.mxu0
      %2588 = vmatprep.subr.bf16.mxu0 0
      %2589 = vmatpush1.bf16.msra.mxu0 %v956
      %2590 = vmatprep.subr.bf16.mxu0 0
      %2591 = vmatpush1.bf16.msra.mxu0 %v957
      %2592 = vmatprep.subr.bf16.mxu0 0
      %2593 = vmatpush1.bf16.msra.mxu0 0
      %2594 = vmatprep.subr.bf16.mxu0 0
      %2595 = vmatpush1.bf16.msra.mxu0 0
      %2596 = vmatprep.subr.bf16.mxu0 0
      %2597 = vmatpush1.bf16.msra.mxu0 0
      %2598 = vmatprep.subr.bf16.mxu0 0
      %2599 = vmatpush1.bf16.msra.mxu0 0
      %2600 = vmatprep.subr.bf16.mxu0 0
      %2601 = vmatpush1.bf16.msra.mxu0 0
      %2602 = vmatprep.subr.bf16.mxu0 0
      %2603 = vmatpush1.bf16.msra.mxu0 0
      %2604 = vmatprep.subr.bf16.mxu0 0
      %2605 = vmatpush1.bf16.msra.mxu0 0
      %2606 = vmatprep.subr.bf16.mxu0 0
      %2607 = vmatpush1.bf16.msra.mxu0 0
      %2608 = vmatprep.subr.bf16.mxu0 0
      %2609 = vmatpush1.bf16.msra.mxu0 0
      %2610 = vmatprep.subr.bf16.mxu0 0
      %2611 = vmatpush1.bf16.msra.mxu0 0
      %2612 = vmatprep.subr.bf16.mxu0 0
      %2613 = vmatpush1.bf16.msra.mxu0 0
      %2614 = vmatprep.subr.bf16.mxu0 0
      %2615 = vmatpush1.bf16.msra.mxu0 0
      %2616 = vmatprep.subr.bf16.mxu0 0
      %2617 = vmatpush1.bf16.msra.mxu0 0
      %2618 = vmatprep.subr.bf16.mxu0 0
      %2619 = vmatpush1.bf16.msra.mxu0 0
      %2620 = vmatprep.mubr.bf16.mxu0 0
      %2621 = vmatmul.mubr.bf16.gmra.mrb[0].mxu0 %v1841
      %v2622 = vpop.f32.mrb[0].mxu0
      %v2623 = vadd.f32 0.0, %v2622
      %v2624 = vpop.f32.mrb[0].mxu0
      %v2625 = vpop.f32.mrb[0].mxu0
      %v2626 = vpop.f32.mrb[0].mxu0
      %2627 = vdwg.mxu0
      %2628 = vmatprep.subr.bf16.mxu0 0
      %2629 = vmatpush1.bf16.msra.mxu0 %v1011
      %2630 = vmatprep.subr.bf16.mxu0 0
      %2631 = vmatpush1.bf16.msra.mxu0 %v1012
      %2632 = vmatprep.subr.bf16.mxu0 0
      %2633 = vmatpush1.bf16.msra.mxu0 0
      %2634 = vmatprep.subr.bf16.mxu0 0
      %2635 = vmatpush1.bf16.msra.mxu0 0
      %2636 = vmatprep.subr.bf16.mxu0 0
      %2637 = vmatpush1.bf16.msra.mxu0 0
      %2638 = vmatprep.subr.bf16.mxu0 0
      %2639 = vmatpush1.bf16.msra.mxu0 0
      %2640 = vmatprep.subr.bf16.mxu0 0
      %2641 = vmatpush1.bf16.msra.mxu0 0
      %2642 = vmatprep.subr.bf16.mxu0 0
      %2643 = vmatpush1.bf16.msra.mxu0 0
      %2644 = vmatprep.subr.bf16.mxu0 0
      %2645 = vmatpush1.bf16.msra.mxu0 0
      %2646 = vmatprep.subr.bf16.mxu0 0
      %2647 = vmatpush1.bf16.msra.mxu0 0
      %2648 = vmatprep.subr.bf16.mxu0 0
      %2649 = vmatpush1.bf16.msra.mxu0 0
      %2650 = vmatprep.subr.bf16.mxu0 0
      %2651 = vmatpush1.bf16.msra.mxu0 0
      %2652 = vmatprep.subr.bf16.mxu0 0
      %2653 = vmatpush1.bf16.msra.mxu0 0
      %2654 = vmatprep.subr.bf16.mxu0 0
      %2655 = vmatpush1.bf16.msra.mxu0 0
      %2656 = vmatprep.subr.bf16.mxu0 0
      %2657 = vmatpush1.bf16.msra.mxu0 0
      %2658 = vmatprep.subr.bf16.mxu0 0
      %2659 = vmatpush1.bf16.msra.mxu0 0
      %2660 = vmatprep.mubr.bf16.mxu0 0
      %2661 = vmatmul.mubr.bf16.gmra.mrb[0].mxu0 %v1896
      %v2662 = vpop.f32.mrb[0].mxu0
      %v2663 = vadd.f32 0.0, %v2662
      %v2664 = vpop.f32.mrb[0].mxu0
      %v2665 = vpop.f32.mrb[0].mxu0
      %v2666 = vpop.f32.mrb[0].mxu0
      %2667 = vdwg.mxu0
      %2668 = vmatprep.subr.bf16.mxu0 0
      %2669 = vmatpush1.bf16.msra.mxu0 %v1066
      %2670 = vmatprep.subr.bf16.mxu0 0
      %2671 = vmatpush1.bf16.msra.mxu0 %v1067
      %2672 = vmatprep.subr.bf16.mxu0 0
      %2673 = vmatpush1.bf16.msra.mxu0 0
      %2674 = vmatprep.subr.bf16.mxu0 0
      %2675 = vmatpush1.bf16.msra.mxu0 0
      %2676 = vmatprep.subr.bf16.mxu0 0
      %2677 = vmatpush1.bf16.msra.mxu0 0
      %2678 = vmatprep.subr.bf16.mxu0 0
      %2679 = vmatpush1.bf16.msra.mxu0 0
      %2680 = vmatprep.subr.bf16.mxu0 0
      %2681 = vmatpush1.bf16.msra.mxu0 0
      %2682 = vmatprep.subr.bf16.mxu0 0
      %2683 = vmatpush1.bf16.msra.mxu0 0
      %2684 = vmatprep.subr.bf16.mxu0 0
      %2685 = vmatpush1.bf16.msra.mxu0 0
      %2686 = vmatprep.subr.bf16.mxu0 0
      %2687 = vmatpush1.bf16.msra.mxu0 0
      %2688 = vmatprep.subr.bf16.mxu0 0
      %2689 = vmatpush1.bf16.msra.mxu0 0
      %2690 = vmatprep.subr.bf16.mxu0 0
      %2691 = vmatpush1.bf16.msra.mxu0 0
      %2692 = vmatprep.subr.bf16.mxu0 0
      %2693 = vmatpush1.bf16.msra.mxu0 0
      %2694 = vmatprep.subr.bf16.mxu0 0
      %2695 = vmatpush1.bf16.msra.mxu0 0
      %2696 = vmatprep.subr.bf16.mxu0 0
      %2697 = vmatpush1.bf16.msra.mxu0 0
      %2698 = vmatprep.subr.bf16.mxu0 0
      %2699 = vmatpush1.bf16.msra.mxu0 0
      %2700 = vmatprep.mubr.bf16.mxu0 0
      %2701 = vmatmul.mubr.bf16.gmra.mrb[0].mxu0 %v1951
      %v2702 = vpop.f32.mrb[0].mxu0
      %v2703 = vadd.f32 0.0, %v2702
      %v2704 = vpop.f32.mrb[0].mxu0
      %v2705 = vpop.f32.mrb[0].mxu0
      %v2706 = vpop.f32.mrb[0].mxu0
      %2707 = vdwg.mxu0
      %2708 = vmatprep.subr.bf16.mxu0 0
      %2709 = vmatpush1.bf16.msra.mxu0 %v1121
      %2710 = vmatprep.subr.bf16.mxu0 0
      %2711 = vmatpush1.bf16.msra.mxu0 %v1122
      %2712 = vmatprep.subr.bf16.mxu0 0
      %2713 = vmatpush1.bf16.msra.mxu0 0
      %2714 = vmatprep.subr.bf16.mxu0 0
      %2715 = vmatpush1.bf16.msra.mxu0 0
      %2716 = vmatprep.subr.bf16.mxu0 0
      %2717 = vmatpush1.bf16.msra.mxu0 0
      %2718 = vmatprep.subr.bf16.mxu0 0
      %2719 = vmatpush1.bf16.msra.mxu0 0
      %2720 = vmatprep.subr.bf16.mxu0 0
      %2721 = vmatpush1.bf16.msra.mxu0 0
      %2722 = vmatprep.subr.bf16.mxu0 0
      %2723 = vmatpush1.bf16.msra.mxu0 0
      %2724 = vmatprep.subr.bf16.mxu0 0
      %2725 = vmatpush1.bf16.msra.mxu0 0
      %2726 = vmatprep.subr.bf16.mxu0 0
      %2727 = vmatpush1.bf16.msra.mxu0 0
      %2728 = vmatprep.subr.bf16.mxu0 0
      %2729 = vmatpush1.bf16.msra.mxu0 0
      %2730 = vmatprep.subr.bf16.mxu0 0
      %2731 = vmatpush1.bf16.msra.mxu0 0
      %2732 = vmatprep.subr.bf16.mxu0 0
      %2733 = vmatpush1.bf16.msra.mxu0 0
      %2734 = vmatprep.subr.bf16.mxu0 0
      %2735 = vmatpush1.bf16.msra.mxu0 0
      %2736 = vmatprep.subr.bf16.mxu0 0
      %2737 = vmatpush1.bf16.msra.mxu0 0
      %2738 = vmatprep.subr.bf16.mxu0 0
      %2739 = vmatpush1.bf16.msra.mxu0 0
      %2740 = vmatprep.mubr.bf16.mxu0 0
      %2741 = vmatmul.mubr.bf16.gmra.mrb[0].mxu0 %v2006
      %v2742 = vpop.f32.mrb[0].mxu0
      %v2743 = vadd.f32 0.0, %v2742
      %v2744 = vpop.f32.mrb[0].mxu0
      %v2745 = vpop.f32.mrb[0].mxu0
      %v2746 = vpop.f32.mrb[0].mxu0
      %2747 = vdwg.mxu0
      %2748 = vmatprep.subr.bf16.mxu0 0
      %2749 = vmatpush1.bf16.msra.mxu0 %v1176
      %2750 = vmatprep.subr.bf16.mxu0 0
      %2751 = vmatpush1.bf16.msra.mxu0 %v1177
      %2752 = vmatprep.subr.bf16.mxu0 0
      %2753 = vmatpush1.bf16.msra.mxu0 0
      %2754 = vmatprep.subr.bf16.mxu0 0
      %2755 = vmatpush1.bf16.msra.mxu0 0
      %2756 = vmatprep.subr.bf16.mxu0 0
      %2757 = vmatpush1.bf16.msra.mxu0 0
      %2758 = vmatprep.subr.bf16.mxu0 0
      %2759 = vmatpush1.bf16.msra.mxu0 0
      %2760 = vmatprep.subr.bf16.mxu0 0
      %2761 = vmatpush1.bf16.msra.mxu0 0
      %2762 = vmatprep.subr.bf16.mxu0 0
      %2763 = vmatpush1.bf16.msra.mxu0 0
      %2764 = vmatprep.subr.bf16.mxu0 0
      %2765 = vmatpush1.bf16.msra.mxu0 0
      %2766 = vmatprep.subr.bf16.mxu0 0
      %2767 = vmatpush1.bf16.msra.mxu0 0
      %2768 = vmatprep.subr.bf16.mxu0 0
      %2769 = vmatpush1.bf16.msra.mxu0 0
      %2770 = vmatprep.subr.bf16.mxu0 0
      %2771 = vmatpush1.bf16.msra.mxu0 0
      %2772 = vmatprep.subr.bf16.mxu0 0
      %2773 = vmatpush1.bf16.msra.mxu0 0
      %2774 = vmatprep.subr.bf16.mxu0 0
      %2775 = vmatpush1.bf16.msra.mxu0 0
      %2776 = vmatprep.subr.bf16.mxu0 0
      %2777 = vmatpush1.bf16.msra.mxu0 0
      %2778 = vmatprep.subr.bf16.mxu0 0
      %2779 = vmatpush1.bf16.msra.mxu0 0
      %2780 = vmatprep.mubr.bf16.mxu0 0
      %2781 = vmatmul.mubr.bf16.gmra.mrb[0].mxu0 %v2061
      %v2782 = vpop.f32.mrb[0].mxu0
      %v2783 = vadd.f32 0.0, %v2782
      %v2784 = vpop.f32.mrb[0].mxu0
      %v2785 = vpop.f32.mrb[0].mxu0
      %v2786 = vpop.f32.mrb[0].mxu0
      %2787 = vdwg.mxu0
      %2788 = vmatprep.subr.bf16.mxu0 0
      %2789 = vmatpush1.bf16.msra.mxu0 %v1231
      %2790 = vmatprep.subr.bf16.mxu0 0
      %2791 = vmatpush1.bf16.msra.mxu0 %v1232
      %2792 = vmatprep.subr.bf16.mxu0 0
      %2793 = vmatpush1.bf16.msra.mxu0 0
      %2794 = vmatprep.subr.bf16.mxu0 0
      %2795 = vmatpush1.bf16.msra.mxu0 0
      %2796 = vmatprep.subr.bf16.mxu0 0
      %2797 = vmatpush1.bf16.msra.mxu0 0
      %2798 = vmatprep.subr.bf16.mxu0 0
      %2799 = vmatpush1.bf16.msra.mxu0 0
      %2800 = vmatprep.subr.bf16.mxu0 0
      %2801 = vmatpush1.bf16.msra.mxu0 0
      %2802 = vmatprep.subr.bf16.mxu0 0
      %2803 = vmatpush1.bf16.msra.mxu0 0
      %2804 = vmatprep.subr.bf16.mxu0 0
      %2805 = vmatpush1.bf16.msra.mxu0 0
      %2806 = vmatprep.subr.bf16.mxu0 0
      %2807 = vmatpush1.bf16.msra.mxu0 0
      %2808 = vmatprep.subr.bf16.mxu0 0
      %2809 = vmatpush1.bf16.msra.mxu0 0
      %2810 = vmatprep.subr.bf16.mxu0 0
      %2811 = vmatpush1.bf16.msra.mxu0 0
      %2812 = vmatprep.subr.bf16.mxu0 0
      %2813 = vmatpush1.bf16.msra.mxu0 0
      %2814 = vmatprep.subr.bf16.mxu0 0
      %2815 = vmatpush1.bf16.msra.mxu0 0
      %2816 = vmatprep.subr.bf16.mxu0 0
      %2817 = vmatpush1.bf16.msra.mxu0 0
      %2818 = vmatprep.subr.bf16.mxu0 0
      %2819 = vmatpush1.bf16.msra.mxu0 0
      %2820 = vmatprep.mubr.bf16.mxu0 0
      %2821 = vmatmul.mubr.bf16.gmra.mrb[0].mxu0 %v2116
      %v2822 = vpop.f32.mrb[0].mxu0
      %v2823 = vadd.f32 0.0, %v2822
      %v2824 = vpop.f32.mrb[0].mxu0
      %v2825 = vpop.f32.mrb[0].mxu0
      %v2826 = vpop.f32.mrb[0].mxu0
      %2827 = vdwg.mxu0
      %2828 = vmatprep.subr.bf16.mxu0 0
      %2829 = vmatpush1.bf16.msra.mxu0 %v1286
      %2830 = vmatprep.subr.bf16.mxu0 0
      %2831 = vmatpush1.bf16.msra.mxu0 %v1287
      %2832 = vmatprep.subr.bf16.mxu0 0
      %2833 = vmatpush1.bf16.msra.mxu0 0
      %2834 = vmatprep.subr.bf16.mxu0 0
      %2835 = vmatpush1.bf16.msra.mxu0 0
      %2836 = vmatprep.subr.bf16.mxu0 0
      %2837 = vmatpush1.bf16.msra.mxu0 0
      %2838 = vmatprep.subr.bf16.mxu0 0
      %2839 = vmatpush1.bf16.msra.mxu0 0
      %2840 = vmatprep.subr.bf16.mxu0 0
      %2841 = vmatpush1.bf16.msra.mxu0 0
      %2842 = vmatprep.subr.bf16.mxu0 0
      %2843 = vmatpush1.bf16.msra.mxu0 0
      %2844 = vmatprep.subr.bf16.mxu0 0
      %2845 = vmatpush1.bf16.msra.mxu0 0
      %2846 = vmatprep.subr.bf16.mxu0 0
      %2847 = vmatpush1.bf16.msra.mxu0 0
      %2848 = vmatprep.subr.bf16.mxu0 0
      %2849 = vmatpush1.bf16.msra.mxu0 0
      %2850 = vmatprep.subr.bf16.mxu0 0
      %2851 = vmatpush1.bf16.msra.mxu0 0
      %2852 = vmatprep.subr.bf16.mxu0 0
      %2853 = vmatpush1.bf16.msra.mxu0 0
      %2854 = vmatprep.subr.bf16.mxu0 0
      %2855 = vmatpush1.bf16.msra.mxu0 0
      %2856 = vmatprep.subr.bf16.mxu0 0
      %2857 = vmatpush1.bf16.msra.mxu0 0
      %2858 = vmatprep.subr.bf16.mxu0 0
      %2859 = vmatpush1.bf16.msra.mxu0 0
      %2860 = vmatprep.mubr.bf16.mxu0 0
      %2861 = vmatmul.mubr.bf16.gmra.mrb[0].mxu0 %v2171
      %v2862 = vpop.f32.mrb[0].mxu0
      %v2863 = vadd.f32 0.0, %v2862
      %v2864 = vpop.f32.mrb[0].mxu0
      %v2865 = vpop.f32.mrb[0].mxu0
      %v2866 = vpop.f32.mrb[0].mxu0
      %2867 = vdwg.mxu0
      %2868 = vmatprep.subr.bf16.mxu0 0
      %2869 = vmatpush1.bf16.msra.mxu0 %v1341
      %2870 = vmatprep.subr.bf16.mxu0 0
      %2871 = vmatpush1.bf16.msra.mxu0 %v1342
      %2872 = vmatprep.subr.bf16.mxu0 0
      %2873 = vmatpush1.bf16.msra.mxu0 0
      %2874 = vmatprep.subr.bf16.mxu0 0
      %2875 = vmatpush1.bf16.msra.mxu0 0
      %2876 = vmatprep.subr.bf16.mxu0 0
      %2877 = vmatpush1.bf16.msra.mxu0 0
      %2878 = vmatprep.subr.bf16.mxu0 0
      %2879 = vmatpush1.bf16.msra.mxu0 0
      %2880 = vmatprep.subr.bf16.mxu0 0
      %2881 = vmatpush1.bf16.msra.mxu0 0
      %2882 = vmatprep.subr.bf16.mxu0 0
      %2883 = vmatpush1.bf16.msra.mxu0 0
      %2884 = vmatprep.subr.bf16.mxu0 0
      %2885 = vmatpush1.bf16.msra.mxu0 0
      %2886 = vmatprep.subr.bf16.mxu0 0
      %2887 = vmatpush1.bf16.msra.mxu0 0
      %2888 = vmatprep.subr.bf16.mxu0 0
      %2889 = vmatpush1.bf16.msra.mxu0 0
      %2890 = vmatprep.subr.bf16.mxu0 0
      %2891 = vmatpush1.bf16.msra.mxu0 0
      %2892 = vmatprep.subr.bf16.mxu0 0
      %2893 = vmatpush1.bf16.msra.mxu0 0
      %2894 = vmatprep.subr.bf16.mxu0 0
      %2895 = vmatpush1.bf16.msra.mxu0 0
      %2896 = vmatprep.subr.bf16.mxu0 0
      %2897 = vmatpush1.bf16.msra.mxu0 0
      %2898 = vmatprep.subr.bf16.mxu0 0
      %2899 = vmatpush1.bf16.msra.mxu0 0
      %2900 = vmatprep.mubr.bf16.mxu0 0
      %2901 = vmatmul.mubr.bf16.gmra.mrb[0].mxu0 %v2226
      %v2902 = vpop.f32.mrb[0].mxu0
      %v2903 = vadd.f32 0.0, %v2902
      %v2904 = vpop.f32.mrb[0].mxu0
      %v2905 = vpop.f32.mrb[0].mxu0
      %v2906 = vpop.f32.mrb[0].mxu0
      %2907 = vdwg.mxu0
      %v2908 = vsub.f32 %v558, %v1438
      %v2909 = vsub.f32 %v613, %v1493
      %v2910 = vsub.f32 %v668, %v1548
      %v2911 = vsub.f32 %v723, %v1603
      %v2912 = vsub.f32 %v778, %v1658
      %v2913 = vsub.f32 %v833, %v1713
      %v2914 = vsub.f32 %v888, %v1768
      %v2915 = vsub.f32 %v943, %v1823
      %v2916 = vsub.f32 %v998, %v1878
      %v2917 = vsub.f32 %v1053, %v1933
      %v2918 = vsub.f32 %v1108, %v1988
      %v2919 = vsub.f32 %v1163, %v2043
      %v2920 = vsub.f32 %v1218, %v2098
      %v2921 = vsub.f32 %v1273, %v2153
      %v2922 = vsub.f32 %v1328, %v2208
      %v2923 = vsub.f32 %v1383, %v2263
      %vm2924 = vcmask 254976
      %2925 = vst.msk [vmem:[%s306] sm:$0x3] %vm2924, %v2908
      %2926 = vst.msk [vmem:[%s306 + $0x2] sm:$0x3] %vm2924, %v2909
      %2927 = vst.msk [vmem:[%s306 + $0x4] sm:$0x3] %vm2924, %v2910
      %2928 = vst.msk [vmem:[%s306 + $0x6] sm:$0x3] %vm2924, %v2911
      %2929 = vst.msk [vmem:[%s306 + $0x8] sm:$0x3] %vm2924, %v2912
      %2930 = vst.msk [vmem:[%s306 + $0xa] sm:$0x3] %vm2924, %v2913
      %2931 = vst.msk [vmem:[%s306 + $0xc] sm:$0x3] %vm2924, %v2914
      %2932 = vst.msk [vmem:[%s306 + $0xe] sm:$0x3] %vm2924, %v2915
      %2933 = vst.msk [vmem:[%s306 + $0x10] sm:$0x3] %vm2924, %v2916
      %2934 = vst.msk [vmem:[%s306 + $0x12] sm:$0x3] %vm2924, %v2917
      %2935 = vst.msk [vmem:[%s306 + $0x14] sm:$0x3] %vm2924, %v2918
      %2936 = vst.msk [vmem:[%s306 + $0x16] sm:$0x3] %vm2924, %v2919
      %2937 = vst.msk [vmem:[%s306 + $0x18] sm:$0x3] %vm2924, %v2920
      %2938 = vst.msk [vmem:[%s306 + $0x1a] sm:$0x3] %vm2924, %v2921
      %2939 = vst.msk [vmem:[%s306 + $0x1c] sm:$0x3] %vm2924, %v2922
      %2940 = vst.msk [vmem:[%s306 + $0x1e] sm:$0x3] %vm2924, %v2923
      %2941 = vmatprep.subr.bf16.mxu0 0
      %2942 = vmatpush1.bf16.msra.mxu0 %v1396
      %2943 = vmatprep.subr.bf16.mxu0 0
      %2944 = vmatpush1.bf16.msra.mxu0 %v1397
      %2945 = vmatprep.subr.bf16.mxu0 0
      %2946 = vmatpush1.bf16.msra.mxu0 0
      %2947 = vmatprep.subr.bf16.mxu0 0
      %2948 = vmatpush1.bf16.msra.mxu0 0
      %2949 = vmatprep.subr.bf16.mxu0 0
      %2950 = vmatpush1.bf16.msra.mxu0 0
      %2951 = vmatprep.subr.bf16.mxu0 0
      %2952 = vmatpush1.bf16.msra.mxu0 0
      %2953 = vmatprep.subr.bf16.mxu0 0
      %2954 = vmatpush1.bf16.msra.mxu0 0
      %2955 = vmatprep.subr.bf16.mxu0 0
      %2956 = vmatpush1.bf16.msra.mxu0 0
      %2957 = vmatprep.subr.bf16.mxu0 0
      %2958 = vmatpush1.bf16.msra.mxu0 0
      %2959 = vmatprep.subr.bf16.mxu0 0
      %2960 = vmatpush1.bf16.msra.mxu0 0
      %2961 = vmatprep.subr.bf16.mxu0 0
      %2962 = vmatpush1.bf16.msra.mxu0 0
      %2963 = vmatprep.subr.bf16.mxu0 0
      %2964 = vmatpush1.bf16.msra.mxu0 0
      %2965 = vmatprep.subr.bf16.mxu0 0
      %2966 = vmatpush1.bf16.msra.mxu0 0
      %2967 = vmatprep.subr.bf16.mxu0 0
      %2968 = vmatpush1.bf16.msra.mxu0 0
      %2969 = vmatprep.subr.bf16.mxu0 0
      %2970 = vmatpush1.bf16.msra.mxu0 0
      %2971 = vmatprep.subr.bf16.mxu0 0
      %2972 = vmatpush1.bf16.msra.mxu0 0
      %2973 = vmatprep.mubr.bf16.mxu0 0
      %2974 = vmatmul.mubr.bf16.gmra.mrb[0].mxu0 %v521
      %v2975 = vpop.f32.mrb[0].mxu0
      %v2976 = vadd.f32 %v2303, %v2975
      %v2977 = vpop.f32.mrb[0].mxu0
      %v2978 = vpop.f32.mrb[0].mxu0
      %v2979 = vpop.f32.mrb[0].mxu0
      %2980 = vdwg.mxu0
      %2981 = vmatprep.subr.bf16.mxu0 0
      %2982 = vmatpush1.bf16.msra.mxu0 %v1451
      %2983 = vmatprep.subr.bf16.mxu0 0
      %2984 = vmatpush1.bf16.msra.mxu0 %v1452
      %2985 = vmatprep.subr.bf16.mxu0 0
      %2986 = vmatpush1.bf16.msra.mxu0 0
      %2987 = vmatprep.subr.bf16.mxu0 0
      %2988 = vmatpush1.bf16.msra.mxu0 0
      %2989 = vmatprep.subr.bf16.mxu0 0
      %2990 = vmatpush1.bf16.msra.mxu0 0
      %2991 = vmatprep.subr.bf16.mxu0 0
      %2992 = vmatpush1.bf16.msra.mxu0 0
      %2993 = vmatprep.subr.bf16.mxu0 0
      %2994 = vmatpush1.bf16.msra.mxu0 0
      %2995 = vmatprep.subr.bf16.mxu0 0
      %2996 = vmatpush1.bf16.msra.mxu0 0
      %2997 = vmatprep.subr.bf16.mxu0 0
      %2998 = vmatpush1.bf16.msra.mxu0 0
      %2999 = vmatprep.subr.bf16.mxu0 0
      %3000 = vmatpush1.bf16.msra.mxu0 0
      %3001 = vmatprep.subr.bf16.mxu0 0
      %3002 = vmatpush1.bf16.msra.mxu0 0
      %3003 = vmatprep.subr.bf16.mxu0 0
      %3004 = vmatpush1.bf16.msra.mxu0 0
      %3005 = vmatprep.subr.bf16.mxu0 0
      %3006 = vmatpush1.bf16.msra.mxu0 0
      %3007 = vmatprep.subr.bf16.mxu0 0
      %3008 = vmatpush1.bf16.msra.mxu0 0
      %3009 = vmatprep.subr.bf16.mxu0 0
      %3010 = vmatpush1.bf16.msra.mxu0 0
      %3011 = vmatprep.subr.bf16.mxu0 0
      %3012 = vmatpush1.bf16.msra.mxu0 0
      %3013 = vmatprep.mubr.bf16.mxu0 0
      %3014 = vmatmul.mubr.bf16.gmra.mrb[0].mxu0 %v576
      %v3015 = vpop.f32.mrb[0].mxu0
      %v3016 = vadd.f32 %v2343, %v3015
      %v3017 = vpop.f32.mrb[0].mxu0
      %v3018 = vpop.f32.mrb[0].mxu0
      %v3019 = vpop.f32.mrb[0].mxu0
      %3020 = vdwg.mxu0
      %3021 = vmatprep.subr.bf16.mxu0 0
      %3022 = vmatpush1.bf16.msra.mxu0 %v1506
      %3023 = vmatprep.subr.bf16.mxu0 0
      %3024 = vmatpush1.bf16.msra.mxu0 %v1507
      %3025 = vmatprep.subr.bf16.mxu0 0
      %3026 = vmatpush1.bf16.msra.mxu0 0
      %3027 = vmatprep.subr.bf16.mxu0 0
      %3028 = vmatpush1.bf16.msra.mxu0 0
      %3029 = vmatprep.subr.bf16.mxu0 0
      %3030 = vmatpush1.bf16.msra.mxu0 0
      %3031 = vmatprep.subr.bf16.mxu0 0
      %3032 = vmatpush1.bf16.msra.mxu0 0
      %3033 = vmatprep.subr.bf16.mxu0 0
      %3034 = vmatpush1.bf16.msra.mxu0 0
      %3035 = vmatprep.subr.bf16.mxu0 0
      %3036 = vmatpush1.bf16.msra.mxu0 0
      %3037 = vmatprep.subr.bf16.mxu0 0
      %3038 = vmatpush1.bf16.msra.mxu0 0
      %3039 = vmatprep.subr.bf16.mxu0 0
      %3040 = vmatpush1.bf16.msra.mxu0 0
      %3041 = vmatprep.subr.bf16.mxu0 0
      %3042 = vmatpush1.bf16.msra.mxu0 0
      %3043 = vmatprep.subr.bf16.mxu0 0
      %3044 = vmatpush1.bf16.msra.mxu0 0
      %3045 = vmatprep.subr.bf16.mxu0 0
      %3046 = vmatpush1.bf16.msra.mxu0 0
      %3047 = vmatprep.subr.bf16.mxu0 0
      %3048 = vmatpush1.bf16.msra.mxu0 0
      %3049 = vmatprep.subr.bf16.mxu0 0
      %3050 = vmatpush1.bf16.msra.mxu0 0
      %3051 = vmatprep.subr.bf16.mxu0 0
      %3052 = vmatpush1.bf16.msra.mxu0 0
      %3053 = vmatprep.mubr.bf16.mxu0 0
      %3054 = vmatmul.mubr.bf16.gmra.mrb[0].mxu0 %v631
      %v3055 = vpop.f32.mrb[0].mxu0
      %v3056 = vadd.f32 %v2383, %v3055
      %v3057 = vpop.f32.mrb[0].mxu0
      %v3058 = vpop.f32.mrb[0].mxu0
      %v3059 = vpop.f32.mrb[0].mxu0
      %3060 = vdwg.mxu0
      %3061 = vmatprep.subr.bf16.mxu0 0
      %3062 = vmatpush1.bf16.msra.mxu0 %v1561
      %3063 = vmatprep.subr.bf16.mxu0 0
      %3064 = vmatpush1.bf16.msra.mxu0 %v1562
      %3065 = vmatprep.subr.bf16.mxu0 0
      %3066 = vmatpush1.bf16.msra.mxu0 0
      %3067 = vmatprep.subr.bf16.mxu0 0
      %3068 = vmatpush1.bf16.msra.mxu0 0
      %3069 = vmatprep.subr.bf16.mxu0 0
      %3070 = vmatpush1.bf16.msra.mxu0 0
      %3071 = vmatprep.subr.bf16.mxu0 0
      %3072 = vmatpush1.bf16.msra.mxu0 0
      %3073 = vmatprep.subr.bf16.mxu0 0
      %3074 = vmatpush1.bf16.msra.mxu0 0
      %3075 = vmatprep.subr.bf16.mxu0 0
      %3076 = vmatpush1.bf16.msra.mxu0 0
      %3077 = vmatprep.subr.bf16.mxu0 0
      %3078 = vmatpush1.bf16.msra.mxu0 0
      %3079 = vmatprep.subr.bf16.mxu0 0
      %3080 = vmatpush1.bf16.msra.mxu0 0
      %3081 = vmatprep.subr.bf16.mxu0 0
      %3082 = vmatpush1.bf16.msra.mxu0 0
      %3083 = vmatprep.subr.bf16.mxu0 0
      %3084 = vmatpush1.bf16.msra.mxu0 0
      %3085 = vmatprep.subr.bf16.mxu0 0
      %3086 = vmatpush1.bf16.msra.mxu0 0
      %3087 = vmatprep.subr.bf16.mxu0 0
      %3088 = vmatpush1.bf16.msra.mxu0 0
      %3089 = vmatprep.subr.bf16.mxu0 0
      %3090 = vmatpush1.bf16.msra.mxu0 0
      %3091 = vmatprep.subr.bf16.mxu0 0
      %3092 = vmatpush1.bf16.msra.mxu0 0
      %3093 = vmatprep.mubr.bf16.mxu0 0
      %3094 = vmatmul.mubr.bf16.gmra.mrb[0].mxu0 %v686
      %v3095 = vpop.f32.mrb[0].mxu0
      %v3096 = vadd.f32 %v2423, %v3095
      %v3097 = vpop.f32.mrb[0].mxu0
      %v3098 = vpop.f32.mrb[0].mxu0
      %v3099 = vpop.f32.mrb[0].mxu0
      %3100 = vdwg.mxu0
      %3101 = vmatprep.subr.bf16.mxu0 0
      %3102 = vmatpush1.bf16.msra.mxu0 %v1616
      %3103 = vmatprep.subr.bf16.mxu0 0
      %3104 = vmatpush1.bf16.msra.mxu0 %v1617
      %3105 = vmatprep.subr.bf16.mxu0 0
      %3106 = vmatpush1.bf16.msra.mxu0 0
      %3107 = vmatprep.subr.bf16.mxu0 0
      %3108 = vmatpush1.bf16.msra.mxu0 0
      %3109 = vmatprep.subr.bf16.mxu0 0
      %3110 = vmatpush1.bf16.msra.mxu0 0
      %3111 = vmatprep.subr.bf16.mxu0 0
      %3112 = vmatpush1.bf16.msra.mxu0 0
      %3113 = vmatprep.subr.bf16.mxu0 0
      %3114 = vmatpush1.bf16.msra.mxu0 0
      %3115 = vmatprep.subr.bf16.mxu0 0
      %3116 = vmatpush1.bf16.msra.mxu0 0
      %3117 = vmatprep.subr.bf16.mxu0 0
      %3118 = vmatpush1.bf16.msra.mxu0 0
      %3119 = vmatprep.subr.bf16.mxu0 0
      %3120 = vmatpush1.bf16.msra.mxu0 0
      %3121 = vmatprep.subr.bf16.mxu0 0
      %3122 = vmatpush1.bf16.msra.mxu0 0
      %3123 = vmatprep.subr.bf16.mxu0 0
      %3124 = vmatpush1.bf16.msra.mxu0 0
      %3125 = vmatprep.subr.bf16.mxu0 0
      %3126 = vmatpush1.bf16.msra.mxu0 0
      %3127 = vmatprep.subr.bf16.mxu0 0
      %3128 = vmatpush1.bf16.msra.mxu0 0
      %3129 = vmatprep.subr.bf16.mxu0 0
      %3130 = vmatpush1.bf16.msra.mxu0 0
      %3131 = vmatprep.subr.bf16.mxu0 0
      %3132 = vmatpush1.bf16.msra.mxu0 0
      %3133 = vmatprep.mubr.bf16.mxu0 0
      %3134 = vmatmul.mubr.bf16.gmra.mrb[0].mxu0 %v741
      %v3135 = vpop.f32.mrb[0].mxu0
      %v3136 = vadd.f32 %v2463, %v3135
      %v3137 = vpop.f32.mrb[0].mxu0
      %v3138 = vpop.f32.mrb[0].mxu0
      %v3139 = vpop.f32.mrb[0].mxu0
      %3140 = vdwg.mxu0
      %3141 = vmatprep.subr.bf16.mxu0 0
      %3142 = vmatpush1.bf16.msra.mxu0 %v1671
      %3143 = vmatprep.subr.bf16.mxu0 0
      %3144 = vmatpush1.bf16.msra.mxu0 %v1672
      %3145 = vmatprep.subr.bf16.mxu0 0
      %3146 = vmatpush1.bf16.msra.mxu0 0
      %3147 = vmatprep.subr.bf16.mxu0 0
      %3148 = vmatpush1.bf16.msra.mxu0 0
      %3149 = vmatprep.subr.bf16.mxu0 0
      %3150 = vmatpush1.bf16.msra.mxu0 0
      %3151 = vmatprep.subr.bf16.mxu0 0
      %3152 = vmatpush1.bf16.msra.mxu0 0
      %3153 = vmatprep.subr.bf16.mxu0 0
      %3154 = vmatpush1.bf16.msra.mxu0 0
      %3155 = vmatprep.subr.bf16.mxu0 0
      %3156 = vmatpush1.bf16.msra.mxu0 0
      %3157 = vmatprep.subr.bf16.mxu0 0
      %3158 = vmatpush1.bf16.msra.mxu0 0
      %3159 = vmatprep.subr.bf16.mxu0 0
      %3160 = vmatpush1.bf16.msra.mxu0 0
      %3161 = vmatprep.subr.bf16.mxu0 0
      %3162 = vmatpush1.bf16.msra.mxu0 0
      %3163 = vmatprep.subr.bf16.mxu0 0
      %3164 = vmatpush1.bf16.msra.mxu0 0
      %3165 = vmatprep.subr.bf16.mxu0 0
      %3166 = vmatpush1.bf16.msra.mxu0 0
      %3167 = vmatprep.subr.bf16.mxu0 0
      %3168 = vmatpush1.bf16.msra.mxu0 0
      %3169 = vmatprep.subr.bf16.mxu0 0
      %3170 = vmatpush1.bf16.msra.mxu0 0
      %3171 = vmatprep.subr.bf16.mxu0 0
      %3172 = vmatpush1.bf16.msra.mxu0 0
      %3173 = vmatprep.mubr.bf16.mxu0 0
      %3174 = vmatmul.mubr.bf16.gmra.mrb[0].mxu0 %v796
      %v3175 = vpop.f32.mrb[0].mxu0
      %v3176 = vadd.f32 %v2503, %v3175
      %v3177 = vpop.f32.mrb[0].mxu0
      %v3178 = vpop.f32.mrb[0].mxu0
      %v3179 = vpop.f32.mrb[0].mxu0
      %3180 = vdwg.mxu0
      %3181 = vmatprep.subr.bf16.mxu0 0
      %3182 = vmatpush1.bf16.msra.mxu0 %v1726
      %3183 = vmatprep.subr.bf16.mxu0 0
      %3184 = vmatpush1.bf16.msra.mxu0 %v1727
      %3185 = vmatprep.subr.bf16.mxu0 0
      %3186 = vmatpush1.bf16.msra.mxu0 0
      %3187 = vmatprep.subr.bf16.mxu0 0
      %3188 = vmatpush1.bf16.msra.mxu0 0
      %3189 = vmatprep.subr.bf16.mxu0 0
      %3190 = vmatpush1.bf16.msra.mxu0 0
      %3191 = vmatprep.subr.bf16.mxu0 0
      %3192 = vmatpush1.bf16.msra.mxu0 0
      %3193 = vmatprep.subr.bf16.mxu0 0
      %3194 = vmatpush1.bf16.msra.mxu0 0
      %3195 = vmatprep.subr.bf16.mxu0 0
      %3196 = vmatpush1.bf16.msra.mxu0 0
      %3197 = vmatprep.subr.bf16.mxu0 0
      %3198 = vmatpush1.bf16.msra.mxu0 0
      %3199 = vmatprep.subr.bf16.mxu0 0
      %3200 = vmatpush1.bf16.msra.mxu0 0
      %3201 = vmatprep.subr.bf16.mxu0 0
      %3202 = vmatpush1.bf16.msra.mxu0 0
      %3203 = vmatprep.subr.bf16.mxu0 0
      %3204 = vmatpush1.bf16.msra.mxu0 0
      %3205 = vmatprep.subr.bf16.mxu0 0
      %3206 = vmatpush1.bf16.msra.mxu0 0
      %3207 = vmatprep.subr.bf16.mxu0 0
      %3208 = vmatpush1.bf16.msra.mxu0 0
      %3209 = vmatprep.subr.bf16.mxu0 0
      %3210 = vmatpush1.bf16.msra.mxu0 0
      %3211 = vmatprep.subr.bf16.mxu0 0
      %3212 = vmatpush1.bf16.msra.mxu0 0
      %3213 = vmatprep.mubr.bf16.mxu0 0
      %3214 = vmatmul.mubr.bf16.gmra.mrb[0].mxu0 %v851
      %v3215 = vpop.f32.mrb[0].mxu0
      %v3216 = vadd.f32 %v2543, %v3215
      %v3217 = vpop.f32.mrb[0].mxu0
      %v3218 = vpop.f32.mrb[0].mxu0
      %v3219 = vpop.f32.mrb[0].mxu0
      %3220 = vdwg.mxu0
      %3221 = vmatprep.subr.bf16.mxu0 0
      %3222 = vmatpush1.bf16.msra.mxu0 %v1781
      %3223 = vmatprep.subr.bf16.mxu0 0
      %3224 = vmatpush1.bf16.msra.mxu0 %v1782
      %3225 = vmatprep.subr.bf16.mxu0 0
      %3226 = vmatpush1.bf16.msra.mxu0 0
      %3227 = vmatprep.subr.bf16.mxu0 0
      %3228 = vmatpush1.bf16.msra.mxu0 0
      %3229 = vmatprep.subr.bf16.mxu0 0
      %3230 = vmatpush1.bf16.msra.mxu0 0
      %3231 = vmatprep.subr.bf16.mxu0 0
      %3232 = vmatpush1.bf16.msra.mxu0 0
      %3233 = vmatprep.subr.bf16.mxu0 0
      %3234 = vmatpush1.bf16.msra.mxu0 0
      %3235 = vmatprep.subr.bf16.mxu0 0
      %3236 = vmatpush1.bf16.msra.mxu0 0
      %3237 = vmatprep.subr.bf16.mxu0 0
      %3238 = vmatpush1.bf16.msra.mxu0 0
      %3239 = vmatprep.subr.bf16.mxu0 0
      %3240 = vmatpush1.bf16.msra.mxu0 0
      %3241 = vmatprep.subr.bf16.mxu0 0
      %3242 = vmatpush1.bf16.msra.mxu0 0
      %3243 = vmatprep.subr.bf16.mxu0 0
      %3244 = vmatpush1.bf16.msra.mxu0 0
      %3245 = vmatprep.subr.bf16.mxu0 0
      %3246 = vmatpush1.bf16.msra.mxu0 0
      %3247 = vmatprep.subr.bf16.mxu0 0
      %3248 = vmatpush1.bf16.msra.mxu0 0
      %3249 = vmatprep.subr.bf16.mxu0 0
      %3250 = vmatpush1.bf16.msra.mxu0 0
      %3251 = vmatprep.subr.bf16.mxu0 0
      %3252 = vmatpush1.bf16.msra.mxu0 0
      %3253 = vmatprep.mubr.bf16.mxu0 0
      %3254 = vmatmul.mubr.bf16.gmra.mrb[0].mxu0 %v906
      %v3255 = vpop.f32.mrb[0].mxu0
      %v3256 = vadd.f32 %v2583, %v3255
      %v3257 = vpop.f32.mrb[0].mxu0
      %v3258 = vpop.f32.mrb[0].mxu0
      %v3259 = vpop.f32.mrb[0].mxu0
      %3260 = vdwg.mxu0
      %3261 = vmatprep.subr.bf16.mxu0 0
      %3262 = vmatpush1.bf16.msra.mxu0 %v1836
      %3263 = vmatprep.subr.bf16.mxu0 0
      %3264 = vmatpush1.bf16.msra.mxu0 %v1837
      %3265 = vmatprep.subr.bf16.mxu0 0
      %3266 = vmatpush1.bf16.msra.mxu0 0
      %3267 = vmatprep.subr.bf16.mxu0 0
      %3268 = vmatpush1.bf16.msra.mxu0 0
      %3269 = vmatprep.subr.bf16.mxu0 0
      %3270 = vmatpush1.bf16.msra.mxu0 0
      %3271 = vmatprep.subr.bf16.mxu0 0
      %3272 = vmatpush1.bf16.msra.mxu0 0
      %3273 = vmatprep.subr.bf16.mxu0 0
      %3274 = vmatpush1.bf16.msra.mxu0 0
      %3275 = vmatprep.subr.bf16.mxu0 0
      %3276 = vmatpush1.bf16.msra.mxu0 0
      %3277 = vmatprep.subr.bf16.mxu0 0
      %3278 = vmatpush1.bf16.msra.mxu0 0
      %3279 = vmatprep.subr.bf16.mxu0 0
      %3280 = vmatpush1.bf16.msra.mxu0 0
      %3281 = vmatprep.subr.bf16.mxu0 0
      %3282 = vmatpush1.bf16.msra.mxu0 0
      %3283 = vmatprep.subr.bf16.mxu0 0
      %3284 = vmatpush1.bf16.msra.mxu0 0
      %3285 = vmatprep.subr.bf16.mxu0 0
      %3286 = vmatpush1.bf16.msra.mxu0 0
      %3287 = vmatprep.subr.bf16.mxu0 0
      %3288 = vmatpush1.bf16.msra.mxu0 0
      %3289 = vmatprep.subr.bf16.mxu0 0
      %3290 = vmatpush1.bf16.msra.mxu0 0
      %3291 = vmatprep.subr.bf16.mxu0 0
      %3292 = vmatpush1.bf16.msra.mxu0 0
      %3293 = vmatprep.mubr.bf16.mxu0 0
      %3294 = vmatmul.mubr.bf16.gmra.mrb[0].mxu0 %v961
      %v3295 = vpop.f32.mrb[0].mxu0
      %v3296 = vadd.f32 %v2623, %v3295
      %v3297 = vpop.f32.mrb[0].mxu0
      %v3298 = vpop.f32.mrb[0].mxu0
      %v3299 = vpop.f32.mrb[0].mxu0
      %3300 = vdwg.mxu0
      %3301 = vmatprep.subr.bf16.mxu0 0
      %3302 = vmatpush1.bf16.msra.mxu0 %v1891
      %3303 = vmatprep.subr.bf16.mxu0 0
      %3304 = vmatpush1.bf16.msra.mxu0 %v1892
      %3305 = vmatprep.subr.bf16.mxu0 0
      %3306 = vmatpush1.bf16.msra.mxu0 0
      %3307 = vmatprep.subr.bf16.mxu0 0
      %3308 = vmatpush1.bf16.msra.mxu0 0
      %3309 = vmatprep.subr.bf16.mxu0 0
      %3310 = vmatpush1.bf16.msra.mxu0 0
      %3311 = vmatprep.subr.bf16.mxu0 0
      %3312 = vmatpush1.bf16.msra.mxu0 0
      %3313 = vmatprep.subr.bf16.mxu0 0
      %3314 = vmatpush1.bf16.msra.mxu0 0
      %3315 = vmatprep.subr.bf16.mxu0 0
      %3316 = vmatpush1.bf16.msra.mxu0 0
      %3317 = vmatprep.subr.bf16.mxu0 0
      %3318 = vmatpush1.bf16.msra.mxu0 0
      %3319 = vmatprep.subr.bf16.mxu0 0
      %3320 = vmatpush1.bf16.msra.mxu0 0
      %3321 = vmatprep.subr.bf16.mxu0 0
      %3322 = vmatpush1.bf16.msra.mxu0 0
      %3323 = vmatprep.subr.bf16.mxu0 0
      %3324 = vmatpush1.bf16.msra.mxu0 0
      %3325 = vmatprep.subr.bf16.mxu0 0
      %3326 = vmatpush1.bf16.msra.mxu0 0
      %3327 = vmatprep.subr.bf16.mxu0 0
      %3328 = vmatpush1.bf16.msra.mxu0 0
      %3329 = vmatprep.subr.bf16.mxu0 0
      %3330 = vmatpush1.bf16.msra.mxu0 0
      %3331 = vmatprep.subr.bf16.mxu0 0
      %3332 = vmatpush1.bf16.msra.mxu0 0
      %3333 = vmatprep.mubr.bf16.mxu0 0
      %3334 = vmatmul.mubr.bf16.gmra.mrb[0].mxu0 %v1016
      %v3335 = vpop.f32.mrb[0].mxu0
      %v3336 = vadd.f32 %v2663, %v3335
      %v3337 = vpop.f32.mrb[0].mxu0
      %v3338 = vpop.f32.mrb[0].mxu0
      %v3339 = vpop.f32.mrb[0].mxu0
      %3340 = vdwg.mxu0
      %3341 = vmatprep.subr.bf16.mxu0 0
      %3342 = vmatpush1.bf16.msra.mxu0 %v1946
      %3343 = vmatprep.subr.bf16.mxu0 0
      %3344 = vmatpush1.bf16.msra.mxu0 %v1947
      %3345 = vmatprep.subr.bf16.mxu0 0
      %3346 = vmatpush1.bf16.msra.mxu0 0
      %3347 = vmatprep.subr.bf16.mxu0 0
      %3348 = vmatpush1.bf16.msra.mxu0 0
      %3349 = vmatprep.subr.bf16.mxu0 0
      %3350 = vmatpush1.bf16.msra.mxu0 0
      %3351 = vmatprep.subr.bf16.mxu0 0
      %3352 = vmatpush1.bf16.msra.mxu0 0
      %3353 = vmatprep.subr.bf16.mxu0 0
      %3354 = vmatpush1.bf16.msra.mxu0 0
      %3355 = vmatprep.subr.bf16.mxu0 0
      %3356 = vmatpush1.bf16.msra.mxu0 0
      %3357 = vmatprep.subr.bf16.mxu0 0
      %3358 = vmatpush1.bf16.msra.mxu0 0
      %3359 = vmatprep.subr.bf16.mxu0 0
      %3360 = vmatpush1.bf16.msra.mxu0 0
      %3361 = vmatprep.subr.bf16.mxu0 0
      %3362 = vmatpush1.bf16.msra.mxu0 0
      %3363 = vmatprep.subr.bf16.mxu0 0
      %3364 = vmatpush1.bf16.msra.mxu0 0
      %3365 = vmatprep.subr.bf16.mxu0 0
      %3366 = vmatpush1.bf16.msra.mxu0 0
      %3367 = vmatprep.subr.bf16.mxu0 0
      %3368 = vmatpush1.bf16.msra.mxu0 0
      %3369 = vmatprep.subr.bf16.mxu0 0
      %3370 = vmatpush1.bf16.msra.mxu0 0
      %3371 = vmatprep.subr.bf16.mxu0 0
      %3372 = vmatpush1.bf16.msra.mxu0 0
      %3373 = vmatprep.mubr.bf16.mxu0 0
      %3374 = vmatmul.mubr.bf16.gmra.mrb[0].mxu0 %v1071
      %v3375 = vpop.f32.mrb[0].mxu0
      %v3376 = vadd.f32 %v2703, %v3375
      %v3377 = vpop.f32.mrb[0].mxu0
      %v3378 = vpop.f32.mrb[0].mxu0
      %v3379 = vpop.f32.mrb[0].mxu0
      %3380 = vdwg.mxu0
      %3381 = vmatprep.subr.bf16.mxu0 0
      %3382 = vmatpush1.bf16.msra.mxu0 %v2001
      %3383 = vmatprep.subr.bf16.mxu0 0
      %3384 = vmatpush1.bf16.msra.mxu0 %v2002
      %3385 = vmatprep.subr.bf16.mxu0 0
      %3386 = vmatpush1.bf16.msra.mxu0 0
      %3387 = vmatprep.subr.bf16.mxu0 0
      %3388 = vmatpush1.bf16.msra.mxu0 0
      %3389 = vmatprep.subr.bf16.mxu0 0
      %3390 = vmatpush1.bf16.msra.mxu0 0
      %3391 = vmatprep.subr.bf16.mxu0 0
      %3392 = vmatpush1.bf16.msra.mxu0 0
      %3393 = vmatprep.subr.bf16.mxu0 0
      %3394 = vmatpush1.bf16.msra.mxu0 0
      %3395 = vmatprep.subr.bf16.mxu0 0
      %3396 = vmatpush1.bf16.msra.mxu0 0
      %3397 = vmatprep.subr.bf16.mxu0 0
      %3398 = vmatpush1.bf16.msra.mxu0 0
      %3399 = vmatprep.subr.bf16.mxu0 0
      %3400 = vmatpush1.bf16.msra.mxu0 0
      %3401 = vmatprep.subr.bf16.mxu0 0
      %3402 = vmatpush1.bf16.msra.mxu0 0
      %3403 = vmatprep.subr.bf16.mxu0 0
      %3404 = vmatpush1.bf16.msra.mxu0 0
      %3405 = vmatprep.subr.bf16.mxu0 0
      %3406 = vmatpush1.bf16.msra.mxu0 0
      %3407 = vmatprep.subr.bf16.mxu0 0
      %3408 = vmatpush1.bf16.msra.mxu0 0
      %3409 = vmatprep.subr.bf16.mxu0 0
      %3410 = vmatpush1.bf16.msra.mxu0 0
      %3411 = vmatprep.subr.bf16.mxu0 0
      %3412 = vmatpush1.bf16.msra.mxu0 0
      %3413 = vmatprep.mubr.bf16.mxu0 0
      %3414 = vmatmul.mubr.bf16.gmra.mrb[0].mxu0 %v1126
      %v3415 = vpop.f32.mrb[0].mxu0
      %v3416 = vadd.f32 %v2743, %v3415
      %v3417 = vpop.f32.mrb[0].mxu0
      %v3418 = vpop.f32.mrb[0].mxu0
      %v3419 = vpop.f32.mrb[0].mxu0
      %3420 = vdwg.mxu0
      %3421 = vmatprep.subr.bf16.mxu0 0
      %3422 = vmatpush1.bf16.msra.mxu0 %v2056
      %3423 = vmatprep.subr.bf16.mxu0 0
      %3424 = vmatpush1.bf16.msra.mxu0 %v2057
      %3425 = vmatprep.subr.bf16.mxu0 0
      %3426 = vmatpush1.bf16.msra.mxu0 0
      %3427 = vmatprep.subr.bf16.mxu0 0
      %3428 = vmatpush1.bf16.msra.mxu0 0
      %3429 = vmatprep.subr.bf16.mxu0 0
      %3430 = vmatpush1.bf16.msra.mxu0 0
      %3431 = vmatprep.subr.bf16.mxu0 0
      %3432 = vmatpush1.bf16.msra.mxu0 0
      %3433 = vmatprep.subr.bf16.mxu0 0
      %3434 = vmatpush1.bf16.msra.mxu0 0
      %3435 = vmatprep.subr.bf16.mxu0 0
      %3436 = vmatpush1.bf16.msra.mxu0 0
      %3437 = vmatprep.subr.bf16.mxu0 0
      %3438 = vmatpush1.bf16.msra.mxu0 0
      %3439 = vmatprep.subr.bf16.mxu0 0
      %3440 = vmatpush1.bf16.msra.mxu0 0
      %3441 = vmatprep.subr.bf16.mxu0 0
      %3442 = vmatpush1.bf16.msra.mxu0 0
      %3443 = vmatprep.subr.bf16.mxu0 0
      %3444 = vmatpush1.bf16.msra.mxu0 0
      %3445 = vmatprep.subr.bf16.mxu0 0
      %3446 = vmatpush1.bf16.msra.mxu0 0
      %3447 = vmatprep.subr.bf16.mxu0 0
      %3448 = vmatpush1.bf16.msra.mxu0 0
      %3449 = vmatprep.subr.bf16.mxu0 0
      %3450 = vmatpush1.bf16.msra.mxu0 0
      %3451 = vmatprep.subr.bf16.mxu0 0
      %3452 = vmatpush1.bf16.msra.mxu0 0
      %3453 = vmatprep.mubr.bf16.mxu0 0
      %3454 = vmatmul.mubr.bf16.gmra.mrb[0].mxu0 %v1181
      %v3455 = vpop.f32.mrb[0].mxu0
      %v3456 = vadd.f32 %v2783, %v3455
      %v3457 = vpop.f32.mrb[0].mxu0
      %v3458 = vpop.f32.mrb[0].mxu0
      %v3459 = vpop.f32.mrb[0].mxu0
      %3460 = vdwg.mxu0
      %3461 = vmatprep.subr.bf16.mxu0 0
      %3462 = vmatpush1.bf16.msra.mxu0 %v2111
      %3463 = vmatprep.subr.bf16.mxu0 0
      %3464 = vmatpush1.bf16.msra.mxu0 %v2112
      %3465 = vmatprep.subr.bf16.mxu0 0
      %3466 = vmatpush1.bf16.msra.mxu0 0
      %3467 = vmatprep.subr.bf16.mxu0 0
      %3468 = vmatpush1.bf16.msra.mxu0 0
      %3469 = vmatprep.subr.bf16.mxu0 0
      %3470 = vmatpush1.bf16.msra.mxu0 0
      %3471 = vmatprep.subr.bf16.mxu0 0
      %3472 = vmatpush1.bf16.msra.mxu0 0
      %3473 = vmatprep.subr.bf16.mxu0 0
      %3474 = vmatpush1.bf16.msra.mxu0 0
      %3475 = vmatprep.subr.bf16.mxu0 0
      %3476 = vmatpush1.bf16.msra.mxu0 0
      %3477 = vmatprep.subr.bf16.mxu0 0
      %3478 = vmatpush1.bf16.msra.mxu0 0
      %3479 = vmatprep.subr.bf16.mxu0 0
      %3480 = vmatpush1.bf16.msra.mxu0 0
      %3481 = vmatprep.subr.bf16.mxu0 0
      %3482 = vmatpush1.bf16.msra.mxu0 0
      %3483 = vmatprep.subr.bf16.mxu0 0
      %3484 = vmatpush1.bf16.msra.mxu0 0
      %3485 = vmatprep.subr.bf16.mxu0 0
      %3486 = vmatpush1.bf16.msra.mxu0 0
      %3487 = vmatprep.subr.bf16.mxu0 0
      %3488 = vmatpush1.bf16.msra.mxu0 0
      %3489 = vmatprep.subr.bf16.mxu0 0
      %3490 = vmatpush1.bf16.msra.mxu0 0
      %3491 = vmatprep.subr.bf16.mxu0 0
      %3492 = vmatpush1.bf16.msra.mxu0 0
      %3493 = vmatprep.mubr.bf16.mxu0 0
      %3494 = vmatmul.mubr.bf16.gmra.mrb[0].mxu0 %v1236
      %v3495 = vpop.f32.mrb[0].mxu0
      %v3496 = vadd.f32 %v2823, %v3495
      %v3497 = vpop.f32.mrb[0].mxu0
      %v3498 = vpop.f32.mrb[0].mxu0
      %v3499 = vpop.f32.mrb[0].mxu0
      %3500 = vdwg.mxu0
      %3501 = vmatprep.subr.bf16.mxu0 0
      %3502 = vmatpush1.bf16.msra.mxu0 %v2166
      %3503 = vmatprep.subr.bf16.mxu0 0
      %3504 = vmatpush1.bf16.msra.mxu0 %v2167
      %3505 = vmatprep.subr.bf16.mxu0 0
      %3506 = vmatpush1.bf16.msra.mxu0 0
      %3507 = vmatprep.subr.bf16.mxu0 0
      %3508 = vmatpush1.bf16.msra.mxu0 0
      %3509 = vmatprep.subr.bf16.mxu0 0
      %3510 = vmatpush1.bf16.msra.mxu0 0
      %3511 = vmatprep.subr.bf16.mxu0 0
      %3512 = vmatpush1.bf16.msra.mxu0 0
      %3513 = vmatprep.subr.bf16.mxu0 0
      %3514 = vmatpush1.bf16.msra.mxu0 0
      %3515 = vmatprep.subr.bf16.mxu0 0
      %3516 = vmatpush1.bf16.msra.mxu0 0
      %3517 = vmatprep.subr.bf16.mxu0 0
      %3518 = vmatpush1.bf16.msra.mxu0 0
      %3519 = vmatprep.subr.bf16.mxu0 0
      %3520 = vmatpush1.bf16.msra.mxu0 0
      %3521 = vmatprep.subr.bf16.mxu0 0
      %3522 = vmatpush1.bf16.msra.mxu0 0
      %3523 = vmatprep.subr.bf16.mxu0 0
      %3524 = vmatpush1.bf16.msra.mxu0 0
      %3525 = vmatprep.subr.bf16.mxu0 0
      %3526 = vmatpush1.bf16.msra.mxu0 0
      %3527 = vmatprep.subr.bf16.mxu0 0
      %3528 = vmatpush1.bf16.msra.mxu0 0
      %3529 = vmatprep.subr.bf16.mxu0 0
      %3530 = vmatpush1.bf16.msra.mxu0 0
      %3531 = vmatprep.subr.bf16.mxu0 0
      %3532 = vmatpush1.bf16.msra.mxu0 0
      %3533 = vmatprep.mubr.bf16.mxu0 0
      %3534 = vmatmul.mubr.bf16.gmra.mrb[0].mxu0 %v1291
      %v3535 = vpop.f32.mrb[0].mxu0
      %v3536 = vadd.f32 %v2863, %v3535
      %v3537 = vpop.f32.mrb[0].mxu0
      %v3538 = vpop.f32.mrb[0].mxu0
      %v3539 = vpop.f32.mrb[0].mxu0
      %3540 = vdwg.mxu0
      %3541 = vmatprep.subr.bf16.mxu0 0
      %3542 = vmatpush1.bf16.msra.mxu0 %v2221
      %3543 = vmatprep.subr.bf16.mxu0 0
      %3544 = vmatpush1.bf16.msra.mxu0 %v2222
      %3545 = vmatprep.subr.bf16.mxu0 0
      %3546 = vmatpush1.bf16.msra.mxu0 0
      %3547 = vmatprep.subr.bf16.mxu0 0
      %3548 = vmatpush1.bf16.msra.mxu0 0
      %3549 = vmatprep.subr.bf16.mxu0 0
      %3550 = vmatpush1.bf16.msra.mxu0 0
      %3551 = vmatprep.subr.bf16.mxu0 0
      %3552 = vmatpush1.bf16.msra.mxu0 0
      %3553 = vmatprep.subr.bf16.mxu0 0
      %3554 = vmatpush1.bf16.msra.mxu0 0
      %3555 = vmatprep.subr.bf16.mxu0 0
      %3556 = vmatpush1.bf16.msra.mxu0 0
      %3557 = vmatprep.subr.bf16.mxu0 0
      %3558 = vmatpush1.bf16.msra.mxu0 0
      %3559 = vmatprep.subr.bf16.mxu0 0
      %3560 = vmatpush1.bf16.msra.mxu0 0
      %3561 = vmatprep.subr.bf16.mxu0 0
      %3562 = vmatpush1.bf16.msra.mxu0 0
      %3563 = vmatprep.subr.bf16.mxu0 0
      %3564 = vmatpush1.bf16.msra.mxu0 0
      %3565 = vmatprep.subr.bf16.mxu0 0
      %3566 = vmatpush1.bf16.msra.mxu0 0
      %3567 = vmatprep.subr.bf16.mxu0 0
      %3568 = vmatpush1.bf16.msra.mxu0 0
      %3569 = vmatprep.subr.bf16.mxu0 0
      %3570 = vmatpush1.bf16.msra.mxu0 0
      %3571 = vmatprep.subr.bf16.mxu0 0
      %3572 = vmatpush1.bf16.msra.mxu0 0
      %3573 = vmatprep.mubr.bf16.mxu0 0
      %3574 = vmatmul.mubr.bf16.gmra.mrb[0].mxu0 %v1346
      %v3575 = vpop.f32.mrb[0].mxu0
      %v3576 = vadd.f32 %v2903, %v3575
      %v3577 = vpop.f32.mrb[0].mxu0
      %v3578 = vpop.f32.mrb[0].mxu0
      %v3579 = vpop.f32.mrb[0].mxu0
      %3580 = vdwg.mxu0
      %3581 = vst.msk [vmem:[%s312] sm:$0x3] %vm2924, %v2976
      %3582 = vst.msk [vmem:[%s312 + $0x2] sm:$0x3] %vm2924, %v3016
      %3583 = vst.msk [vmem:[%s312 + $0x4] sm:$0x3] %vm2924, %v3056
      %3584 = vst.msk [vmem:[%s312 + $0x6] sm:$0x3] %vm2924, %v3096
      %3585 = vst.msk [vmem:[%s312 + $0x8] sm:$0x3] %vm2924, %v3136
      %3586 = vst.msk [vmem:[%s312 + $0xa] sm:$0x3] %vm2924, %v3176
      %3587 = vst.msk [vmem:[%s312 + $0xc] sm:$0x3] %vm2924, %v3216
      %3588 = vst.msk [vmem:[%s312 + $0xe] sm:$0x3] %vm2924, %v3256
      %3589 = vst.msk [vmem:[%s312 + $0x10] sm:$0x3] %vm2924, %v3296
      %3590 = vst.msk [vmem:[%s312 + $0x12] sm:$0x3] %vm2924, %v3336
      %3591 = vst.msk [vmem:[%s312 + $0x14] sm:$0x3] %vm2924, %v3376
      %3592 = vst.msk [vmem:[%s312 + $0x16] sm:$0x3] %vm2924, %v3416
      %3593 = vst.msk [vmem:[%s312 + $0x18] sm:$0x3] %vm2924, %v3456
      %3594 = vst.msk [vmem:[%s312 + $0x1a] sm:$0x3] %vm2924, %v3496
      %3595 = vst.msk [vmem:[%s312 + $0x1c] sm:$0x3] %vm2924, %v3536
      %3596 = vst.msk [vmem:[%s312 + $0x1e] sm:$0x3] %vm2924, %v3576
      %s3597 = smul.u32 16, %s17
      %p3598 = scmp.lt.s32.totalorder %s3597, 31
      %s3599 = scalar_select %p3598, %s3597, 31
      %s3600 = smul.addr %s3599, 2
      %s3601 = scalar_lea.vmem %s4, %s3600
      %s3602 = smul.u32 16, %s17
      %p3603 = scmp.lt.s32.totalorder %s3602, 31
      %s3604 = scalar_select %p3603, %s3602, 31
      %s3605 = smul.addr %s3604, 2
      %s3606 = scalar_lea.vmem %s5, %s3605
      // Predicated region
      $region37: #{_lambda_.7} parent=35 // pred_check
        %p3607 = pneg %p139
      $region38: #{_lambda_.7} parent=35 // pred_check_branch
        %3609 = sbr.rel (%p3607) target = $region40
      $region39: #{_lambda_.7} parent=35 // pred_region
        %s3610 = smul.u32 16, %s17
      $region40: #{_lambda_.7} parent=35 // pred_fallthru
        _
      // Predicated region
      $region41: #{_lambda_.7} parent=35 // pred_check
        %p3611 = pneg %p165
      $region42: #{_lambda_.7} parent=35 // pred_check_branch
        %3613 = sbr.rel (%p3611) target = $region44
      $region43: #{_lambda_.7} parent=35 // pred_region
        %s3614 = smul.u32 16, %s17
      $region44: #{_lambda_.7} parent=35 // pred_fallthru
        _
    $region36: #{_lambda_.7} parent=5 // pred_fallthru
      _
    %p3615 = scmp.le.s32.totalorder 2, %s12
    // Predicated region
    $region45: #{_lambda_.7} parent=5 // pred_check
      %p3616 = pneg %p3615
    $region46: #{_lambda_.7} parent=5 // pred_check_branch
      %3618 = sbr.rel (%p3616) target = $region48
    $region47: #{_lambda_.7} parent=5 // pred_region
      %s3619 = ssub.s32 %s12, 2
      // Predicated region
      $region49: #{_lambda_.7} parent=47 // pred_check
        %p3620 = pneg %p145
      $region50: #{_lambda_.7} parent=47 // pred_check_branch
        %3622 = sbr.rel (%p3620) target = $region52
      $region51: #{_lambda_.7} parent=47 // pred_region
        %s3623 = smul.u32 16, %s18
        %p3624 = scmp.lt.s32.totalorder %s3623, 31
        %s3625 = scalar_select %p3624, %s3623, 31
        %s3626 = smul.addr %s3625, 2
        %s3627 = scalar_lea.vmem %s4, %s3626
      $region52: #{_lambda_.7} parent=47 // pred_fallthru
        _
      // Predicated region
      $region53: #{_lambda_.7} parent=47 // pred_check
        %p3628 = pneg %p171
      $region54: #{_lambda_.7} parent=47 // pred_check_branch
        %3630 = sbr.rel (%p3628) target = $region56
      $region55: #{_lambda_.7} parent=47 // pred_region
        %s3631 = smul.u32 16, %s18
        %p3632 = scmp.lt.s32.totalorder %s3631, 31
        %s3633 = scalar_select %p3632, %s3631, 31
        %s3634 = smul.addr %s3633, 2
        %s3635 = scalar_lea.vmem %s5, %s3634
      $region56: #{_lambda_.7} parent=47 // pred_fallthru
        _
    $region48: #{_lambda_.7} parent=5 // pred_fallthru
      _
  $region6: #{_lambda_.7} parent=0 // loop_footer
    %s16 = sadd.s32 1, %s12
  $region7: #{_lambda_.7} parent=0 // loop_footer_branch
    %11 = sbr.rel target = $region3
  $region8: #{_lambda_.7} parent=0 // loop_exit
    _

// kernel: _lambda_.8
$region0: #{_lambda_.8}
  #allocation0 [shape = 'u32[]', space=smem, size = 0x4, offset = 0x4, fixed_abs, tag = 'smem constant byte address 0x4 - core index']
  #allocation1 [shape = 'u32[144,128]{1,0:T(1,128)}', space=vmem, size = 0x12000, scoped, tag = 'internal scratch']
  %s0 = inlined_call_operand.vmem [shape: bf16[128,128], index: 0, kind: input, shape index: {}]
  %s1 = inlined_call_operand.vmem [shape: f32[128,128], index: 1, kind: input, shape index: {}]
  %s2 = inlined_call_operand.vmem [shape: bf16[128,128], index: 2, kind: input, shape index: {}]
  %s3 = inlined_call_operand.vmem [shape: f32[1,128], index: 3, kind: input, shape index: {}]
  %s4 = inlined_call_operand.vmem [shape: bf16[128,128], index: 4, kind: output, shape index: {}]
  %s5 = sld [smem:[#allocation0]]
  $region49: #{_lambda_.8} parent=0
    _
  %s7 = ssub.s32 1, %s5
  %s8 = scalar_select 0, %s7, %s5
  loop: start=0, step=1, limit=4
  $region2: #{_lambda_.8} parent=0 // loop_pre_header
    _
  $region3: #{_lambda_.8} parent=0 // loop_header
    %s10 = sphi 0, %s14
    %p11 = scmp.ge.s32.totalorder %s10, 4
    %s20 = sphi 0, %s22
    %s23 = sphi 0, %s20
    %s24 = sphi 0, %s23
    %s40 = sphi 0, %s24
    %s46 = sphi 0, %s48
    %s49 = sphi 0, %s46
    %s50 = sphi 0, %s49
    %s66 = sphi 0, %s50
    %s70 = sphi 0, %s70
    %s72 = sphi 0, %s70
    %s73 = sphi 0, %s72
    %s87 = sphi 0, %s73
    %s91 = sphi 0, %s91
    %s93 = sphi 0, %s91
    %s94 = sphi 0, %s93
    %s108 = sphi 0, %s94
    %s114 = sphi 0, %s116
    %s117 = sphi 0, %s114
    %s118 = sphi 0, %s117
    %s134 = sphi 0, %s118
  $region4: #{_lambda_.8} parent=0 // loop_header_branch
    %13 = sbr.rel (%p11) target = $region8
  $region5: #{_lambda_.8} parent=0 // loop_body
    %s15 = ssub.s32 %s10, 1
    %s16 = ssub.s32 %s10, 2
    %s17 = sadd.s32 %s10, 1
    %s18 = ssub.s32 %s10, %s17
    %p19 = scmp.eq.s32.totalorder %s18, 0
    %s21 = sadd.s32 %s20, 1
    %s22 = scalar_select %p19, %s20, %s21
    %p25 = pneg %p19
    %p26 = scmp.eq.s32.totalorder %s10, 1
    %p27 = por %p25, %p26
    %p28 = scmp.ne.s32.totalorder %s20, %s23
    %p29 = scmp.eq.s32.totalorder %s10, 0
    %p30 = por %p28, %p29
    %p31 = scmp.ne.s32.totalorder %s20, %s23
    %p32 = scmp.eq.s32.totalorder %s15, 1
    %p33 = por %p31, %p32
    %p34 = scmp.ne.s32.totalorder %s23, %s24
    %p35 = scmp.eq.s32.totalorder %s15, 0
    %p36 = por %p34, %p35
    %p37 = scmp.ne.s32.totalorder %s23, %s24
    %p38 = scmp.eq.s32.totalorder %s16, 1
    %p39 = por %p37, %p38
    %p41 = scmp.ne.s32.totalorder %s24, %s40
    %p42 = scmp.eq.s32.totalorder %s16, 0
    %p43 = por %p41, %p42
    %s44 = ssub.s32 %s10, %s17
    %p45 = scmp.eq.s32.totalorder %s44, 0
    %s47 = sadd.s32 %s46, 1
    %s48 = scalar_select %p45, %s46, %s47
    %p51 = pneg %p45
    %p52 = scmp.eq.s32.totalorder %s10, 1
    %p53 = por %p51, %p52
    %p54 = scmp.ne.s32.totalorder %s46, %s49
    %p55 = scmp.eq.s32.totalorder %s10, 0
    %p56 = por %p54, %p55
    %p57 = scmp.ne.s32.totalorder %s46, %s49
    %p58 = scmp.eq.s32.totalorder %s15, 1
    %p59 = por %p57, %p58
    %p60 = scmp.ne.s32.totalorder %s49, %s50
    %p61 = scmp.eq.s32.totalorder %s15, 0
    %p62 = por %p60, %p61
    %p63 = scmp.ne.s32.totalorder %s49, %s50
    %p64 = scmp.eq.s32.totalorder %s16, 1
    %p65 = por %p63, %p64
    %p67 = scmp.ne.s32.totalorder %s50, %s66
    %p68 = scmp.eq.s32.totalorder %s16, 0
    %p69 = por %p67, %p68
    %s71 = sadd.s32 %s70, 1
    %p74 = scmp.eq.s32.totalorder %s10, 1
    %p75 = scmp.ne.s32.totalorder %s70, %s72
    %p76 = scmp.eq.s32.totalorder %s10, 0
    %p77 = por %p75, %p76
    %p78 = scmp.ne.s32.totalorder %s70, %s72
    %p79 = scmp.eq.s32.totalorder %s15, 1
    %p80 = por %p78, %p79
    %p81 = scmp.ne.s32.totalorder %s72, %s73
    %p82 = scmp.eq.s32.totalorder %s15, 0
    %p83 = por %p81, %p82
    %p84 = scmp.ne.s32.totalorder %s72, %s73
    %p85 = scmp.eq.s32.totalorder %s16, 1
    %p86 = por %p84, %p85
    %p88 = scmp.ne.s32.totalorder %s73, %s87
    %p89 = scmp.eq.s32.totalorder %s16, 0
    %p90 = por %p88, %p89
    %s92 = sadd.s32 %s91, 1
    %p95 = scmp.eq.s32.totalorder %s10, 1
    %p96 = scmp.ne.s32.totalorder %s91, %s93
    %p97 = scmp.eq.s32.totalorder %s10, 0
    %p98 = por %p96, %p97
    %p99 = scmp.ne.s32.totalorder %s91, %s93
    %p100 = scmp.eq.s32.totalorder %s15, 1
    %p101 = por %p99, %p100
    %p102 = scmp.ne.s32.totalorder %s93, %s94
    %p103 = scmp.eq.s32.totalorder %s15, 0
    %p104 = por %p102, %p103
    %p105 = scmp.ne.s32.totalorder %s93, %s94
    %p106 = scmp.eq.s32.totalorder %s16, 1
    %p107 = por %p105, %p106
    %p109 = scmp.ne.s32.totalorder %s94, %s108
    %p110 = scmp.eq.s32.totalorder %s16, 0
    %p111 = por %p109, %p110
    %s112 = ssub.s32 %s10, %s17
    %p113 = scmp.eq.s32.totalorder %s112, 0
    %s115 = sadd.s32 %s114, 1
    %s116 = scalar_select %p113, %s114, %s115
    %p119 = pneg %p113
    %p120 = scmp.eq.s32.totalorder %s10, 1
    %p121 = por %p119, %p120
    %p122 = scmp.ne.s32.totalorder %s114, %s117
    %p123 = scmp.eq.s32.totalorder %s10, 0
    %p124 = por %p122, %p123
    %p125 = scmp.ne.s32.totalorder %s114, %s117
    %p126 = scmp.eq.s32.totalorder %s15, 1
    %p127 = por %p125, %p126
    %p128 = scmp.ne.s32.totalorder %s117, %s118
    %p129 = scmp.eq.s32.totalorder %s15, 0
    %p130 = por %p128, %p129
    %p131 = scmp.ne.s32.totalorder %s117, %s118
    %p132 = scmp.eq.s32.totalorder %s16, 1
    %p133 = por %p131, %p132
    %p135 = scmp.ne.s32.totalorder %s118, %s134
    %p136 = scmp.eq.s32.totalorder %s16, 0
    %p137 = por %p135, %p136
    %p138 = scmp.le.s32.totalorder 1, %s10
    %p139 = scmp.lt.s32.totalorder %s10, 3
    %p140 = pnand %p138, %p139
    %p141 = pneg %p140
    // Predicated region
    $region9: #{_lambda_.8} parent=5 // pred_check
      _
    $region10: #{_lambda_.8} parent=5 // pred_check_branch
      %143 = sbr.rel (%p140) target = $region12
    $region11: #{_lambda_.8} parent=5 // pred_region
      %s144 = ssub.s32 %s10, 1
      // Predicated region
      $region13: #{_lambda_.8} parent=11 // pred_check
        %p145 = pneg %p83
      $region14: #{_lambda_.8} parent=11 // pred_check_branch
        %147 = sbr.rel (%p145) target = $region16
      $region15: #{_lambda_.8} parent=11 // pred_region
        _
      $region16: #{_lambda_.8} parent=11 // pred_fallthru
        _
      // Predicated region
      $region17: #{_lambda_.8} parent=11 // pred_check
        %p148 = pneg %p104
      $region18: #{_lambda_.8} parent=11 // pred_check_branch
        %150 = sbr.rel (%p148) target = $region20
      $region19: #{_lambda_.8} parent=11 // pred_region
        _
      $region20: #{_lambda_.8} parent=11 // pred_fallthru
        _
    $region12: #{_lambda_.8} parent=5 // pred_fallthru
      _
    %p151 = scmp.lt.s32.totalorder %s10, 2
    // Predicated region
    $region21: #{_lambda_.8} parent=5 // pred_check
      %p152 = pneg %p151
    $region22: #{_lambda_.8} parent=5 // pred_check_branch
      %154 = sbr.rel (%p152) target = $region24
    $region23: #{_lambda_.8} parent=5 // pred_region
      // Predicated region
      $region25: #{_lambda_.8} parent=23 // pred_check
        %p155 = pneg %p30
      $region26: #{_lambda_.8} parent=23 // pred_check_branch
        %157 = sbr.rel (%p155) target = $region28
      $region27: #{_lambda_.8} parent=23 // pred_region
        %s158 = smul.u32 8, %s10
        %p159 = scmp.lt.s32.totalorder %s158, 15
        %s160 = scalar_select %p159, %s158, 15
        %s161 = smul.addr %s160, 4
        %s162 = scalar_lea.vmem %s0, %s161
        %s163 = smul.u32 8, %s10
      $region28: #{_lambda_.8} parent=23 // pred_fallthru
        _
      // Predicated region
      $region29: #{_lambda_.8} parent=23 // pred_check
        %p164 = pneg %p56
      $region30: #{_lambda_.8} parent=23 // pred_check_branch
        %166 = sbr.rel (%p164) target = $region32
      $region31: #{_lambda_.8} parent=23 // pred_region
        %s167 = smul.u32 8, %s10
        %p168 = scmp.lt.s32.totalorder %s167, 15
        %s169 = scalar_select %p168, %s167, 15
        %s170 = smul.addr %s169, 8
        %s171 = scalar_lea.vmem %s1, %s170
        %s172 = smul.u32 8, %s10
      $region32: #{_lambda_.8} parent=23 // pred_fallthru
        _
    $region24: #{_lambda_.8} parent=5 // pred_fallthru
      _
    %p173 = scmp.le.s32.totalorder 1, %s10
    %p174 = scmp.lt.s32.totalorder %s10, 3
    %p175 = pnand %p173, %p174
    %p176 = pneg %p175
    // Predicated region
    $region33: #{_lambda_.8} parent=5 // pred_check
      _
    $region34: #{_lambda_.8} parent=5 // pred_check_branch
      %178 = sbr.rel (%p175) target = $region36
    $region35: #{_lambda_.8} parent=5 // pred_region
      %s179 = ssub.s32 %s10, 1
      %s180 = smul.u32 8, %s15
      %p181 = scmp.lt.s32.totalorder %s180, 15
      %s182 = scalar_select %p181, %s180, 15
      %s183 = smul.addr %s182, 4
      %s184 = scalar_lea.vmem %s0, %s183
      %p185 = pneg %p36
      %p186 = pneg %p33
      %s187 = smul.u32 8, %s15
      %p188 = scmp.lt.s32.totalorder %s187, 15
      %s189 = scalar_select %p188, %s187, 15
      %s190 = smul.addr %s189, 8
      %s191 = scalar_lea.vmem %s1, %s190
      %p192 = pneg %p62
      %p193 = pneg %p59
      %p194 = pneg %p83
      %p195 = pneg %p80
      %p196 = pneg %p104
      %p197 = pneg %p101
      %p198 = pneg %p130
      %p199 = pneg %p127
      %s200 = smul.u32 8, %s15
      %p201 = scmp.lt.s32.totalorder %s200, 15
      %s202 = scalar_select %p201, %s200, 15
      %s203 = smul.addr %s202, 4
      %s204 = scalar_lea.vmem %s4, %s203
      %s205 = smul.u32 8, %s15
      %p206 = scmp.lt.s32.totalorder %s205, 15
      %s207 = scalar_select %p206, %s205, 15
      %s208 = smul.addr %s207, 4
      %s209 = scalar_lea.vmem %s0, %s208
      %s210 = smul.u32 8, %s15
      %s211 = smul.u32 8, %s15
      %p212 = scmp.lt.s32.totalorder %s211, 15
      %s213 = scalar_select %p212, %s211, 15
      %s214 = smul.addr %s213, 8
      %s215 = scalar_lea.vmem %s1, %s214
      %s216 = smul.u32 8, %s15
      %s217 = smul.u32 8, %s15
      %p218 = scmp.lt.s32.totalorder %s217, 15
      %s219 = scalar_select %p218, %s217, 15
      %s220 = smul.addr %s219, 4
      %s221 = scalar_lea.vmem %s4, %s220
      %s222 = smul.u32 8, %s15
      %v224 = vld [vmem:[%s209] sm:$0xf]
      %v225 = vld [vmem:[%s209 + $0x4] sm:$0xf]
      %v226 = vld [vmem:[%s209 + $0x8] sm:$0xf]
      %v227 = vld [vmem:[%s209 + $0xc] sm:$0xf]
      %v228 = vld [vmem:[%s209 + $0x10] sm:$0xf]
      %v229 = vld [vmem:[%s209 + $0x14] sm:$0xf]
      %v230 = vld [vmem:[%s209 + $0x18] sm:$0xf]
      %v231 = vld [vmem:[%s209 + $0x1c] sm:$0xf]
      %v232 = vld [vmem:[%s2] sm:$0xf]
      %v233 = vld [vmem:[%s2 + $0x4] sm:$0xf]
      %v234 = vld [vmem:[%s2 + $0x8] sm:$0xf]
      %v235 = vld [vmem:[%s2 + $0xc] sm:$0xf]
      %v236 = vld [vmem:[%s2 + $0x10] sm:$0xf]
      %v237 = vld [vmem:[%s2 + $0x14] sm:$0xf]
      %v238 = vld [vmem:[%s2 + $0x18] sm:$0xf]
      %v239 = vld [vmem:[%s2 + $0x1c] sm:$0xf]
      %v240 = vld [vmem:[%s2 + $0x20] sm:$0xf]
      %v241 = vld [vmem:[%s2 + $0x24] sm:$0xf]
      %v242 = vld [vmem:[%s2 + $0x28] sm:$0xf]
      %v243 = vld [vmem:[%s2 + $0x2c] sm:$0xf]
      %v244 = vld [vmem:[%s2 + $0x30] sm:$0xf]
      %v245 = vld [vmem:[%s2 + $0x34] sm:$0xf]
      %v246 = vld [vmem:[%s2 + $0x38] sm:$0xf]
      %v247 = vld [vmem:[%s2 + $0x3c] sm:$0xf]
      %v248 = vld [vmem:[%s3] sm:$0x1]
      %v250 = vlaneseq
      %v251 = vshrl.u32 %v250, 7
      %v252 = vsub.s32 0, %v251
      %v253 = vrot.slane %v248, %v252
      %v263 = vunpack.c.l.b16 %v224
      %v264 = vunpack.c.l.b16 %v225
      %v265 = vunpack.c.l.b16 %v226
      %v266 = vunpack.c.l.b16 %v227
      %v267 = vunpack.c.l.b16 %v228
      %v268 = vunpack.c.l.b16 %v229
      %v269 = vunpack.c.l.b16 %v230
      %v270 = vunpack.c.l.b16 %v231
      %v271 = vpack.c.b16 %v264, %v263
      %v272 = vpack.c.b16 %v266, %v265
      %v273 = vpack.c.b16 %v268, %v267
      %v274 = vpack.c.b16 %v270, %v269
      %v295 = vunpack.c.l.b16 %v232
      %v296 = vunpack.c.l.b16 %v233
      %v297 = vunpack.c.l.b16 %v234
      %v298 = vunpack.c.l.b16 %v235
      %v299 = vunpack.c.l.b16 %v236
      %v300 = vunpack.c.l.b16 %v237
      %v301 = vunpack.c.l.b16 %v238
      %v302 = vunpack.c.l.b16 %v239
      %v303 = vunpack.c.l.b16 %v240
      %v304 = vunpack.c.l.b16 %v241
      %v305 = vunpack.c.l.b16 %v242
      %v306 = vunpack.c.l.b16 %v243
      %v307 = vunpack.c.l.b16 %v244
      %v308 = vunpack.c.l.b16 %v245
      %v309 = vunpack.c.l.b16 %v246
      %v310 = vunpack.c.l.b16 %v247
      %v311 = vpack.c.b16 %v296, %v295
      %v312 = vpack.c.b16 %v298, %v297
      %v313 = vpack.c.b16 %v300, %v299
      %v314 = vpack.c.b16 %v302, %v301
      %v315 = vpack.c.b16 %v304, %v303
      %v316 = vpack.c.b16 %v306, %v305
      %v317 = vpack.c.b16 %v308, %v307
      %v318 = vpack.c.b16 %v310, %v309
      %327 = vmatprep.subr.bf16.mxu0 0
      %328 = vmatpush1.bf16.msra.mxu0 %v311
      %329 = vmatprep.subr.bf16.mxu0 0
      %330 = vmatpush1.bf16.msra.mxu0 %v312
      %331 = vmatprep.subr.bf16.mxu0 0
      %332 = vmatpush1.bf16.msra.mxu0 %v313
      %333 = vmatprep.subr.bf16.mxu0 0
      %334 = vmatpush1.bf16.msra.mxu0 %v314
      %335 = vmatprep.subr.bf16.mxu0 0
      %336 = vmatpush1.bf16.msra.mxu0 %v315
      %337 = vmatprep.subr.bf16.mxu0 0
      %338 = vmatpush1.bf16.msra.mxu0 %v316
      %339 = vmatprep.subr.bf16.mxu0 0
      %340 = vmatpush1.bf16.msra.mxu0 %v317
      %341 = vmatprep.subr.bf16.mxu0 0
      %342 = vmatpush1.bf16.msra.mxu0 %v318
      %343 = vmatprep.subr.bf16.mxu0 0
      %344 = vmatpush1.bf16.msra.mxu0 0
      %345 = vmatprep.subr.bf16.mxu0 0
      %346 = vmatpush1.bf16.msra.mxu0 0
      %347 = vmatprep.subr.bf16.mxu0 0
      %348 = vmatpush1.bf16.msra.mxu0 0
      %349 = vmatprep.subr.bf16.mxu0 0
      %350 = vmatpush1.bf16.msra.mxu0 0
      %351 = vmatprep.subr.bf16.mxu0 0
      %352 = vmatpush1.bf16.msra.mxu0 0
      %353 = vmatprep.subr.bf16.mxu0 0
      %354 = vmatpush1.bf16.msra.mxu0 0
      %355 = vmatprep.subr.bf16.mxu0 0
      %356 = vmatpush1.bf16.msra.mxu0 0
      %357 = vmatprep.subr.bf16.mxu0 0
      %358 = vmatpush1.bf16.msra.mxu0 0
      %359 = vmatprep.mubr.bf16.mxu0 0
      %360 = vmatmul.mubr.bf16.gmra.mrb[0].mxu0 %v271
      %v361 = vpop.f32.mrb[0].mxu0
      %v362 = vadd.f32 %v253, %v361
      %v363 = vpop.f32.mrb[0].mxu0
      %v364 = vpop.f32.mrb[0].mxu0
      %v365 = vadd.f32 %v253, %v364
      %v366 = vpop.f32.mrb[0].mxu0
      %367 = vmatprep.mubr.bf16.mxu0 0
      %368 = vmatmul.mubr.bf16.gmra.mrb[0].mxu0 %v272
      %v369 = vpop.f32.mrb[0].mxu0
      %v370 = vadd.f32 %v253, %v369
      %v371 = vpop.f32.mrb[0].mxu0
      %v372 = vpop.f32.mrb[0].mxu0
      %v373 = vadd.f32 %v253, %v372
      %v374 = vpop.f32.mrb[0].mxu0
      %375 = vmatprep.mubr.bf16.mxu0 0
      %376 = vmatmul.mubr.bf16.gmra.mrb[0].mxu0 %v273
      %v377 = vpop.f32.mrb[0].mxu0
      %v378 = vadd.f32 %v253, %v377
      %v379 = vpop.f32.mrb[0].mxu0
      %v380 = vpop.f32.mrb[0].mxu0
      %v381 = vadd.f32 %v253, %v380
      %v382 = vpop.f32.mrb[0].mxu0
      %383 = vmatprep.mubr.bf16.mxu0 0
      %384 = vmatmul.mubr.bf16.gmra.mrb[0].mxu0 %v274
      %v385 = vpop.f32.mrb[0].mxu0
      %v386 = vadd.f32 %v253, %v385
      %v387 = vpop.f32.mrb[0].mxu0
      %v388 = vpop.f32.mrb[0].mxu0
      %v389 = vadd.f32 %v253, %v388
      %v390 = vpop.f32.mrb[0].mxu0
      %391 = vdwg.mxu0
      %v392 = vld [vmem:[%s215] sm:$0xff]
      %v393 = vld [vmem:[%s215 + $0x8] sm:$0xff]
      %v394 = vld [vmem:[%s215 + $0x10] sm:$0xff]
      %v395 = vld [vmem:[%s215 + $0x18] sm:$0xff]
      %v396 = vld [vmem:[%s215 + $0x20] sm:$0xff]
      %v397 = vld [vmem:[%s215 + $0x28] sm:$0xff]
      %v398 = vld [vmem:[%s215 + $0x30] sm:$0xff]
      %v399 = vld [vmem:[%s215 + $0x38] sm:$0xff]
      %v400 = vadd.f32 %v362, %v392
      %v401 = vadd.f32 %v365, %v393
      %v402 = vadd.f32 %v370, %v394
      %v403 = vadd.f32 %v373, %v395
      %v404 = vadd.f32 %v378, %v396
      %v405 = vadd.f32 %v381, %v397
      %v406 = vadd.f32 %v386, %v398
      %v407 = vadd.f32 %v389, %v399
      %v408 = vmul.f32 %v400, %v400
      %v409 = vmul.f32 %v401, %v401
      %v410 = vmul.f32 %v402, %v402
      %v411 = vmul.f32 %v403, %v403
      %v412 = vmul.f32 %v404, %v404
      %v413 = vmul.f32 %v405, %v405
      %v414 = vmul.f32 %v406, %v406
      %v415 = vmul.f32 %v407, %v407
      %v416 = vmul.f32 %v400, %v408
      %v417 = vmul.f32 %v401, %v409
      %v418 = vmul.f32 %v402, %v410
      %v419 = vmul.f32 %v403, %v411
      %v420 = vmul.f32 %v404, %v412
      %v421 = vmul.f32 %v405, %v413
      %v422 = vmul.f32 %v406, %v414
      %v423 = vmul.f32 %v407, %v415
      %v424 = vmul.f32 %v416, 0.044715
      %v425 = vmul.f32 %v417, 0.044715
      %v426 = vmul.f32 %v418, 0.044715
      %v427 = vmul.f32 %v419, 0.044715
      %v428 = vmul.f32 %v420, 0.044715
      %v429 = vmul.f32 %v421, 0.044715
      %v430 = vmul.f32 %v422, 0.044715
      %v431 = vmul.f32 %v423, 0.044715
      %v432 = vadd.f32 %v400, %v424
      %v433 = vadd.f32 %v401, %v425
      %v434 = vadd.f32 %v402, %v426
      %v435 = vadd.f32 %v403, %v427
      %v436 = vadd.f32 %v404, %v428
      %v437 = vadd.f32 %v405, %v429
      %v438 = vadd.f32 %v406, %v430
      %v439 = vadd.f32 %v407, %v431
      %v440 = vmul.f32 %v432, 0.7978846
      %v441 = vmul.f32 %v433, 0.7978846
      %v442 = vmul.f32 %v434, 0.7978846
      %v443 = vmul.f32 %v435, 0.7978846
      %v444 = vmul.f32 %v436, 0.7978846
      %v445 = vmul.f32 %v437, 0.7978846
      %v446 = vmul.f32 %v438, 0.7978846
      %v447 = vmul.f32 %v439, 0.7978846
      %v448 = vtanh.pop %v440
      %v449 = vtanh.pop %v441
      %v450 = vtanh.pop %v442
      %v451 = vtanh.pop %v443
      %v452 = vtanh.pop %v444
      %v453 = vtanh.pop %v445
      %v454 = vtanh.pop %v446
      %v455 = vtanh.pop %v447
      %v456 = vadd.f32 %v448, 1.0
      %v457 = vadd.f32 %v449, 1.0
      %v458 = vadd.f32 %v450, 1.0
      %v459 = vadd.f32 %v451, 1.0
      %v460 = vadd.f32 %v452, 1.0
      %v461 = vadd.f32 %v453, 1.0
      %v462 = vadd.f32 %v454, 1.0
      %v463 = vadd.f32 %v455, 1.0
      %v464 = vmul.f32 %v456, 0.5
      %v465 = vmul.f32 %v457, 0.5
      %v466 = vmul.f32 %v458, 0.5
      %v467 = vmul.f32 %v459, 0.5
      %v468 = vmul.f32 %v460, 0.5
      %v469 = vmul.f32 %v461, 0.5
      %v470 = vmul.f32 %v462, 0.5
      %v471 = vmul.f32 %v463, 0.5
      %v472 = vmul.f32 %v400, %v464
      %v473 = vmul.f32 %v401, %v465
      %v474 = vmul.f32 %v402, %v466
      %v475 = vmul.f32 %v403, %v467
      %v476 = vmul.f32 %v404, %v468
      %v477 = vmul.f32 %v405, %v469
      %v478 = vmul.f32 %v406, %v470
      %v479 = vmul.f32 %v407, %v471
      %v480 = vpack.c.bf16 %v473, %v472
      %v481 = vpack.c.bf16 %v475, %v474
      %v482 = vpack.c.bf16 %v477, %v476
      %v483 = vpack.c.bf16 %v479, %v478
      %v488 = vunpack.c.l.b16 %v480
      %v489 = vunpack.c.h.b16 %v480
      %v490 = vunpack.c.l.b16 %v481
      %v491 = vunpack.c.h.b16 %v481
      %v492 = vunpack.c.l.b16 %v482
      %v493 = vunpack.c.h.b16 %v482
      %v494 = vunpack.c.l.b16 %v483
      %v495 = vunpack.c.h.b16 %v483
      %v496 = vpack.c.b16 %v488, %v488
      %v497 = vpack.c.b16 %v489, %v489
      %v498 = vpack.c.b16 %v490, %v490
      %v499 = vpack.c.b16 %v491, %v491
      %v500 = vpack.c.b16 %v492, %v492
      %v501 = vpack.c.b16 %v493, %v493
      %v502 = vpack.c.b16 %v494, %v494
      %v503 = vpack.c.b16 %v495, %v495
      %512 = vst [vmem:[%s221] sm:$0xf] %v496
      %513 = vst [vmem:[%s221 + $0x4] sm:$0xf] %v497
      %514 = vst [vmem:[%s221 + $0x8] sm:$0xf] %v498
      %515 = vst [vmem:[%s221 + $0xc] sm:$0xf] %v499
      %516 = vst [vmem:[%s221 + $0x10] sm:$0xf] %v500
      %517 = vst [vmem:[%s221 + $0x14] sm:$0xf] %v501
      %518 = vst [vmem:[%s221 + $0x18] sm:$0xf] %v502
      %519 = vst [vmem:[%s221 + $0x1c] sm:$0xf] %v503
      %s520 = smul.u32 8, %s15
      %p521 = scmp.lt.s32.totalorder %s520, 15
      %s522 = scalar_select %p521, %s520, 15
      %s523 = smul.addr %s522, 4
      %s524 = scalar_lea.vmem %s4, %s523
      // Predicated region
      $region37: #{_lambda_.8} parent=35 // pred_check
        %p525 = pneg %p127
      $region38: #{_lambda_.8} parent=35 // pred_check_branch
        %527 = sbr.rel (%p525) target = $region40
      $region39: #{_lambda_.8} parent=35 // pred_region
        %s528 = smul.u32 8, %s15
      $region40: #{_lambda_.8} parent=35 // pred_fallthru
        _
    $region36: #{_lambda_.8} parent=5 // pred_fallthru
      _
    %p529 = scmp.le.s32.totalorder 2, %s10
    // Predicated region
    $region41: #{_lambda_.8} parent=5 // pred_check
      %p530 = pneg %p529
    $region42: #{_lambda_.8} parent=5 // pred_check_branch
      %532 = sbr.rel (%p530) target = $region44
    $region43: #{_lambda_.8} parent=5 // pred_region
      %s533 = ssub.s32 %s10, 2
      // Predicated region
      $region45: #{_lambda_.8} parent=43 // pred_check
        %p534 = pneg %p133
      $region46: #{_lambda_.8} parent=43 // pred_check_branch
        %536 = sbr.rel (%p534) target = $region48
      $region47: #{_lambda_.8} parent=43 // pred_region
        %s537 = smul.u32 8, %s16
        %p538 = scmp.lt.s32.totalorder %s537, 15
        %s539 = scalar_select %p538, %s537, 15
        %s540 = smul.addr %s539, 4
        %s541 = scalar_lea.vmem %s4, %s540
      $region48: #{_lambda_.8} parent=43 // pred_fallthru
        _
    $region44: #{_lambda_.8} parent=5 // pred_fallthru
      _
  $region6: #{_lambda_.8} parent=0 // loop_footer
    %s14 = sadd.s32 1, %s10
  $region7: #{_lambda_.8} parent=0 // loop_footer_branch
    %9 = sbr.rel target = $region3
  $region8: #{_lambda_.8} parent=0 // loop_exit
    _

// kernel: _lambda_.10
$region0: #{_lambda_.10}
  #allocation0 [shape = 'u32[]', space=smem, size = 0x4, offset = 0x4, fixed_abs, tag = 'smem constant byte address 0x4 - core index']
  #allocation1 [shape = 'u32[144,128]{1,0:T(1,128)}', space=vmem, size = 0x12000, scoped, tag = 'internal scratch']
  %s0 = inlined_call_operand.vmem [shape: bf16[128,128], index: 0, kind: input, shape index: {}]
  %s1 = inlined_call_operand.vmem [shape: f32[128,128], index: 1, kind: input, shape index: {}]
  %s2 = inlined_call_operand.vmem [shape: bf16[128,128], index: 2, kind: input, shape index: {}]
  %s3 = inlined_call_operand.vmem [shape: f32[1,128], index: 3, kind: input, shape index: {}]
  %s4 = inlined_call_operand.vmem [shape: bf16[128,128], index: 4, kind: output, shape index: {}]
  %s5 = sld [smem:[#allocation0]]
  $region49: #{_lambda_.10} parent=0
    _
  %s7 = ssub.s32 1, %s5
  %s8 = scalar_select 0, %s7, %s5
  loop: start=0, step=1, limit=4
  $region2: #{_lambda_.10} parent=0 // loop_pre_header
    _
  $region3: #{_lambda_.10} parent=0 // loop_header
    %s10 = sphi 0, %s14
    %p11 = scmp.ge.s32.totalorder %s10, 4
    %s20 = sphi 0, %s22
    %s23 = sphi 0, %s20
    %s24 = sphi 0, %s23
    %s40 = sphi 0, %s24
    %s46 = sphi 0, %s48
    %s49 = sphi 0, %s46
    %s50 = sphi 0, %s49
    %s66 = sphi 0, %s50
    %s70 = sphi 0, %s70
    %s72 = sphi 0, %s70
    %s73 = sphi 0, %s72
    %s87 = sphi 0, %s73
    %s91 = sphi 0, %s91
    %s93 = sphi 0, %s91
    %s94 = sphi 0, %s93
    %s108 = sphi 0, %s94
    %s114 = sphi 0, %s116
    %s117 = sphi 0, %s114
    %s118 = sphi 0, %s117
    %s134 = sphi 0, %s118
  $region4: #{_lambda_.10} parent=0 // loop_header_branch
    %13 = sbr.rel (%p11) target = $region8
  $region5: #{_lambda_.10} parent=0 // loop_body
    %s15 = ssub.s32 %s10, 1
    %s16 = ssub.s32 %s10, 2
    %s17 = sadd.s32 %s10, 1
    %s18 = ssub.s32 %s10, %s17
    %p19 = scmp.eq.s32.totalorder %s18, 0
    %s21 = sadd.s32 %s20, 1
    %s22 = scalar_select %p19, %s20, %s21
    %p25 = pneg %p19
    %p26 = scmp.eq.s32.totalorder %s10, 1
    %p27 = por %p25, %p26
    %p28 = scmp.ne.s32.totalorder %s20, %s23
    %p29 = scmp.eq.s32.totalorder %s10, 0
    %p30 = por %p28, %p29
    %p31 = scmp.ne.s32.totalorder %s20, %s23
    %p32 = scmp.eq.s32.totalorder %s15, 1
    %p33 = por %p31, %p32
    %p34 = scmp.ne.s32.totalorder %s23, %s24
    %p35 = scmp.eq.s32.totalorder %s15, 0
    %p36 = por %p34, %p35
    %p37 = scmp.ne.s32.totalorder %s23, %s24
    %p38 = scmp.eq.s32.totalorder %s16, 1
    %p39 = por %p37, %p38
    %p41 = scmp.ne.s32.totalorder %s24, %s40
    %p42 = scmp.eq.s32.totalorder %s16, 0
    %p43 = por %p41, %p42
    %s44 = ssub.s32 %s10, %s17
    %p45 = scmp.eq.s32.totalorder %s44, 0
    %s47 = sadd.s32 %s46, 1
    %s48 = scalar_select %p45, %s46, %s47
    %p51 = pneg %p45
    %p52 = scmp.eq.s32.totalorder %s10, 1
    %p53 = por %p51, %p52
    %p54 = scmp.ne.s32.totalorder %s46, %s49
    %p55 = scmp.eq.s32.totalorder %s10, 0
    %p56 = por %p54, %p55
    %p57 = scmp.ne.s32.totalorder %s46, %s49
    %p58 = scmp.eq.s32.totalorder %s15, 1
    %p59 = por %p57, %p58
    %p60 = scmp.ne.s32.totalorder %s49, %s50
    %p61 = scmp.eq.s32.totalorder %s15, 0
    %p62 = por %p60, %p61
    %p63 = scmp.ne.s32.totalorder %s49, %s50
    %p64 = scmp.eq.s32.totalorder %s16, 1
    %p65 = por %p63, %p64
    %p67 = scmp.ne.s32.totalorder %s50, %s66
    %p68 = scmp.eq.s32.totalorder %s16, 0
    %p69 = por %p67, %p68
    %s71 = sadd.s32 %s70, 1
    %p74 = scmp.eq.s32.totalorder %s10, 1
    %p75 = scmp.ne.s32.totalorder %s70, %s72
    %p76 = scmp.eq.s32.totalorder %s10, 0
    %p77 = por %p75, %p76
    %p78 = scmp.ne.s32.totalorder %s70, %s72
    %p79 = scmp.eq.s32.totalorder %s15, 1
    %p80 = por %p78, %p79
    %p81 = scmp.ne.s32.totalorder %s72, %s73
    %p82 = scmp.eq.s32.totalorder %s15, 0
    %p83 = por %p81, %p82
    %p84 = scmp.ne.s32.totalorder %s72, %s73
    %p85 = scmp.eq.s32.totalorder %s16, 1
    %p86 = por %p84, %p85
    %p88 = scmp.ne.s32.totalorder %s73, %s87
    %p89 = scmp.eq.s32.totalorder %s16, 0
    %p90 = por %p88, %p89
    %s92 = sadd.s32 %s91, 1
    %p95 = scmp.eq.s32.totalorder %s10, 1
    %p96 = scmp.ne.s32.totalorder %s91, %s93
    %p97 = scmp.eq.s32.totalorder %s10, 0
    %p98 = por %p96, %p97
    %p99 = scmp.ne.s32.totalorder %s91, %s93
    %p100 = scmp.eq.s32.totalorder %s15, 1
    %p101 = por %p99, %p100
    %p102 = scmp.ne.s32.totalorder %s93, %s94
    %p103 = scmp.eq.s32.totalorder %s15, 0
    %p104 = por %p102, %p103
    %p105 = scmp.ne.s32.totalorder %s93, %s94
    %p106 = scmp.eq.s32.totalorder %s16, 1
    %p107 = por %p105, %p106
    %p109 = scmp.ne.s32.totalorder %s94, %s108
    %p110 = scmp.eq.s32.totalorder %s16, 0
    %p111 = por %p109, %p110
    %s112 = ssub.s32 %s10, %s17
    %p113 = scmp.eq.s32.totalorder %s112, 0
    %s115 = sadd.s32 %s114, 1
    %s116 = scalar_select %p113, %s114, %s115
    %p119 = pneg %p113
    %p120 = scmp.eq.s32.totalorder %s10, 1
    %p121 = por %p119, %p120
    %p122 = scmp.ne.s32.totalorder %s114, %s117
    %p123 = scmp.eq.s32.totalorder %s10, 0
    %p124 = por %p122, %p123
    %p125 = scmp.ne.s32.totalorder %s114, %s117
    %p126 = scmp.eq.s32.totalorder %s15, 1
    %p127 = por %p125, %p126
    %p128 = scmp.ne.s32.totalorder %s117, %s118
    %p129 = scmp.eq.s32.totalorder %s15, 0
    %p130 = por %p128, %p129
    %p131 = scmp.ne.s32.totalorder %s117, %s118
    %p132 = scmp.eq.s32.totalorder %s16, 1
    %p133 = por %p131, %p132
    %p135 = scmp.ne.s32.totalorder %s118, %s134
    %p136 = scmp.eq.s32.totalorder %s16, 0
    %p137 = por %p135, %p136
    %p138 = scmp.le.s32.totalorder 1, %s10
    %p139 = scmp.lt.s32.totalorder %s10, 3
    %p140 = pnand %p138, %p139
    %p141 = pneg %p140
    // Predicated region
    $region9: #{_lambda_.10} parent=5 // pred_check
      _
    $region10: #{_lambda_.10} parent=5 // pred_check_branch
      %143 = sbr.rel (%p140) target = $region12
    $region11: #{_lambda_.10} parent=5 // pred_region
      %s144 = ssub.s32 %s10, 1
      // Predicated region
      $region13: #{_lambda_.10} parent=11 // pred_check
        %p145 = pneg %p83
      $region14: #{_lambda_.10} parent=11 // pred_check_branch
        %147 = sbr.rel (%p145) target = $region16
      $region15: #{_lambda_.10} parent=11 // pred_region
        _
      $region16: #{_lambda_.10} parent=11 // pred_fallthru
        _
      // Predicated region
      $region17: #{_lambda_.10} parent=11 // pred_check
        %p148 = pneg %p104
      $region18: #{_lambda_.10} parent=11 // pred_check_branch
        %150 = sbr.rel (%p148) target = $region20
      $region19: #{_lambda_.10} parent=11 // pred_region
        _
      $region20: #{_lambda_.10} parent=11 // pred_fallthru
        _
    $region12: #{_lambda_.10} parent=5 // pred_fallthru
      _
    %p151 = scmp.lt.s32.totalorder %s10, 2
    // Predicated region
    $region21: #{_lambda_.10} parent=5 // pred_check
      %p152 = pneg %p151
    $region22: #{_lambda_.10} parent=5 // pred_check_branch
      %154 = sbr.rel (%p152) target = $region24
    $region23: #{_lambda_.10} parent=5 // pred_region
      // Predicated region
      $region25: #{_lambda_.10} parent=23 // pred_check
        %p155 = pneg %p30
      $region26: #{_lambda_.10} parent=23 // pred_check_branch
        %157 = sbr.rel (%p155) target = $region28
      $region27: #{_lambda_.10} parent=23 // pred_region
        %s158 = smul.u32 8, %s10
        %p159 = scmp.lt.s32.totalorder %s158, 15
        %s160 = scalar_select %p159, %s158, 15
        %s161 = smul.addr %s160, 4
        %s162 = scalar_lea.vmem %s0, %s161
        %s163 = smul.u32 8, %s10
      $region28: #{_lambda_.10} parent=23 // pred_fallthru
        _
      // Predicated region
      $region29: #{_lambda_.10} parent=23 // pred_check
        %p164 = pneg %p56
      $region30: #{_lambda_.10} parent=23 // pred_check_branch
        %166 = sbr.rel (%p164) target = $region32
      $region31: #{_lambda_.10} parent=23 // pred_region
        %s167 = smul.u32 8, %s10
        %p168 = scmp.lt.s32.totalorder %s167, 15
        %s169 = scalar_select %p168, %s167, 15
        %s170 = smul.addr %s169, 8
        %s171 = scalar_lea.vmem %s1, %s170
        %s172 = smul.u32 8, %s10
      $region32: #{_lambda_.10} parent=23 // pred_fallthru
        _
    $region24: #{_lambda_.10} parent=5 // pred_fallthru
      _
    %p173 = scmp.le.s32.totalorder 1, %s10
    %p174 = scmp.lt.s32.totalorder %s10, 3
    %p175 = pnand %p173, %p174
    %p176 = pneg %p175
    // Predicated region
    $region33: #{_lambda_.10} parent=5 // pred_check
      _
    $region34: #{_lambda_.10} parent=5 // pred_check_branch
      %178 = sbr.rel (%p175) target = $region36
    $region35: #{_lambda_.10} parent=5 // pred_region
      %s179 = ssub.s32 %s10, 1
      %s180 = smul.u32 8, %s15
      %p181 = scmp.lt.s32.totalorder %s180, 15
      %s182 = scalar_select %p181, %s180, 15
      %s183 = smul.addr %s182, 4
      %s184 = scalar_lea.vmem %s0, %s183
      %p185 = pneg %p36
      %p186 = pneg %p33
      %s187 = smul.u32 8, %s15
      %p188 = scmp.lt.s32.totalorder %s187, 15
      %s189 = scalar_select %p188, %s187, 15
      %s190 = smul.addr %s189, 8
      %s191 = scalar_lea.vmem %s1, %s190
      %p192 = pneg %p62
      %p193 = pneg %p59
      %p194 = pneg %p83
      %p195 = pneg %p80
      %p196 = pneg %p104
      %p197 = pneg %p101
      %p198 = pneg %p130
      %p199 = pneg %p127
      %s200 = smul.u32 8, %s15
      %p201 = scmp.lt.s32.totalorder %s200, 15
      %s202 = scalar_select %p201, %s200, 15
      %s203 = smul.addr %s202, 4
      %s204 = scalar_lea.vmem %s4, %s203
      %s205 = smul.u32 8, %s15
      %p206 = scmp.lt.s32.totalorder %s205, 15
      %s207 = scalar_select %p206, %s205, 15
      %s208 = smul.addr %s207, 4
      %s209 = scalar_lea.vmem %s0, %s208
      %s210 = smul.u32 8, %s15
      %s211 = smul.u32 8, %s15
      %p212 = scmp.lt.s32.totalorder %s211, 15
      %s213 = scalar_select %p212, %s211, 15
      %s214 = smul.addr %s213, 8
      %s215 = scalar_lea.vmem %s1, %s214
      %s216 = smul.u32 8, %s15
      %s217 = smul.u32 8, %s15
      %p218 = scmp.lt.s32.totalorder %s217, 15
      %s219 = scalar_select %p218, %s217, 15
      %s220 = smul.addr %s219, 4
      %s221 = scalar_lea.vmem %s4, %s220
      %s222 = smul.u32 8, %s15
      %v224 = vld [vmem:[%s209] sm:$0xf]
      %v225 = vld [vmem:[%s209 + $0x4] sm:$0xf]
      %v226 = vld [vmem:[%s209 + $0x8] sm:$0xf]
      %v227 = vld [vmem:[%s209 + $0xc] sm:$0xf]
      %v228 = vld [vmem:[%s209 + $0x10] sm:$0xf]
      %v229 = vld [vmem:[%s209 + $0x14] sm:$0xf]
      %v230 = vld [vmem:[%s209 + $0x18] sm:$0xf]
      %v231 = vld [vmem:[%s209 + $0x1c] sm:$0xf]
      %v232 = vld [vmem:[%s2] sm:$0xf]
      %v233 = vld [vmem:[%s2 + $0x4] sm:$0xf]
      %v234 = vld [vmem:[%s2 + $0x8] sm:$0xf]
      %v235 = vld [vmem:[%s2 + $0xc] sm:$0xf]
      %v236 = vld [vmem:[%s2 + $0x10] sm:$0xf]
      %v237 = vld [vmem:[%s2 + $0x14] sm:$0xf]
      %v238 = vld [vmem:[%s2 + $0x18] sm:$0xf]
      %v239 = vld [vmem:[%s2 + $0x1c] sm:$0xf]
      %v240 = vld [vmem:[%s2 + $0x20] sm:$0xf]
      %v241 = vld [vmem:[%s2 + $0x24] sm:$0xf]
      %v242 = vld [vmem:[%s2 + $0x28] sm:$0xf]
      %v243 = vld [vmem:[%s2 + $0x2c] sm:$0xf]
      %v244 = vld [vmem:[%s2 + $0x30] sm:$0xf]
      %v245 = vld [vmem:[%s2 + $0x34] sm:$0xf]
      %v246 = vld [vmem:[%s2 + $0x38] sm:$0xf]
      %v247 = vld [vmem:[%s2 + $0x3c] sm:$0xf]
      %v248 = vld [vmem:[%s3] sm:$0x1]
      %v250 = vlaneseq
      %v251 = vshrl.u32 %v250, 7
      %v252 = vsub.s32 0, %v251
      %v253 = vrot.slane %v248, %v252
      %v263 = vunpack.c.l.b16 %v224
      %v264 = vunpack.c.l.b16 %v225
      %v265 = vunpack.c.l.b16 %v226
      %v266 = vunpack.c.l.b16 %v227
      %v267 = vunpack.c.l.b16 %v228
      %v268 = vunpack.c.l.b16 %v229
      %v269 = vunpack.c.l.b16 %v230
      %v270 = vunpack.c.l.b16 %v231
      %v271 = vpack.c.b16 %v264, %v263
      %v272 = vpack.c.b16 %v266, %v265
      %v273 = vpack.c.b16 %v268, %v267
      %v274 = vpack.c.b16 %v270, %v269
      %v295 = vunpack.c.l.b16 %v232
      %v296 = vunpack.c.l.b16 %v233
      %v297 = vunpack.c.l.b16 %v234
      %v298 = vunpack.c.l.b16 %v235
      %v299 = vunpack.c.l.b16 %v236
      %v300 = vunpack.c.l.b16 %v237
      %v301 = vunpack.c.l.b16 %v238
      %v302 = vunpack.c.l.b16 %v239
      %v303 = vunpack.c.l.b16 %v240
      %v304 = vunpack.c.l.b16 %v241
      %v305 = vunpack.c.l.b16 %v242
      %v306 = vunpack.c.l.b16 %v243
      %v307 = vunpack.c.l.b16 %v244
      %v308 = vunpack.c.l.b16 %v245
      %v309 = vunpack.c.l.b16 %v246
      %v310 = vunpack.c.l.b16 %v247
      %v311 = vpack.c.b16 %v296, %v295
      %v312 = vpack.c.b16 %v298, %v297
      %v313 = vpack.c.b16 %v300, %v299
      %v314 = vpack.c.b16 %v302, %v301
      %v315 = vpack.c.b16 %v304, %v303
      %v316 = vpack.c.b16 %v306, %v305
      %v317 = vpack.c.b16 %v308, %v307
      %v318 = vpack.c.b16 %v310, %v309
      %327 = vmatprep.subr.bf16.mxu0 0
      %328 = vmatpush1.bf16.msra.mxu0 %v311
      %329 = vmatprep.subr.bf16.mxu0 0
      %330 = vmatpush1.bf16.msra.mxu0 %v312
      %331 = vmatprep.subr.bf16.mxu0 0
      %332 = vmatpush1.bf16.msra.mxu0 %v313
      %333 = vmatprep.subr.bf16.mxu0 0
      %334 = vmatpush1.bf16.msra.mxu0 %v314
      %335 = vmatprep.subr.bf16.mxu0 0
      %336 = vmatpush1.bf16.msra.mxu0 %v315
      %337 = vmatprep.subr.bf16.mxu0 0
      %338 = vmatpush1.bf16.msra.mxu0 %v316
      %339 = vmatprep.subr.bf16.mxu0 0
      %340 = vmatpush1.bf16.msra.mxu0 %v317
      %341 = vmatprep.subr.bf16.mxu0 0
      %342 = vmatpush1.bf16.msra.mxu0 %v318
      %343 = vmatprep.subr.bf16.mxu0 0
      %344 = vmatpush1.bf16.msra.mxu0 0
      %345 = vmatprep.subr.bf16.mxu0 0
      %346 = vmatpush1.bf16.msra.mxu0 0
      %347 = vmatprep.subr.bf16.mxu0 0
      %348 = vmatpush1.bf16.msra.mxu0 0
      %349 = vmatprep.subr.bf16.mxu0 0
      %350 = vmatpush1.bf16.msra.mxu0 0
      %351 = vmatprep.subr.bf16.mxu0 0
      %352 = vmatpush1.bf16.msra.mxu0 0
      %353 = vmatprep.subr.bf16.mxu0 0
      %354 = vmatpush1.bf16.msra.mxu0 0
      %355 = vmatprep.subr.bf16.mxu0 0
      %356 = vmatpush1.bf16.msra.mxu0 0
      %357 = vmatprep.subr.bf16.mxu0 0
      %358 = vmatpush1.bf16.msra.mxu0 0
      %359 = vmatprep.mubr.bf16.mxu0 0
      %360 = vmatmul.mubr.bf16.gmra.mrb[0].mxu0 %v271
      %v361 = vpop.f32.mrb[0].mxu0
      %v362 = vadd.f32 %v253, %v361
      %v363 = vpop.f32.mrb[0].mxu0
      %v364 = vpop.f32.mrb[0].mxu0
      %v365 = vadd.f32 %v253, %v364
      %v366 = vpop.f32.mrb[0].mxu0
      %367 = vmatprep.mubr.bf16.mxu0 0
      %368 = vmatmul.mubr.bf16.gmra.mrb[0].mxu0 %v272
      %v369 = vpop.f32.mrb[0].mxu0
      %v370 = vadd.f32 %v253, %v369
      %v371 = vpop.f32.mrb[0].mxu0
      %v372 = vpop.f32.mrb[0].mxu0
      %v373 = vadd.f32 %v253, %v372
      %v374 = vpop.f32.mrb[0].mxu0
      %375 = vmatprep.mubr.bf16.mxu0 0
      %376 = vmatmul.mubr.bf16.gmra.mrb[0].mxu0 %v273
      %v377 = vpop.f32.mrb[0].mxu0
      %v378 = vadd.f32 %v253, %v377
      %v379 = vpop.f32.mrb[0].mxu0
      %v380 = vpop.f32.mrb[0].mxu0
      %v381 = vadd.f32 %v253, %v380
      %v382 = vpop.f32.mrb[0].mxu0
      %383 = vmatprep.mubr.bf16.mxu0 0
      %384 = vmatmul.mubr.bf16.gmra.mrb[0].mxu0 %v274
      %v385 = vpop.f32.mrb[0].mxu0
      %v386 = vadd.f32 %v253, %v385
      %v387 = vpop.f32.mrb[0].mxu0
      %v388 = vpop.f32.mrb[0].mxu0
      %v389 = vadd.f32 %v253, %v388
      %v390 = vpop.f32.mrb[0].mxu0
      %391 = vdwg.mxu0
      %v392 = vld [vmem:[%s215] sm:$0xff]
      %v393 = vld [vmem:[%s215 + $0x8] sm:$0xff]
      %v394 = vld [vmem:[%s215 + $0x10] sm:$0xff]
      %v395 = vld [vmem:[%s215 + $0x18] sm:$0xff]
      %v396 = vld [vmem:[%s215 + $0x20] sm:$0xff]
      %v397 = vld [vmem:[%s215 + $0x28] sm:$0xff]
      %v398 = vld [vmem:[%s215 + $0x30] sm:$0xff]
      %v399 = vld [vmem:[%s215 + $0x38] sm:$0xff]
      %v400 = vadd.f32 %v362, %v392
      %v401 = vadd.f32 %v365, %v393
      %v402 = vadd.f32 %v370, %v394
      %v403 = vadd.f32 %v373, %v395
      %v404 = vadd.f32 %v378, %v396
      %v405 = vadd.f32 %v381, %v397
      %v406 = vadd.f32 %v386, %v398
      %v407 = vadd.f32 %v389, %v399
      %v408 = vpack.c.bf16 %v401, %v400
      %v409 = vpack.c.bf16 %v403, %v402
      %v410 = vpack.c.bf16 %v405, %v404
      %v411 = vpack.c.bf16 %v407, %v406
      %v416 = vunpack.c.l.b16 %v408
      %v417 = vunpack.c.h.b16 %v408
      %v418 = vunpack.c.l.b16 %v409
      %v419 = vunpack.c.h.b16 %v409
      %v420 = vunpack.c.l.b16 %v410
      %v421 = vunpack.c.h.b16 %v410
      %v422 = vunpack.c.l.b16 %v411
      %v423 = vunpack.c.h.b16 %v411
      %v424 = vpack.c.b16 %v416, %v416
      %v425 = vpack.c.b16 %v417, %v417
      %v426 = vpack.c.b16 %v418, %v418
      %v427 = vpack.c.b16 %v419, %v419
      %v428 = vpack.c.b16 %v420, %v420
      %v429 = vpack.c.b16 %v421, %v421
      %v430 = vpack.c.b16 %v422, %v422
      %v431 = vpack.c.b16 %v423, %v423
      %440 = vst [vmem:[%s221] sm:$0xf] %v424
      %441 = vst [vmem:[%s221 + $0x4] sm:$0xf] %v425
      %442 = vst [vmem:[%s221 + $0x8] sm:$0xf] %v426
      %443 = vst [vmem:[%s221 + $0xc] sm:$0xf] %v427
      %444 = vst [vmem:[%s221 + $0x10] sm:$0xf] %v428
      %445 = vst [vmem:[%s221 + $0x14] sm:$0xf] %v429
      %446 = vst [vmem:[%s221 + $0x18] sm:$0xf] %v430
      %447 = vst [vmem:[%s221 + $0x1c] sm:$0xf] %v431
      %s448 = smul.u32 8, %s15
      %p449 = scmp.lt.s32.totalorder %s448, 15
      %s450 = scalar_select %p449, %s448, 15
      %s451 = smul.addr %s450, 4
      %s452 = scalar_lea.vmem %s4, %s451
      // Predicated region
      $region37: #{_lambda_.10} parent=35 // pred_check
        %p453 = pneg %p127
      $region38: #{_lambda_.10} parent=35 // pred_check_branch
        %455 = sbr.rel (%p453) target = $region40
      $region39: #{_lambda_.10} parent=35 // pred_region
        %s456 = smul.u32 8, %s15
      $region40: #{_lambda_.10} parent=35 // pred_fallthru
        _
    $region36: #{_lambda_.10} parent=5 // pred_fallthru
      _
    %p457 = scmp.le.s32.totalorder 2, %s10
    // Predicated region
    $region41: #{_lambda_.10} parent=5 // pred_check
      %p458 = pneg %p457
    $region42: #{_lambda_.10} parent=5 // pred_check_branch
      %460 = sbr.rel (%p458) target = $region44
    $region43: #{_lambda_.10} parent=5 // pred_region
      %s461 = ssub.s32 %s10, 2
      // Predicated region
      $region45: #{_lambda_.10} parent=43 // pred_check
        %p462 = pneg %p133
      $region46: #{_lambda_.10} parent=43 // pred_check_branch
        %464 = sbr.rel (%p462) target = $region48
      $region47: #{_lambda_.10} parent=43 // pred_region
        %s465 = smul.u32 8, %s16
        %p466 = scmp.lt.s32.totalorder %s465, 15
        %s467 = scalar_select %p466, %s465, 15
        %s468 = smul.addr %s467, 4
        %s469 = scalar_lea.vmem %s4, %s468
      $region48: #{_lambda_.10} parent=43 // pred_fallthru
        _
    $region44: #{_lambda_.10} parent=5 // pred_fallthru
      _
  $region6: #{_lambda_.10} parent=0 // loop_footer
    %s14 = sadd.s32 1, %s10
  $region7: #{_lambda_.10} parent=0 // loop_footer_branch
    %9 = sbr.rel target = $region3
  $region8: #{_lambda_.10} parent=0 // loop_exit
    _

// kernel: tile.1
$region0: #{tile.1}
  #allocation0 [shape = 's32[1]{0}', space=sflag, size = 0x4, scoped, tag = 'scoped memory for tile.1']
  %s0 = inlined_call_operand.<no memory space> [shape: f32[], index: 0, kind: input, shape index: {}]
  %s1 = inlined_call_operand.vmem [shape: f32[1,256], index: 1, kind: output, shape index: {}]
  %v2 = vstv %s0
  %3 = vst [vmem:[%s1] sm:$0x1] %v2
  %s4 = scalar_lea.vmem %s1, 1
  %5 = vst [vmem:[%s4] sm:$0x1] %v2

// kernel: _lambda_.11
$region0: #{_lambda_.11}
  #allocation0 [shape = 'u32[]', space=smem, size = 0x4, offset = 0x4, fixed_abs, tag = 'smem constant byte address 0x4 - core index']
  #allocation1 [shape = 'u32[144,128]{1,0:T(1,128)}', space=vmem, size = 0x12000, scoped, tag = 'internal scratch']
  %s0 = inlined_call_operand.vmem [shape: bf16[128,128], index: 0, kind: input, shape index: {}]
  %s1 = inlined_call_operand.vmem [shape: bf16[128,256], index: 1, kind: input, shape index: {}]
  %s2 = inlined_call_operand.vmem [shape: f32[1,256], index: 2, kind: input, shape index: {}]
  %s3 = inlined_call_operand.vmem [shape: bf16[256,4], index: 3, kind: input, shape index: {}]
  %s4 = inlined_call_operand.vmem [shape: f32[1,4], index: 4, kind: input, shape index: {}]
  %s5 = inlined_call_operand.vmem [shape: f32[128,4], index: 5, kind: output, shape index: {}]
  %s6 = sld [smem:[#allocation0]]
  $region53: #{_lambda_.11} parent=0
    _
  %s8 = ssub.s32 1, %s6
  %s9 = scalar_select 0, %s8, %s6
  loop: start=0, step=1, limit=4
  $region2: #{_lambda_.11} parent=0 // loop_pre_header
    _
  $region3: #{_lambda_.11} parent=0 // loop_header
    %s11 = sphi 0, %s15
    %p12 = scmp.ge.s32.totalorder %s11, 4
    %s21 = sphi 0, %s23
    %s24 = sphi 0, %s21
    %s25 = sphi 0, %s24
    %s41 = sphi 0, %s25
    %s45 = sphi 0, %s45
    %s47 = sphi 0, %s45
    %s48 = sphi 0, %s47
    %s62 = sphi 0, %s48
    %s66 = sphi 0, %s66
    %s68 = sphi 0, %s66
    %s69 = sphi 0, %s68
    %s83 = sphi 0, %s69
    %s87 = sphi 0, %s87
    %s89 = sphi 0, %s87
    %s90 = sphi 0, %s89
    %s104 = sphi 0, %s90
    %s108 = sphi 0, %s108
    %s110 = sphi 0, %s108
    %s111 = sphi 0, %s110
    %s125 = sphi 0, %s111
    %s131 = sphi 0, %s133
    %s134 = sphi 0, %s131
    %s135 = sphi 0, %s134
    %s151 = sphi 0, %s135
  $region4: #{_lambda_.11} parent=0 // loop_header_branch
    %14 = sbr.rel (%p12) target = $region8
  $region5: #{_lambda_.11} parent=0 // loop_body
    %s16 = ssub.s32 %s11, 1
    %s17 = ssub.s32 %s11, 2
    %s18 = sadd.s32 %s11, 1
    %s19 = ssub.s32 %s11, %s18
    %p20 = scmp.eq.s32.totalorder %s19, 0
    %s22 = sadd.s32 %s21, 1
    %s23 = scalar_select %p20, %s21, %s22
    %p26 = pneg %p20
    %p27 = scmp.eq.s32.totalorder %s11, 1
    %p28 = por %p26, %p27
    %p29 = scmp.ne.s32.totalorder %s21, %s24
    %p30 = scmp.eq.s32.totalorder %s11, 0
    %p31 = por %p29, %p30
    %p32 = scmp.ne.s32.totalorder %s21, %s24
    %p33 = scmp.eq.s32.totalorder %s16, 1
    %p34 = por %p32, %p33
    %p35 = scmp.ne.s32.totalorder %s24, %s25
    %p36 = scmp.eq.s32.totalorder %s16, 0
    %p37 = por %p35, %p36
    %p38 = scmp.ne.s32.totalorder %s24, %s25
    %p39 = scmp.eq.s32.totalorder %s17, 1
    %p40 = por %p38, %p39
    %p42 = scmp.ne.s32.totalorder %s25, %s41
    %p43 = scmp.eq.s32.totalorder %s17, 0
    %p44 = por %p42, %p43
    %s46 = sadd.s32 %s45, 1
    %p49 = scmp.eq.s32.totalorder %s11, 1
    %p50 = scmp.ne.s32.totalorder %s45, %s47
    %p51 = scmp.eq.s32.totalorder %s11, 0
    %p52 = por %p50, %p51
    %p53 = scmp.ne.s32.totalorder %s45, %s47
    %p54 = scmp.eq.s32.totalorder %s16, 1
    %p55 = por %p53, %p54
    %p56 = scmp.ne.s32.totalorder %s47, %s48
    %p57 = scmp.eq.s32.totalorder %s16, 0
    %p58 = por %p56, %p57
    %p59 = scmp.ne.s32.totalorder %s47, %s48
    %p60 = scmp.eq.s32.totalorder %s17, 1
    %p61 = por %p59, %p60
    %p63 = scmp.ne.s32.totalorder %s48, %s62
    %p64 = scmp.eq.s32.totalorder %s17, 0
    %p65 = por %p63, %p64
    %s67 = sadd.s32 %s66, 1
    %p70 = scmp.eq.s32.totalorder %s11, 1
    %p71 = scmp.ne.s32.totalorder %s66, %s68
    %p72 = scmp.eq.s32.totalorder %s11, 0
    %p73 = por %p71, %p72
    %p74 = scmp.ne.s32.totalorder %s66, %s68
    %p75 = scmp.eq.s32.totalorder %s16, 1
    %p76 = por %p74, %p75
    %p77 = scmp.ne.s32.totalorder %s68, %s69
    %p78 = scmp.eq.s32.totalorder %s16, 0
    %p79 = por %p77, %p78
    %p80 = scmp.ne.s32.totalorder %s68, %s69
    %p81 = scmp.eq.s32.totalorder %s17, 1
    %p82 = por %p80, %p81
    %p84 = scmp.ne.s32.totalorder %s69, %s83
    %p85 = scmp.eq.s32.totalorder %s17, 0
    %p86 = por %p84, %p85
    %s88 = sadd.s32 %s87, 1
    %p91 = scmp.eq.s32.totalorder %s11, 1
    %p92 = scmp.ne.s32.totalorder %s87, %s89
    %p93 = scmp.eq.s32.totalorder %s11, 0
    %p94 = por %p92, %p93
    %p95 = scmp.ne.s32.totalorder %s87, %s89
    %p96 = scmp.eq.s32.totalorder %s16, 1
    %p97 = por %p95, %p96
    %p98 = scmp.ne.s32.totalorder %s89, %s90
    %p99 = scmp.eq.s32.totalorder %s16, 0
    %p100 = por %p98, %p99
    %p101 = scmp.ne.s32.totalorder %s89, %s90
    %p102 = scmp.eq.s32.totalorder %s17, 1
    %p103 = por %p101, %p102
    %p105 = scmp.ne.s32.totalorder %s90, %s104
    %p106 = scmp.eq.s32.totalorder %s17, 0
    %p107 = por %p105, %p106
    %s109 = sadd.s32 %s108, 1
    %p112 = scmp.eq.s32.totalorder %s11, 1
    %p113 = scmp.ne.s32.totalorder %s108, %s110
    %p114 = scmp.eq.s32.totalorder %s11, 0
    %p115 = por %p113, %p114
    %p116 = scmp.ne.s32.totalorder %s108, %s110
    %p117 = scmp.eq.s32.totalorder %s16, 1
    %p118 = por %p116, %p117
    %p119 = scmp.ne.s32.totalorder %s110, %s111
    %p120 = scmp.eq.s32.totalorder %s16, 0
    %p121 = por %p119, %p120
    %p122 = scmp.ne.s32.totalorder %s110, %s111
    %p123 = scmp.eq.s32.totalorder %s17, 1
    %p124 = por %p122, %p123
    %p126 = scmp.ne.s32.totalorder %s111, %s125
    %p127 = scmp.eq.s32.totalorder %s17, 0
    %p128 = por %p126, %p127
    %s129 = ssub.s32 %s11, %s18
    %p130 = scmp.eq.s32.totalorder %s129, 0
    %s132 = sadd.s32 %s131, 1
    %s133 = scalar_select %p130, %s131, %s132
    %p136 = pneg %p130
    %p137 = scmp.eq.s32.totalorder %s11, 1
    %p138 = por %p136, %p137
    %p139 = scmp.ne.s32.totalorder %s131, %s134
    %p140 = scmp.eq.s32.totalorder %s11, 0
    %p141 = por %p139, %p140
    %p142 = scmp.ne.s32.totalorder %s131, %s134
    %p143 = scmp.eq.s32.totalorder %s16, 1
    %p144 = por %p142, %p143
    %p145 = scmp.ne.s32.totalorder %s134, %s135
    %p146 = scmp.eq.s32.totalorder %s16, 0
    %p147 = por %p145, %p146
    %p148 = scmp.ne.s32.totalorder %s134, %s135
    %p149 = scmp.eq.s32.totalorder %s17, 1
    %p150 = por %p148, %p149
    %p152 = scmp.ne.s32.totalorder %s135, %s151
    %p153 = scmp.eq.s32.totalorder %s17, 0
    %p154 = por %p152, %p153
    %p155 = scmp.le.s32.totalorder 1, %s11
    %p156 = scmp.lt.s32.totalorder %s11, 3
    %p157 = pnand %p155, %p156
    %p158 = pneg %p157
    // Predicated region
    $region9: #{_lambda_.11} parent=5 // pred_check
      _
    $region10: #{_lambda_.11} parent=5 // pred_check_branch
      %160 = sbr.rel (%p157) target = $region12
    $region11: #{_lambda_.11} parent=5 // pred_region
      %s161 = ssub.s32 %s11, 1
      // Predicated region
      $region13: #{_lambda_.11} parent=11 // pred_check
        %p162 = pneg %p58
      $region14: #{_lambda_.11} parent=11 // pred_check_branch
        %164 = sbr.rel (%p162) target = $region16
      $region15: #{_lambda_.11} parent=11 // pred_region
        _
      $region16: #{_lambda_.11} parent=11 // pred_fallthru
        _
      // Predicated region
      $region17: #{_lambda_.11} parent=11 // pred_check
        %p165 = pneg %p79
      $region18: #{_lambda_.11} parent=11 // pred_check_branch
        %167 = sbr.rel (%p165) target = $region20
      $region19: #{_lambda_.11} parent=11 // pred_region
        _
      $region20: #{_lambda_.11} parent=11 // pred_fallthru
        _
      // Predicated region
      $region21: #{_lambda_.11} parent=11 // pred_check
        %p168 = pneg %p100
      $region22: #{_lambda_.11} parent=11 // pred_check_branch
        %170 = sbr.rel (%p168) target = $region24
      $region23: #{_lambda_.11} parent=11 // pred_region
        _
      $region24: #{_lambda_.11} parent=11 // pred_fallthru
        _
      // Predicated region
      $region25: #{_lambda_.11} parent=11 // pred_check
        %p171 = pneg %p121
      $region26: #{_lambda_.11} parent=11 // pred_check_branch
        %173 = sbr.rel (%p171) target = $region28
      $region27: #{_lambda_.11} parent=11 // pred_region
        _
      $region28: #{_lambda_.11} parent=11 // pred_fallthru
        _
    $region12: #{_lambda_.11} parent=5 // pred_fallthru
      _
    %p174 = scmp.lt.s32.totalorder %s11, 2
    // Predicated region
    $region29: #{_lambda_.11} parent=5 // pred_check
      %p175 = pneg %p174
    $region30: #{_lambda_.11} parent=5 // pred_check_branch
      %177 = sbr.rel (%p175) target = $region32
    $region31: #{_lambda_.11} parent=5 // pred_region
      // Predicated region
      $region33: #{_lambda_.11} parent=31 // pred_check
        %p178 = pneg %p31
      $region34: #{_lambda_.11} parent=31 // pred_check_branch
        %180 = sbr.rel (%p178) target = $region36
      $region35: #{_lambda_.11} parent=31 // pred_region
        %s181 = smul.u32 8, %s11
        %p182 = scmp.lt.s32.totalorder %s181, 15
        %s183 = scalar_select %p182, %s181, 15
        %s184 = smul.addr %s183, 4
        %s185 = scalar_lea.vmem %s0, %s184
        %s186 = smul.u32 8, %s11
      $region36: #{_lambda_.11} parent=31 // pred_fallthru
        _
    $region32: #{_lambda_.11} parent=5 // pred_fallthru
      _
    %p187 = scmp.le.s32.totalorder 1, %s11
    %p188 = scmp.lt.s32.totalorder %s11, 3
    %p189 = pnand %p187, %p188
    %p190 = pneg %p189
    // Predicated region
    $region37: #{_lambda_.11} parent=5 // pred_check
      _
    $region38: #{_lambda_.11} parent=5 // pred_check_branch
      %192 = sbr.rel (%p189) target = $region40
    $region39: #{_lambda_.11} parent=5 // pred_region
      %s193 = ssub.s32 %s11, 1
      %s194 = smul.u32 8, %s16
      %p195 = scmp.lt.s32.totalorder %s194, 15
      %s196 = scalar_select %p195, %s194, 15
      %s197 = smul.addr %s196, 4
      %s198 = scalar_lea.vmem %s0, %s197
      %p199 = pneg %p37
      %p200 = pneg %p34
      %p201 = pneg %p58
      %p202 = pneg %p55
      %p203 = pneg %p79
      %p204 = pneg %p76
      %p205 = pneg %p100
      %p206 = pneg %p97
      %p207 = pneg %p121
      %p208 = pneg %p118
      %p209 = pneg %p147
      %p210 = pneg %p144
      %s211 = smul.u32 8, %s16
      %p212 = scmp.lt.s32.totalorder %s211, 15
      %s213 = scalar_select %p212, %s211, 15
      %s214 = smul.addr %s213, 8
      %s215 = scalar_lea.vmem %s5, %s214
      %s216 = smul.u32 8, %s16
      %p217 = scmp.lt.s32.totalorder %s216, 15
      %s218 = scalar_select %p217, %s216, 15
      %s219 = smul.addr %s218, 4
      %s220 = scalar_lea.vmem %s0, %s219
      %s221 = smul.u32 8, %s16
      %s222 = smul.u32 8, %s16
      %p223 = scmp.lt.s32.totalorder %s222, 15
      %s224 = scalar_select %p223, %s222, 15
      %s225 = smul.addr %s224, 8
      %s226 = scalar_lea.vmem %s5, %s225
      %s227 = smul.u32 8, %s16
      %v229 = vld [vmem:[%s220] sm:$0xf]
      %v230 = vld [vmem:[%s220 + $0x4] sm:$0xf]
      %v231 = vld [vmem:[%s220 + $0x8] sm:$0xf]
      %v232 = vld [vmem:[%s220 + $0xc] sm:$0xf]
      %v233 = vld [vmem:[%s220 + $0x10] sm:$0xf]
      %v234 = vld [vmem:[%s220 + $0x14] sm:$0xf]
      %v235 = vld [vmem:[%s220 + $0x18] sm:$0xf]
      %v236 = vld [vmem:[%s220 + $0x1c] sm:$0xf]
      %v237 = vld [vmem:[%s1] sm:$0xff]
      %v238 = vld [vmem:[%s1 + $0x8] sm:$0xff]
      %v239 = vld [vmem:[%s1 + $0x10] sm:$0xff]
      %v240 = vld [vmem:[%s1 + $0x18] sm:$0xff]
      %v241 = vld [vmem:[%s1 + $0x20] sm:$0xff]
      %v242 = vld [vmem:[%s1 + $0x28] sm:$0xff]
      %v243 = vld [vmem:[%s1 + $0x30] sm:$0xff]
      %v244 = vld [vmem:[%s1 + $0x38] sm:$0xff]
      %v245 = vld [vmem:[%s1 + $0x40] sm:$0xff]
      %v246 = vld [vmem:[%s1 + $0x48] sm:$0xff]
      %v247 = vld [vmem:[%s1 + $0x50] sm:$0xff]
      %v248 = vld [vmem:[%s1 + $0x58] sm:$0xff]
      %v249 = vld [vmem:[%s1 + $0x60] sm:$0xff]
      %v250 = vld [vmem:[%s1 + $0x68] sm:$0xff]
      %v251 = vld [vmem:[%s1 + $0x70] sm:$0xff]
      %v252 = vld [vmem:[%s1 + $0x78] sm:$0xff]
      %v253 = vld [vmem:[%s2] sm:$0x3]
      %v255 = vlaneseq
      %v256 = vshrl.u32 %v255, 7
      %v257 = vsub.s32 0, %v256
      %v258 = vrot.slane %v253, %v257
      %v259 = vlaneseq
      %v260 = vshrl.u32 %v259, 7
      %v261 = vsub.s32 1, %v260
      %v262 = vrot.slane %v253, %v261
      %v273 = vunpack.c.l.b16 %v229
      %v274 = vunpack.c.l.b16 %v230
      %v275 = vunpack.c.l.b16 %v231
      %v276 = vunpack.c.l.b16 %v232
      %v277 = vunpack.c.l.b16 %v233
      %v278 = vunpack.c.l.b16 %v234
      %v279 = vunpack.c.l.b16 %v235
      %v280 = vunpack.c.l.b16 %v236
      %v281 = vpack.c.b16 %v274, %v273
      %v282 = vpack.c.b16 %v276, %v275
      %v283 = vpack.c.b16 %v278, %v277
      %v284 = vpack.c.b16 %v280, %v279
      %v305 = vunpack.c.l.b16 %v237
      %v306 = vunpack.c.h.b16 %v237
      %v307 = vunpack.c.l.b16 %v238
      %v308 = vunpack.c.h.b16 %v238
      %v309 = vunpack.c.l.b16 %v239
      %v310 = vunpack.c.h.b16 %v239
      %v311 = vunpack.c.l.b16 %v240
      %v312 = vunpack.c.h.b16 %v240
      %v313 = vunpack.c.l.b16 %v241
      %v314 = vunpack.c.h.b16 %v241
      %v315 = vunpack.c.l.b16 %v242
      %v316 = vunpack.c.h.b16 %v242
      %v317 = vunpack.c.l.b16 %v243
      %v318 = vunpack.c.h.b16 %v243
      %v319 = vunpack.c.l.b16 %v244
      %v320 = vunpack.c.h.b16 %v244
      %v321 = vunpack.c.l.b16 %v245
      %v322 = vunpack.c.h.b16 %v245
      %v323 = vunpack.c.l.b16 %v246
      %v324 = vunpack.c.h.b16 %v246
      %v325 = vunpack.c.l.b16 %v247
      %v326 = vunpack.c.h.b16 %v247
      %v327 = vunpack.c.l.b16 %v248
      %v328 = vunpack.c.h.b16 %v248
      %v329 = vunpack.c.l.b16 %v249
      %v330 = vunpack.c.h.b16 %v249
      %v331 = vunpack.c.l.b16 %v250
      %v332 = vunpack.c.h.b16 %v250
      %v333 = vunpack.c.l.b16 %v251
      %v334 = vunpack.c.h.b16 %v251
      %v335 = vunpack.c.l.b16 %v252
      %v336 = vunpack.c.h.b16 %v252
      %v337 = vpack.c.b16 %v307, %v305
      %v338 = vpack.c.b16 %v308, %v306
      %v339 = vpack.c.b16 %v311, %v309
      %v340 = vpack.c.b16 %v312, %v310
      %v341 = vpack.c.b16 %v315, %v313
      %v342 = vpack.c.b16 %v316, %v314
      %v343 = vpack.c.b16 %v319, %v317
      %v344 = vpack.c.b16 %v320, %v318
      %v345 = vpack.c.b16 %v323, %v321
      %v346 = vpack.c.b16 %v324, %v322
      %v347 = vpack.c.b16 %v327, %v325
      %v348 = vpack.c.b16 %v328, %v326
      %v349 = vpack.c.b16 %v331, %v329
      %v350 = vpack.c.b16 %v332, %v330
      %v351 = vpack.c.b16 %v335, %v333
      %v352 = vpack.c.b16 %v336, %v334
      %369 = vmatprep.subr.bf16.mxu0 %v338
      %370 = vmatpush1.bf16.msra.mxu0 %v337
      %371 = vmatprep.subr.bf16.mxu0 %v340
      %372 = vmatpush1.bf16.msra.mxu0 %v339
      %373 = vmatprep.subr.bf16.mxu0 %v342
      %374 = vmatpush1.bf16.msra.mxu0 %v341
      %375 = vmatprep.subr.bf16.mxu0 %v344
      %376 = vmatpush1.bf16.msra.mxu0 %v343
      %377 = vmatprep.subr.bf16.mxu0 %v346
      %378 = vmatpush1.bf16.msra.mxu0 %v345
      %379 = vmatprep.subr.bf16.mxu0 %v348
      %380 = vmatpush1.bf16.msra.mxu0 %v347
      %381 = vmatprep.subr.bf16.mxu0 %v350
      %382 = vmatpush1.bf16.msra.mxu0 %v349
      %383 = vmatprep.subr.bf16.mxu0 %v352
      %384 = vmatpush1.bf16.msra.mxu0 %v351
      %385 = vmatprep.subr.bf16.mxu0 0
      %386 = vmatpush1.bf16.msra.mxu0 0
      %387 = vmatprep.subr.bf16.mxu0 0
      %388 = vmatpush1.bf16.msra.mxu0 0
      %389 = vmatprep.subr.bf16.mxu0 0
      %390 = vmatpush1.bf16.msra.mxu0 0
      %391 = vmatprep.subr.bf16.mxu0 0
      %392 = vmatpush1.bf16.msra.mxu0 0
      %393 = vmatprep.subr.bf16.mxu0 0
      %394 = vmatpush1.bf16.msra.mxu0 0
      %395 = vmatprep.subr.bf16.mxu0 0
      %396 = vmatpush1.bf16.msra.mxu0 0
      %397 = vmatprep.subr.bf16.mxu0 0
      %398 = vmatpush1.bf16.msra.mxu0 0
      %399 = vmatprep.subr.bf16.mxu0 0
      %400 = vmatpush1.bf16.msra.mxu0 0
      %401 = vmatprep.mubr.bf16.mxu0 0
      %402 = vmatmul.mubr.bf16.gmra.mrb[0].mxu0 %v281
      %v403 = vpop.f32.mrb[0].mxu0
      %v404 = vadd.f32 %v258, %v403
      %v405 = vpop.f32.mrb[0].mxu0
      %v406 = vadd.f32 %v262, %v405
      %v407 = vpop.f32.mrb[0].mxu0
      %v408 = vadd.f32 %v258, %v407
      %v409 = vpop.f32.mrb[0].mxu0
      %v410 = vadd.f32 %v262, %v409
      %411 = vmatprep.mubr.bf16.mxu0 0
      %412 = vmatmul.mubr.bf16.gmra.mrb[0].mxu0 %v282
      %v413 = vpop.f32.mrb[0].mxu0
      %v414 = vadd.f32 %v258, %v413
      %v415 = vpop.f32.mrb[0].mxu0
      %v416 = vadd.f32 %v262, %v415
      %v417 = vpop.f32.mrb[0].mxu0
      %v418 = vadd.f32 %v258, %v417
      %v419 = vpop.f32.mrb[0].mxu0
      %v420 = vadd.f32 %v262, %v419
      %421 = vmatprep.mubr.bf16.mxu0 0
      %422 = vmatmul.mubr.bf16.gmra.mrb[0].mxu0 %v283
      %v423 = vpop.f32.mrb[0].mxu0
      %v424 = vadd.f32 %v258, %v423
      %v425 = vpop.f32.mrb[0].mxu0
      %v426 = vadd.f32 %v262, %v425
      %v427 = vpop.f32.mrb[0].mxu0
      %v428 = vadd.f32 %v258, %v427
      %v429 = vpop.f32.mrb[0].mxu0
      %v430 = vadd.f32 %v262, %v429
      %431 = vmatprep.mubr.bf16.mxu0 0
      %432 = vmatmul.mubr.bf16.gmra.mrb[0].mxu0 %v284
      %v433 = vpop.f32.mrb[0].mxu0
      %v434 = vadd.f32 %v258, %v433
      %v435 = vpop.f32.mrb[0].mxu0
      %v436 = vadd.f32 %v262, %v435
      %v437 = vpop.f32.mrb[0].mxu0
      %v438 = vadd.f32 %v258, %v437
      %v439 = vpop.f32.mrb[0].mxu0
      %v440 = vadd.f32 %v262, %v439
      %441 = vdwg.mxu0
      %v442 = vmul.f32 %v404, %v404
      %v443 = vmul.f32 %v406, %v406
      %v444 = vmul.f32 %v408, %v408
      %v445 = vmul.f32 %v410, %v410
      %v446 = vmul.f32 %v414, %v414
      %v447 = vmul.f32 %v416, %v416
      %v448 = vmul.f32 %v418, %v418
      %v449 = vmul.f32 %v420, %v420
      %v450 = vmul.f32 %v424, %v424
      %v451 = vmul.f32 %v426, %v426
      %v452 = vmul.f32 %v428, %v428
      %v453 = vmul.f32 %v430, %v430
      %v454 = vmul.f32 %v434, %v434
      %v455 = vmul.f32 %v436, %v436
      %v456 = vmul.f32 %v438, %v438
      %v457 = vmul.f32 %v440, %v440
      %v458 = vmul.f32 %v404, %v442
      %v459 = vmul.f32 %v406, %v443
      %v460 = vmul.f32 %v408, %v444
      %v461 = vmul.f32 %v410, %v445
      %v462 = vmul.f32 %v414, %v446
      %v463 = vmul.f32 %v416, %v447
      %v464 = vmul.f32 %v418, %v448
      %v465 = vmul.f32 %v420, %v449
      %v466 = vmul.f32 %v424, %v450
      %v467 = vmul.f32 %v426, %v451
      %v468 = vmul.f32 %v428, %v452
      %v469 = vmul.f32 %v430, %v453
      %v470 = vmul.f32 %v434, %v454
      %v471 = vmul.f32 %v436, %v455
      %v472 = vmul.f32 %v438, %v456
      %v473 = vmul.f32 %v440, %v457
      %v474 = vmul.f32 %v458, 0.044715
      %v475 = vmul.f32 %v459, 0.044715
      %v476 = vmul.f32 %v460, 0.044715
      %v477 = vmul.f32 %v461, 0.044715
      %v478 = vmul.f32 %v462, 0.044715
      %v479 = vmul.f32 %v463, 0.044715
      %v480 = vmul.f32 %v464, 0.044715
      %v481 = vmul.f32 %v465, 0.044715
      %v482 = vmul.f32 %v466, 0.044715
      %v483 = vmul.f32 %v467, 0.044715
      %v484 = vmul.f32 %v468, 0.044715
      %v485 = vmul.f32 %v469, 0.044715
      %v486 = vmul.f32 %v470, 0.044715
      %v487 = vmul.f32 %v471, 0.044715
      %v488 = vmul.f32 %v472, 0.044715
      %v489 = vmul.f32 %v473, 0.044715
      %v490 = vadd.f32 %v404, %v474
      %v491 = vadd.f32 %v406, %v475
      %v492 = vadd.f32 %v408, %v476
      %v493 = vadd.f32 %v410, %v477
      %v494 = vadd.f32 %v414, %v478
      %v495 = vadd.f32 %v416, %v479
      %v496 = vadd.f32 %v418, %v480
      %v497 = vadd.f32 %v420, %v481
      %v498 = vadd.f32 %v424, %v482
      %v499 = vadd.f32 %v426, %v483
      %v500 = vadd.f32 %v428, %v484
      %v501 = vadd.f32 %v430, %v485
      %v502 = vadd.f32 %v434, %v486
      %v503 = vadd.f32 %v436, %v487
      %v504 = vadd.f32 %v438, %v488
      %v505 = vadd.f32 %v440, %v489
      %v506 = vmul.f32 %v490, 0.7978846
      %v507 = vmul.f32 %v491, 0.7978846
      %v508 = vmul.f32 %v492, 0.7978846
      %v509 = vmul.f32 %v493, 0.7978846
      %v510 = vmul.f32 %v494, 0.7978846
      %v511 = vmul.f32 %v495, 0.7978846
      %v512 = vmul.f32 %v496, 0.7978846
      %v513 = vmul.f32 %v497, 0.7978846
      %v514 = vmul.f32 %v498, 0.7978846
      %v515 = vmul.f32 %v499, 0.7978846
      %v516 = vmul.f32 %v500, 0.7978846
      %v517 = vmul.f32 %v501, 0.7978846
      %v518 = vmul.f32 %v502, 0.7978846
      %v519 = vmul.f32 %v503, 0.7978846
      %v520 = vmul.f32 %v504, 0.7978846
      %v521 = vmul.f32 %v505, 0.7978846
      %v522 = vtanh.pop %v506
      %v523 = vtanh.pop %v507
      %v524 = vtanh.pop %v508
      %v525 = vtanh.pop %v509
      %v526 = vtanh.pop %v510
      %v527 = vtanh.pop %v511
      %v528 = vtanh.pop %v512
      %v529 = vtanh.pop %v513
      %v530 = vtanh.pop %v514
      %v531 = vtanh.pop %v515
      %v532 = vtanh.pop %v516
      %v533 = vtanh.pop %v517
      %v534 = vtanh.pop %v518
      %v535 = vtanh.pop %v519
      %v536 = vtanh.pop %v520
      %v537 = vtanh.pop %v521
      %v538 = vadd.f32 %v522, 1.0
      %v539 = vadd.f32 %v523, 1.0
      %v540 = vadd.f32 %v524, 1.0
      %v541 = vadd.f32 %v525, 1.0
      %v542 = vadd.f32 %v526, 1.0
      %v543 = vadd.f32 %v527, 1.0
      %v544 = vadd.f32 %v528, 1.0
      %v545 = vadd.f32 %v529, 1.0
      %v546 = vadd.f32 %v530, 1.0
      %v547 = vadd.f32 %v531, 1.0
      %v548 = vadd.f32 %v532, 1.0
      %v549 = vadd.f32 %v533, 1.0
      %v550 = vadd.f32 %v534, 1.0
      %v551 = vadd.f32 %v535, 1.0
      %v552 = vadd.f32 %v536, 1.0
      %v553 = vadd.f32 %v537, 1.0
      %v554 = vmul.f32 %v538, 0.5
      %v555 = vmul.f32 %v539, 0.5
      %v556 = vmul.f32 %v540, 0.5
      %v557 = vmul.f32 %v541, 0.5
      %v558 = vmul.f32 %v542, 0.5
      %v559 = vmul.f32 %v543, 0.5
      %v560 = vmul.f32 %v544, 0.5
      %v561 = vmul.f32 %v545, 0.5
      %v562 = vmul.f32 %v546, 0.5
      %v563 = vmul.f32 %v547, 0.5
      %v564 = vmul.f32 %v548, 0.5
      %v565 = vmul.f32 %v549, 0.5
      %v566 = vmul.f32 %v550, 0.5
      %v567 = vmul.f32 %v551, 0.5
      %v568 = vmul.f32 %v552, 0.5
      %v569 = vmul.f32 %v553, 0.5
      %v570 = vmul.f32 %v404, %v554
      %v571 = vmul.f32 %v406, %v555
      %v572 = vmul.f32 %v408, %v556
      %v573 = vmul.f32 %v410, %v557
      %v574 = vmul.f32 %v414, %v558
      %v575 = vmul.f32 %v416, %v559
      %v576 = vmul.f32 %v418, %v560
      %v577 = vmul.f32 %v420, %v561
      %v578 = vmul.f32 %v424, %v562
      %v579 = vmul.f32 %v426, %v563
      %v580 = vmul.f32 %v428, %v564
      %v581 = vmul.f32 %v430, %v565
      %v582 = vmul.f32 %v434, %v566
      %v583 = vmul.f32 %v436, %v567
      %v584 = vmul.f32 %v438, %v568
      %v585 = vmul.f32 %v440, %v569
      %v586 = vpack.c.bf16 %v572, %v570
      %v587 = vpack.c.bf16 %v573, %v571
      %v588 = vpack.c.bf16 %v576, %v574
      %v589 = vpack.c.bf16 %v577, %v575
      %v590 = vpack.c.bf16 %v580, %v578
      %v591 = vpack.c.bf16 %v581, %v579
      %v592 = vpack.c.bf16 %v584, %v582
      %v593 = vpack.c.bf16 %v585, %v583
      %v594 = vld [vmem:[%s3] sm:$0xf]
      %v595 = vld [vmem:[%s3 + $0x4] sm:$0xf]
      %v596 = vld [vmem:[%s3 + $0x8] sm:$0xf]
      %v597 = vld [vmem:[%s3 + $0xc] sm:$0xf]
      %v598 = vld [vmem:[%s3 + $0x10] sm:$0xf]
      %v599 = vld [vmem:[%s3 + $0x14] sm:$0xf]
      %v600 = vld [vmem:[%s3 + $0x18] sm:$0xf]
      %v601 = vld [vmem:[%s3 + $0x1c] sm:$0xf]
      %v602 = vld [vmem:[%s3 + $0x20] sm:$0xf]
      %v603 = vld [vmem:[%s3 + $0x24] sm:$0xf]
      %v604 = vld [vmem:[%s3 + $0x28] sm:$0xf]
      %v605 = vld [vmem:[%s3 + $0x2c] sm:$0xf]
      %v606 = vld [vmem:[%s3 + $0x30] sm:$0xf]
      %v607 = vld [vmem:[%s3 + $0x34] sm:$0xf]
      %v608 = vld [vmem:[%s3 + $0x38] sm:$0xf]
      %v609 = vld [vmem:[%s3 + $0x3c] sm:$0xf]
      %v610 = vld [vmem:[%s3 + $0x40] sm:$0xf]
      %v611 = vld [vmem:[%s3 + $0x44] sm:$0xf]
      %v612 = vld [vmem:[%s3 + $0x48] sm:$0xf]
      %v613 = vld [vmem:[%s3 + $0x4c] sm:$0xf]
      %v614 = vld [vmem:[%s3 + $0x50] sm:$0xf]
      %v615 = vld [vmem:[%s3 + $0x54] sm:$0xf]
      %v616 = vld [vmem:[%s3 + $0x58] sm:$0xf]
      %v617 = vld [vmem:[%s3 + $0x5c] sm:$0xf]
      %v618 = vld [vmem:[%s3 + $0x60] sm:$0xf]
      %v619 = vld [vmem:[%s3 + $0x64] sm:$0xf]
      %v620 = vld [vmem:[%s3 + $0x68] sm:$0xf]
      %v621 = vld [vmem:[%s3 + $0x6c] sm:$0xf]
      %v622 = vld [vmem:[%s3 + $0x70] sm:$0xf]
      %v623 = vld [vmem:[%s3 + $0x74] sm:$0xf]
      %v624 = vld [vmem:[%s3 + $0x78] sm:$0xf]
      %v625 = vld [vmem:[%s3 + $0x7c] sm:$0xf]
      %v626 = vld [vmem:[%s4] sm:$0x1]
      %v628 = vlaneseq
      %v629 = vshrl.u32 %v628, 7
      %v630 = vsub.s32 0, %v629
      %v631 = vrot.slane %v626, %v630
      %v665 = vunpack.c.l.b16 %v594
      %v666 = vunpack.c.l.b16 %v595
      %v667 = vunpack.c.l.b16 %v596
      %v668 = vunpack.c.l.b16 %v597
      %v669 = vunpack.c.l.b16 %v598
      %v670 = vunpack.c.l.b16 %v599
      %v671 = vunpack.c.l.b16 %v600
      %v672 = vunpack.c.l.b16 %v601
      %v673 = vunpack.c.l.b16 %v602
      %v674 = vunpack.c.l.b16 %v603
      %v675 = vunpack.c.l.b16 %v604
      %v676 = vunpack.c.l.b16 %v605
      %v677 = vunpack.c.l.b16 %v606
      %v678 = vunpack.c.l.b16 %v607
      %v679 = vunpack.c.l.b16 %v608
      %v680 = vunpack.c.l.b16 %v609
      %v681 = vunpack.c.l.b16 %v610
      %v682 = vunpack.c.l.b16 %v611
      %v683 = vunpack.c.l.b16 %v612
      %v684 = vunpack.c.l.b16 %v613
      %v685 = vunpack.c.l.b16 %v614
      %v686 = vunpack.c.l.b16 %v615
      %v687 = vunpack.c.l.b16 %v616
      %v688 = vunpack.c.l.b16 %v617
      %v689 = vunpack.c.l.b16 %v618
      %v690 = vunpack.c.l.b16 %v619
      %v691 = vunpack.c.l.b16 %v620
      %v692 = vunpack.c.l.b16 %v621
      %v693 = vunpack.c.l.b16 %v622
      %v694 = vunpack.c.l.b16 %v623
      %v695 = vunpack.c.l.b16 %v624
      %v696 = vunpack.c.l.b16 %v625
      %v697 = vpack.c.b16 %v666, %v665
      %v698 = vpack.c.b16 %v668, %v667
      %v699 = vpack.c.b16 %v670, %v669
      %v700 = vpack.c.b16 %v672, %v671
      %v701 = vpack.c.b16 %v674, %v673
      %v702 = vpack.c.b16 %v676, %v675
      %v703 = vpack.c.b16 %v678, %v677
      %v704 = vpack.c.b16 %v680, %v679
      %v705 = vpack.c.b16 %v682, %v681
      %v706 = vpack.c.b16 %v684, %v683
      %v707 = vpack.c.b16 %v686, %v685
      %v708 = vpack.c.b16 %v688, %v687
      %v709 = vpack.c.b16 %v690, %v689
      %v710 = vpack.c.b16 %v692, %v691
      %v711 = vpack.c.b16 %v694, %v693
      %v712 = vpack.c.b16 %v696, %v695
      %729 = vmatprep.subr.bf16.mxu0 0
      %730 = vmatpush1.bf16.msra.mxu0 %v697
      %731 = vmatprep.subr.bf16.mxu0 0
      %732 = vmatpush1.bf16.msra.mxu0 %v698
      %733 = vmatprep.subr.bf16.mxu0 0
      %734 = vmatpush1.bf16.msra.mxu0 %v699
      %735 = vmatprep.subr.bf16.mxu0 0
      %736 = vmatpush1.bf16.msra.mxu0 %v700
      %737 = vmatprep.subr.bf16.mxu0 0
      %738 = vmatpush1.bf16.msra.mxu0 %v701
      %739 = vmatprep.subr.bf16.mxu0 0
      %740 = vmatpush1.bf16.msra.mxu0 %v702
      %741 = vmatprep.subr.bf16.mxu0 0
      %742 = vmatpush1.bf16.msra.mxu0 %v703
      %743 = vmatprep.subr.bf16.mxu0 0
      %744 = vmatpush1.bf16.msra.mxu0 %v704
      %745 = vmatprep.subr.bf16.mxu0 0
      %746 = vmatpush1.bf16.msra.mxu0 %v705
      %747 = vmatprep.subr.bf16.mxu0 0
      %748 = vmatpush1.bf16.msra.mxu0 %v706
      %749 = vmatprep.subr.bf16.mxu0 0
      %750 = vmatpush1.bf16.msra.mxu0 %v707
      %751 = vmatprep.subr.bf16.mxu0 0
      %752 = vmatpush1.bf16.msra.mxu0 %v708
      %753 = vmatprep.subr.bf16.mxu0 0
      %754 = vmatpush1.bf16.msra.mxu0 %v709
      %755 = vmatprep.subr.bf16.mxu0 0
      %756 = vmatpush1.bf16.msra.mxu0 %v710
      %757 = vmatprep.subr.bf16.mxu0 0
      %758 = vmatpush1.bf16.msra.mxu0 %v711
      %759 = vmatprep.subr.bf16.mxu0 0
      %760 = vmatpush1.bf16.msra.mxu0 %v712
      %761 = vmatprep.mubr.bf16.mxu0 %v587
      %762 = vmatmul.mubr.bf16.gmra.mrb[0].mxu0 %v586
      %v763 = vpop.f32.mrb[0].mxu0
      %v764 = vadd.f32 %v631, %v763
      %v765 = vpop.f32.mrb[0].mxu0
      %v766 = vpop.f32.mrb[0].mxu0
      %v767 = vadd.f32 %v631, %v766
      %v768 = vpop.f32.mrb[0].mxu0
      %769 = vmatprep.mubr.bf16.mxu0 %v589
      %770 = vmatmul.mubr.bf16.gmra.mrb[0].mxu0 %v588
      %v771 = vpop.f32.mrb[0].mxu0
      %v772 = vadd.f32 %v631, %v771
      %v773 = vpop.f32.mrb[0].mxu0
      %v774 = vpop.f32.mrb[0].mxu0
      %v775 = vadd.f32 %v631, %v774
      %v776 = vpop.f32.mrb[0].mxu0
      %777 = vmatprep.mubr.bf16.mxu0 %v591
      %778 = vmatmul.mubr.bf16.gmra.mrb[0].mxu0 %v590
      %v779 = vpop.f32.mrb[0].mxu0
      %v780 = vadd.f32 %v631, %v779
      %v781 = vpop.f32.mrb[0].mxu0
      %v782 = vpop.f32.mrb[0].mxu0
      %v783 = vadd.f32 %v631, %v782
      %v784 = vpop.f32.mrb[0].mxu0
      %785 = vmatprep.mubr.bf16.mxu0 %v593
      %786 = vmatmul.mubr.bf16.gmra.mrb[0].mxu0 %v592
      %v787 = vpop.f32.mrb[0].mxu0
      %v788 = vadd.f32 %v631, %v787
      %v789 = vpop.f32.mrb[0].mxu0
      %v790 = vpop.f32.mrb[0].mxu0
      %v791 = vadd.f32 %v631, %v790
      %v792 = vpop.f32.mrb[0].mxu0
      %793 = vdwg.mxu0
      %vm794 = vcmask 31744
      %795 = vst.msk [vmem:[%s226] sm:$0xff] %vm794, %v764
      %796 = vst.msk [vmem:[%s226 + $0x8] sm:$0xff] %vm794, %v767
      %797 = vst.msk [vmem:[%s226 + $0x10] sm:$0xff] %vm794, %v772
      %798 = vst.msk [vmem:[%s226 + $0x18] sm:$0xff] %vm794, %v775
      %799 = vst.msk [vmem:[%s226 + $0x20] sm:$0xff] %vm794, %v780
      %800 = vst.msk [vmem:[%s226 + $0x28] sm:$0xff] %vm794, %v783
      %801 = vst.msk [vmem:[%s226 + $0x30] sm:$0xff] %vm794, %v788
      %802 = vst.msk [vmem:[%s226 + $0x38] sm:$0xff] %vm794, %v791
      %s803 = smul.u32 8, %s16
      %p804 = scmp.lt.s32.totalorder %s803, 15
      %s805 = scalar_select %p804, %s803, 15
      %s806 = smul.addr %s805, 8
      %s807 = scalar_lea.vmem %s5, %s806
      // Predicated region
      $region41: #{_lambda_.11} parent=39 // pred_check
        %p808 = pneg %p144
      $region42: #{_lambda_.11} parent=39 // pred_check_branch
        %810 = sbr.rel (%p808) target = $region44
      $region43: #{_lambda_.11} parent=39 // pred_region
        %s811 = smul.u32 8, %s16
      $region44: #{_lambda_.11} parent=39 // pred_fallthru
        _
    $region40: #{_lambda_.11} parent=5 // pred_fallthru
      _
    %p812 = scmp.le.s32.totalorder 2, %s11
    // Predicated region
    $region45: #{_lambda_.11} parent=5 // pred_check
      %p813 = pneg %p812
    $region46: #{_lambda_.11} parent=5 // pred_check_branch
      %815 = sbr.rel (%p813) target = $region48
    $region47: #{_lambda_.11} parent=5 // pred_region
      %s816 = ssub.s32 %s11, 2
      // Predicated region
      $region49: #{_lambda_.11} parent=47 // pred_check
        %p817 = pneg %p150
      $region50: #{_lambda_.11} parent=47 // pred_check_branch
        %819 = sbr.rel (%p817) target = $region52
      $region51: #{_lambda_.11} parent=47 // pred_region
        %s820 = smul.u32 8, %s17
        %p821 = scmp.lt.s32.totalorder %s820, 15
        %s822 = scalar_select %p821, %s820, 15
        %s823 = smul.addr %s822, 8
        %s824 = scalar_lea.vmem %s5, %s823
      $region52: #{_lambda_.11} parent=47 // pred_fallthru
        _
    $region48: #{_lambda_.11} parent=5 // pred_fallthru
      _
  $region6: #{_lambda_.11} parent=0 // loop_footer
    %s15 = sadd.s32 1, %s11
  $region7: #{_lambda_.11} parent=0 // loop_footer_branch
    %10 = sbr.rel target = $region3
  $region8: #{_lambda_.11} parent=0 // loop_exit
    _

</llo_original>
